<compile_context>
chip_gen: v7x
topology: tpu7x:2x2x1
jax: 0.10.0
libtpu: 0.0.40
codegen_flags: <defaults>
</compile_context>

<pallas_src>
import functools

import jax
import jax.numpy as jnp
from jax import lax
from jax.experimental import pallas as pl
from jax.experimental.pallas import tpu as pltpu

C_PAD = 128  # lane-dense channel padding for every conv layer / fc2


# ----------------------------------------------------------------------------
# Fused conv block kernel: conv (tap matmuls) + bias + LeakyReLU + BN + 2x2 pool
# ----------------------------------------------------------------------------

def _conv_block_kernel(x_ref, w_ref, bst_ref, o_ref, *, H, W, taps, slope):
    """One grid step == one batch image.

    x_ref : (1, Hp, Wp, Cin)  bf16   spatially padded input (or im2col'd input)
    w_ref : (n_taps, Cin, 128) bf16  per-tap weight matrices
    bst_ref: (3, 128) f32            [bias; bn_scale; bn_shift]
    o_ref : (1, H//2, W//2, 128)     pooled output (bf16)
    """
    Ho, Wo = H // 2, W // 2

    bias = bst_ref[0:1, :]      # [1, 128]
    scale = bst_ref[1:2, :]
    shift = bst_ref[2:3, :]

    # 0/1 selection matrices that compact even / odd columns (exact, on MXU).
    r = lax.broadcasted_iota(jnp.int32, (Wo, W), 0)
    c = lax.broadcasted_iota(jnp.int32, (Wo, W), 1)
    p_even = (c == 2 * r).astype(jnp.float32)
    p_odd = (c == 2 * r + 1).astype(jnp.float32)

    def conv_row(h):
        """Pre-pool activation for output row h: [W, 128] f32."""
        acc = jnp.zeros((W, C_PAD), jnp.float32)
        for di, djs in taps:                       # taps: ((di, ((t, dj), ...)), ...)
            row = x_ref[0, h + di]                 # [Wp, Cin]  (one input row)
            for t, dj in djs:
                acc = acc + jnp.dot(row[dj:dj + W, :], w_ref[t],
                                    preferred_element_type=jnp.float32)
        z = acc + bias
        z = jnp.where(z >= 0.0, z, slope * z)      # LeakyReLU
        return z * scale + shift                   # BatchNorm (eval) affine

    def body(i, carry):
        z0 = conv_row(2 * i)
        z1 = conv_row(2 * i + 1)
        mh = jnp.maximum(z0, z1)                   # pool over H (adjacent rows)
        pooled = jnp.maximum(                      # pool over W (even/odd columns)
            jnp.dot(p_even, mh, preferred_element_type=jnp.float32),
            jnp.dot(p_odd, mh, preferred_element_type=jnp.float32))
        o_ref[0, i] = pooled.astype(o_ref.dtype)
        return carry

    lax.fori_loop(0, Ho, body, None)


def conv_block(x, w, bst, *, H, W, taps, slope=0.2, out_dtype=jnp.bfloat16):
    """x: [B, Hp, Wp, Cin] bf16; w: [n_taps, Cin, 128] bf16; bst: [3, 128] f32."""
    B, Hp, Wp, Cin = x.shape
    n_taps = w.shape[0]
    Ho, Wo = H // 2, W // 2
    kernel = functools.partial(_conv_block_kernel, H=H, W=W, taps=taps, slope=slope)
    return pl.pallas_call(
        kernel,
        out_shape=jax.ShapeDtypeStruct((B, Ho, Wo, C_PAD), out_dtype),
        grid=(B,),
        in_specs=[
            pl.BlockSpec((1, Hp, Wp, Cin), lambda b: (b, 0, 0, 0)),
            pl.BlockSpec((n_taps, Cin, C_PAD), lambda b: (0, 0, 0)),
            pl.BlockSpec((3, C_PAD), lambda b: (0, 0)),
        ],
        out_specs=pl.BlockSpec((1, Ho, Wo, C_PAD), lambda b: (b, 0, 0, 0)),
        compiler_params=pltpu.CompilerParams(dimension_semantics=("parallel",)),
    )(x, w, bst)


# ----------------------------------------------------------------------------
# Fused FC head: Linear(1152->512) + LeakyReLU(0.2) + [Dropout=id] + Linear(512->7pad)
# ----------------------------------------------------------------------------

def _fc_kernel(x_ref, w1_ref, b1_ref, w2_ref, b2_ref, o_ref):
    h = jnp.dot(x_ref[...], w1_ref[...], preferred_element_type=jnp.float32) + b1_ref[...]
    h = jnp.where(h >= 0.0, h, 0.2 * h)
    # Dropout(p=0.5) is identity in eval mode.
    o = jnp.dot(h.astype(w2_ref.dtype), w2_ref[...],
                preferred_element_type=jnp.float32) + b2_ref[...]
    o_ref[...] = o


def fc_head(x, w1, b1, w2, b2):
    B = x.shape[0]
    return pl.pallas_call(
        _fc_kernel,
        out_shape=jax.ShapeDtypeStruct((B, w2.shape[1]), jnp.float32),
    )(x, w1, b1, w2, b2)


# ----------------------------------------------------------------------------
# Host-side glue
# ----------------------------------------------------------------------------

TAPS_1 = ((0, ((0, 0),)),)                                              # conv1 (im2col)
TAPS_3 = tuple((di, tuple((di * 3 + dj, dj) for dj in range(3))) for di in range(3))


def _im2col5(x):
    """x: [B,48,48,1] f32 -> [B,48,48,32] bf16 (25 5x5 taps, K padded 25->32)."""
    B, H, W, _ = x.shape
    xp = jnp.pad(x, ((0, 0), (2, 2), (2, 2), (0, 0)))
    cols = [xp[:, di:di + H, dj:dj + W, 0] for di in range(5) for dj in range(5)]
    cols = jnp.stack(cols, axis=-1)                                     # [B,48,48,25]
    cols = jnp.pad(cols, ((0, 0), (0, 0), (0, 0), (0, 32 - 25)))
    return cols.astype(jnp.bfloat16)


def cnn_forward(params, x_nchw):
    x = jnp.transpose(x_nchw, (0, 2, 3, 1)).astype(jnp.float32)         # [B,48,48,1]
    B = x.shape[0]

    # conv1: 5x5 / Cin=1 -> single im2col matmul, fused epilogue + pool
    p = params["conv1"]
    y = conv_block(_im2col5(x), p["w"], p["bst"], H=48, W=48, taps=TAPS_1)   # [B,24,24,128]

    # conv2..4: 3x3 shifted-tap conv (channels padded to 128), fused epilogue + pool
    for name, hw in (("conv2", 24), ("conv3", 12), ("conv4", 6)):
        p = params[name]
        xpad = jnp.pad(y, ((0, 0), (1, 1), (1, 1), (0, 0)))
        y = conv_block(xpad, p["w"], p["bst"], H=hw, W=hw, taps=TAPS_3)

    # conv4 output: [B,3,3,128] with all 128 channels real.  Flatten in NHWC
    # order; fc1 weight rows were permuted at init to match PyTorch's
    # x.view(-1, 3*3*128) (c,h,w) order.
    flat = y.reshape(B, 3 * 3 * C_PAD)

    p1, p2 = params["fc1"], params["fc2"]
    logits = fc_head(flat, p1["w"], p1["b"], p2["w"], p2["b"])           # [B,128] f32
    return logits[:, :7]


# ----------------------------------------------------------------------------
# Parameter construction (deterministic, fresh-init eval-mode semantics)
# ----------------------------------------------------------------------------

def init_params(key):
    eps = 1e-5
    params = {}

    def conv_bn(key, k, cin, cout):
        kw_, kb_ = jax.random.split(key)
        fan_in = cin * k * k
        w = jax.random.normal(kw_, (k, k, cin, cout), jnp.float32) / jnp.sqrt(fan_in)
        b = 0.01 * jax.random.normal(kb_, (cout,), jnp.float32)
        # BatchNorm2d fresh init, eval mode: gamma=1, beta=0, mean=0, var=1
        scale = jnp.ones((cout,), jnp.float32) / jnp.sqrt(1.0 + eps)
        shift = jnp.zeros((cout,), jnp.float32)
        return w, b, scale, shift

    def pack_bst(b, scale, shift):
        def pad_c(v):
            return jnp.pad(v, (0, C_PAD - v.shape[0]))
        return jnp.stack([pad_c(b), pad_c(scale), pad_c(shift)], axis=0)  # [3,128] f32

    keys = jax.random.split(key, 6)

    # conv1: 5x5, Cin=1, Cout=32 -> im2col-matmul weight [1, 32(K pad 25->32), 128]
    w, b, sc, sh = conv_bn(keys[0], 5, 1, 32)
    wm = jnp.pad(w.reshape(25, 32), ((0, 32 - 25), (0, C_PAD - 32)))
    params["conv1"] = dict(w=wm.reshape(1, 32, C_PAD).astype(jnp.bfloat16),
                           bst=pack_bst(b, sc, sh))

    # conv2..4: 3x3, tap-matmul weights [9, 128, 128] (Cin/Cout zero-padded to 128)
    def conv_tap_params(key, cin, cout):
        w, b, sc, sh = conv_bn(key, 3, cin, cout)
        wp = jnp.pad(w, ((0, 0), (0, 0), (0, C_PAD - cin), (0, C_PAD - cout)))
        return dict(w=wp.reshape(9, C_PAD, C_PAD).astype(jnp.bfloat16),
                    bst=pack_bst(b, sc, sh))

    params["conv2"] = conv_tap_params(keys[1], 32, 64)
    params["conv3"] = conv_tap_params(keys[2], 64, 128)
    params["conv4"] = conv_tap_params(keys[3], 128, 128)

    # fc1: 1152 -> 512.  Rows permuted from PyTorch's (c,h,w) flatten order to
    # the kernel's (h,w,c) flatten order.
    kw_, kb_ = jax.random.split(keys[4])
    w1 = jax.random.normal(kw_, (1152, 512), jnp.float32) / jnp.sqrt(1152.0)
    perm = jnp.array([c * 9 + h * 3 + w
                      for h in range(3) for w in range(3) for c in range(C_PAD)],
                     dtype=jnp.int32)
    w1 = w1[perm, :]
    b1 = 0.01 * jax.random.normal(kb_, (512,), jnp.float32)
    params["fc1"] = dict(w=w1.astype(jnp.bfloat16), b=b1.reshape(1, 512))

    # fc2: 512 -> 7, N padded to 128 for lane-dense stores (sliced back to 7 on host)
    kw_, kb_ = jax.random.split(keys[5])
    w2 = jax.random.normal(kw_, (512, 7), jnp.float32) / jnp.sqrt(512.0)
    b2 = 0.01 * jax.random.normal(kb_, (7,), jnp.float32)
    params["fc2"] = dict(w=jnp.pad(w2, ((0, 0), (0, C_PAD - 7))).astype(jnp.bfloat16),
                         b=jnp.pad(b2, (0, C_PAD - 7)).reshape(1, C_PAD))

    return params


if __name__ == "__main__":
    key = jax.random.PRNGKey(0)
    k_param, k_x = jax.random.split(key)

    params = init_params(k_param)
    # 1 channel, 48x48 -> after four MaxPool2d(2) the spatial size is 3x3,
    # matching the module's 128*3*3 fc input.
    x = jax.random.normal(k_x, (2, 1, 48, 48), jnp.float32)

    fwd = jax.jit(cnn_forward)
    out = fwd(params, x)
    jax.block_until_ready(out)

    assert out.shape == (2, 7), out.shape
    assert bool(jnp.all(jnp.isfinite(out)))
    print("KERNEL_OK")
</pallas_src>

<mosaic_0001>
module attributes {stable_mosaic.version = 11 : i64} {
  func.func @_conv_block_kernel(%arg0: i32, %arg1: memref<1x48x48x32xbf16, #tpu.memory_space<vmem>>, %arg2: memref<1x32x128xbf16, #tpu.memory_space<vmem>>, %arg3: memref<3x128xf32, #tpu.memory_space<vmem>>, %arg4: memref<1x24x24x128xbf16, #tpu.memory_space<vmem>>) attributes {dimension_semantics = [#tpu.dimension_semantics<parallel>], iteration_bounds = array<i64: 2>, scalar_prefetch = 0 : i64, scratch_operands = 0 : i64, tpu.core_type = #tpu.core_type<tc>, window_params = [{transform_indices = @transform_0, window_bounds = array<i64: 1, 48, 48, 32>}, {pipeline_mode = #tpu.pipeline_mode<synchronous>, transform_indices = @transform_1, window_bounds = array<i64: 1, 32, 128>}, {pipeline_mode = #tpu.pipeline_mode<synchronous>, transform_indices = @transform_2, window_bounds = array<i64: 3, 128>}, {transform_indices = @transform_3, window_bounds = array<i64: 1, 24, 24, 128>}]} {
    %c0 = arith.constant 0 : index
    %c0_0 = arith.constant 0 : index
    %0 = vector.load %arg3[%c0, %c0_0] : memref<3x128xf32, #tpu.memory_space<vmem>>, vector<1x128xf32>
    %c1 = arith.constant 1 : index
    %c0_1 = arith.constant 0 : index
    %1 = vector.load %arg3[%c1, %c0_1] : memref<3x128xf32, #tpu.memory_space<vmem>>, vector<1x128xf32>
    %c2 = arith.constant 2 : index
    %c0_2 = arith.constant 0 : index
    %2 = vector.load %arg3[%c2, %c0_2] : memref<3x128xf32, #tpu.memory_space<vmem>>, vector<1x128xf32>
    %3 = tpu.iota {dimensions = array<i32: 0>} : vector<24x48xi32>
    %4 = tpu.iota {dimensions = array<i32: 1>} : vector<24x48xi32>
    %c2_i32 = arith.constant 2 : i32
    %5 = vector.broadcast %c2_i32 : i32 to vector<24x48xi32>
    %6 = arith.muli %5, %3 : vector<24x48xi32>
    %7 = arith.cmpi eq, %4, %6 : vector<24x48xi32>
    %8 = arith.extui %7 : vector<24x48xi1> to vector<24x48xi32>
    %9 = arith.sitofp %8 : vector<24x48xi32> to vector<24x48xf32>
    %c2_i32_3 = arith.constant 2 : i32
    %10 = vector.broadcast %c2_i32_3 : i32 to vector<24x48xi32>
    %11 = arith.muli %10, %3 : vector<24x48xi32>
    %c1_i32 = arith.constant 1 : i32
    %12 = vector.broadcast %c1_i32 : i32 to vector<24x48xi32>
    %13 = arith.addi %11, %12 : vector<24x48xi32>
    %14 = arith.cmpi eq, %4, %13 : vector<24x48xi32>
    %15 = arith.extui %14 : vector<24x48xi1> to vector<24x48xi32>
    %16 = arith.sitofp %15 : vector<24x48xi32> to vector<24x48xf32>
    %c0_i32 = arith.constant 0 : i32
    %c24_i32 = arith.constant 24 : i32
    %17 = arith.addi %c0_i32, %c24_i32 : i32
    %c1_i32_4 = arith.constant 1 : i32
    scf.for %arg5 = %c0_i32 to %17 step %c1_i32_4  : i32 {
      %c2_i32_6 = arith.constant 2 : i32
      %18 = arith.muli %c2_i32_6, %arg5 : i32
      %cst = arith.constant 0.000000e+00 : f32
      %19 = vector.broadcast %cst : f32 to vector<48x128xf32>
      %c0_i32_7 = arith.constant 0 : i32
      %20 = arith.addi %18, %c0_i32_7 : i32
      %c0_8 = arith.constant 0 : index
      %21 = arith.index_cast %20 : i32 to index
      %c0_9 = arith.constant 0 : index
      %c0_10 = arith.constant 0 : index
      %22 = vector.load %arg1[%c0_8, %21, %c0_9, %c0_10] : memref<1x48x48x32xbf16, #tpu.memory_space<vmem>>, vector<1x1x48x32xbf16>
      %23 = vector.shape_cast %22 : vector<1x1x48x32xbf16> to vector<48x32xbf16>
      %c0_11 = arith.constant 0 : index
      %c0_12 = arith.constant 0 : index
      %c0_13 = arith.constant 0 : index
      %24 = vector.load %arg2[%c0_11, %c0_12, %c0_13] : memref<1x32x128xbf16, #tpu.memory_space<vmem>>, vector<1x32x128xbf16>
      %25 = vector.shape_cast %24 : vector<1x32x128xbf16> to vector<32x128xbf16>
      %cst_14 = arith.constant dense<0.000000e+00> : vector<48x128xf32>
      %26 = tpu.matmul %23, %25, %cst_14 {dimension_numbers = #tpu.dot_dimension_numbers<[1], [0], [0], [1], [0, 0, 1, 1], [], []>} : vector<48x32xbf16>, vector<32x128xbf16>, vector<48x128xf32> -> vector<48x128xf32>
      %27 = arith.addf %19, %26 : vector<48x128xf32>
      %28 = vector.broadcast %0 : vector<1x128xf32> to vector<48x128xf32>
      %29 = arith.addf %27, %28 : vector<48x128xf32>
      %cst_15 = arith.constant 0.000000e+00 : f32
      %30 = vector.broadcast %cst_15 : f32 to vector<48x128xf32>
      %31 = arith.cmpf oge, %29, %30 : vector<48x128xf32>
      %cst_16 = arith.constant 2.000000e-01 : f32
      %32 = vector.broadcast %cst_16 : f32 to vector<48x128xf32>
      %33 = arith.mulf %32, %29 : vector<48x128xf32>
      %34 = arith.select %31, %29, %33 : vector<48x128xi1>, vector<48x128xf32>
      %35 = vector.broadcast %1 : vector<1x128xf32> to vector<48x128xf32>
      %36 = arith.mulf %34, %35 : vector<48x128xf32>
      %37 = vector.broadcast %2 : vector<1x128xf32> to vector<48x128xf32>
      %38 = arith.addf %36, %37 : vector<48x128xf32>
      %c2_i32_17 = arith.constant 2 : i32
      %39 = arith.muli %c2_i32_17, %arg5 : i32
      %c1_i32_18 = arith.constant 1 : i32
      %40 = arith.addi %39, %c1_i32_18 : i32
      %cst_19 = arith.constant 0.000000e+00 : f32
      %41 = vector.broadcast %cst_19 : f32 to vector<48x128xf32>
      %c0_i32_20 = arith.constant 0 : i32
      %42 = arith.addi %40, %c0_i32_20 : i32
      %c0_21 = arith.constant 0 : index
      %43 = arith.index_cast %42 : i32 to index
      %c0_22 = arith.constant 0 : index
      %c0_23 = arith.constant 0 : index
      %44 = vector.load %arg1[%c0_21, %43, %c0_22, %c0_23] : memref<1x48x48x32xbf16, #tpu.memory_space<vmem>>, vector<1x1x48x32xbf16>
      %45 = vector.shape_cast %44 : vector<1x1x48x32xbf16> to vector<48x32xbf16>
      %c0_24 = arith.constant 0 : index
      %c0_25 = arith.constant 0 : index
      %c0_26 = arith.constant 0 : index
      %46 = vector.load %arg2[%c0_24, %c0_25, %c0_26] : memref<1x32x128xbf16, #tpu.memory_space<vmem>>, vector<1x32x128xbf16>
      %47 = vector.shape_cast %46 : vector<1x32x128xbf16> to vector<32x128xbf16>
      %cst_27 = arith.constant dense<0.000000e+00> : vector<48x128xf32>
      %48 = tpu.matmul %45, %47, %cst_27 {dimension_numbers = #tpu.dot_dimension_numbers<[1], [0], [0], [1], [0, 0, 1, 1], [], []>} : vector<48x32xbf16>, vector<32x128xbf16>, vector<48x128xf32> -> vector<48x128xf32>
      %49 = arith.addf %41, %48 : vector<48x128xf32>
      %50 = vector.broadcast %0 : vector<1x128xf32> to vector<48x128xf32>
      %51 = arith.addf %49, %50 : vector<48x128xf32>
      %cst_28 = arith.constant 0.000000e+00 : f32
      %52 = vector.broadcast %cst_28 : f32 to vector<48x128xf32>
      %53 = arith.cmpf oge, %51, %52 : vector<48x128xf32>
      %cst_29 = arith.constant 2.000000e-01 : f32
      %54 = vector.broadcast %cst_29 : f32 to vector<48x128xf32>
      %55 = arith.mulf %54, %51 : vector<48x128xf32>
      %56 = arith.select %53, %51, %55 : vector<48x128xi1>, vector<48x128xf32>
      %57 = vector.broadcast %1 : vector<1x128xf32> to vector<48x128xf32>
      %58 = arith.mulf %56, %57 : vector<48x128xf32>
      %59 = vector.broadcast %2 : vector<1x128xf32> to vector<48x128xf32>
      %60 = arith.addf %58, %59 : vector<48x128xf32>
      %61 = arith.maximumf %38, %60 : vector<48x128xf32>
      %cst_30 = arith.constant dense<0.000000e+00> : vector<24x128xf32>
      %62 = tpu.matmul %9, %61, %cst_30 {dimension_numbers = #tpu.dot_dimension_numbers<[1], [0], [0], [1], [0, 0, 1, 1], [], []>} : vector<24x48xf32>, vector<48x128xf32>, vector<24x128xf32> -> vector<24x128xf32>
      %cst_31 = arith.constant dense<0.000000e+00> : vector<24x128xf32>
      %63 = tpu.matmul %16, %61, %cst_31 {dimension_numbers = #tpu.dot_dimension_numbers<[1], [0], [0], [1], [0, 0, 1, 1], [], []>} : vector<24x48xf32>, vector<48x128xf32>, vector<24x128xf32> -> vector<24x128xf32>
      %64 = arith.maximumf %62, %63 : vector<24x128xf32>
      %65 = arith.truncf %64 : vector<24x128xf32> to vector<24x128xbf16>
      %c0_32 = arith.constant 0 : index
      %66 = arith.index_cast %arg5 : i32 to index
      %c0_33 = arith.constant 0 : index
      %c0_34 = arith.constant 0 : index
      %67 = vector.load %arg4[%c0_32, %66, %c0_33, %c0_34] : memref<1x24x24x128xbf16, #tpu.memory_space<vmem>>, vector<1x1x24x128xbf16>
      %68 = vector.shape_cast %67 : vector<1x1x24x128xbf16> to vector<24x128xbf16>
      %69 = vector.shape_cast %65 : vector<24x128xbf16> to vector<1x1x24x128xbf16>
      tpu.vector_store %arg4[%c0_32, %66, %c0_33, %c0_34], %69 {strides = array<i32>} : memref<1x24x24x128xbf16, #tpu.memory_space<vmem>>, vector<1x1x24x128xbf16>,
    }
    %c24_i32_5 = arith.constant 24 : i32
    return
  }
  func.func @transform_0(%arg0: i32) -> (i32, i32, i32, i32) {
    %c0_i32 = arith.constant 0 : i32
    %c0_i32_0 = arith.constant 0 : i32
    %c0_i32_1 = arith.constant 0 : i32
    %c0_i32_2 = arith.constant 0 : i32
    return %arg0, %c0_i32, %c0_i32_0, %c0_i32_1 : i32, i32, i32, i32
  }
  func.func @transform_1(%arg0: i32) -> (i32, i32, i32) {
    %c0_i32 = arith.constant 0 : i32
    %c0_i32_0 = arith.constant 0 : i32
    %c0_i32_1 = arith.constant 0 : i32
    %c0_i32_2 = arith.constant 0 : i32
    return %c0_i32, %c0_i32_0, %c0_i32_1 : i32, i32, i32
  }
  func.func @transform_2(%arg0: i32) -> (i32, i32) {
    %c0_i32 = arith.constant 0 : i32
    %c0_i32_0 = arith.constant 0 : i32
    %c0_i32_1 = arith.constant 0 : i32
    return %c0_i32, %c0_i32_0 : i32, i32
  }
  func.func @transform_3(%arg0: i32) -> (i32, i32, i32, i32) {
    %c0_i32 = arith.constant 0 : i32
    %c0_i32_0 = arith.constant 0 : i32
    %c0_i32_1 = arith.constant 0 : i32
    %c0_i32_2 = arith.constant 0 : i32
    return %arg0, %c0_i32, %c0_i32_0, %c0_i32_1 : i32, i32, i32, i32
  }
}

module attributes {stable_mosaic.version = 11 : i64} {
  func.func @_conv_block_kernel(%arg0: i32, %arg1: memref<1x26x26x128xbf16, #tpu.memory_space<vmem>>, %arg2: memref<9x128x128xbf16, #tpu.memory_space<vmem>>, %arg3: memref<3x128xf32, #tpu.memory_space<vmem>>, %arg4: memref<1x12x12x128xbf16, #tpu.memory_space<vmem>>) attributes {dimension_semantics = [#tpu.dimension_semantics<parallel>], iteration_bounds = array<i64: 2>, scalar_prefetch = 0 : i64, scratch_operands = 0 : i64, tpu.core_type = #tpu.core_type<tc>, window_params = [{transform_indices = @transform_0, window_bounds = array<i64: 1, 26, 26, 128>}, {pipeline_mode = #tpu.pipeline_mode<synchronous>, transform_indices = @transform_1, window_bounds = array<i64: 9, 128, 128>}, {pipeline_mode = #tpu.pipeline_mode<synchronous>, transform_indices = @transform_2, window_bounds = array<i64: 3, 128>}, {transform_indices = @transform_3, window_bounds = array<i64: 1, 12, 12, 128>}]} {
    %c0 = arith.constant 0 : index
    %c0_0 = arith.constant 0 : index
    %0 = vector.load %arg3[%c0, %c0_0] : memref<3x128xf32, #tpu.memory_space<vmem>>, vector<1x128xf32>
    %c1 = arith.constant 1 : index
    %c0_1 = arith.constant 0 : index
    %1 = vector.load %arg3[%c1, %c0_1] : memref<3x128xf32, #tpu.memory_space<vmem>>, vector<1x128xf32>
    %c2 = arith.constant 2 : index
    %c0_2 = arith.constant 0 : index
    %2 = vector.load %arg3[%c2, %c0_2] : memref<3x128xf32, #tpu.memory_space<vmem>>, vector<1x128xf32>
    %3 = tpu.iota {dimensions = array<i32: 0>} : vector<12x24xi32>
    %4 = tpu.iota {dimensions = array<i32: 1>} : vector<12x24xi32>
    %c2_i32 = arith.constant 2 : i32
    %5 = vector.broadcast %c2_i32 : i32 to vector<12x24xi32>
    %6 = arith.muli %5, %3 : vector<12x24xi32>
    %7 = arith.cmpi eq, %4, %6 : vector<12x24xi32>
    %8 = arith.extui %7 : vector<12x24xi1> to vector<12x24xi32>
    %9 = arith.sitofp %8 : vector<12x24xi32> to vector<12x24xf32>
    %c2_i32_3 = arith.constant 2 : i32
    %10 = vector.broadcast %c2_i32_3 : i32 to vector<12x24xi32>
    %11 = arith.muli %10, %3 : vector<12x24xi32>
    %c1_i32 = arith.constant 1 : i32
    %12 = vector.broadcast %c1_i32 : i32 to vector<12x24xi32>
    %13 = arith.addi %11, %12 : vector<12x24xi32>
    %14 = arith.cmpi eq, %4, %13 : vector<12x24xi32>
    %15 = arith.extui %14 : vector<12x24xi1> to vector<12x24xi32>
    %16 = arith.sitofp %15 : vector<12x24xi32> to vector<12x24xf32>
    %c0_i32 = arith.constant 0 : i32
    %c12_i32 = arith.constant 12 : i32
    %17 = arith.addi %c0_i32, %c12_i32 : i32
    %c1_i32_4 = arith.constant 1 : i32
    scf.for %arg5 = %c0_i32 to %17 step %c1_i32_4  : i32 {
      %c2_i32_6 = arith.constant 2 : i32
      %18 = arith.muli %c2_i32_6, %arg5 : i32
      %cst = arith.constant 0.000000e+00 : f32
      %19 = vector.broadcast %cst : f32 to vector<24x128xf32>
      %c0_i32_7 = arith.constant 0 : i32
      %20 = arith.addi %18, %c0_i32_7 : i32
      %c0_8 = arith.constant 0 : index
      %21 = arith.index_cast %20 : i32 to index
      %c0_9 = arith.constant 0 : index
      %c0_10 = arith.constant 0 : index
      %22 = vector.load %arg1[%c0_8, %21, %c0_9, %c0_10] : memref<1x26x26x128xbf16, #tpu.memory_space<vmem>>, vector<1x1x26x128xbf16>
      %23 = vector.shape_cast %22 : vector<1x1x26x128xbf16> to vector<26x128xbf16>
      %24 = vector.extract_strided_slice %23 {offsets = [0, 0], sizes = [24, 128], strides = [1, 1]} : vector<26x128xbf16> to vector<24x128xbf16>
      %c0_11 = arith.constant 0 : index
      %c0_12 = arith.constant 0 : index
      %c0_13 = arith.constant 0 : index
      %25 = vector.load %arg2[%c0_11, %c0_12, %c0_13] : memref<9x128x128xbf16, #tpu.memory_space<vmem>>, vector<1x128x128xbf16>
      %26 = vector.shape_cast %25 : vector<1x128x128xbf16> to vector<128x128xbf16>
      %cst_14 = arith.constant dense<0.000000e+00> : vector<24x128xf32>
      %27 = tpu.matmul %24, %26, %cst_14 {dimension_numbers = #tpu.dot_dimension_numbers<[1], [0], [0], [1], [0, 0, 1, 1], [], []>} : vector<24x128xbf16>, vector<128x128xbf16>, vector<24x128xf32> -> vector<24x128xf32>
      %28 = arith.addf %19, %27 : vector<24x128xf32>
      %29 = vector.extract_strided_slice %23 {offsets = [1, 0], sizes = [24, 128], strides = [1, 1]} : vector<26x128xbf16> to vector<24x128xbf16>
      %c1_15 = arith.constant 1 : index
      %c0_16 = arith.constant 0 : index
      %c0_17 = arith.constant 0 : index
      %30 = vector.load %arg2[%c1_15, %c0_16, %c0_17] : memref<9x128x128xbf16, #tpu.memory_space<vmem>>, vector<1x128x128xbf16>
      %31 = vector.shape_cast %30 : vector<1x128x128xbf16> to vector<128x128xbf16>
      %cst_18 = arith.constant dense<0.000000e+00> : vector<24x128xf32>
      %32 = tpu.matmul %29, %31, %cst_18 {dimension_numbers = #tpu.dot_dimension_numbers<[1], [0], [0], [1], [0, 0, 1, 1], [], []>} : vector<24x128xbf16>, vector<128x128xbf16>, vector<24x128xf32> -> vector<24x128xf32>
      %33 = arith.addf %28, %32 : vector<24x128xf32>
      %34 = vector.extract_strided_slice %23 {offsets = [2, 0], sizes = [24, 128], strides = [1, 1]} : vector<26x128xbf16> to vector<24x128xbf16>
      %c2_19 = arith.constant 2 : index
      %c0_20 = arith.constant 0 : index
      %c0_21 = arith.constant 0 : index
      %35 = vector.load %arg2[%c2_19, %c0_20, %c0_21] : memref<9x128x128xbf16, #tpu.memory_space<vmem>>, vector<1x128x128xbf16>
      %36 = vector.shape_cast %35 : vector<1x128x128xbf16> to vector<128x128xbf16>
      %cst_22 = arith.constant dense<0.000000e+00> : vector<24x128xf32>
      %37 = tpu.matmul %34, %36, %cst_22 {dimension_numbers = #tpu.dot_dimension_numbers<[1], [0], [0], [1], [0, 0, 1, 1], [], []>} : vector<24x128xbf16>, vector<128x128xbf16>, vector<24x128xf32> -> vector<24x128xf32>
      %38 = arith.addf %33, %37 : vector<24x128xf32>
      %c1_i32_23 = arith.constant 1 : i32
      %39 = arith.addi %18, %c1_i32_23 : i32
      %c0_24 = arith.constant 0 : index
      %40 = arith.index_cast %39 : i32 to index
      %c0_25 = arith.constant 0 : index
      %c0_26 = arith.constant 0 : index
      %41 = vector.load %arg1[%c0_24, %40, %c0_25, %c0_26] : memref<1x26x26x128xbf16, #tpu.memory_space<vmem>>, vector<1x1x26x128xbf16>
      %42 = vector.shape_cast %41 : vector<1x1x26x128xbf16> to vector<26x128xbf16>
      %43 = vector.extract_strided_slice %42 {offsets = [0, 0], sizes = [24, 128], strides = [1, 1]} : vector<26x128xbf16> to vector<24x128xbf16>
      %c3 = arith.constant 3 : index
      %c0_27 = arith.constant 0 : index
      %c0_28 = arith.constant 0 : index
      %44 = vector.load %arg2[%c3, %c0_27, %c0_28] : memref<9x128x128xbf16, #tpu.memory_space<vmem>>, vector<1x128x128xbf16>
      %45 = vector.shape_cast %44 : vector<1x128x128xbf16> to vector<128x128xbf16>
      %cst_29 = arith.constant dense<0.000000e+00> : vector<24x128xf32>
      %46 = tpu.matmul %43, %45, %cst_29 {dimension_numbers = #tpu.dot_dimension_numbers<[1], [0], [0], [1], [0, 0, 1, 1], [], []>} : vector<24x128xbf16>, vector<128x128xbf16>, vector<24x128xf32> -> vector<24x128xf32>
      %47 = arith.addf %38, %46 : vector<24x128xf32>
      %48 = vector.extract_strided_slice %42 {offsets = [1, 0], sizes = [24, 128], strides = [1, 1]} : vector<26x128xbf16> to vector<24x128xbf16>
      %c4 = arith.constant 4 : index
      %c0_30 = arith.constant 0 : index
      %c0_31 = arith.constant 0 : index
      %49 = vector.load %arg2[%c4, %c0_30, %c0_31] : memref<9x128x128xbf16, #tpu.memory_space<vmem>>, vector<1x128x128xbf16>
      %50 = vector.shape_cast %49 : vector<1x128x128xbf16> to vector<128x128xbf16>
      %cst_32 = arith.constant dense<0.000000e+00> : vector<24x128xf32>
      %51 = tpu.matmul %48, %50, %cst_32 {dimension_numbers = #tpu.dot_dimension_numbers<[1], [0], [0], [1], [0, 0, 1, 1], [], []>} : vector<24x128xbf16>, vector<128x128xbf16>, vector<24x128xf32> -> vector<24x128xf32>
      %52 = arith.addf %47, %51 : vector<24x128xf32>
      %53 = vector.extract_strided_slice %42 {offsets = [2, 0], sizes = [24, 128], strides = [1, 1]} : vector<26x128xbf16> to vector<24x128xbf16>
      %c5 = arith.constant 5 : index
      %c0_33 = arith.constant 0 : index
      %c0_34 = arith.constant 0 : index
      %54 = vector.load %arg2[%c5, %c0_33, %c0_34] : memref<9x128x128xbf16, #tpu.memory_space<vmem>>, vector<1x128x128xbf16>
      %55 = vector.shape_cast %54 : vector<1x128x128xbf16> to vector<128x128xbf16>
      %cst_35 = arith.constant dense<0.000000e+00> : vector<24x128xf32>
      %56 = tpu.matmul %53, %55, %cst_35 {dimension_numbers = #tpu.dot_dimension_numbers<[1], [0], [0], [1], [0, 0, 1, 1], [], []>} : vector<24x128xbf16>, vector<128x128xbf16>, vector<24x128xf32> -> vector<24x128xf32>
      %57 = arith.addf %52, %56 : vector<24x128xf32>
      %c2_i32_36 = arith.constant 2 : i32
      %58 = arith.addi %18, %c2_i32_36 : i32
      %c0_37 = arith.constant 0 : index
      %59 = arith.index_cast %58 : i32 to index
      %c0_38 = arith.constant 0 : index
      %c0_39 = arith.constant 0 : index
      %60 = vector.load %arg1[%c0_37, %59, %c0_38, %c0_39] : memref<1x26x26x128xbf16, #tpu.memory_space<vmem>>, vector<1x1x26x128xbf16>
      %61 = vector.shape_cast %60 : vector<1x1x26x128xbf16> to vector<26x128xbf16>
      %62 = vector.extract_strided_slice %61 {offsets = [0, 0], sizes = [24, 128], strides = [1, 1]} : vector<26x128xbf16> to vector<24x128xbf16>
      %c6 = arith.constant 6 : index
      %c0_40 = arith.constant 0 : index
      %c0_41 = arith.constant 0 : index
      %63 = vector.load %arg2[%c6, %c0_40, %c0_41] : memref<9x128x128xbf16, #tpu.memory_space<vmem>>, vector<1x128x128xbf16>
      %64 = vector.shape_cast %63 : vector<1x128x128xbf16> to vector<128x128xbf16>
      %cst_42 = arith.constant dense<0.000000e+00> : vector<24x128xf32>
      %65 = tpu.matmul %62, %64, %cst_42 {dimension_numbers = #tpu.dot_dimension_numbers<[1], [0], [0], [1], [0, 0, 1, 1], [], []>} : vector<24x128xbf16>, vector<128x128xbf16>, vector<24x128xf32> -> vector<24x128xf32>
      %66 = arith.addf %57, %65 : vector<24x128xf32>
      %67 = vector.extract_strided_slice %61 {offsets = [1, 0], sizes = [24, 128], strides = [1, 1]} : vector<26x128xbf16> to vector<24x128xbf16>
      %c7 = arith.constant 7 : index
      %c0_43 = arith.constant 0 : index
      %c0_44 = arith.constant 0 : index
      %68 = vector.load %arg2[%c7, %c0_43, %c0_44] : memref<9x128x128xbf16, #tpu.memory_space<vmem>>, vector<1x128x128xbf16>
      %69 = vector.shape_cast %68 : vector<1x128x128xbf16> to vector<128x128xbf16>
      %cst_45 = arith.constant dense<0.000000e+00> : vector<24x128xf32>
      %70 = tpu.matmul %67, %69, %cst_45 {dimension_numbers = #tpu.dot_dimension_numbers<[1], [0], [0], [1], [0, 0, 1, 1], [], []>} : vector<24x128xbf16>, vector<128x128xbf16>, vector<24x128xf32> -> vector<24x128xf32>
      %71 = arith.addf %66, %70 : vector<24x128xf32>
      %72 = vector.extract_strided_slice %61 {offsets = [2, 0], sizes = [24, 128], strides = [1, 1]} : vector<26x128xbf16> to vector<24x128xbf16>
      %c8 = arith.constant 8 : index
      %c0_46 = arith.constant 0 : index
      %c0_47 = arith.constant 0 : index
      %73 = vector.load %arg2[%c8, %c0_46, %c0_47] : memref<9x128x128xbf16, #tpu.memory_space<vmem>>, vector<1x128x128xbf16>
      %74 = vector.shape_cast %73 : vector<1x128x128xbf16> to vector<128x128xbf16>
      %cst_48 = arith.constant dense<0.000000e+00> : vector<24x128xf32>
      %75 = tpu.matmul %72, %74, %cst_48 {dimension_numbers = #tpu.dot_dimension_numbers<[1], [0], [0], [1], [0, 0, 1, 1], [], []>} : vector<24x128xbf16>, vector<128x128xbf16>, vector<24x128xf32> -> vector<24x128xf32>
      %76 = arith.addf %71, %75 : vector<24x128xf32>
      %77 = vector.broadcast %0 : vector<1x128xf32> to vector<24x128xf32>
      %78 = arith.addf %76, %77 : vector<24x128xf32>
      %cst_49 = arith.constant 0.000000e+00 : f32
      %79 = vector.broadcast %cst_49 : f32 to vector<24x128xf32>
      %80 = arith.cmpf oge, %78, %79 : vector<24x128xf32>
      %cst_50 = arith.constant 2.000000e-01 : f32
      %81 = vector.broadcast %cst_50 : f32 to vector<24x128xf32>
      %82 = arith.mulf %81, %78 : vector<24x128xf32>
      %83 = arith.select %80, %78, %82 : vector<24x128xi1>, vector<24x128xf32>
      %84 = vector.broadcast %1 : vector<1x128xf32> to vector<24x128xf32>
      %85 = arith.mulf %83, %84 : vector<24x128xf32>
      %86 = vector.broadcast %2 : vector<1x128xf32> to vector<24x128xf32>
      %87 = arith.addf %85, %86 : vector<24x128xf32>
      %c2_i32_51 = arith.constant 2 : i32
      %88 = arith.muli %c2_i32_51, %arg5 : i32
      %c1_i32_52 = arith.constant 1 : i32
      %89 = arith.addi %88, %c1_i32_52 : i32
      %cst_53 = arith.constant 0.000000e+00 : f32
      %90 = vector.broadcast %cst_53 : f32 to vector<24x128xf32>
      %c0_i32_54 = arith.constant 0 : i32
      %91 = arith.addi %89, %c0_i32_54 : i32
      %c0_55 = arith.constant 0 : index
      %92 = arith.index_cast %91 : i32 to index
      %c0_56 = arith.constant 0 : index
      %c0_57 = arith.constant 0 : index
      %93 = vector.load %arg1[%c0_55, %92, %c0_56, %c0_57] : memref<1x26x26x128xbf16, #tpu.memory_space<vmem>>, vector<1x1x26x128xbf16>
      %94 = vector.shape_cast %93 : vector<1x1x26x128xbf16> to vector<26x128xbf16>
      %95 = vector.extract_strided_slice %94 {offsets = [0, 0], sizes = [24, 128], strides = [1, 1]} : vector<26x128xbf16> to vector<24x128xbf16>
      %c0_58 = arith.constant 0 : index
      %c0_59 = arith.constant 0 : index
      %c0_60 = arith.constant 0 : index
      %96 = vector.load %arg2[%c0_58, %c0_59, %c0_60] : memref<9x128x128xbf16, #tpu.memory_space<vmem>>, vector<1x128x128xbf16>
      %97 = vector.shape_cast %96 : vector<1x128x128xbf16> to vector<128x128xbf16>
      %cst_61 = arith.constant dense<0.000000e+00> : vector<24x128xf32>
      %98 = tpu.matmul %95, %97, %cst_61 {dimension_numbers = #tpu.dot_dimension_numbers<[1], [0], [0], [1], [0, 0, 1, 1], [], []>} : vector<24x128xbf16>, vector<128x128xbf16>, vector<24x128xf32> -> vector<24x128xf32>
      %99 = arith.addf %90, %98 : vector<24x128xf32>
      %100 = vector.extract_strided_slice %94 {offsets = [1, 0], sizes = [24, 128], strides = [1, 1]} : vector<26x128xbf16> to vector<24x128xbf16>
      %c1_62 = arith.constant 1 : index
      %c0_63 = arith.constant 0 : index
      %c0_64 = arith.constant 0 : index
      %101 = vector.load %arg2[%c1_62, %c0_63, %c0_64] : memref<9x128x128xbf16, #tpu.memory_space<vmem>>, vector<1x128x128xbf16>
      %102 = vector.shape_cast %101 : vector<1x128x128xbf16> to vector<128x128xbf16>
      %cst_65 = arith.constant dense<0.000000e+00> : vector<24x128xf32>
      %103 = tpu.matmul %100, %102, %cst_65 {dimension_numbers = #tpu.dot_dimension_numbers<[1], [0], [0], [1], [0, 0, 1, 1], [], []>} : vector<24x128xbf16>, vector<128x128xbf16>, vector<24x128xf32> -> vector<24x128xf32>
      %104 = arith.addf %99, %103 : vector<24x128xf32>
      %105 = vector.extract_strided_slice %94 {offsets = [2, 0], sizes = [24, 128], strides = [1, 1]} : vector<26x128xbf16> to vector<24x128xbf16>
      %c2_66 = arith.constant 2 : index
      %c0_67 = arith.constant 0 : index
      %c0_68 = arith.constant 0 : index
      %106 = vector.load %arg2[%c2_66, %c0_67, %c0_68] : memref<9x128x128xbf16, #tpu.memory_space<vmem>>, vector<1x128x128xbf16>
      %107 = vector.shape_cast %106 : vector<1x128x128xbf16> to vector<128x128xbf16>
      %cst_69 = arith.constant dense<0.000000e+00> : vector<24x128xf32>
      %108 = tpu.matmul %105, %107, %cst_69 {dimension_numbers = #tpu.dot_dimension_numbers<[1], [0], [0], [1], [0, 0, 1, 1], [], []>} : vector<24x128xbf16>, vector<128x128xbf16>, vector<24x128xf32> -> vector<24x128xf32>
      %109 = arith.addf %104, %108 : vector<24x128xf32>
      %c1_i32_70 = arith.constant 1 : i32
      %110 = arith.addi %89, %c1_i32_70 : i32
      %c0_71 = arith.constant 0 : index
      %111 = arith.index_cast %110 : i32 to index
      %c0_72 = arith.constant 0 : index
      %c0_73 = arith.constant 0 : index
      %112 = vector.load %arg1[%c0_71, %111, %c0_72, %c0_73] : memref<1x26x26x128xbf16, #tpu.memory_space<vmem>>, vector<1x1x26x128xbf16>
      %113 = vector.shape_cast %112 : vector<1x1x26x128xbf16> to vector<26x128xbf16>
      %114 = vector.extract_strided_slice %113 {offsets = [0, 0], sizes = [24, 128], strides = [1, 1]} : vector<26x128xbf16> to vector<24x128xbf16>
      %c3_74 = arith.constant 3 : index
      %c0_75 = arith.constant 0 : index
      %c0_76 = arith.constant 0 : index
      %115 = vector.load %arg2[%c3_74, %c0_75, %c0_76] : memref<9x128x128xbf16, #tpu.memory_space<vmem>>, vector<1x128x128xbf16>
      %116 = vector.shape_cast %115 : vector<1x128x128xbf16> to vector<128x128xbf16>
      %cst_77 = arith.constant dense<0.000000e+00> : vector<24x128xf32>
      %117 = tpu.matmul %114, %116, %cst_77 {dimension_numbers = #tpu.dot_dimension_numbers<[1], [0], [0], [1], [0, 0, 1, 1], [], []>} : vector<24x128xbf16>, vector<128x128xbf16>, vector<24x128xf32> -> vector<24x128xf32>
      %118 = arith.addf %109, %117 : vector<24x128xf32>
      %119 = vector.extract_strided_slice %113 {offsets = [1, 0], sizes = [24, 128], strides = [1, 1]} : vector<26x128xbf16> to vector<24x128xbf16>
      %c4_78 = arith.constant 4 : index
      %c0_79 = arith.constant 0 : index
      %c0_80 = arith.constant 0 : index
      %120 = vector.load %arg2[%c4_78, %c0_79, %c0_80] : memref<9x128x128xbf16, #tpu.memory_space<vmem>>, vector<1x128x128xbf16>
      %121 = vector.shape_cast %120 : vector<1x128x128xbf16> to vector<128x128xbf16>
      %cst_81 = arith.constant dense<0.000000e+00> : vector<24x128xf32>
      %122 = tpu.matmul %119, %121, %cst_81 {dimension_numbers = #tpu.dot_dimension_numbers<[1], [0], [0], [1], [0, 0, 1, 1], [], []>} : vector<24x128xbf16>, vector<128x128xbf16>, vector<24x128xf32> -> vector<24x128xf32>
      %123 = arith.addf %118, %122 : vector<24x128xf32>
      %124 = vector.extract_strided_slice %113 {offsets = [2, 0], sizes = [24, 128], strides = [1, 1]} : vector<26x128xbf16> to vector<24x128xbf16>
      %c5_82 = arith.constant 5 : index
      %c0_83 = arith.constant 0 : index
      %c0_84 = arith.constant 0 : index
      %125 = vector.load %arg2[%c5_82, %c0_83, %c0_84] : memref<9x128x128xbf16, #tpu.memory_space<vmem>>, vector<1x128x128xbf16>
      %126 = vector.shape_cast %125 : vector<1x128x128xbf16> to vector<128x128xbf16>
      %cst_85 = arith.constant dense<0.000000e+00> : vector<24x128xf32>
      %127 = tpu.matmul %124, %126, %cst_85 {dimension_numbers = #tpu.dot_dimension_numbers<[1], [0], [0], [1], [0, 0, 1, 1], [], []>} : vector<24x128xbf16>, vector<128x128xbf16>, vector<24x128xf32> -> vector<24x128xf32>
      %128 = arith.addf %123, %127 : vector<24x128xf32>
      %c2_i32_86 = arith.constant 2 : i32
      %129 = arith.addi %89, %c2_i32_86 : i32
      %c0_87 = arith.constant 0 : index
      %130 = arith.index_cast %129 : i32 to index
      %c0_88 = arith.constant 0 : index
      %c0_89 = arith.constant 0 : index
      %131 = vector.load %arg1[%c0_87, %130, %c0_88, %c0_89] : memref<1x26x26x128xbf16, #tpu.memory_space<vmem>>, vector<1x1x26x128xbf16>
      %132 = vector.shape_cast %131 : vector<1x1x26x128xbf16> to vector<26x128xbf16>
      %133 = vector.extract_strided_slice %132 {offsets = [0, 0], sizes = [24, 128], strides = [1, 1]} : vector<26x128xbf16> to vector<24x128xbf16>
      %c6_90 = arith.constant 6 : index
      %c0_91 = arith.constant 0 : index
      %c0_92 = arith.constant 0 : index
      %134 = vector.load %arg2[%c6_90, %c0_91, %c0_92] : memref<9x128x128xbf16, #tpu.memory_space<vmem>>, vector<1x128x128xbf16>
      %135 = vector.shape_cast %134 : vector<1x128x128xbf16> to vector<128x128xbf16>
      %cst_93 = arith.constant dense<0.000000e+00> : vector<24x128xf32>
      %136 = tpu.matmul %133, %135, %cst_93 {dimension_numbers = #tpu.dot_dimension_numbers<[1], [0], [0], [1], [0, 0, 1, 1], [], []>} : vector<24x128xbf16>, vector<128x128xbf16>, vector<24x128xf32> -> vector<24x128xf32>
      %137 = arith.addf %128, %136 : vector<24x128xf32>
      %138 = vector.extract_strided_slice %132 {offsets = [1, 0], sizes = [24, 128], strides = [1, 1]} : vector<26x128xbf16> to vector<24x128xbf16>
      %c7_94 = arith.constant 7 : index
      %c0_95 = arith.constant 0 : index
      %c0_96 = arith.constant 0 : index
      %139 = vector.load %arg2[%c7_94, %c0_95, %c0_96] : memref<9x128x128xbf16, #tpu.memory_space<vmem>>, vector<1x128x128xbf16>
      %140 = vector.shape_cast %139 : vector<1x128x128xbf16> to vector<128x128xbf16>
      %cst_97 = arith.constant dense<0.000000e+00> : vector<24x128xf32>
      %141 = tpu.matmul %138, %140, %cst_97 {dimension_numbers = #tpu.dot_dimension_numbers<[1], [0], [0], [1], [0, 0, 1, 1], [], []>} : vector<24x128xbf16>, vector<128x128xbf16>, vector<24x128xf32> -> vector<24x128xf32>
      %142 = arith.addf %137, %141 : vector<24x128xf32>
      %143 = vector.extract_strided_slice %132 {offsets = [2, 0], sizes = [24, 128], strides = [1, 1]} : vector<26x128xbf16> to vector<24x128xbf16>
      %c8_98 = arith.constant 8 : index
      %c0_99 = arith.constant 0 : index
      %c0_100 = arith.constant 0 : index
      %144 = vector.load %arg2[%c8_98, %c0_99, %c0_100] : memref<9x128x128xbf16, #tpu.memory_space<vmem>>, vector<1x128x128xbf16>
      %145 = vector.shape_cast %144 : vector<1x128x128xbf16> to vector<128x128xbf16>
      %cst_101 = arith.constant dense<0.000000e+00> : vector<24x128xf32>
      %146 = tpu.matmul %143, %145, %cst_101 {dimension_numbers = #tpu.dot_dimension_numbers<[1], [0], [0], [1], [0, 0, 1, 1], [], []>} : vector<24x128xbf16>, vector<128x128xbf16>, vector<24x128xf32> -> vector<24x128xf32>
      %147 = arith.addf %142, %146 : vector<24x128xf32>
      %148 = vector.broadcast %0 : vector<1x128xf32> to vector<24x128xf32>
      %149 = arith.addf %147, %148 : vector<24x128xf32>
      %cst_102 = arith.constant 0.000000e+00 : f32
      %150 = vector.broadcast %cst_102 : f32 to vector<24x128xf32>
      %151 = arith.cmpf oge, %149, %150 : vector<24x128xf32>
      %cst_103 = arith.constant 2.000000e-01 : f32
      %152 = vector.broadcast %cst_103 : f32 to vector<24x128xf32>
      %153 = arith.mulf %152, %149 : vector<24x128xf32>
      %154 = arith.select %151, %149, %153 : vector<24x128xi1>, vector<24x128xf32>
      %155 = vector.broadcast %1 : vector<1x128xf32> to vector<24x128xf32>
      %156 = arith.mulf %154, %155 : vector<24x128xf32>
      %157 = vector.broadcast %2 : vector<1x128xf32> to vector<24x128xf32>
      %158 = arith.addf %156, %157 : vector<24x128xf32>
      %159 = arith.maximumf %87, %158 : vector<24x128xf32>
      %cst_104 = arith.constant dense<0.000000e+00> : vector<12x128xf32>
      %160 = tpu.matmul %9, %159, %cst_104 {dimension_numbers = #tpu.dot_dimension_numbers<[1], [0], [0], [1], [0, 0, 1, 1], [], []>} : vector<12x24xf32>, vector<24x128xf32>, vector<12x128xf32> -> vector<12x128xf32>
      %cst_105 = arith.constant dense<0.000000e+00> : vector<12x128xf32>
      %161 = tpu.matmul %16, %159, %cst_105 {dimension_numbers = #tpu.dot_dimension_numbers<[1], [0], [0], [1], [0, 0, 1, 1], [], []>} : vector<12x24xf32>, vector<24x128xf32>, vector<12x128xf32> -> vector<12x128xf32>
      %162 = arith.maximumf %160, %161 : vector<12x128xf32>
      %163 = arith.truncf %162 : vector<12x128xf32> to vector<12x128xbf16>
      %c0_106 = arith.constant 0 : index
      %164 = arith.index_cast %arg5 : i32 to index
      %c0_107 = arith.constant 0 : index
      %c0_108 = arith.constant 0 : index
      %165 = vector.load %arg4[%c0_106, %164, %c0_107, %c0_108] : memref<1x12x12x128xbf16, #tpu.memory_space<vmem>>, vector<1x1x12x128xbf16>
      %166 = vector.shape_cast %165 : vector<1x1x12x128xbf16> to vector<12x128xbf16>
      %167 = vector.shape_cast %163 : vector<12x128xbf16> to vector<1x1x12x128xbf16>
      tpu.vector_store %arg4[%c0_106, %164, %c0_107, %c0_108], %167 {strides = array<i32>} : memref<1x12x12x128xbf16, #tpu.memory_space<vmem>>, vector<1x1x12x128xbf16>,
    }
    %c12_i32_5 = arith.constant 12 : i32
    return
  }
  func.func @transform_0(%arg0: i32) -> (i32, i32, i32, i32) {
    %c0_i32 = arith.constant 0 : i32
    %c0_i32_0 = arith.constant 0 : i32
    %c0_i32_1 = arith.constant 0 : i32
    %c0_i32_2 = arith.constant 0 : i32
    return %arg0, %c0_i32, %c0_i32_0, %c0_i32_1 : i32, i32, i32, i32
  }
  func.func @transform_1(%arg0: i32) -> (i32, i32, i32) {
    %c0_i32 = arith.constant 0 : i32
    %c0_i32_0 = arith.constant 0 : i32
    %c0_i32_1 = arith.constant 0 : i32
    %c0_i32_2 = arith.constant 0 : i32
    return %c0_i32, %c0_i32_0, %c0_i32_1 : i32, i32, i32
  }
  func.func @transform_2(%arg0: i32) -> (i32, i32) {
    %c0_i32 = arith.constant 0 : i32
    %c0_i32_0 = arith.constant 0 : i32
    %c0_i32_1 = arith.constant 0 : i32
    return %c0_i32, %c0_i32_0 : i32, i32
  }
  func.func @transform_3(%arg0: i32) -> (i32, i32, i32, i32) {
    %c0_i32 = arith.constant 0 : i32
    %c0_i32_0 = arith.constant 0 : i32
    %c0_i32_1 = arith.constant 0 : i32
    %c0_i32_2 = arith.constant 0 : i32
    return %arg0, %c0_i32, %c0_i32_0, %c0_i32_1 : i32, i32, i32, i32
  }
}

module attributes {stable_mosaic.version = 11 : i64} {
  func.func @_conv_block_kernel(%arg0: i32, %arg1: memref<1x14x14x128xbf16, #tpu.memory_space<vmem>>, %arg2: memref<9x128x128xbf16, #tpu.memory_space<vmem>>, %arg3: memref<3x128xf32, #tpu.memory_space<vmem>>, %arg4: memref<1x6x6x128xbf16, #tpu.memory_space<vmem>>) attributes {dimension_semantics = [#tpu.dimension_semantics<parallel>], iteration_bounds = array<i64: 2>, scalar_prefetch = 0 : i64, scratch_operands = 0 : i64, tpu.core_type = #tpu.core_type<tc>, window_params = [{transform_indices = @transform_0, window_bounds = array<i64: 1, 14, 14, 128>}, {pipeline_mode = #tpu.pipeline_mode<synchronous>, transform_indices = @transform_1, window_bounds = array<i64: 9, 128, 128>}, {pipeline_mode = #tpu.pipeline_mode<synchronous>, transform_indices = @transform_2, window_bounds = array<i64: 3, 128>}, {transform_indices = @transform_3, window_bounds = array<i64: 1, 6, 6, 128>}]} {
    %c0 = arith.constant 0 : index
    %c0_0 = arith.constant 0 : index
    %0 = vector.load %arg3[%c0, %c0_0] : memref<3x128xf32, #tpu.memory_space<vmem>>, vector<1x128xf32>
    %c1 = arith.constant 1 : index
    %c0_1 = arith.constant 0 : index
    %1 = vector.load %arg3[%c1, %c0_1] : memref<3x128xf32, #tpu.memory_space<vmem>>, vector<1x128xf32>
    %c2 = arith.constant 2 : index
    %c0_2 = arith.constant 0 : index
    %2 = vector.load %arg3[%c2, %c0_2] : memref<3x128xf32, #tpu.memory_space<vmem>>, vector<1x128xf32>
    %3 = tpu.iota {dimensions = array<i32: 0>} : vector<6x12xi32>
    %4 = tpu.iota {dimensions = array<i32: 1>} : vector<6x12xi32>
    %c2_i32 = arith.constant 2 : i32
    %5 = vector.broadcast %c2_i32 : i32 to vector<6x12xi32>
    %6 = arith.muli %5, %3 : vector<6x12xi32>
    %7 = arith.cmpi eq, %4, %6 : vector<6x12xi32>
    %8 = arith.extui %7 : vector<6x12xi1> to vector<6x12xi32>
    %9 = arith.sitofp %8 : vector<6x12xi32> to vector<6x12xf32>
    %c2_i32_3 = arith.constant 2 : i32
    %10 = vector.broadcast %c2_i32_3 : i32 to vector<6x12xi32>
    %11 = arith.muli %10, %3 : vector<6x12xi32>
    %c1_i32 = arith.constant 1 : i32
    %12 = vector.broadcast %c1_i32 : i32 to vector<6x12xi32>
    %13 = arith.addi %11, %12 : vector<6x12xi32>
    %14 = arith.cmpi eq, %4, %13 : vector<6x12xi32>
    %15 = arith.extui %14 : vector<6x12xi1> to vector<6x12xi32>
    %16 = arith.sitofp %15 : vector<6x12xi32> to vector<6x12xf32>
    %c0_i32 = arith.constant 0 : i32
    %c6_i32 = arith.constant 6 : i32
    %17 = arith.addi %c0_i32, %c6_i32 : i32
    %c1_i32_4 = arith.constant 1 : i32
    scf.for %arg5 = %c0_i32 to %17 step %c1_i32_4  : i32 {
      %c2_i32_6 = arith.constant 2 : i32
      %18 = arith.muli %c2_i32_6, %arg5 : i32
      %cst = arith.constant 0.000000e+00 : f32
      %19 = vector.broadcast %cst : f32 to vector<12x128xf32>
      %c0_i32_7 = arith.constant 0 : i32
      %20 = arith.addi %18, %c0_i32_7 : i32
      %c0_8 = arith.constant 0 : index
      %21 = arith.index_cast %20 : i32 to index
      %c0_9 = arith.constant 0 : index
      %c0_10 = arith.constant 0 : index
      %22 = vector.load %arg1[%c0_8, %21, %c0_9, %c0_10] : memref<1x14x14x128xbf16, #tpu.memory_space<vmem>>, vector<1x1x14x128xbf16>
      %23 = vector.shape_cast %22 : vector<1x1x14x128xbf16> to vector<14x128xbf16>
      %24 = vector.extract_strided_slice %23 {offsets = [0, 0], sizes = [12, 128], strides = [1, 1]} : vector<14x128xbf16> to vector<12x128xbf16>
      %c0_11 = arith.constant 0 : index
      %c0_12 = arith.constant 0 : index
      %c0_13 = arith.constant 0 : index
      %25 = vector.load %arg2[%c0_11, %c0_12, %c0_13] : memref<9x128x128xbf16, #tpu.memory_space<vmem>>, vector<1x128x128xbf16>
      %26 = vector.shape_cast %25 : vector<1x128x128xbf16> to vector<128x128xbf16>
      %cst_14 = arith.constant dense<0.000000e+00> : vector<12x128xf32>
      %27 = tpu.matmul %24, %26, %cst_14 {dimension_numbers = #tpu.dot_dimension_numbers<[1], [0], [0], [1], [0, 0, 1, 1], [], []>} : vector<12x128xbf16>, vector<128x128xbf16>, vector<12x128xf32> -> vector<12x128xf32>
      %28 = arith.addf %19, %27 : vector<12x128xf32>
      %29 = vector.extract_strided_slice %23 {offsets = [1, 0], sizes = [12, 128], strides = [1, 1]} : vector<14x128xbf16> to vector<12x128xbf16>
      %c1_15 = arith.constant 1 : index
      %c0_16 = arith.constant 0 : index
      %c0_17 = arith.constant 0 : index
      %30 = vector.load %arg2[%c1_15, %c0_16, %c0_17] : memref<9x128x128xbf16, #tpu.memory_space<vmem>>, vector<1x128x128xbf16>
      %31 = vector.shape_cast %30 : vector<1x128x128xbf16> to vector<128x128xbf16>
      %cst_18 = arith.constant dense<0.000000e+00> : vector<12x128xf32>
      %32 = tpu.matmul %29, %31, %cst_18 {dimension_numbers = #tpu.dot_dimension_numbers<[1], [0], [0], [1], [0, 0, 1, 1], [], []>} : vector<12x128xbf16>, vector<128x128xbf16>, vector<12x128xf32> -> vector<12x128xf32>
      %33 = arith.addf %28, %32 : vector<12x128xf32>
      %34 = vector.extract_strided_slice %23 {offsets = [2, 0], sizes = [12, 128], strides = [1, 1]} : vector<14x128xbf16> to vector<12x128xbf16>
      %c2_19 = arith.constant 2 : index
      %c0_20 = arith.constant 0 : index
      %c0_21 = arith.constant 0 : index
      %35 = vector.load %arg2[%c2_19, %c0_20, %c0_21] : memref<9x128x128xbf16, #tpu.memory_space<vmem>>, vector<1x128x128xbf16>
      %36 = vector.shape_cast %35 : vector<1x128x128xbf16> to vector<128x128xbf16>
      %cst_22 = arith.constant dense<0.000000e+00> : vector<12x128xf32>
      %37 = tpu.matmul %34, %36, %cst_22 {dimension_numbers = #tpu.dot_dimension_numbers<[1], [0], [0], [1], [0, 0, 1, 1], [], []>} : vector<12x128xbf16>, vector<128x128xbf16>, vector<12x128xf32> -> vector<12x128xf32>
      %38 = arith.addf %33, %37 : vector<12x128xf32>
      %c1_i32_23 = arith.constant 1 : i32
      %39 = arith.addi %18, %c1_i32_23 : i32
      %c0_24 = arith.constant 0 : index
      %40 = arith.index_cast %39 : i32 to index
      %c0_25 = arith.constant 0 : index
      %c0_26 = arith.constant 0 : index
      %41 = vector.load %arg1[%c0_24, %40, %c0_25, %c0_26] : memref<1x14x14x128xbf16, #tpu.memory_space<vmem>>, vector<1x1x14x128xbf16>
      %42 = vector.shape_cast %41 : vector<1x1x14x128xbf16> to vector<14x128xbf16>
      %43 = vector.extract_strided_slice %42 {offsets = [0, 0], sizes = [12, 128], strides = [1, 1]} : vector<14x128xbf16> to vector<12x128xbf16>
      %c3 = arith.constant 3 : index
      %c0_27 = arith.constant 0 : index
      %c0_28 = arith.constant 0 : index
      %44 = vector.load %arg2[%c3, %c0_27, %c0_28] : memref<9x128x128xbf16, #tpu.memory_space<vmem>>, vector<1x128x128xbf16>
      %45 = vector.shape_cast %44 : vector<1x128x128xbf16> to vector<128x128xbf16>
      %cst_29 = arith.constant dense<0.000000e+00> : vector<12x128xf32>
      %46 = tpu.matmul %43, %45, %cst_29 {dimension_numbers = #tpu.dot_dimension_numbers<[1], [0], [0], [1], [0, 0, 1, 1], [], []>} : vector<12x128xbf16>, vector<128x128xbf16>, vector<12x128xf32> -> vector<12x128xf32>
      %47 = arith.addf %38, %46 : vector<12x128xf32>
      %48 = vector.extract_strided_slice %42 {offsets = [1, 0], sizes = [12, 128], strides = [1, 1]} : vector<14x128xbf16> to vector<12x128xbf16>
      %c4 = arith.constant 4 : index
      %c0_30 = arith.constant 0 : index
      %c0_31 = arith.constant 0 : index
      %49 = vector.load %arg2[%c4, %c0_30, %c0_31] : memref<9x128x128xbf16, #tpu.memory_space<vmem>>, vector<1x128x128xbf16>
      %50 = vector.shape_cast %49 : vector<1x128x128xbf16> to vector<128x128xbf16>
      %cst_32 = arith.constant dense<0.000000e+00> : vector<12x128xf32>
      %51 = tpu.matmul %48, %50, %cst_32 {dimension_numbers = #tpu.dot_dimension_numbers<[1], [0], [0], [1], [0, 0, 1, 1], [], []>} : vector<12x128xbf16>, vector<128x128xbf16>, vector<12x128xf32> -> vector<12x128xf32>
      %52 = arith.addf %47, %51 : vector<12x128xf32>
      %53 = vector.extract_strided_slice %42 {offsets = [2, 0], sizes = [12, 128], strides = [1, 1]} : vector<14x128xbf16> to vector<12x128xbf16>
      %c5 = arith.constant 5 : index
      %c0_33 = arith.constant 0 : index
      %c0_34 = arith.constant 0 : index
      %54 = vector.load %arg2[%c5, %c0_33, %c0_34] : memref<9x128x128xbf16, #tpu.memory_space<vmem>>, vector<1x128x128xbf16>
      %55 = vector.shape_cast %54 : vector<1x128x128xbf16> to vector<128x128xbf16>
      %cst_35 = arith.constant dense<0.000000e+00> : vector<12x128xf32>
      %56 = tpu.matmul %53, %55, %cst_35 {dimension_numbers = #tpu.dot_dimension_numbers<[1], [0], [0], [1], [0, 0, 1, 1], [], []>} : vector<12x128xbf16>, vector<128x128xbf16>, vector<12x128xf32> -> vector<12x128xf32>
      %57 = arith.addf %52, %56 : vector<12x128xf32>
      %c2_i32_36 = arith.constant 2 : i32
      %58 = arith.addi %18, %c2_i32_36 : i32
      %c0_37 = arith.constant 0 : index
      %59 = arith.index_cast %58 : i32 to index
      %c0_38 = arith.constant 0 : index
      %c0_39 = arith.constant 0 : index
      %60 = vector.load %arg1[%c0_37, %59, %c0_38, %c0_39] : memref<1x14x14x128xbf16, #tpu.memory_space<vmem>>, vector<1x1x14x128xbf16>
      %61 = vector.shape_cast %60 : vector<1x1x14x128xbf16> to vector<14x128xbf16>
      %62 = vector.extract_strided_slice %61 {offsets = [0, 0], sizes = [12, 128], strides = [1, 1]} : vector<14x128xbf16> to vector<12x128xbf16>
      %c6 = arith.constant 6 : index
      %c0_40 = arith.constant 0 : index
      %c0_41 = arith.constant 0 : index
      %63 = vector.load %arg2[%c6, %c0_40, %c0_41] : memref<9x128x128xbf16, #tpu.memory_space<vmem>>, vector<1x128x128xbf16>
      %64 = vector.shape_cast %63 : vector<1x128x128xbf16> to vector<128x128xbf16>
      %cst_42 = arith.constant dense<0.000000e+00> : vector<12x128xf32>
      %65 = tpu.matmul %62, %64, %cst_42 {dimension_numbers = #tpu.dot_dimension_numbers<[1], [0], [0], [1], [0, 0, 1, 1], [], []>} : vector<12x128xbf16>, vector<128x128xbf16>, vector<12x128xf32> -> vector<12x128xf32>
      %66 = arith.addf %57, %65 : vector<12x128xf32>
      %67 = vector.extract_strided_slice %61 {offsets = [1, 0], sizes = [12, 128], strides = [1, 1]} : vector<14x128xbf16> to vector<12x128xbf16>
      %c7 = arith.constant 7 : index
      %c0_43 = arith.constant 0 : index
      %c0_44 = arith.constant 0 : index
      %68 = vector.load %arg2[%c7, %c0_43, %c0_44] : memref<9x128x128xbf16, #tpu.memory_space<vmem>>, vector<1x128x128xbf16>
      %69 = vector.shape_cast %68 : vector<1x128x128xbf16> to vector<128x128xbf16>
      %cst_45 = arith.constant dense<0.000000e+00> : vector<12x128xf32>
      %70 = tpu.matmul %67, %69, %cst_45 {dimension_numbers = #tpu.dot_dimension_numbers<[1], [0], [0], [1], [0, 0, 1, 1], [], []>} : vector<12x128xbf16>, vector<128x128xbf16>, vector<12x128xf32> -> vector<12x128xf32>
      %71 = arith.addf %66, %70 : vector<12x128xf32>
      %72 = vector.extract_strided_slice %61 {offsets = [2, 0], sizes = [12, 128], strides = [1, 1]} : vector<14x128xbf16> to vector<12x128xbf16>
      %c8 = arith.constant 8 : index
      %c0_46 = arith.constant 0 : index
      %c0_47 = arith.constant 0 : index
      %73 = vector.load %arg2[%c8, %c0_46, %c0_47] : memref<9x128x128xbf16, #tpu.memory_space<vmem>>, vector<1x128x128xbf16>
      %74 = vector.shape_cast %73 : vector<1x128x128xbf16> to vector<128x128xbf16>
      %cst_48 = arith.constant dense<0.000000e+00> : vector<12x128xf32>
      %75 = tpu.matmul %72, %74, %cst_48 {dimension_numbers = #tpu.dot_dimension_numbers<[1], [0], [0], [1], [0, 0, 1, 1], [], []>} : vector<12x128xbf16>, vector<128x128xbf16>, vector<12x128xf32> -> vector<12x128xf32>
      %76 = arith.addf %71, %75 : vector<12x128xf32>
      %77 = vector.broadcast %0 : vector<1x128xf32> to vector<12x128xf32>
      %78 = arith.addf %76, %77 : vector<12x128xf32>
      %cst_49 = arith.constant 0.000000e+00 : f32
      %79 = vector.broadcast %cst_49 : f32 to vector<12x128xf32>
      %80 = arith.cmpf oge, %78, %79 : vector<12x128xf32>
      %cst_50 = arith.constant 2.000000e-01 : f32
      %81 = vector.broadcast %cst_50 : f32 to vector<12x128xf32>
      %82 = arith.mulf %81, %78 : vector<12x128xf32>
      %83 = arith.select %80, %78, %82 : vector<12x128xi1>, vector<12x128xf32>
      %84 = vector.broadcast %1 : vector<1x128xf32> to vector<12x128xf32>
      %85 = arith.mulf %83, %84 : vector<12x128xf32>
      %86 = vector.broadcast %2 : vector<1x128xf32> to vector<12x128xf32>
      %87 = arith.addf %85, %86 : vector<12x128xf32>
      %c2_i32_51 = arith.constant 2 : i32
      %88 = arith.muli %c2_i32_51, %arg5 : i32
      %c1_i32_52 = arith.constant 1 : i32
      %89 = arith.addi %88, %c1_i32_52 : i32
      %cst_53 = arith.constant 0.000000e+00 : f32
      %90 = vector.broadcast %cst_53 : f32 to vector<12x128xf32>
      %c0_i32_54 = arith.constant 0 : i32
      %91 = arith.addi %89, %c0_i32_54 : i32
      %c0_55 = arith.constant 0 : index
      %92 = arith.index_cast %91 : i32 to index
      %c0_56 = arith.constant 0 : index
      %c0_57 = arith.constant 0 : index
      %93 = vector.load %arg1[%c0_55, %92, %c0_56, %c0_57] : memref<1x14x14x128xbf16, #tpu.memory_space<vmem>>, vector<1x1x14x128xbf16>
      %94 = vector.shape_cast %93 : vector<1x1x14x128xbf16> to vector<14x128xbf16>
      %95 = vector.extract_strided_slice %94 {offsets = [0, 0], sizes = [12, 128], strides = [1, 1]} : vector<14x128xbf16> to vector<12x128xbf16>
      %c0_58 = arith.constant 0 : index
      %c0_59 = arith.constant 0 : index
      %c0_60 = arith.constant 0 : index
      %96 = vector.load %arg2[%c0_58, %c0_59, %c0_60] : memref<9x128x128xbf16, #tpu.memory_space<vmem>>, vector<1x128x128xbf16>
      %97 = vector.shape_cast %96 : vector<1x128x128xbf16> to vector<128x128xbf16>
      %cst_61 = arith.constant dense<0.000000e+00> : vector<12x128xf32>
      %98 = tpu.matmul %95, %97, %cst_61 {dimension_numbers = #tpu.dot_dimension_numbers<[1], [0], [0], [1], [0, 0, 1, 1], [], []>} : vector<12x128xbf16>, vector<128x128xbf16>, vector<12x128xf32> -> vector<12x128xf32>
      %99 = arith.addf %90, %98 : vector<12x128xf32>
      %100 = vector.extract_strided_slice %94 {offsets = [1, 0], sizes = [12, 128], strides = [1, 1]} : vector<14x128xbf16> to vector<12x128xbf16>
      %c1_62 = arith.constant 1 : index
      %c0_63 = arith.constant 0 : index
      %c0_64 = arith.constant 0 : index
      %101 = vector.load %arg2[%c1_62, %c0_63, %c0_64] : memref<9x128x128xbf16, #tpu.memory_space<vmem>>, vector<1x128x128xbf16>
      %102 = vector.shape_cast %101 : vector<1x128x128xbf16> to vector<128x128xbf16>
      %cst_65 = arith.constant dense<0.000000e+00> : vector<12x128xf32>
      %103 = tpu.matmul %100, %102, %cst_65 {dimension_numbers = #tpu.dot_dimension_numbers<[1], [0], [0], [1], [0, 0, 1, 1], [], []>} : vector<12x128xbf16>, vector<128x128xbf16>, vector<12x128xf32> -> vector<12x128xf32>
      %104 = arith.addf %99, %103 : vector<12x128xf32>
      %105 = vector.extract_strided_slice %94 {offsets = [2, 0], sizes = [12, 128], strides = [1, 1]} : vector<14x128xbf16> to vector<12x128xbf16>
      %c2_66 = arith.constant 2 : index
      %c0_67 = arith.constant 0 : index
      %c0_68 = arith.constant 0 : index
      %106 = vector.load %arg2[%c2_66, %c0_67, %c0_68] : memref<9x128x128xbf16, #tpu.memory_space<vmem>>, vector<1x128x128xbf16>
      %107 = vector.shape_cast %106 : vector<1x128x128xbf16> to vector<128x128xbf16>
      %cst_69 = arith.constant dense<0.000000e+00> : vector<12x128xf32>
      %108 = tpu.matmul %105, %107, %cst_69 {dimension_numbers = #tpu.dot_dimension_numbers<[1], [0], [0], [1], [0, 0, 1, 1], [], []>} : vector<12x128xbf16>, vector<128x128xbf16>, vector<12x128xf32> -> vector<12x128xf32>
      %109 = arith.addf %104, %108 : vector<12x128xf32>
      %c1_i32_70 = arith.constant 1 : i32
      %110 = arith.addi %89, %c1_i32_70 : i32
      %c0_71 = arith.constant 0 : index
      %111 = arith.index_cast %110 : i32 to index
      %c0_72 = arith.constant 0 : index
      %c0_73 = arith.constant 0 : index
      %112 = vector.load %arg1[%c0_71, %111, %c0_72, %c0_73] : memref<1x14x14x128xbf16, #tpu.memory_space<vmem>>, vector<1x1x14x128xbf16>
      %113 = vector.shape_cast %112 : vector<1x1x14x128xbf16> to vector<14x128xbf16>
      %114 = vector.extract_strided_slice %113 {offsets = [0, 0], sizes = [12, 128], strides = [1, 1]} : vector<14x128xbf16> to vector<12x128xbf16>
      %c3_74 = arith.constant 3 : index
      %c0_75 = arith.constant 0 : index
      %c0_76 = arith.constant 0 : index
      %115 = vector.load %arg2[%c3_74, %c0_75, %c0_76] : memref<9x128x128xbf16, #tpu.memory_space<vmem>>, vector<1x128x128xbf16>
      %116 = vector.shape_cast %115 : vector<1x128x128xbf16> to vector<128x128xbf16>
      %cst_77 = arith.constant dense<0.000000e+00> : vector<12x128xf32>
      %117 = tpu.matmul %114, %116, %cst_77 {dimension_numbers = #tpu.dot_dimension_numbers<[1], [0], [0], [1], [0, 0, 1, 1], [], []>} : vector<12x128xbf16>, vector<128x128xbf16>, vector<12x128xf32> -> vector<12x128xf32>
      %118 = arith.addf %109, %117 : vector<12x128xf32>
      %119 = vector.extract_strided_slice %113 {offsets = [1, 0], sizes = [12, 128], strides = [1, 1]} : vector<14x128xbf16> to vector<12x128xbf16>
      %c4_78 = arith.constant 4 : index
      %c0_79 = arith.constant 0 : index
      %c0_80 = arith.constant 0 : index
      %120 = vector.load %arg2[%c4_78, %c0_79, %c0_80] : memref<9x128x128xbf16, #tpu.memory_space<vmem>>, vector<1x128x128xbf16>
      %121 = vector.shape_cast %120 : vector<1x128x128xbf16> to vector<128x128xbf16>
      %cst_81 = arith.constant dense<0.000000e+00> : vector<12x128xf32>
      %122 = tpu.matmul %119, %121, %cst_81 {dimension_numbers = #tpu.dot_dimension_numbers<[1], [0], [0], [1], [0, 0, 1, 1], [], []>} : vector<12x128xbf16>, vector<128x128xbf16>, vector<12x128xf32> -> vector<12x128xf32>
      %123 = arith.addf %118, %122 : vector<12x128xf32>
      %124 = vector.extract_strided_slice %113 {offsets = [2, 0], sizes = [12, 128], strides = [1, 1]} : vector<14x128xbf16> to vector<12x128xbf16>
      %c5_82 = arith.constant 5 : index
      %c0_83 = arith.constant 0 : index
      %c0_84 = arith.constant 0 : index
      %125 = vector.load %arg2[%c5_82, %c0_83, %c0_84] : memref<9x128x128xbf16, #tpu.memory_space<vmem>>, vector<1x128x128xbf16>
      %126 = vector.shape_cast %125 : vector<1x128x128xbf16> to vector<128x128xbf16>
      %cst_85 = arith.constant dense<0.000000e+00> : vector<12x128xf32>
      %127 = tpu.matmul %124, %126, %cst_85 {dimension_numbers = #tpu.dot_dimension_numbers<[1], [0], [0], [1], [0, 0, 1, 1], [], []>} : vector<12x128xbf16>, vector<128x128xbf16>, vector<12x128xf32> -> vector<12x128xf32>
      %128 = arith.addf %123, %127 : vector<12x128xf32>
      %c2_i32_86 = arith.constant 2 : i32
      %129 = arith.addi %89, %c2_i32_86 : i32
      %c0_87 = arith.constant 0 : index
      %130 = arith.index_cast %129 : i32 to index
      %c0_88 = arith.constant 0 : index
      %c0_89 = arith.constant 0 : index
      %131 = vector.load %arg1[%c0_87, %130, %c0_88, %c0_89] : memref<1x14x14x128xbf16, #tpu.memory_space<vmem>>, vector<1x1x14x128xbf16>
      %132 = vector.shape_cast %131 : vector<1x1x14x128xbf16> to vector<14x128xbf16>
      %133 = vector.extract_strided_slice %132 {offsets = [0, 0], sizes = [12, 128], strides = [1, 1]} : vector<14x128xbf16> to vector<12x128xbf16>
      %c6_90 = arith.constant 6 : index
      %c0_91 = arith.constant 0 : index
      %c0_92 = arith.constant 0 : index
      %134 = vector.load %arg2[%c6_90, %c0_91, %c0_92] : memref<9x128x128xbf16, #tpu.memory_space<vmem>>, vector<1x128x128xbf16>
      %135 = vector.shape_cast %134 : vector<1x128x128xbf16> to vector<128x128xbf16>
      %cst_93 = arith.constant dense<0.000000e+00> : vector<12x128xf32>
      %136 = tpu.matmul %133, %135, %cst_93 {dimension_numbers = #tpu.dot_dimension_numbers<[1], [0], [0], [1], [0, 0, 1, 1], [], []>} : vector<12x128xbf16>, vector<128x128xbf16>, vector<12x128xf32> -> vector<12x128xf32>
      %137 = arith.addf %128, %136 : vector<12x128xf32>
      %138 = vector.extract_strided_slice %132 {offsets = [1, 0], sizes = [12, 128], strides = [1, 1]} : vector<14x128xbf16> to vector<12x128xbf16>
      %c7_94 = arith.constant 7 : index
      %c0_95 = arith.constant 0 : index
      %c0_96 = arith.constant 0 : index
      %139 = vector.load %arg2[%c7_94, %c0_95, %c0_96] : memref<9x128x128xbf16, #tpu.memory_space<vmem>>, vector<1x128x128xbf16>
      %140 = vector.shape_cast %139 : vector<1x128x128xbf16> to vector<128x128xbf16>
      %cst_97 = arith.constant dense<0.000000e+00> : vector<12x128xf32>
      %141 = tpu.matmul %138, %140, %cst_97 {dimension_numbers = #tpu.dot_dimension_numbers<[1], [0], [0], [1], [0, 0, 1, 1], [], []>} : vector<12x128xbf16>, vector<128x128xbf16>, vector<12x128xf32> -> vector<12x128xf32>
      %142 = arith.addf %137, %141 : vector<12x128xf32>
      %143 = vector.extract_strided_slice %132 {offsets = [2, 0], sizes = [12, 128], strides = [1, 1]} : vector<14x128xbf16> to vector<12x128xbf16>
      %c8_98 = arith.constant 8 : index
      %c0_99 = arith.constant 0 : index
      %c0_100 = arith.constant 0 : index
      %144 = vector.load %arg2[%c8_98, %c0_99, %c0_100] : memref<9x128x128xbf16, #tpu.memory_space<vmem>>, vector<1x128x128xbf16>
      %145 = vector.shape_cast %144 : vector<1x128x128xbf16> to vector<128x128xbf16>
      %cst_101 = arith.constant dense<0.000000e+00> : vector<12x128xf32>
      %146 = tpu.matmul %143, %145, %cst_101 {dimension_numbers = #tpu.dot_dimension_numbers<[1], [0], [0], [1], [0, 0, 1, 1], [], []>} : vector<12x128xbf16>, vector<128x128xbf16>, vector<12x128xf32> -> vector<12x128xf32>
      %147 = arith.addf %142, %146 : vector<12x128xf32>
      %148 = vector.broadcast %0 : vector<1x128xf32> to vector<12x128xf32>
      %149 = arith.addf %147, %148 : vector<12x128xf32>
      %cst_102 = arith.constant 0.000000e+00 : f32
      %150 = vector.broadcast %cst_102 : f32 to vector<12x128xf32>
      %151 = arith.cmpf oge, %149, %150 : vector<12x128xf32>
      %cst_103 = arith.constant 2.000000e-01 : f32
      %152 = vector.broadcast %cst_103 : f32 to vector<12x128xf32>
      %153 = arith.mulf %152, %149 : vector<12x128xf32>
      %154 = arith.select %151, %149, %153 : vector<12x128xi1>, vector<12x128xf32>
      %155 = vector.broadcast %1 : vector<1x128xf32> to vector<12x128xf32>
      %156 = arith.mulf %154, %155 : vector<12x128xf32>
      %157 = vector.broadcast %2 : vector<1x128xf32> to vector<12x128xf32>
      %158 = arith.addf %156, %157 : vector<12x128xf32>
      %159 = arith.maximumf %87, %158 : vector<12x128xf32>
      %cst_104 = arith.constant dense<0.000000e+00> : vector<6x128xf32>
      %160 = tpu.matmul %9, %159, %cst_104 {dimension_numbers = #tpu.dot_dimension_numbers<[1], [0], [0], [1], [0, 0, 1, 1], [], []>} : vector<6x12xf32>, vector<12x128xf32>, vector<6x128xf32> -> vector<6x128xf32>
      %cst_105 = arith.constant dense<0.000000e+00> : vector<6x128xf32>
      %161 = tpu.matmul %16, %159, %cst_105 {dimension_numbers = #tpu.dot_dimension_numbers<[1], [0], [0], [1], [0, 0, 1, 1], [], []>} : vector<6x12xf32>, vector<12x128xf32>, vector<6x128xf32> -> vector<6x128xf32>
      %162 = arith.maximumf %160, %161 : vector<6x128xf32>
      %163 = arith.truncf %162 : vector<6x128xf32> to vector<6x128xbf16>
      %c0_106 = arith.constant 0 : index
      %164 = arith.index_cast %arg5 : i32 to index
      %c0_107 = arith.constant 0 : index
      %c0_108 = arith.constant 0 : index
      %165 = vector.load %arg4[%c0_106, %164, %c0_107, %c0_108] : memref<1x6x6x128xbf16, #tpu.memory_space<vmem>>, vector<1x1x6x128xbf16>
      %166 = vector.shape_cast %165 : vector<1x1x6x128xbf16> to vector<6x128xbf16>
      %167 = vector.shape_cast %163 : vector<6x128xbf16> to vector<1x1x6x128xbf16>
      tpu.vector_store %arg4[%c0_106, %164, %c0_107, %c0_108], %167 {strides = array<i32>} : memref<1x6x6x128xbf16, #tpu.memory_space<vmem>>, vector<1x1x6x128xbf16>,
    }
    %c6_i32_5 = arith.constant 6 : i32
    return
  }
  func.func @transform_0(%arg0: i32) -> (i32, i32, i32, i32) {
    %c0_i32 = arith.constant 0 : i32
    %c0_i32_0 = arith.constant 0 : i32
    %c0_i32_1 = arith.constant 0 : i32
    %c0_i32_2 = arith.constant 0 : i32
    return %arg0, %c0_i32, %c0_i32_0, %c0_i32_1 : i32, i32, i32, i32
  }
  func.func @transform_1(%arg0: i32) -> (i32, i32, i32) {
    %c0_i32 = arith.constant 0 : i32
    %c0_i32_0 = arith.constant 0 : i32
    %c0_i32_1 = arith.constant 0 : i32
    %c0_i32_2 = arith.constant 0 : i32
    return %c0_i32, %c0_i32_0, %c0_i32_1 : i32, i32, i32
  }
  func.func @transform_2(%arg0: i32) -> (i32, i32) {
    %c0_i32 = arith.constant 0 : i32
    %c0_i32_0 = arith.constant 0 : i32
    %c0_i32_1 = arith.constant 0 : i32
    return %c0_i32, %c0_i32_0 : i32, i32
  }
  func.func @transform_3(%arg0: i32) -> (i32, i32, i32, i32) {
    %c0_i32 = arith.constant 0 : i32
    %c0_i32_0 = arith.constant 0 : i32
    %c0_i32_1 = arith.constant 0 : i32
    %c0_i32_2 = arith.constant 0 : i32
    return %arg0, %c0_i32, %c0_i32_0, %c0_i32_1 : i32, i32, i32, i32
  }
}

module attributes {stable_mosaic.version = 11 : i64} {
  func.func @_conv_block_kernel(%arg0: i32, %arg1: memref<1x8x8x128xbf16, #tpu.memory_space<vmem>>, %arg2: memref<9x128x128xbf16, #tpu.memory_space<vmem>>, %arg3: memref<3x128xf32, #tpu.memory_space<vmem>>, %arg4: memref<1x3x3x128xbf16, #tpu.memory_space<vmem>>) attributes {dimension_semantics = [#tpu.dimension_semantics<parallel>], iteration_bounds = array<i64: 2>, scalar_prefetch = 0 : i64, scratch_operands = 0 : i64, tpu.core_type = #tpu.core_type<tc>, window_params = [{transform_indices = @transform_0, window_bounds = array<i64: 1, 8, 8, 128>}, {pipeline_mode = #tpu.pipeline_mode<synchronous>, transform_indices = @transform_1, window_bounds = array<i64: 9, 128, 128>}, {pipeline_mode = #tpu.pipeline_mode<synchronous>, transform_indices = @transform_2, window_bounds = array<i64: 3, 128>}, {transform_indices = @transform_3, window_bounds = array<i64: 1, 3, 3, 128>}]} {
    %c0 = arith.constant 0 : index
    %c0_0 = arith.constant 0 : index
    %0 = vector.load %arg3[%c0, %c0_0] : memref<3x128xf32, #tpu.memory_space<vmem>>, vector<1x128xf32>
    %c1 = arith.constant 1 : index
    %c0_1 = arith.constant 0 : index
    %1 = vector.load %arg3[%c1, %c0_1] : memref<3x128xf32, #tpu.memory_space<vmem>>, vector<1x128xf32>
    %c2 = arith.constant 2 : index
    %c0_2 = arith.constant 0 : index
    %2 = vector.load %arg3[%c2, %c0_2] : memref<3x128xf32, #tpu.memory_space<vmem>>, vector<1x128xf32>
    %3 = tpu.iota {dimensions = array<i32: 0>} : vector<3x6xi32>
    %4 = tpu.iota {dimensions = array<i32: 1>} : vector<3x6xi32>
    %c2_i32 = arith.constant 2 : i32
    %5 = vector.broadcast %c2_i32 : i32 to vector<3x6xi32>
    %6 = arith.muli %5, %3 : vector<3x6xi32>
    %7 = arith.cmpi eq, %4, %6 : vector<3x6xi32>
    %8 = arith.extui %7 : vector<3x6xi1> to vector<3x6xi32>
    %9 = arith.sitofp %8 : vector<3x6xi32> to vector<3x6xf32>
    %c2_i32_3 = arith.constant 2 : i32
    %10 = vector.broadcast %c2_i32_3 : i32 to vector<3x6xi32>
    %11 = arith.muli %10, %3 : vector<3x6xi32>
    %c1_i32 = arith.constant 1 : i32
    %12 = vector.broadcast %c1_i32 : i32 to vector<3x6xi32>
    %13 = arith.addi %11, %12 : vector<3x6xi32>
    %14 = arith.cmpi eq, %4, %13 : vector<3x6xi32>
    %15 = arith.extui %14 : vector<3x6xi1> to vector<3x6xi32>
    %16 = arith.sitofp %15 : vector<3x6xi32> to vector<3x6xf32>
    %c0_i32 = arith.constant 0 : i32
    %c3_i32 = arith.constant 3 : i32
    %17 = arith.addi %c0_i32, %c3_i32 : i32
    %c1_i32_4 = arith.constant 1 : i32
    scf.for %arg5 = %c0_i32 to %17 step %c1_i32_4  : i32 {
      %c2_i32_6 = arith.constant 2 : i32
      %18 = arith.muli %c2_i32_6, %arg5 : i32
      %cst = arith.constant 0.000000e+00 : f32
      %19 = vector.broadcast %cst : f32 to vector<6x128xf32>
      %c0_i32_7 = arith.constant 0 : i32
      %20 = arith.addi %18, %c0_i32_7 : i32
      %c0_8 = arith.constant 0 : index
      %21 = arith.index_cast %20 : i32 to index
      %c0_9 = arith.constant 0 : index
      %c0_10 = arith.constant 0 : index
      %22 = vector.load %arg1[%c0_8, %21, %c0_9, %c0_10] : memref<1x8x8x128xbf16, #tpu.memory_space<vmem>>, vector<1x1x8x128xbf16>
      %23 = vector.shape_cast %22 : vector<1x1x8x128xbf16> to vector<8x128xbf16>
      %24 = vector.extract_strided_slice %23 {offsets = [0, 0], sizes = [6, 128], strides = [1, 1]} : vector<8x128xbf16> to vector<6x128xbf16>
      %c0_11 = arith.constant 0 : index
      %c0_12 = arith.constant 0 : index
      %c0_13 = arith.constant 0 : index
      %25 = vector.load %arg2[%c0_11, %c0_12, %c0_13] : memref<9x128x128xbf16, #tpu.memory_space<vmem>>, vector<1x128x128xbf16>
      %26 = vector.shape_cast %25 : vector<1x128x128xbf16> to vector<128x128xbf16>
      %cst_14 = arith.constant dense<0.000000e+00> : vector<6x128xf32>
      %27 = tpu.matmul %24, %26, %cst_14 {dimension_numbers = #tpu.dot_dimension_numbers<[1], [0], [0], [1], [0, 0, 1, 1], [], []>} : vector<6x128xbf16>, vector<128x128xbf16>, vector<6x128xf32> -> vector<6x128xf32>
      %28 = arith.addf %19, %27 : vector<6x128xf32>
      %29 = vector.extract_strided_slice %23 {offsets = [1, 0], sizes = [6, 128], strides = [1, 1]} : vector<8x128xbf16> to vector<6x128xbf16>
      %c1_15 = arith.constant 1 : index
      %c0_16 = arith.constant 0 : index
      %c0_17 = arith.constant 0 : index
      %30 = vector.load %arg2[%c1_15, %c0_16, %c0_17] : memref<9x128x128xbf16, #tpu.memory_space<vmem>>, vector<1x128x128xbf16>
      %31 = vector.shape_cast %30 : vector<1x128x128xbf16> to vector<128x128xbf16>
      %cst_18 = arith.constant dense<0.000000e+00> : vector<6x128xf32>
      %32 = tpu.matmul %29, %31, %cst_18 {dimension_numbers = #tpu.dot_dimension_numbers<[1], [0], [0], [1], [0, 0, 1, 1], [], []>} : vector<6x128xbf16>, vector<128x128xbf16>, vector<6x128xf32> -> vector<6x128xf32>
      %33 = arith.addf %28, %32 : vector<6x128xf32>
      %34 = vector.extract_strided_slice %23 {offsets = [2, 0], sizes = [6, 128], strides = [1, 1]} : vector<8x128xbf16> to vector<6x128xbf16>
      %c2_19 = arith.constant 2 : index
      %c0_20 = arith.constant 0 : index
      %c0_21 = arith.constant 0 : index
      %35 = vector.load %arg2[%c2_19, %c0_20, %c0_21] : memref<9x128x128xbf16, #tpu.memory_space<vmem>>, vector<1x128x128xbf16>
      %36 = vector.shape_cast %35 : vector<1x128x128xbf16> to vector<128x128xbf16>
      %cst_22 = arith.constant dense<0.000000e+00> : vector<6x128xf32>
      %37 = tpu.matmul %34, %36, %cst_22 {dimension_numbers = #tpu.dot_dimension_numbers<[1], [0], [0], [1], [0, 0, 1, 1], [], []>} : vector<6x128xbf16>, vector<128x128xbf16>, vector<6x128xf32> -> vector<6x128xf32>
      %38 = arith.addf %33, %37 : vector<6x128xf32>
      %c1_i32_23 = arith.constant 1 : i32
      %39 = arith.addi %18, %c1_i32_23 : i32
      %c0_24 = arith.constant 0 : index
      %40 = arith.index_cast %39 : i32 to index
      %c0_25 = arith.constant 0 : index
      %c0_26 = arith.constant 0 : index
      %41 = vector.load %arg1[%c0_24, %40, %c0_25, %c0_26] : memref<1x8x8x128xbf16, #tpu.memory_space<vmem>>, vector<1x1x8x128xbf16>
      %42 = vector.shape_cast %41 : vector<1x1x8x128xbf16> to vector<8x128xbf16>
      %43 = vector.extract_strided_slice %42 {offsets = [0, 0], sizes = [6, 128], strides = [1, 1]} : vector<8x128xbf16> to vector<6x128xbf16>
      %c3 = arith.constant 3 : index
      %c0_27 = arith.constant 0 : index
      %c0_28 = arith.constant 0 : index
      %44 = vector.load %arg2[%c3, %c0_27, %c0_28] : memref<9x128x128xbf16, #tpu.memory_space<vmem>>, vector<1x128x128xbf16>
      %45 = vector.shape_cast %44 : vector<1x128x128xbf16> to vector<128x128xbf16>
      %cst_29 = arith.constant dense<0.000000e+00> : vector<6x128xf32>
      %46 = tpu.matmul %43, %45, %cst_29 {dimension_numbers = #tpu.dot_dimension_numbers<[1], [0], [0], [1], [0, 0, 1, 1], [], []>} : vector<6x128xbf16>, vector<128x128xbf16>, vector<6x128xf32> -> vector<6x128xf32>
      %47 = arith.addf %38, %46 : vector<6x128xf32>
      %48 = vector.extract_strided_slice %42 {offsets = [1, 0], sizes = [6, 128], strides = [1, 1]} : vector<8x128xbf16> to vector<6x128xbf16>
      %c4 = arith.constant 4 : index
      %c0_30 = arith.constant 0 : index
      %c0_31 = arith.constant 0 : index
      %49 = vector.load %arg2[%c4, %c0_30, %c0_31] : memref<9x128x128xbf16, #tpu.memory_space<vmem>>, vector<1x128x128xbf16>
      %50 = vector.shape_cast %49 : vector<1x128x128xbf16> to vector<128x128xbf16>
      %cst_32 = arith.constant dense<0.000000e+00> : vector<6x128xf32>
      %51 = tpu.matmul %48, %50, %cst_32 {dimension_numbers = #tpu.dot_dimension_numbers<[1], [0], [0], [1], [0, 0, 1, 1], [], []>} : vector<6x128xbf16>, vector<128x128xbf16>, vector<6x128xf32> -> vector<6x128xf32>
      %52 = arith.addf %47, %51 : vector<6x128xf32>
      %53 = vector.extract_strided_slice %42 {offsets = [2, 0], sizes = [6, 128], strides = [1, 1]} : vector<8x128xbf16> to vector<6x128xbf16>
      %c5 = arith.constant 5 : index
      %c0_33 = arith.constant 0 : index
      %c0_34 = arith.constant 0 : index
      %54 = vector.load %arg2[%c5, %c0_33, %c0_34] : memref<9x128x128xbf16, #tpu.memory_space<vmem>>, vector<1x128x128xbf16>
      %55 = vector.shape_cast %54 : vector<1x128x128xbf16> to vector<128x128xbf16>
      %cst_35 = arith.constant dense<0.000000e+00> : vector<6x128xf32>
      %56 = tpu.matmul %53, %55, %cst_35 {dimension_numbers = #tpu.dot_dimension_numbers<[1], [0], [0], [1], [0, 0, 1, 1], [], []>} : vector<6x128xbf16>, vector<128x128xbf16>, vector<6x128xf32> -> vector<6x128xf32>
      %57 = arith.addf %52, %56 : vector<6x128xf32>
      %c2_i32_36 = arith.constant 2 : i32
      %58 = arith.addi %18, %c2_i32_36 : i32
      %c0_37 = arith.constant 0 : index
      %59 = arith.index_cast %58 : i32 to index
      %c0_38 = arith.constant 0 : index
      %c0_39 = arith.constant 0 : index
      %60 = vector.load %arg1[%c0_37, %59, %c0_38, %c0_39] : memref<1x8x8x128xbf16, #tpu.memory_space<vmem>>, vector<1x1x8x128xbf16>
      %61 = vector.shape_cast %60 : vector<1x1x8x128xbf16> to vector<8x128xbf16>
      %62 = vector.extract_strided_slice %61 {offsets = [0, 0], sizes = [6, 128], strides = [1, 1]} : vector<8x128xbf16> to vector<6x128xbf16>
      %c6 = arith.constant 6 : index
      %c0_40 = arith.constant 0 : index
      %c0_41 = arith.constant 0 : index
      %63 = vector.load %arg2[%c6, %c0_40, %c0_41] : memref<9x128x128xbf16, #tpu.memory_space<vmem>>, vector<1x128x128xbf16>
      %64 = vector.shape_cast %63 : vector<1x128x128xbf16> to vector<128x128xbf16>
      %cst_42 = arith.constant dense<0.000000e+00> : vector<6x128xf32>
      %65 = tpu.matmul %62, %64, %cst_42 {dimension_numbers = #tpu.dot_dimension_numbers<[1], [0], [0], [1], [0, 0, 1, 1], [], []>} : vector<6x128xbf16>, vector<128x128xbf16>, vector<6x128xf32> -> vector<6x128xf32>
      %66 = arith.addf %57, %65 : vector<6x128xf32>
      %67 = vector.extract_strided_slice %61 {offsets = [1, 0], sizes = [6, 128], strides = [1, 1]} : vector<8x128xbf16> to vector<6x128xbf16>
      %c7 = arith.constant 7 : index
      %c0_43 = arith.constant 0 : index
      %c0_44 = arith.constant 0 : index
      %68 = vector.load %arg2[%c7, %c0_43, %c0_44] : memref<9x128x128xbf16, #tpu.memory_space<vmem>>, vector<1x128x128xbf16>
      %69 = vector.shape_cast %68 : vector<1x128x128xbf16> to vector<128x128xbf16>
      %cst_45 = arith.constant dense<0.000000e+00> : vector<6x128xf32>
      %70 = tpu.matmul %67, %69, %cst_45 {dimension_numbers = #tpu.dot_dimension_numbers<[1], [0], [0], [1], [0, 0, 1, 1], [], []>} : vector<6x128xbf16>, vector<128x128xbf16>, vector<6x128xf32> -> vector<6x128xf32>
      %71 = arith.addf %66, %70 : vector<6x128xf32>
      %72 = vector.extract_strided_slice %61 {offsets = [2, 0], sizes = [6, 128], strides = [1, 1]} : vector<8x128xbf16> to vector<6x128xbf16>
      %c8 = arith.constant 8 : index
      %c0_46 = arith.constant 0 : index
      %c0_47 = arith.constant 0 : index
      %73 = vector.load %arg2[%c8, %c0_46, %c0_47] : memref<9x128x128xbf16, #tpu.memory_space<vmem>>, vector<1x128x128xbf16>
      %74 = vector.shape_cast %73 : vector<1x128x128xbf16> to vector<128x128xbf16>
      %cst_48 = arith.constant dense<0.000000e+00> : vector<6x128xf32>
      %75 = tpu.matmul %72, %74, %cst_48 {dimension_numbers = #tpu.dot_dimension_numbers<[1], [0], [0], [1], [0, 0, 1, 1], [], []>} : vector<6x128xbf16>, vector<128x128xbf16>, vector<6x128xf32> -> vector<6x128xf32>
      %76 = arith.addf %71, %75 : vector<6x128xf32>
      %77 = vector.broadcast %0 : vector<1x128xf32> to vector<6x128xf32>
      %78 = arith.addf %76, %77 : vector<6x128xf32>
      %cst_49 = arith.constant 0.000000e+00 : f32
      %79 = vector.broadcast %cst_49 : f32 to vector<6x128xf32>
      %80 = arith.cmpf oge, %78, %79 : vector<6x128xf32>
      %cst_50 = arith.constant 2.000000e-01 : f32
      %81 = vector.broadcast %cst_50 : f32 to vector<6x128xf32>
      %82 = arith.mulf %81, %78 : vector<6x128xf32>
      %83 = arith.select %80, %78, %82 : vector<6x128xi1>, vector<6x128xf32>
      %84 = vector.broadcast %1 : vector<1x128xf32> to vector<6x128xf32>
      %85 = arith.mulf %83, %84 : vector<6x128xf32>
      %86 = vector.broadcast %2 : vector<1x128xf32> to vector<6x128xf32>
      %87 = arith.addf %85, %86 : vector<6x128xf32>
      %c2_i32_51 = arith.constant 2 : i32
      %88 = arith.muli %c2_i32_51, %arg5 : i32
      %c1_i32_52 = arith.constant 1 : i32
      %89 = arith.addi %88, %c1_i32_52 : i32
      %cst_53 = arith.constant 0.000000e+00 : f32
      %90 = vector.broadcast %cst_53 : f32 to vector<6x128xf32>
      %c0_i32_54 = arith.constant 0 : i32
      %91 = arith.addi %89, %c0_i32_54 : i32
      %c0_55 = arith.constant 0 : index
      %92 = arith.index_cast %91 : i32 to index
      %c0_56 = arith.constant 0 : index
      %c0_57 = arith.constant 0 : index
      %93 = vector.load %arg1[%c0_55, %92, %c0_56, %c0_57] : memref<1x8x8x128xbf16, #tpu.memory_space<vmem>>, vector<1x1x8x128xbf16>
      %94 = vector.shape_cast %93 : vector<1x1x8x128xbf16> to vector<8x128xbf16>
      %95 = vector.extract_strided_slice %94 {offsets = [0, 0], sizes = [6, 128], strides = [1, 1]} : vector<8x128xbf16> to vector<6x128xbf16>
      %c0_58 = arith.constant 0 : index
      %c0_59 = arith.constant 0 : index
      %c0_60 = arith.constant 0 : index
      %96 = vector.load %arg2[%c0_58, %c0_59, %c0_60] : memref<9x128x128xbf16, #tpu.memory_space<vmem>>, vector<1x128x128xbf16>
      %97 = vector.shape_cast %96 : vector<1x128x128xbf16> to vector<128x128xbf16>
      %cst_61 = arith.constant dense<0.000000e+00> : vector<6x128xf32>
      %98 = tpu.matmul %95, %97, %cst_61 {dimension_numbers = #tpu.dot_dimension_numbers<[1], [0], [0], [1], [0, 0, 1, 1], [], []>} : vector<6x128xbf16>, vector<128x128xbf16>, vector<6x128xf32> -> vector<6x128xf32>
      %99 = arith.addf %90, %98 : vector<6x128xf32>
      %100 = vector.extract_strided_slice %94 {offsets = [1, 0], sizes = [6, 128], strides = [1, 1]} : vector<8x128xbf16> to vector<6x128xbf16>
      %c1_62 = arith.constant 1 : index
      %c0_63 = arith.constant 0 : index
      %c0_64 = arith.constant 0 : index
      %101 = vector.load %arg2[%c1_62, %c0_63, %c0_64] : memref<9x128x128xbf16, #tpu.memory_space<vmem>>, vector<1x128x128xbf16>
      %102 = vector.shape_cast %101 : vector<1x128x128xbf16> to vector<128x128xbf16>
      %cst_65 = arith.constant dense<0.000000e+00> : vector<6x128xf32>
      %103 = tpu.matmul %100, %102, %cst_65 {dimension_numbers = #tpu.dot_dimension_numbers<[1], [0], [0], [1], [0, 0, 1, 1], [], []>} : vector<6x128xbf16>, vector<128x128xbf16>, vector<6x128xf32> -> vector<6x128xf32>
      %104 = arith.addf %99, %103 : vector<6x128xf32>
      %105 = vector.extract_strided_slice %94 {offsets = [2, 0], sizes = [6, 128], strides = [1, 1]} : vector<8x128xbf16> to vector<6x128xbf16>
      %c2_66 = arith.constant 2 : index
      %c0_67 = arith.constant 0 : index
      %c0_68 = arith.constant 0 : index
      %106 = vector.load %arg2[%c2_66, %c0_67, %c0_68] : memref<9x128x128xbf16, #tpu.memory_space<vmem>>, vector<1x128x128xbf16>
      %107 = vector.shape_cast %106 : vector<1x128x128xbf16> to vector<128x128xbf16>
      %cst_69 = arith.constant dense<0.000000e+00> : vector<6x128xf32>
      %108 = tpu.matmul %105, %107, %cst_69 {dimension_numbers = #tpu.dot_dimension_numbers<[1], [0], [0], [1], [0, 0, 1, 1], [], []>} : vector<6x128xbf16>, vector<128x128xbf16>, vector<6x128xf32> -> vector<6x128xf32>
      %109 = arith.addf %104, %108 : vector<6x128xf32>
      %c1_i32_70 = arith.constant 1 : i32
      %110 = arith.addi %89, %c1_i32_70 : i32
      %c0_71 = arith.constant 0 : index
      %111 = arith.index_cast %110 : i32 to index
      %c0_72 = arith.constant 0 : index
      %c0_73 = arith.constant 0 : index
      %112 = vector.load %arg1[%c0_71, %111, %c0_72, %c0_73] : memref<1x8x8x128xbf16, #tpu.memory_space<vmem>>, vector<1x1x8x128xbf16>
      %113 = vector.shape_cast %112 : vector<1x1x8x128xbf16> to vector<8x128xbf16>
      %114 = vector.extract_strided_slice %113 {offsets = [0, 0], sizes = [6, 128], strides = [1, 1]} : vector<8x128xbf16> to vector<6x128xbf16>
      %c3_74 = arith.constant 3 : index
      %c0_75 = arith.constant 0 : index
      %c0_76 = arith.constant 0 : index
      %115 = vector.load %arg2[%c3_74, %c0_75, %c0_76] : memref<9x128x128xbf16, #tpu.memory_space<vmem>>, vector<1x128x128xbf16>
      %116 = vector.shape_cast %115 : vector<1x128x128xbf16> to vector<128x128xbf16>
      %cst_77 = arith.constant dense<0.000000e+00> : vector<6x128xf32>
      %117 = tpu.matmul %114, %116, %cst_77 {dimension_numbers = #tpu.dot_dimension_numbers<[1], [0], [0], [1], [0, 0, 1, 1], [], []>} : vector<6x128xbf16>, vector<128x128xbf16>, vector<6x128xf32> -> vector<6x128xf32>
      %118 = arith.addf %109, %117 : vector<6x128xf32>
      %119 = vector.extract_strided_slice %113 {offsets = [1, 0], sizes = [6, 128], strides = [1, 1]} : vector<8x128xbf16> to vector<6x128xbf16>
      %c4_78 = arith.constant 4 : index
      %c0_79 = arith.constant 0 : index
      %c0_80 = arith.constant 0 : index
      %120 = vector.load %arg2[%c4_78, %c0_79, %c0_80] : memref<9x128x128xbf16, #tpu.memory_space<vmem>>, vector<1x128x128xbf16>
      %121 = vector.shape_cast %120 : vector<1x128x128xbf16> to vector<128x128xbf16>
      %cst_81 = arith.constant dense<0.000000e+00> : vector<6x128xf32>
      %122 = tpu.matmul %119, %121, %cst_81 {dimension_numbers = #tpu.dot_dimension_numbers<[1], [0], [0], [1], [0, 0, 1, 1], [], []>} : vector<6x128xbf16>, vector<128x128xbf16>, vector<6x128xf32> -> vector<6x128xf32>
      %123 = arith.addf %118, %122 : vector<6x128xf32>
      %124 = vector.extract_strided_slice %113 {offsets = [2, 0], sizes = [6, 128], strides = [1, 1]} : vector<8x128xbf16> to vector<6x128xbf16>
      %c5_82 = arith.constant 5 : index
      %c0_83 = arith.constant 0 : index
      %c0_84 = arith.constant 0 : index
      %125 = vector.load %arg2[%c5_82, %c0_83, %c0_84] : memref<9x128x128xbf16, #tpu.memory_space<vmem>>, vector<1x128x128xbf16>
      %126 = vector.shape_cast %125 : vector<1x128x128xbf16> to vector<128x128xbf16>
      %cst_85 = arith.constant dense<0.000000e+00> : vector<6x128xf32>
      %127 = tpu.matmul %124, %126, %cst_85 {dimension_numbers = #tpu.dot_dimension_numbers<[1], [0], [0], [1], [0, 0, 1, 1], [], []>} : vector<6x128xbf16>, vector<128x128xbf16>, vector<6x128xf32> -> vector<6x128xf32>
      %128 = arith.addf %123, %127 : vector<6x128xf32>
      %c2_i32_86 = arith.constant 2 : i32
      %129 = arith.addi %89, %c2_i32_86 : i32
      %c0_87 = arith.constant 0 : index
      %130 = arith.index_cast %129 : i32 to index
      %c0_88 = arith.constant 0 : index
      %c0_89 = arith.constant 0 : index
      %131 = vector.load %arg1[%c0_87, %130, %c0_88, %c0_89] : memref<1x8x8x128xbf16, #tpu.memory_space<vmem>>, vector<1x1x8x128xbf16>
      %132 = vector.shape_cast %131 : vector<1x1x8x128xbf16> to vector<8x128xbf16>
      %133 = vector.extract_strided_slice %132 {offsets = [0, 0], sizes = [6, 128], strides = [1, 1]} : vector<8x128xbf16> to vector<6x128xbf16>
      %c6_90 = arith.constant 6 : index
      %c0_91 = arith.constant 0 : index
      %c0_92 = arith.constant 0 : index
      %134 = vector.load %arg2[%c6_90, %c0_91, %c0_92] : memref<9x128x128xbf16, #tpu.memory_space<vmem>>, vector<1x128x128xbf16>
      %135 = vector.shape_cast %134 : vector<1x128x128xbf16> to vector<128x128xbf16>
      %cst_93 = arith.constant dense<0.000000e+00> : vector<6x128xf32>
      %136 = tpu.matmul %133, %135, %cst_93 {dimension_numbers = #tpu.dot_dimension_numbers<[1], [0], [0], [1], [0, 0, 1, 1], [], []>} : vector<6x128xbf16>, vector<128x128xbf16>, vector<6x128xf32> -> vector<6x128xf32>
      %137 = arith.addf %128, %136 : vector<6x128xf32>
      %138 = vector.extract_strided_slice %132 {offsets = [1, 0], sizes = [6, 128], strides = [1, 1]} : vector<8x128xbf16> to vector<6x128xbf16>
      %c7_94 = arith.constant 7 : index
      %c0_95 = arith.constant 0 : index
      %c0_96 = arith.constant 0 : index
      %139 = vector.load %arg2[%c7_94, %c0_95, %c0_96] : memref<9x128x128xbf16, #tpu.memory_space<vmem>>, vector<1x128x128xbf16>
      %140 = vector.shape_cast %139 : vector<1x128x128xbf16> to vector<128x128xbf16>
      %cst_97 = arith.constant dense<0.000000e+00> : vector<6x128xf32>
      %141 = tpu.matmul %138, %140, %cst_97 {dimension_numbers = #tpu.dot_dimension_numbers<[1], [0], [0], [1], [0, 0, 1, 1], [], []>} : vector<6x128xbf16>, vector<128x128xbf16>, vector<6x128xf32> -> vector<6x128xf32>
      %142 = arith.addf %137, %141 : vector<6x128xf32>
      %143 = vector.extract_strided_slice %132 {offsets = [2, 0], sizes = [6, 128], strides = [1, 1]} : vector<8x128xbf16> to vector<6x128xbf16>
      %c8_98 = arith.constant 8 : index
      %c0_99 = arith.constant 0 : index
      %c0_100 = arith.constant 0 : index
      %144 = vector.load %arg2[%c8_98, %c0_99, %c0_100] : memref<9x128x128xbf16, #tpu.memory_space<vmem>>, vector<1x128x128xbf16>
      %145 = vector.shape_cast %144 : vector<1x128x128xbf16> to vector<128x128xbf16>
      %cst_101 = arith.constant dense<0.000000e+00> : vector<6x128xf32>
      %146 = tpu.matmul %143, %145, %cst_101 {dimension_numbers = #tpu.dot_dimension_numbers<[1], [0], [0], [1], [0, 0, 1, 1], [], []>} : vector<6x128xbf16>, vector<128x128xbf16>, vector<6x128xf32> -> vector<6x128xf32>
      %147 = arith.addf %142, %146 : vector<6x128xf32>
      %148 = vector.broadcast %0 : vector<1x128xf32> to vector<6x128xf32>
      %149 = arith.addf %147, %148 : vector<6x128xf32>
      %cst_102 = arith.constant 0.000000e+00 : f32
      %150 = vector.broadcast %cst_102 : f32 to vector<6x128xf32>
      %151 = arith.cmpf oge, %149, %150 : vector<6x128xf32>
      %cst_103 = arith.constant 2.000000e-01 : f32
      %152 = vector.broadcast %cst_103 : f32 to vector<6x128xf32>
      %153 = arith.mulf %152, %149 : vector<6x128xf32>
      %154 = arith.select %151, %149, %153 : vector<6x128xi1>, vector<6x128xf32>
      %155 = vector.broadcast %1 : vector<1x128xf32> to vector<6x128xf32>
      %156 = arith.mulf %154, %155 : vector<6x128xf32>
      %157 = vector.broadcast %2 : vector<1x128xf32> to vector<6x128xf32>
      %158 = arith.addf %156, %157 : vector<6x128xf32>
      %159 = arith.maximumf %87, %158 : vector<6x128xf32>
      %cst_104 = arith.constant dense<0.000000e+00> : vector<3x128xf32>
      %160 = tpu.matmul %9, %159, %cst_104 {dimension_numbers = #tpu.dot_dimension_numbers<[1], [0], [0], [1], [0, 0, 1, 1], [], []>} : vector<3x6xf32>, vector<6x128xf32>, vector<3x128xf32> -> vector<3x128xf32>
      %cst_105 = arith.constant dense<0.000000e+00> : vector<3x128xf32>
      %161 = tpu.matmul %16, %159, %cst_105 {dimension_numbers = #tpu.dot_dimension_numbers<[1], [0], [0], [1], [0, 0, 1, 1], [], []>} : vector<3x6xf32>, vector<6x128xf32>, vector<3x128xf32> -> vector<3x128xf32>
      %162 = arith.maximumf %160, %161 : vector<3x128xf32>
      %163 = arith.truncf %162 : vector<3x128xf32> to vector<3x128xbf16>
      %c0_106 = arith.constant 0 : index
      %164 = arith.index_cast %arg5 : i32 to index
      %c0_107 = arith.constant 0 : index
      %c0_108 = arith.constant 0 : index
      %165 = vector.load %arg4[%c0_106, %164, %c0_107, %c0_108] : memref<1x3x3x128xbf16, #tpu.memory_space<vmem>>, vector<1x1x3x128xbf16>
      %166 = vector.shape_cast %165 : vector<1x1x3x128xbf16> to vector<3x128xbf16>
      %167 = vector.shape_cast %163 : vector<3x128xbf16> to vector<1x1x3x128xbf16>
      tpu.vector_store %arg4[%c0_106, %164, %c0_107, %c0_108], %167 {strides = array<i32>} : memref<1x3x3x128xbf16, #tpu.memory_space<vmem>>, vector<1x1x3x128xbf16>,
    }
    %c3_i32_5 = arith.constant 3 : i32
    return
  }
  func.func @transform_0(%arg0: i32) -> (i32, i32, i32, i32) {
    %c0_i32 = arith.constant 0 : i32
    %c0_i32_0 = arith.constant 0 : i32
    %c0_i32_1 = arith.constant 0 : i32
    %c0_i32_2 = arith.constant 0 : i32
    return %arg0, %c0_i32, %c0_i32_0, %c0_i32_1 : i32, i32, i32, i32
  }
  func.func @transform_1(%arg0: i32) -> (i32, i32, i32) {
    %c0_i32 = arith.constant 0 : i32
    %c0_i32_0 = arith.constant 0 : i32
    %c0_i32_1 = arith.constant 0 : i32
    %c0_i32_2 = arith.constant 0 : i32
    return %c0_i32, %c0_i32_0, %c0_i32_1 : i32, i32, i32
  }
  func.func @transform_2(%arg0: i32) -> (i32, i32) {
    %c0_i32 = arith.constant 0 : i32
    %c0_i32_0 = arith.constant 0 : i32
    %c0_i32_1 = arith.constant 0 : i32
    return %c0_i32, %c0_i32_0 : i32, i32
  }
  func.func @transform_3(%arg0: i32) -> (i32, i32, i32, i32) {
    %c0_i32 = arith.constant 0 : i32
    %c0_i32_0 = arith.constant 0 : i32
    %c0_i32_1 = arith.constant 0 : i32
    %c0_i32_2 = arith.constant 0 : i32
    return %arg0, %c0_i32, %c0_i32_0, %c0_i32_1 : i32, i32, i32, i32
  }
}

module attributes {stable_mosaic.version = 11 : i64} {
  func.func @_fc_kernel(%arg0: memref<2x1152xbf16, #tpu.memory_space<vmem>>, %arg1: memref<1152x512xbf16, #tpu.memory_space<vmem>>, %arg2: memref<1x512xf32, #tpu.memory_space<vmem>>, %arg3: memref<512x128xbf16, #tpu.memory_space<vmem>>, %arg4: memref<1x128xf32, #tpu.memory_space<vmem>>, %arg5: memref<2x128xf32, #tpu.memory_space<vmem>>) attributes {dimension_semantics = [], scalar_prefetch = 0 : i64, scratch_operands = 0 : i64, tpu.core_type = #tpu.core_type<tc>} {
    %c0 = arith.constant 0 : index
    %c0_0 = arith.constant 0 : index
    %0 = vector.load %arg0[%c0, %c0_0] : memref<2x1152xbf16, #tpu.memory_space<vmem>>, vector<2x1152xbf16>
    %c0_1 = arith.constant 0 : index
    %c0_2 = arith.constant 0 : index
    %1 = vector.load %arg1[%c0_1, %c0_2] : memref<1152x512xbf16, #tpu.memory_space<vmem>>, vector<1152x512xbf16>
    %cst = arith.constant dense<0.000000e+00> : vector<2x512xf32>
    %2 = tpu.matmul %0, %1, %cst {dimension_numbers = #tpu.dot_dimension_numbers<[1], [0], [0], [1], [0, 0, 1, 1], [], []>} : vector<2x1152xbf16>, vector<1152x512xbf16>, vector<2x512xf32> -> vector<2x512xf32>
    %c0_3 = arith.constant 0 : index
    %c0_4 = arith.constant 0 : index
    %3 = vector.load %arg2[%c0_3, %c0_4] : memref<1x512xf32, #tpu.memory_space<vmem>>, vector<1x512xf32>
    %4 = vector.broadcast %3 : vector<1x512xf32> to vector<2x512xf32>
    %5 = arith.addf %2, %4 : vector<2x512xf32>
    %cst_5 = arith.constant 0.000000e+00 : f32
    %6 = vector.broadcast %cst_5 : f32 to vector<2x512xf32>
    %7 = arith.cmpf oge, %5, %6 : vector<2x512xf32>
    %cst_6 = arith.constant 2.000000e-01 : f32
    %8 = vector.broadcast %cst_6 : f32 to vector<2x512xf32>
    %9 = arith.mulf %8, %5 : vector<2x512xf32>
    %10 = arith.select %7, %5, %9 : vector<2x512xi1>, vector<2x512xf32>
    %11 = arith.truncf %10 : vector<2x512xf32> to vector<2x512xbf16>
    %c0_7 = arith.constant 0 : index
    %c0_8 = arith.constant 0 : index
    %12 = vector.load %arg3[%c0_7, %c0_8] : memref<512x128xbf16, #tpu.memory_space<vmem>>, vector<512x128xbf16>
    %cst_9 = arith.constant dense<0.000000e+00> : vector<2x128xf32>
    %13 = tpu.matmul %11, %12, %cst_9 {dimension_numbers = #tpu.dot_dimension_numbers<[1], [0], [0], [1], [0, 0, 1, 1], [], []>} : vector<2x512xbf16>, vector<512x128xbf16>, vector<2x128xf32> -> vector<2x128xf32>
    %c0_10 = arith.constant 0 : index
    %c0_11 = arith.constant 0 : index
    %14 = vector.load %arg4[%c0_10, %c0_11] : memref<1x128xf32, #tpu.memory_space<vmem>>, vector<1x128xf32>
    %15 = vector.broadcast %14 : vector<1x128xf32> to vector<2x128xf32>
    %16 = arith.addf %13, %15 : vector<2x128xf32>
    %c0_12 = arith.constant 0 : index
    %c0_13 = arith.constant 0 : index
    %17 = vector.load %arg5[%c0_12, %c0_13] : memref<2x128xf32, #tpu.memory_space<vmem>>, vector<2x128xf32>
    tpu.vector_store %arg5[%c0_12, %c0_13], %16 {strides = array<i32>} : memref<2x128xf32, #tpu.memory_space<vmem>>, vector<2x128xf32>,
    return
  }
}

</mosaic_0001>

<llo_original>
// kernel: cnn_forward.5
$region0: #{cnn_forward.5}
  #allocation0 [shape = 'u32[]', space=smem, size = 0x4, offset = 0x4, fixed_abs, tag = 'smem constant byte address 0x4 - core index']
  #allocation1 [shape = 'u32[144,128]{1,0:T(1,128)}', space=vmem, size = 0x12000, scoped, tag = 'internal scratch']
  %s0 = inlined_call_operand.vmem [shape: bf16[2,48,48,32], index: 0, kind: input, shape index: {}]
  %s1 = inlined_call_operand.vmem [shape: bf16[1,32,128], index: 1, kind: input, shape index: {}]
  %s2 = inlined_call_operand.vmem [shape: f32[3,128], index: 2, kind: input, shape index: {}]
  %s3 = inlined_call_operand.vmem [shape: bf16[2,24,24,128], index: 3, kind: output, shape index: {}]
  %s4 = sld [smem:[#allocation0]]
  $region52: #{cnn_forward.5} parent=0
    _
  %s6 = ssub.s32 1, %s4
  %s7 = scalar_select 0, %s6, %s4
  loop: start=0, step=1, limit=4
  $region2: #{cnn_forward.5} parent=0 // loop_pre_header
    _
  $region3: #{cnn_forward.5} parent=0 // loop_header
    %s9 = sphi 0, %s13
    %p10 = scmp.ge.s32.totalorder %s9, 4
    %s19 = sphi 0, %s21
    %s22 = sphi 0, %s19
    %s23 = sphi 0, %s22
    %s39 = sphi 0, %s23
    %s43 = sphi 0, %s43
    %s45 = sphi 0, %s43
    %s46 = sphi 0, %s45
    %s60 = sphi 0, %s46
    %s64 = sphi 0, %s64
    %s66 = sphi 0, %s64
    %s67 = sphi 0, %s66
    %s81 = sphi 0, %s67
    %s87 = sphi 0, %s89
    %s90 = sphi 0, %s87
    %s91 = sphi 0, %s90
    %s107 = sphi 0, %s91
  $region4: #{cnn_forward.5} parent=0 // loop_header_branch
    %12 = sbr.rel (%p10) target = $region8
  $region5: #{cnn_forward.5} parent=0 // loop_body
    %s14 = ssub.s32 %s9, 1
    %s15 = ssub.s32 %s9, 2
    %s16 = sadd.s32 %s9, 1
    %s17 = ssub.s32 %s9, %s16
    %p18 = scmp.eq.s32.totalorder %s17, 0
    %s20 = sadd.s32 %s19, 1
    %s21 = scalar_select %p18, %s19, %s20
    %p24 = pneg %p18
    %p25 = scmp.eq.s32.totalorder %s9, 1
    %p26 = por %p24, %p25
    %p27 = scmp.ne.s32.totalorder %s19, %s22
    %p28 = scmp.eq.s32.totalorder %s9, 0
    %p29 = por %p27, %p28
    %p30 = scmp.ne.s32.totalorder %s19, %s22
    %p31 = scmp.eq.s32.totalorder %s14, 1
    %p32 = por %p30, %p31
    %p33 = scmp.ne.s32.totalorder %s22, %s23
    %p34 = scmp.eq.s32.totalorder %s14, 0
    %p35 = por %p33, %p34
    %p36 = scmp.ne.s32.totalorder %s22, %s23
    %p37 = scmp.eq.s32.totalorder %s15, 1
    %p38 = por %p36, %p37
    %p40 = scmp.ne.s32.totalorder %s23, %s39
    %p41 = scmp.eq.s32.totalorder %s15, 0
    %p42 = por %p40, %p41
    %s44 = sadd.s32 %s43, 1
    %p47 = scmp.eq.s32.totalorder %s9, 1
    %p48 = scmp.ne.s32.totalorder %s43, %s45
    %p49 = scmp.eq.s32.totalorder %s9, 0
    %p50 = por %p48, %p49
    %p51 = scmp.ne.s32.totalorder %s43, %s45
    %p52 = scmp.eq.s32.totalorder %s14, 1
    %p53 = por %p51, %p52
    %p54 = scmp.ne.s32.totalorder %s45, %s46
    %p55 = scmp.eq.s32.totalorder %s14, 0
    %p56 = por %p54, %p55
    %p57 = scmp.ne.s32.totalorder %s45, %s46
    %p58 = scmp.eq.s32.totalorder %s15, 1
    %p59 = por %p57, %p58
    %p61 = scmp.ne.s32.totalorder %s46, %s60
    %p62 = scmp.eq.s32.totalorder %s15, 0
    %p63 = por %p61, %p62
    %s65 = sadd.s32 %s64, 1
    %p68 = scmp.eq.s32.totalorder %s9, 1
    %p69 = scmp.ne.s32.totalorder %s64, %s66
    %p70 = scmp.eq.s32.totalorder %s9, 0
    %p71 = por %p69, %p70
    %p72 = scmp.ne.s32.totalorder %s64, %s66
    %p73 = scmp.eq.s32.totalorder %s14, 1
    %p74 = por %p72, %p73
    %p75 = scmp.ne.s32.totalorder %s66, %s67
    %p76 = scmp.eq.s32.totalorder %s14, 0
    %p77 = por %p75, %p76
    %p78 = scmp.ne.s32.totalorder %s66, %s67
    %p79 = scmp.eq.s32.totalorder %s15, 1
    %p80 = por %p78, %p79
    %p82 = scmp.ne.s32.totalorder %s67, %s81
    %p83 = scmp.eq.s32.totalorder %s15, 0
    %p84 = por %p82, %p83
    %s85 = ssub.s32 %s9, %s16
    %p86 = scmp.eq.s32.totalorder %s85, 0
    %s88 = sadd.s32 %s87, 1
    %s89 = scalar_select %p86, %s87, %s88
    %p92 = pneg %p86
    %p93 = scmp.eq.s32.totalorder %s9, 1
    %p94 = por %p92, %p93
    %p95 = scmp.ne.s32.totalorder %s87, %s90
    %p96 = scmp.eq.s32.totalorder %s9, 0
    %p97 = por %p95, %p96
    %p98 = scmp.ne.s32.totalorder %s87, %s90
    %p99 = scmp.eq.s32.totalorder %s14, 1
    %p100 = por %p98, %p99
    %p101 = scmp.ne.s32.totalorder %s90, %s91
    %p102 = scmp.eq.s32.totalorder %s14, 0
    %p103 = por %p101, %p102
    %p104 = scmp.ne.s32.totalorder %s90, %s91
    %p105 = scmp.eq.s32.totalorder %s15, 1
    %p106 = por %p104, %p105
    %p108 = scmp.ne.s32.totalorder %s91, %s107
    %p109 = scmp.eq.s32.totalorder %s15, 0
    %p110 = por %p108, %p109
    %p111 = scmp.le.s32.totalorder 1, %s9
    %p112 = scmp.lt.s32.totalorder %s9, 3
    %p113 = pnand %p111, %p112
    %p114 = pneg %p113
    // Predicated region
    $region9: #{cnn_forward.5} parent=5 // pred_check
      _
    $region10: #{cnn_forward.5} parent=5 // pred_check_branch
      %116 = sbr.rel (%p113) target = $region12
    $region11: #{cnn_forward.5} parent=5 // pred_region
      %s117 = ssub.s32 %s9, 1
      // Predicated region
      $region13: #{cnn_forward.5} parent=11 // pred_check
        %p118 = pneg %p56
      $region14: #{cnn_forward.5} parent=11 // pred_check_branch
        %120 = sbr.rel (%p118) target = $region16
      $region15: #{cnn_forward.5} parent=11 // pred_region
        _
      $region16: #{cnn_forward.5} parent=11 // pred_fallthru
        _
      // Predicated region
      $region17: #{cnn_forward.5} parent=11 // pred_check
        %p121 = pneg %p77
      $region18: #{cnn_forward.5} parent=11 // pred_check_branch
        %123 = sbr.rel (%p121) target = $region20
      $region19: #{cnn_forward.5} parent=11 // pred_region
        _
      $region20: #{cnn_forward.5} parent=11 // pred_fallthru
        _
    $region12: #{cnn_forward.5} parent=5 // pred_fallthru
      _
    %p124 = scmp.lt.s32.totalorder %s9, 2
    // Predicated region
    $region21: #{cnn_forward.5} parent=5 // pred_check
      %p125 = pneg %p124
    $region22: #{cnn_forward.5} parent=5 // pred_check_branch
      %127 = sbr.rel (%p125) target = $region24
    $region23: #{cnn_forward.5} parent=5 // pred_region
      // Predicated region
      $region25: #{cnn_forward.5} parent=23 // pred_check
        %p128 = pneg %p29
      $region26: #{cnn_forward.5} parent=23 // pred_check_branch
        %130 = sbr.rel (%p128) target = $region28
      $region27: #{cnn_forward.5} parent=23 // pred_region
        %p131 = scmp.lt.s32.totalorder %s9, 1
        %s132 = scalar_select %p131, %s9, 1
        %s133 = smul.addr %s132, 288
        %s134 = smul.addr %s133, 4
        %s135 = scalar_lea.vmem %s0, %s134
      $region28: #{cnn_forward.5} parent=23 // pred_fallthru
        _
    $region24: #{cnn_forward.5} parent=5 // pred_fallthru
      _
    %p136 = scmp.le.s32.totalorder 1, %s9
    %p137 = scmp.lt.s32.totalorder %s9, 3
    %p138 = pnand %p136, %p137
    %p139 = pneg %p138
    // Predicated region
    $region29: #{cnn_forward.5} parent=5 // pred_check
      _
    $region30: #{cnn_forward.5} parent=5 // pred_check_branch
      %141 = sbr.rel (%p138) target = $region32
    $region31: #{cnn_forward.5} parent=5 // pred_region
      %s142 = ssub.s32 %s9, 1
      %p143 = scmp.lt.s32.totalorder %s14, 1
      %s144 = scalar_select %p143, %s14, 1
      %s145 = smul.addr %s144, 288
      %s146 = smul.addr %s145, 4
      %s147 = scalar_lea.vmem %s0, %s146
      %p148 = pneg %p35
      %p149 = pneg %p32
      %p150 = pneg %p56
      %p151 = pneg %p53
      %p152 = pneg %p77
      %p153 = pneg %p74
      %p154 = pneg %p103
      %p155 = pneg %p100
      %p156 = scmp.lt.s32.totalorder %s14, 1
      %s157 = scalar_select %p156, %s14, 1
      %s158 = smul.addr %s157, 72
      %s159 = smul.addr %s158, 4
      %s160 = scalar_lea.vmem %s3, %s159
      %p161 = scmp.lt.s32.totalorder %s14, 1
      %s162 = scalar_select %p161, %s14, 1
      %s163 = smul.addr %s162, 288
      %s164 = smul.addr %s163, 4
      %s165 = scalar_lea.vmem %s0, %s164
      %p166 = scmp.lt.s32.totalorder %s14, 1
      %s167 = scalar_select %p166, %s14, 1
      %s168 = smul.addr %s167, 72
      %s169 = smul.addr %s168, 4
      %s170 = scalar_lea.vmem %s3, %s169
      %v172 = vld [vmem:[%s2] sm:$0x1]
      %v173 = vld [vmem:[%s2 + $0x1] sm:$0x1]
      %v174 = vld [vmem:[%s2 + $0x2] sm:$0x1]
      %v175 = vlaneseq
      %v176 = vshrl.u32 %v175, 7
      %v177 = vadd.s32 %v176, 8
      %v178 = vadd.s32 %v176, 16
      %v179 = vlaneseq
      %v180 = vand.u32 %v179, 127
      %v181 = vmul.u32 %v176, 2
      %v182 = vmul.u32 %v177, 2
      %v183 = vmul.u32 %v178, 2
      %vm184 = vcmp.eq.s32.totalorder %v180, %v181
      %vm185 = vcmp.eq.s32.totalorder %v180, %v182
      %vm186 = vcmp.eq.s32.totalorder %v180, %v183
      %v187 = vsel %vm184, 1, 0
      %v188 = vsel %vm185, 1, 0
      %v189 = vsel %vm186, 1, 0
      %v190 = vcvt.s32.f32 %v187
      %v191 = vcvt.s32.f32 %v188
      %v192 = vcvt.s32.f32 %v189
      %v193 = vadd.s32 %v181, 1
      %v194 = vadd.s32 %v182, 1
      %v195 = vadd.s32 %v183, 1
      %vm196 = vcmp.eq.s32.totalorder %v180, %v193
      %vm197 = vcmp.eq.s32.totalorder %v180, %v194
      %vm198 = vcmp.eq.s32.totalorder %v180, %v195
      %v199 = vsel %vm196, 1, 0
      %v200 = vsel %vm197, 1, 0
      %v201 = vsel %vm198, 1, 0
      %v202 = vcvt.s32.f32 %v199
      %v203 = vcvt.s32.f32 %v200
      %v204 = vcvt.s32.f32 %v201
      loop: start=0, step=1, limit=24
      $region33: #{cnn_forward.5} parent=31 // loop_pre_header
        _
      $region34: #{cnn_forward.5} parent=31 // loop_header
        %s206 = sphi 0, %s210
        %p207 = scmp.ge.s32.totalorder %s206, 24
      $region35: #{cnn_forward.5} parent=31 // loop_header_branch
        %209 = sbr.rel (%p207) target = $region39
      $region36: #{cnn_forward.5} parent=31 // loop_body
        %s211 = smul.u32 %s206, 2
        %s212 = smul.u32 %s211, 6
        %s213 = smul.addr %s212, 4
        %s214 = scalar_lea.vmem %s165, %s213
        %v215 = vld [vmem:[%s214] sm:$0xf]
        %v216 = vld [vmem:[%s214 + $0x4] sm:$0xf]
        %v217 = vld [vmem:[%s214 + $0x8] sm:$0xf]
        %v218 = vld [vmem:[%s214 + $0xc] sm:$0xf]
        %v219 = vld [vmem:[%s214 + $0x10] sm:$0xf]
        %v220 = vld [vmem:[%s214 + $0x14] sm:$0xf]
        %v221 = vld [vmem:[%s1] sm:$0xf]
        %v222 = vld [vmem:[%s1 + $0x4] sm:$0xf]
        %v223 = vld [vmem:[%s1 + $0x8] sm:$0xf]
        %v224 = vld [vmem:[%s1 + $0xc] sm:$0xf]
        %v225 = vlaneseq
        %v226 = vshrl.u32 %v225, 7
        %v227 = vsub.s32 0, %v226
        %v228 = vrot.slane %v172, %v227
        %v235 = vunpack.c.l.b16 %v215
        %v236 = vunpack.c.l.b16 %v216
        %v237 = vunpack.c.l.b16 %v217
        %v238 = vunpack.c.l.b16 %v218
        %v239 = vunpack.c.l.b16 %v219
        %v240 = vunpack.c.l.b16 %v220
        %v241 = vpack.c.b16 %v236, %v235
        %v242 = vpack.c.b16 %v238, %v237
        %v243 = vpack.c.b16 %v240, %v239
        %v248 = vunpack.c.l.b16 %v221
        %v249 = vunpack.c.l.b16 %v222
        %v250 = vunpack.c.l.b16 %v223
        %v251 = vunpack.c.l.b16 %v224
        %v252 = vpack.c.b16 %v249, %v248
        %v253 = vpack.c.b16 %v251, %v250
        %vm256 = vcmask 261120
        %v258 = vsel %vm256, %v241, 0
        %v261 = vsel %vm256, %v242, 0
        %v264 = vsel %vm256, %v243, 0
        %266 = vmatprep.subr.bf16.mxu0 0
        %267 = vmatpush1.bf16.msra.mxu0 %v252
        %268 = vmatprep.subr.bf16.mxu0 0
        %269 = vmatpush1.bf16.msra.mxu0 %v253
        %270 = vmatprep.subr.bf16.mxu0 0
        %271 = vmatpush1.bf16.msra.mxu0 0
        %272 = vmatprep.subr.bf16.mxu0 0
        %273 = vmatpush1.bf16.msra.mxu0 0
        %274 = vmatprep.subr.bf16.mxu0 0
        %275 = vmatpush1.bf16.msra.mxu0 0
        %276 = vmatprep.subr.bf16.mxu0 0
        %277 = vmatpush1.bf16.msra.mxu0 0
        %278 = vmatprep.subr.bf16.mxu0 0
        %279 = vmatpush1.bf16.msra.mxu0 0
        %280 = vmatprep.subr.bf16.mxu0 0
        %281 = vmatpush1.bf16.msra.mxu0 0
        %282 = vmatprep.subr.bf16.mxu0 0
        %283 = vmatpush1.bf16.msra.mxu0 0
        %284 = vmatprep.subr.bf16.mxu0 0
        %285 = vmatpush1.bf16.msra.mxu0 0
        %286 = vmatprep.subr.bf16.mxu0 0
        %287 = vmatpush1.bf16.msra.mxu0 0
        %288 = vmatprep.subr.bf16.mxu0 0
        %289 = vmatpush1.bf16.msra.mxu0 0
        %290 = vmatprep.subr.bf16.mxu0 0
        %291 = vmatpush1.bf16.msra.mxu0 0
        %292 = vmatprep.subr.bf16.mxu0 0
        %293 = vmatpush1.bf16.msra.mxu0 0
        %294 = vmatprep.subr.bf16.mxu0 0
        %295 = vmatpush1.bf16.msra.mxu0 0
        %296 = vmatprep.subr.bf16.mxu0 0
        %297 = vmatpush1.bf16.msra.mxu0 0
        %298 = vmatprep.mubr.bf16.mxu0 0
        %299 = vmatmul.mubr.bf16.gmra.mrb[0].mxu0 %v258
        %v300 = vpop.f32.mrb[0].mxu0
        %v301 = vadd.f32 %v228, %v300
        %v302 = vpop.f32.mrb[0].mxu0
        %v303 = vpop.f32.mrb[0].mxu0
        %v304 = vadd.f32 %v228, %v303
        %v305 = vpop.f32.mrb[0].mxu0
        %306 = vmatprep.mubr.bf16.mxu0 0
        %307 = vmatmul.mubr.bf16.gmra.mrb[0].mxu0 %v261
        %v308 = vpop.f32.mrb[0].mxu0
        %v309 = vadd.f32 %v228, %v308
        %v310 = vpop.f32.mrb[0].mxu0
        %v311 = vpop.f32.mrb[0].mxu0
        %v312 = vadd.f32 %v228, %v311
        %v313 = vpop.f32.mrb[0].mxu0
        %314 = vmatprep.mubr.bf16.mxu0 0
        %315 = vmatmul.mubr.bf16.gmra.mrb[0].mxu0 %v264
        %v316 = vpop.f32.mrb[0].mxu0
        %v317 = vadd.f32 %v228, %v316
        %v318 = vpop.f32.mrb[0].mxu0
        %v319 = vpop.f32.mrb[0].mxu0
        %v320 = vadd.f32 %v228, %v319
        %v321 = vpop.f32.mrb[0].mxu0
        %322 = vdwg.mxu0
        %vm323 = vcmp.ge.f32.partialorder %v301, 0.0
        %vm324 = vcmp.ge.f32.partialorder %v304, 0.0
        %vm325 = vcmp.ge.f32.partialorder %v309, 0.0
        %vm326 = vcmp.ge.f32.partialorder %v312, 0.0
        %vm327 = vcmp.ge.f32.partialorder %v317, 0.0
        %vm328 = vcmp.ge.f32.partialorder %v320, 0.0
        %v329 = vmul.f32 %v301, 0.2
        %v330 = vmul.f32 %v304, 0.2
        %v331 = vmul.f32 %v309, 0.2
        %v332 = vmul.f32 %v312, 0.2
        %v333 = vmul.f32 %v317, 0.2
        %v334 = vmul.f32 %v320, 0.2
        %v335 = vsel %vm323, %v301, %v329
        %v336 = vsel %vm324, %v304, %v330
        %v337 = vsel %vm325, %v309, %v331
        %v338 = vsel %vm326, %v312, %v332
        %v339 = vsel %vm327, %v317, %v333
        %v340 = vsel %vm328, %v320, %v334
        %v341 = vlaneseq
        %v342 = vshrl.u32 %v341, 7
        %v343 = vsub.s32 0, %v342
        %v344 = vrot.slane %v173, %v343
        %v345 = vmul.f32 %v335, %v344
        %v346 = vmul.f32 %v336, %v344
        %v347 = vmul.f32 %v337, %v344
        %v348 = vmul.f32 %v338, %v344
        %v349 = vmul.f32 %v339, %v344
        %v350 = vmul.f32 %v340, %v344
        %v351 = vlaneseq
        %v352 = vshrl.u32 %v351, 7
        %v353 = vsub.s32 0, %v352
        %v354 = vrot.slane %v174, %v353
        %v355 = vadd.f32 %v345, %v354
        %v356 = vadd.f32 %v346, %v354
        %v357 = vadd.f32 %v347, %v354
        %v358 = vadd.f32 %v348, %v354
        %v359 = vadd.f32 %v349, %v354
        %v360 = vadd.f32 %v350, %v354
        %s361 = sadd.s32 %s211, 1
        %s362 = smul.u32 %s361, 6
        %s363 = smul.addr %s362, 4
        %s364 = scalar_lea.vmem %s165, %s363
        %v365 = vld [vmem:[%s364] sm:$0xf]
        %v366 = vld [vmem:[%s364 + $0x4] sm:$0xf]
        %v367 = vld [vmem:[%s364 + $0x8] sm:$0xf]
        %v368 = vld [vmem:[%s364 + $0xc] sm:$0xf]
        %v369 = vld [vmem:[%s364 + $0x10] sm:$0xf]
        %v370 = vld [vmem:[%s364 + $0x14] sm:$0xf]
        %v377 = vunpack.c.l.b16 %v365
        %v378 = vunpack.c.l.b16 %v366
        %v379 = vunpack.c.l.b16 %v367
        %v380 = vunpack.c.l.b16 %v368
        %v381 = vunpack.c.l.b16 %v369
        %v382 = vunpack.c.l.b16 %v370
        %v383 = vpack.c.b16 %v378, %v377
        %v384 = vpack.c.b16 %v380, %v379
        %v385 = vpack.c.b16 %v382, %v381
        %v387 = vsel %vm256, %v383, 0
        %v390 = vsel %vm256, %v384, 0
        %v393 = vsel %vm256, %v385, 0
        %395 = vmatprep.subr.bf16.mxu0 0
        %396 = vmatpush1.bf16.msra.mxu0 %v252
        %397 = vmatprep.subr.bf16.mxu0 0
        %398 = vmatpush1.bf16.msra.mxu0 %v253
        %399 = vmatprep.subr.bf16.mxu0 0
        %400 = vmatpush1.bf16.msra.mxu0 0
        %401 = vmatprep.subr.bf16.mxu0 0
        %402 = vmatpush1.bf16.msra.mxu0 0
        %403 = vmatprep.subr.bf16.mxu0 0
        %404 = vmatpush1.bf16.msra.mxu0 0
        %405 = vmatprep.subr.bf16.mxu0 0
        %406 = vmatpush1.bf16.msra.mxu0 0
        %407 = vmatprep.subr.bf16.mxu0 0
        %408 = vmatpush1.bf16.msra.mxu0 0
        %409 = vmatprep.subr.bf16.mxu0 0
        %410 = vmatpush1.bf16.msra.mxu0 0
        %411 = vmatprep.subr.bf16.mxu0 0
        %412 = vmatpush1.bf16.msra.mxu0 0
        %413 = vmatprep.subr.bf16.mxu0 0
        %414 = vmatpush1.bf16.msra.mxu0 0
        %415 = vmatprep.subr.bf16.mxu0 0
        %416 = vmatpush1.bf16.msra.mxu0 0
        %417 = vmatprep.subr.bf16.mxu0 0
        %418 = vmatpush1.bf16.msra.mxu0 0
        %419 = vmatprep.subr.bf16.mxu0 0
        %420 = vmatpush1.bf16.msra.mxu0 0
        %421 = vmatprep.subr.bf16.mxu0 0
        %422 = vmatpush1.bf16.msra.mxu0 0
        %423 = vmatprep.subr.bf16.mxu0 0
        %424 = vmatpush1.bf16.msra.mxu0 0
        %425 = vmatprep.subr.bf16.mxu0 0
        %426 = vmatpush1.bf16.msra.mxu0 0
        %427 = vmatprep.mubr.bf16.mxu0 0
        %428 = vmatmul.mubr.bf16.gmra.mrb[0].mxu0 %v387
        %v429 = vpop.f32.mrb[0].mxu0
        %v430 = vadd.f32 %v228, %v429
        %v431 = vpop.f32.mrb[0].mxu0
        %v432 = vpop.f32.mrb[0].mxu0
        %v433 = vadd.f32 %v228, %v432
        %v434 = vpop.f32.mrb[0].mxu0
        %435 = vmatprep.mubr.bf16.mxu0 0
        %436 = vmatmul.mubr.bf16.gmra.mrb[0].mxu0 %v390
        %v437 = vpop.f32.mrb[0].mxu0
        %v438 = vadd.f32 %v228, %v437
        %v439 = vpop.f32.mrb[0].mxu0
        %v440 = vpop.f32.mrb[0].mxu0
        %v441 = vadd.f32 %v228, %v440
        %v442 = vpop.f32.mrb[0].mxu0
        %443 = vmatprep.mubr.bf16.mxu0 0
        %444 = vmatmul.mubr.bf16.gmra.mrb[0].mxu0 %v393
        %v445 = vpop.f32.mrb[0].mxu0
        %v446 = vadd.f32 %v228, %v445
        %v447 = vpop.f32.mrb[0].mxu0
        %v448 = vpop.f32.mrb[0].mxu0
        %v449 = vadd.f32 %v228, %v448
        %v450 = vpop.f32.mrb[0].mxu0
        %451 = vdwg.mxu0
        %vm452 = vcmp.ge.f32.partialorder %v430, 0.0
        %vm453 = vcmp.ge.f32.partialorder %v433, 0.0
        %vm454 = vcmp.ge.f32.partialorder %v438, 0.0
        %vm455 = vcmp.ge.f32.partialorder %v441, 0.0
        %vm456 = vcmp.ge.f32.partialorder %v446, 0.0
        %vm457 = vcmp.ge.f32.partialorder %v449, 0.0
        %v458 = vmul.f32 %v430, 0.2
        %v459 = vmul.f32 %v433, 0.2
        %v460 = vmul.f32 %v438, 0.2
        %v461 = vmul.f32 %v441, 0.2
        %v462 = vmul.f32 %v446, 0.2
        %v463 = vmul.f32 %v449, 0.2
        %v464 = vsel %vm452, %v430, %v458
        %v465 = vsel %vm453, %v433, %v459
        %v466 = vsel %vm454, %v438, %v460
        %v467 = vsel %vm455, %v441, %v461
        %v468 = vsel %vm456, %v446, %v462
        %v469 = vsel %vm457, %v449, %v463
        %v470 = vmul.f32 %v464, %v344
        %v471 = vmul.f32 %v465, %v344
        %v472 = vmul.f32 %v466, %v344
        %v473 = vmul.f32 %v467, %v344
        %v474 = vmul.f32 %v468, %v344
        %v475 = vmul.f32 %v469, %v344
        %v476 = vadd.f32 %v470, %v354
        %v477 = vadd.f32 %v471, %v354
        %v478 = vadd.f32 %v472, %v354
        %v479 = vadd.f32 %v473, %v354
        %v480 = vadd.f32 %v474, %v354
        %v481 = vadd.f32 %v475, %v354
        %v482 = vmax.f32 %v355, %v476
        %v483 = vmax.f32 %v356, %v477
        %v484 = vmax.f32 %v357, %v478
        %v485 = vmax.f32 %v358, %v479
        %v486 = vmax.f32 %v359, %v480
        %v487 = vmax.f32 %v360, %v481
        %vm488 = vcmask 392192
        %v490 = vsel %vm488, %v190, 0
        %v493 = vsel %vm488, %v191, 0
        %v496 = vsel %vm488, %v192, 0
        %498 = vmatprep.subr.mxu0 0.0
        %499 = vmatpush1.msra.mxu0 %v482
        %500 = vmatprep.subr.mxu0 0.0
        %501 = vmatpush1.msra.mxu0 %v483
        %502 = vmatprep.subr.mxu0 0.0
        %503 = vmatpush1.msra.mxu0 %v484
        %504 = vmatprep.subr.mxu0 0.0
        %505 = vmatpush1.msra.mxu0 %v485
        %506 = vmatprep.subr.mxu0 0.0
        %507 = vmatpush1.msra.mxu0 %v486
        %508 = vmatprep.subr.mxu0 0.0
        %509 = vmatpush1.msra.mxu0 %v487
        %510 = vmatprep.subr.mxu0 0.0
        %511 = vmatpush1.msra.mxu0 0.0
        %512 = vmatprep.subr.mxu0 0.0
        %513 = vmatpush1.msra.mxu0 0.0
        %514 = vmatprep.subr.mxu0 0.0
        %515 = vmatpush1.msra.mxu0 0.0
        %516 = vmatprep.subr.mxu0 0.0
        %517 = vmatpush1.msra.mxu0 0.0
        %518 = vmatprep.subr.mxu0 0.0
        %519 = vmatpush1.msra.mxu0 0.0
        %520 = vmatprep.subr.mxu0 0.0
        %521 = vmatpush1.msra.mxu0 0.0
        %522 = vmatprep.subr.mxu0 0.0
        %523 = vmatpush1.msra.mxu0 0.0
        %524 = vmatprep.subr.mxu0 0.0
        %525 = vmatpush1.msra.mxu0 0.0
        %526 = vmatprep.subr.mxu0 0.0
        %527 = vmatpush1.msra.mxu0 0.0
        %528 = vmatprep.subr.mxu0 0.0
        %529 = vmatpush1.msra.mxu0 0.0
        %530 = vmatprep.subr.mxu0 0.0
        %531 = vmatpush1.msra.mxu0 0.0
        %532 = vmatprep.subr.mxu0 0.0
        %533 = vmatpush1.msra.mxu0 0.0
        %534 = vmatprep.subr.mxu0 0.0
        %535 = vmatpush1.msra.mxu0 0.0
        %536 = vmatprep.subr.mxu0 0.0
        %537 = vmatpush1.msra.mxu0 0.0
        %538 = vmatprep.subr.mxu0 0.0
        %539 = vmatpush1.msra.mxu0 0.0
        %540 = vmatprep.subr.mxu0 0.0
        %541 = vmatpush1.msra.mxu0 0.0
        %542 = vmatprep.subr.mxu0 0.0
        %543 = vmatpush1.msra.mxu0 0.0
        %544 = vmatprep.subr.mxu0 0.0
        %545 = vmatpush1.msra.mxu0 0.0
        %546 = vmatprep.subr.mxu0 0.0
        %547 = vmatpush1.msra.mxu0 0.0
        %548 = vmatprep.subr.mxu0 0.0
        %549 = vmatpush1.msra.mxu0 0.0
        %550 = vmatprep.subr.mxu0 0.0
        %551 = vmatpush1.msra.mxu0 0.0
        %552 = vmatprep.subr.mxu0 0.0
        %553 = vmatpush1.msra.mxu0 0.0
        %554 = vmatprep.subr.mxu0 0.0
        %555 = vmatpush1.msra.mxu0 0.0
        %556 = vmatprep.subr.mxu0 0.0
        %557 = vmatpush1.msra.mxu0 0.0
        %558 = vmatprep.subr.mxu0 0.0
        %559 = vmatpush1.msra.mxu0 0.0
        %560 = vmatprep.subr.mxu0 0.0
        %561 = vmatpush1.msra.mxu0 0.0
        %562 = vmatprep.mubr.f32.mxu0 0.0
        %563 = vmatmul.mubr.f32.gmra.mrb[0].mxu0 %v490
        %v564 = vpop.f32.mrb[0].mxu0
        %v565 = vadd.f32 0.0, %v564
        %v566 = vpop.f32.mrb[0].mxu0
        %567 = vmatprep.mubr.f32.mxu0 0.0
        %568 = vmatmul.mubr.f32.gmra.mrb[0].mxu0 %v493
        %v569 = vpop.f32.mrb[0].mxu0
        %v570 = vadd.f32 0.0, %v569
        %v571 = vpop.f32.mrb[0].mxu0
        %572 = vmatprep.mubr.f32.mxu0 0.0
        %573 = vmatmul.mubr.f32.gmra.mrb[0].mxu0 %v496
        %v574 = vpop.f32.mrb[0].mxu0
        %v575 = vadd.f32 0.0, %v574
        %v576 = vpop.f32.mrb[0].mxu0
        %577 = vdwg.mxu0
        %v579 = vsel %vm488, %v202, 0
        %v582 = vsel %vm488, %v203, 0
        %v585 = vsel %vm488, %v204, 0
        %587 = vmatprep.subr.mxu0 0.0
        %588 = vmatpush1.msra.mxu0 %v482
        %589 = vmatprep.subr.mxu0 0.0
        %590 = vmatpush1.msra.mxu0 %v483
        %591 = vmatprep.subr.mxu0 0.0
        %592 = vmatpush1.msra.mxu0 %v484
        %593 = vmatprep.subr.mxu0 0.0
        %594 = vmatpush1.msra.mxu0 %v485
        %595 = vmatprep.subr.mxu0 0.0
        %596 = vmatpush1.msra.mxu0 %v486
        %597 = vmatprep.subr.mxu0 0.0
        %598 = vmatpush1.msra.mxu0 %v487
        %599 = vmatprep.subr.mxu0 0.0
        %600 = vmatpush1.msra.mxu0 0.0
        %601 = vmatprep.subr.mxu0 0.0
        %602 = vmatpush1.msra.mxu0 0.0
        %603 = vmatprep.subr.mxu0 0.0
        %604 = vmatpush1.msra.mxu0 0.0
        %605 = vmatprep.subr.mxu0 0.0
        %606 = vmatpush1.msra.mxu0 0.0
        %607 = vmatprep.subr.mxu0 0.0
        %608 = vmatpush1.msra.mxu0 0.0
        %609 = vmatprep.subr.mxu0 0.0
        %610 = vmatpush1.msra.mxu0 0.0
        %611 = vmatprep.subr.mxu0 0.0
        %612 = vmatpush1.msra.mxu0 0.0
        %613 = vmatprep.subr.mxu0 0.0
        %614 = vmatpush1.msra.mxu0 0.0
        %615 = vmatprep.subr.mxu0 0.0
        %616 = vmatpush1.msra.mxu0 0.0
        %617 = vmatprep.subr.mxu0 0.0
        %618 = vmatpush1.msra.mxu0 0.0
        %619 = vmatprep.subr.mxu0 0.0
        %620 = vmatpush1.msra.mxu0 0.0
        %621 = vmatprep.subr.mxu0 0.0
        %622 = vmatpush1.msra.mxu0 0.0
        %623 = vmatprep.subr.mxu0 0.0
        %624 = vmatpush1.msra.mxu0 0.0
        %625 = vmatprep.subr.mxu0 0.0
        %626 = vmatpush1.msra.mxu0 0.0
        %627 = vmatprep.subr.mxu0 0.0
        %628 = vmatpush1.msra.mxu0 0.0
        %629 = vmatprep.subr.mxu0 0.0
        %630 = vmatpush1.msra.mxu0 0.0
        %631 = vmatprep.subr.mxu0 0.0
        %632 = vmatpush1.msra.mxu0 0.0
        %633 = vmatprep.subr.mxu0 0.0
        %634 = vmatpush1.msra.mxu0 0.0
        %635 = vmatprep.subr.mxu0 0.0
        %636 = vmatpush1.msra.mxu0 0.0
        %637 = vmatprep.subr.mxu0 0.0
        %638 = vmatpush1.msra.mxu0 0.0
        %639 = vmatprep.subr.mxu0 0.0
        %640 = vmatpush1.msra.mxu0 0.0
        %641 = vmatprep.subr.mxu0 0.0
        %642 = vmatpush1.msra.mxu0 0.0
        %643 = vmatprep.subr.mxu0 0.0
        %644 = vmatpush1.msra.mxu0 0.0
        %645 = vmatprep.subr.mxu0 0.0
        %646 = vmatpush1.msra.mxu0 0.0
        %647 = vmatprep.subr.mxu0 0.0
        %648 = vmatpush1.msra.mxu0 0.0
        %649 = vmatprep.subr.mxu0 0.0
        %650 = vmatpush1.msra.mxu0 0.0
        %651 = vmatprep.mubr.f32.mxu0 0.0
        %652 = vmatmul.mubr.f32.gmra.mrb[0].mxu0 %v579
        %v653 = vpop.f32.mrb[0].mxu0
        %v654 = vadd.f32 0.0, %v653
        %v655 = vpop.f32.mrb[0].mxu0
        %656 = vmatprep.mubr.f32.mxu0 0.0
        %657 = vmatmul.mubr.f32.gmra.mrb[0].mxu0 %v582
        %v658 = vpop.f32.mrb[0].mxu0
        %v659 = vadd.f32 0.0, %v658
        %v660 = vpop.f32.mrb[0].mxu0
        %661 = vmatprep.mubr.f32.mxu0 0.0
        %662 = vmatmul.mubr.f32.gmra.mrb[0].mxu0 %v585
        %v663 = vpop.f32.mrb[0].mxu0
        %v664 = vadd.f32 0.0, %v663
        %v665 = vpop.f32.mrb[0].mxu0
        %666 = vdwg.mxu0
        %v667 = vmax.f32 %v565, %v654
        %v668 = vmax.f32 %v570, %v659
        %v669 = vmax.f32 %v575, %v664
        %v670 = vpack.c.bf16 %v668, %v667
        %v671 = vpack.c.bf16 %v669, %v669
        %v674 = vunpack.c.l.b16 %v670
        %v675 = vunpack.c.h.b16 %v670
        %v676 = vunpack.c.l.b16 %v671
        %v677 = vpack.c.b16 %v674, %v674
        %v678 = vpack.c.b16 %v675, %v675
        %v679 = vpack.c.b16 %v676, %v676
        %s683 = smul.u32 %s206, 3
        %s684 = smul.addr %s683, 4
        %s685 = scalar_lea.vmem %s170, %s684
        %686 = vst [vmem:[%s685] sm:$0xf] %v677
        %687 = vst [vmem:[%s685 + $0x4] sm:$0xf] %v678
        %688 = vst [vmem:[%s685 + $0x8] sm:$0xf] %v679
      $region37: #{cnn_forward.5} parent=31 // loop_footer
        %s210 = sadd.s32 1, %s206
      $region38: #{cnn_forward.5} parent=31 // loop_footer_branch
        %205 = sbr.rel target = $region34
      $region39: #{cnn_forward.5} parent=31 // loop_exit
        _
      %p689 = scmp.lt.s32.totalorder %s14, 1
      %s690 = scalar_select %p689, %s14, 1
      %s691 = smul.addr %s690, 72
      %s692 = smul.addr %s691, 4
      %s693 = scalar_lea.vmem %s3, %s692
      // Predicated region
      $region40: #{cnn_forward.5} parent=31 // pred_check
        %p694 = pneg %p100
      $region41: #{cnn_forward.5} parent=31 // pred_check_branch
        %696 = sbr.rel (%p694) target = $region43
      $region42: #{cnn_forward.5} parent=31 // pred_region
        _
      $region43: #{cnn_forward.5} parent=31 // pred_fallthru
        _
    $region32: #{cnn_forward.5} parent=5 // pred_fallthru
      _
    %p697 = scmp.le.s32.totalorder 2, %s9
    // Predicated region
    $region44: #{cnn_forward.5} parent=5 // pred_check
      %p698 = pneg %p697
    $region45: #{cnn_forward.5} parent=5 // pred_check_branch
      %700 = sbr.rel (%p698) target = $region47
    $region46: #{cnn_forward.5} parent=5 // pred_region
      %s701 = ssub.s32 %s9, 2
      // Predicated region
      $region48: #{cnn_forward.5} parent=46 // pred_check
        %p702 = pneg %p106
      $region49: #{cnn_forward.5} parent=46 // pred_check_branch
        %704 = sbr.rel (%p702) target = $region51
      $region50: #{cnn_forward.5} parent=46 // pred_region
        %p705 = scmp.lt.s32.totalorder %s15, 1
        %s706 = scalar_select %p705, %s15, 1
        %s707 = smul.addr %s706, 72
        %s708 = smul.addr %s707, 4
        %s709 = scalar_lea.vmem %s3, %s708
      $region51: #{cnn_forward.5} parent=46 // pred_fallthru
        _
    $region47: #{cnn_forward.5} parent=5 // pred_fallthru
      _
  $region6: #{cnn_forward.5} parent=0 // loop_footer
    %s13 = sadd.s32 1, %s9
  $region7: #{cnn_forward.5} parent=0 // loop_footer_branch
    %8 = sbr.rel target = $region3
  $region8: #{cnn_forward.5} parent=0 // loop_exit
    _

// kernel: cnn_forward.6
$region0: #{cnn_forward.6}
  #allocation0 [shape = 'u32[]', space=smem, size = 0x4, offset = 0x4, fixed_abs, tag = 'smem constant byte address 0x4 - core index']
  #allocation1 [shape = 'u32[144,128]{1,0:T(1,128)}', space=vmem, size = 0x12000, scoped, tag = 'internal scratch']
  %s0 = inlined_call_operand.vmem [shape: bf16[2,26,26,128], index: 0, kind: input, shape index: {}]
  %s1 = inlined_call_operand.vmem [shape: bf16[9,128,128], index: 1, kind: input, shape index: {}]
  %s2 = inlined_call_operand.vmem [shape: f32[3,128], index: 2, kind: input, shape index: {}]
  %s3 = inlined_call_operand.vmem [shape: bf16[2,12,12,128], index: 3, kind: output, shape index: {}]
  %s4 = sld [smem:[#allocation0]]
  $region52: #{cnn_forward.6} parent=0
    _
  %s6 = ssub.s32 1, %s4
  %s7 = scalar_select 0, %s6, %s4
  loop: start=0, step=1, limit=4
  $region2: #{cnn_forward.6} parent=0 // loop_pre_header
    _
  $region3: #{cnn_forward.6} parent=0 // loop_header
    %s9 = sphi 0, %s13
    %p10 = scmp.ge.s32.totalorder %s9, 4
    %s19 = sphi 0, %s21
    %s22 = sphi 0, %s19
    %s23 = sphi 0, %s22
    %s39 = sphi 0, %s23
    %s43 = sphi 0, %s43
    %s45 = sphi 0, %s43
    %s46 = sphi 0, %s45
    %s60 = sphi 0, %s46
    %s64 = sphi 0, %s64
    %s66 = sphi 0, %s64
    %s67 = sphi 0, %s66
    %s81 = sphi 0, %s67
    %s87 = sphi 0, %s89
    %s90 = sphi 0, %s87
    %s91 = sphi 0, %s90
    %s107 = sphi 0, %s91
  $region4: #{cnn_forward.6} parent=0 // loop_header_branch
    %12 = sbr.rel (%p10) target = $region8
  $region5: #{cnn_forward.6} parent=0 // loop_body
    %s14 = ssub.s32 %s9, 1
    %s15 = ssub.s32 %s9, 2
    %s16 = sadd.s32 %s9, 1
    %s17 = ssub.s32 %s9, %s16
    %p18 = scmp.eq.s32.totalorder %s17, 0
    %s20 = sadd.s32 %s19, 1
    %s21 = scalar_select %p18, %s19, %s20
    %p24 = pneg %p18
    %p25 = scmp.eq.s32.totalorder %s9, 1
    %p26 = por %p24, %p25
    %p27 = scmp.ne.s32.totalorder %s19, %s22
    %p28 = scmp.eq.s32.totalorder %s9, 0
    %p29 = por %p27, %p28
    %p30 = scmp.ne.s32.totalorder %s19, %s22
    %p31 = scmp.eq.s32.totalorder %s14, 1
    %p32 = por %p30, %p31
    %p33 = scmp.ne.s32.totalorder %s22, %s23
    %p34 = scmp.eq.s32.totalorder %s14, 0
    %p35 = por %p33, %p34
    %p36 = scmp.ne.s32.totalorder %s22, %s23
    %p37 = scmp.eq.s32.totalorder %s15, 1
    %p38 = por %p36, %p37
    %p40 = scmp.ne.s32.totalorder %s23, %s39
    %p41 = scmp.eq.s32.totalorder %s15, 0
    %p42 = por %p40, %p41
    %s44 = sadd.s32 %s43, 1
    %p47 = scmp.eq.s32.totalorder %s9, 1
    %p48 = scmp.ne.s32.totalorder %s43, %s45
    %p49 = scmp.eq.s32.totalorder %s9, 0
    %p50 = por %p48, %p49
    %p51 = scmp.ne.s32.totalorder %s43, %s45
    %p52 = scmp.eq.s32.totalorder %s14, 1
    %p53 = por %p51, %p52
    %p54 = scmp.ne.s32.totalorder %s45, %s46
    %p55 = scmp.eq.s32.totalorder %s14, 0
    %p56 = por %p54, %p55
    %p57 = scmp.ne.s32.totalorder %s45, %s46
    %p58 = scmp.eq.s32.totalorder %s15, 1
    %p59 = por %p57, %p58
    %p61 = scmp.ne.s32.totalorder %s46, %s60
    %p62 = scmp.eq.s32.totalorder %s15, 0
    %p63 = por %p61, %p62
    %s65 = sadd.s32 %s64, 1
    %p68 = scmp.eq.s32.totalorder %s9, 1
    %p69 = scmp.ne.s32.totalorder %s64, %s66
    %p70 = scmp.eq.s32.totalorder %s9, 0
    %p71 = por %p69, %p70
    %p72 = scmp.ne.s32.totalorder %s64, %s66
    %p73 = scmp.eq.s32.totalorder %s14, 1
    %p74 = por %p72, %p73
    %p75 = scmp.ne.s32.totalorder %s66, %s67
    %p76 = scmp.eq.s32.totalorder %s14, 0
    %p77 = por %p75, %p76
    %p78 = scmp.ne.s32.totalorder %s66, %s67
    %p79 = scmp.eq.s32.totalorder %s15, 1
    %p80 = por %p78, %p79
    %p82 = scmp.ne.s32.totalorder %s67, %s81
    %p83 = scmp.eq.s32.totalorder %s15, 0
    %p84 = por %p82, %p83
    %s85 = ssub.s32 %s9, %s16
    %p86 = scmp.eq.s32.totalorder %s85, 0
    %s88 = sadd.s32 %s87, 1
    %s89 = scalar_select %p86, %s87, %s88
    %p92 = pneg %p86
    %p93 = scmp.eq.s32.totalorder %s9, 1
    %p94 = por %p92, %p93
    %p95 = scmp.ne.s32.totalorder %s87, %s90
    %p96 = scmp.eq.s32.totalorder %s9, 0
    %p97 = por %p95, %p96
    %p98 = scmp.ne.s32.totalorder %s87, %s90
    %p99 = scmp.eq.s32.totalorder %s14, 1
    %p100 = por %p98, %p99
    %p101 = scmp.ne.s32.totalorder %s90, %s91
    %p102 = scmp.eq.s32.totalorder %s14, 0
    %p103 = por %p101, %p102
    %p104 = scmp.ne.s32.totalorder %s90, %s91
    %p105 = scmp.eq.s32.totalorder %s15, 1
    %p106 = por %p104, %p105
    %p108 = scmp.ne.s32.totalorder %s91, %s107
    %p109 = scmp.eq.s32.totalorder %s15, 0
    %p110 = por %p108, %p109
    %p111 = scmp.le.s32.totalorder 1, %s9
    %p112 = scmp.lt.s32.totalorder %s9, 3
    %p113 = pnand %p111, %p112
    %p114 = pneg %p113
    // Predicated region
    $region9: #{cnn_forward.6} parent=5 // pred_check
      _
    $region10: #{cnn_forward.6} parent=5 // pred_check_branch
      %116 = sbr.rel (%p113) target = $region12
    $region11: #{cnn_forward.6} parent=5 // pred_region
      %s117 = ssub.s32 %s9, 1
      // Predicated region
      $region13: #{cnn_forward.6} parent=11 // pred_check
        %p118 = pneg %p56
      $region14: #{cnn_forward.6} parent=11 // pred_check_branch
        %120 = sbr.rel (%p118) target = $region16
      $region15: #{cnn_forward.6} parent=11 // pred_region
        _
      $region16: #{cnn_forward.6} parent=11 // pred_fallthru
        _
      // Predicated region
      $region17: #{cnn_forward.6} parent=11 // pred_check
        %p121 = pneg %p77
      $region18: #{cnn_forward.6} parent=11 // pred_check_branch
        %123 = sbr.rel (%p121) target = $region20
      $region19: #{cnn_forward.6} parent=11 // pred_region
        _
      $region20: #{cnn_forward.6} parent=11 // pred_fallthru
        _
    $region12: #{cnn_forward.6} parent=5 // pred_fallthru
      _
    %p124 = scmp.lt.s32.totalorder %s9, 2
    // Predicated region
    $region21: #{cnn_forward.6} parent=5 // pred_check
      %p125 = pneg %p124
    $region22: #{cnn_forward.6} parent=5 // pred_check_branch
      %127 = sbr.rel (%p125) target = $region24
    $region23: #{cnn_forward.6} parent=5 // pred_region
      // Predicated region
      $region25: #{cnn_forward.6} parent=23 // pred_check
        %p128 = pneg %p29
      $region26: #{cnn_forward.6} parent=23 // pred_check_branch
        %130 = sbr.rel (%p128) target = $region28
      $region27: #{cnn_forward.6} parent=23 // pred_region
        %p131 = scmp.lt.s32.totalorder %s9, 1
        %s132 = scalar_select %p131, %s9, 1
        %s133 = smul.addr %s132, 104
        %s134 = smul.addr %s133, 4
        %s135 = scalar_lea.vmem %s0, %s134
      $region28: #{cnn_forward.6} parent=23 // pred_fallthru
        _
    $region24: #{cnn_forward.6} parent=5 // pred_fallthru
      _
    %p136 = scmp.le.s32.totalorder 1, %s9
    %p137 = scmp.lt.s32.totalorder %s9, 3
    %p138 = pnand %p136, %p137
    %p139 = pneg %p138
    // Predicated region
    $region29: #{cnn_forward.6} parent=5 // pred_check
      _
    $region30: #{cnn_forward.6} parent=5 // pred_check_branch
      %141 = sbr.rel (%p138) target = $region32
    $region31: #{cnn_forward.6} parent=5 // pred_region
      %s142 = ssub.s32 %s9, 1
      %p143 = scmp.lt.s32.totalorder %s14, 1
      %s144 = scalar_select %p143, %s14, 1
      %s145 = smul.addr %s144, 104
      %s146 = smul.addr %s145, 4
      %s147 = scalar_lea.vmem %s0, %s146
      %p148 = pneg %p35
      %p149 = pneg %p32
      %p150 = pneg %p56
      %p151 = pneg %p53
      %p152 = pneg %p77
      %p153 = pneg %p74
      %p154 = pneg %p103
      %p155 = pneg %p100
      %p156 = scmp.lt.s32.totalorder %s14, 1
      %s157 = scalar_select %p156, %s14, 1
      %s158 = smul.addr %s157, 24
      %s159 = smul.addr %s158, 4
      %s160 = scalar_lea.vmem %s3, %s159
      %p161 = scmp.lt.s32.totalorder %s14, 1
      %s162 = scalar_select %p161, %s14, 1
      %s163 = smul.addr %s162, 104
      %s164 = smul.addr %s163, 4
      %s165 = scalar_lea.vmem %s0, %s164
      %p166 = scmp.lt.s32.totalorder %s14, 1
      %s167 = scalar_select %p166, %s14, 1
      %s168 = smul.addr %s167, 24
      %s169 = smul.addr %s168, 4
      %s170 = scalar_lea.vmem %s3, %s169
      %v172 = vld [vmem:[%s2] sm:$0x1]
      %v173 = vld [vmem:[%s2 + $0x1] sm:$0x1]
      %v174 = vld [vmem:[%s2 + $0x2] sm:$0x1]
      %v175 = vlaneseq
      %v176 = vshrl.u32 %v175, 7
      %v177 = vadd.s32 %v176, 8
      %v178 = vlaneseq
      %v179 = vand.u32 %v178, 127
      %v180 = vmul.u32 %v176, 2
      %v181 = vmul.u32 %v177, 2
      %vm182 = vcmp.eq.s32.totalorder %v179, %v180
      %vm183 = vcmp.eq.s32.totalorder %v179, %v181
      %v184 = vsel %vm182, 1, 0
      %v185 = vsel %vm183, 1, 0
      %v186 = vcvt.s32.f32 %v184
      %v187 = vcvt.s32.f32 %v185
      %v188 = vadd.s32 %v180, 1
      %v189 = vadd.s32 %v181, 1
      %vm190 = vcmp.eq.s32.totalorder %v179, %v188
      %vm191 = vcmp.eq.s32.totalorder %v179, %v189
      %v192 = vsel %vm190, 1, 0
      %v193 = vsel %vm191, 1, 0
      %v194 = vcvt.s32.f32 %v192
      %v195 = vcvt.s32.f32 %v193
      loop: start=0, step=1, limit=12
      $region33: #{cnn_forward.6} parent=31 // loop_pre_header
        _
      $region34: #{cnn_forward.6} parent=31 // loop_header
        %s197 = sphi 0, %s201
        %p198 = scmp.ge.s32.totalorder %s197, 12
      $region35: #{cnn_forward.6} parent=31 // loop_header_branch
        %200 = sbr.rel (%p198) target = $region39
      $region36: #{cnn_forward.6} parent=31 // loop_body
        %s202 = smul.u32 %s197, 2
        %s203 = smul.u32 %s202, 4
        %s204 = smul.addr %s203, 4
        %s205 = scalar_lea.vmem %s165, %s204
        %v206 = vld [vmem:[%s205] sm:$0xf]
        %v207 = vld [vmem:[%s205 + $0x4] sm:$0xf]
        %v208 = vld [vmem:[%s205 + $0x8] sm:$0xf]
        %v209 = vld [vmem:[%s205 + $0xc] sm:$0x1]
        %v210 = vld [vmem:[%s1] sm:$0xf]
        %v211 = vld [vmem:[%s1 + $0x4] sm:$0xf]
        %v212 = vld [vmem:[%s1 + $0x8] sm:$0xf]
        %v213 = vld [vmem:[%s1 + $0xc] sm:$0xf]
        %v214 = vld [vmem:[%s1 + $0x10] sm:$0xf]
        %v215 = vld [vmem:[%s1 + $0x14] sm:$0xf]
        %v216 = vld [vmem:[%s1 + $0x18] sm:$0xf]
        %v217 = vld [vmem:[%s1 + $0x1c] sm:$0xf]
        %v218 = vld [vmem:[%s1 + $0x20] sm:$0xf]
        %v219 = vld [vmem:[%s1 + $0x24] sm:$0xf]
        %v220 = vld [vmem:[%s1 + $0x28] sm:$0xf]
        %v221 = vld [vmem:[%s1 + $0x2c] sm:$0xf]
        %v222 = vld [vmem:[%s1 + $0x30] sm:$0xf]
        %v223 = vld [vmem:[%s1 + $0x34] sm:$0xf]
        %v224 = vld [vmem:[%s1 + $0x38] sm:$0xf]
        %v225 = vld [vmem:[%s1 + $0x3c] sm:$0xf]
        %s226 = scalar_lea.vmem %s1, 64
        %v227 = vld [vmem:[%s226] sm:$0xf]
        %v228 = vld [vmem:[%s226 + $0x4] sm:$0xf]
        %v229 = vld [vmem:[%s226 + $0x8] sm:$0xf]
        %v230 = vld [vmem:[%s226 + $0xc] sm:$0xf]
        %v231 = vld [vmem:[%s226 + $0x10] sm:$0xf]
        %v232 = vld [vmem:[%s226 + $0x14] sm:$0xf]
        %v233 = vld [vmem:[%s226 + $0x18] sm:$0xf]
        %v234 = vld [vmem:[%s226 + $0x1c] sm:$0xf]
        %v235 = vld [vmem:[%s226 + $0x20] sm:$0xf]
        %v236 = vld [vmem:[%s226 + $0x24] sm:$0xf]
        %v237 = vld [vmem:[%s226 + $0x28] sm:$0xf]
        %v238 = vld [vmem:[%s226 + $0x2c] sm:$0xf]
        %v239 = vld [vmem:[%s226 + $0x30] sm:$0xf]
        %v240 = vld [vmem:[%s226 + $0x34] sm:$0xf]
        %v241 = vld [vmem:[%s226 + $0x38] sm:$0xf]
        %v242 = vld [vmem:[%s226 + $0x3c] sm:$0xf]
        %v247 = vunpack.c.l.b16 %v206
        %v248 = vunpack.c.l.b16 %v207
        %v249 = vunpack.c.l.b16 %v208
        %v250 = vunpack.c.l.b16 %v209
        %v251 = vpack.c.b16 %v248, %v247
        %v252 = vpack.c.b16 %v250, %v249
        %vm253 = vsmask.f32 7424
        %v255 = vshrl.u32 %v251, 16
        %v257 = vshll.u32 %v251, 16
        %v259 = vrot.slane %v257, 1
        %v260 = vor.u32 %v255, %v259
        %v262 = vshll.u32 %v252, 16
        %v264 = vrot.slane %v262, 1
        %v265 = vsel %vm253, %v260, %v264
        %v266 = vshrl.u32 %v252, 16
        %v268 = vor.u32 %v266, %v264
        %v287 = vunpack.c.l.b16 %v227
        %v288 = vunpack.c.l.b16 %v228
        %v289 = vunpack.c.l.b16 %v229
        %v290 = vunpack.c.l.b16 %v230
        %v291 = vunpack.c.l.b16 %v231
        %v292 = vunpack.c.l.b16 %v232
        %v293 = vunpack.c.l.b16 %v233
        %v294 = vunpack.c.l.b16 %v234
        %v295 = vunpack.c.l.b16 %v235
        %v296 = vunpack.c.l.b16 %v236
        %v297 = vunpack.c.l.b16 %v237
        %v298 = vunpack.c.l.b16 %v238
        %v299 = vunpack.c.l.b16 %v239
        %v300 = vunpack.c.l.b16 %v240
        %v301 = vunpack.c.l.b16 %v241
        %v302 = vunpack.c.l.b16 %v242
        %v303 = vpack.c.b16 %v288, %v287
        %v304 = vpack.c.b16 %v290, %v289
        %v305 = vpack.c.b16 %v292, %v291
        %v306 = vpack.c.b16 %v294, %v293
        %v307 = vpack.c.b16 %v296, %v295
        %v308 = vpack.c.b16 %v298, %v297
        %v309 = vpack.c.b16 %v300, %v299
        %v310 = vpack.c.b16 %v302, %v301
        %319 = vmatprep.subr.bf16.mxu0 0
        %320 = vmatpush1.bf16.msra.mxu0 %v303
        %321 = vmatprep.subr.bf16.mxu0 0
        %322 = vmatpush1.bf16.msra.mxu0 %v304
        %323 = vmatprep.subr.bf16.mxu0 0
        %324 = vmatpush1.bf16.msra.mxu0 %v305
        %325 = vmatprep.subr.bf16.mxu0 0
        %326 = vmatpush1.bf16.msra.mxu0 %v306
        %327 = vmatprep.subr.bf16.mxu0 0
        %328 = vmatpush1.bf16.msra.mxu0 %v307
        %329 = vmatprep.subr.bf16.mxu0 0
        %330 = vmatpush1.bf16.msra.mxu0 %v308
        %331 = vmatprep.subr.bf16.mxu0 0
        %332 = vmatpush1.bf16.msra.mxu0 %v309
        %333 = vmatprep.subr.bf16.mxu0 0
        %334 = vmatpush1.bf16.msra.mxu0 %v310
        %335 = vmatprep.subr.bf16.mxu0 0
        %336 = vmatpush1.bf16.msra.mxu0 0
        %337 = vmatprep.subr.bf16.mxu0 0
        %338 = vmatpush1.bf16.msra.mxu0 0
        %339 = vmatprep.subr.bf16.mxu0 0
        %340 = vmatpush1.bf16.msra.mxu0 0
        %341 = vmatprep.subr.bf16.mxu0 0
        %342 = vmatpush1.bf16.msra.mxu0 0
        %343 = vmatprep.subr.bf16.mxu0 0
        %344 = vmatpush1.bf16.msra.mxu0 0
        %345 = vmatprep.subr.bf16.mxu0 0
        %346 = vmatpush1.bf16.msra.mxu0 0
        %347 = vmatprep.subr.bf16.mxu0 0
        %348 = vmatpush1.bf16.msra.mxu0 0
        %349 = vmatprep.subr.bf16.mxu0 0
        %350 = vmatpush1.bf16.msra.mxu0 0
        %351 = vmatprep.mubr.bf16.mxu0 0
        %352 = vmatmul.mubr.bf16.gmra.mrb[0].mxu0 %v265
        %v353 = vpop.f32.mrb[0].mxu0
        %v354 = vadd.f32 0.0, %v353
        %v355 = vpop.f32.mrb[0].mxu0
        %v356 = vpop.f32.mrb[0].mxu0
        %v357 = vadd.f32 0.0, %v356
        %v358 = vpop.f32.mrb[0].mxu0
        %359 = vmatprep.mubr.bf16.mxu0 0
        %360 = vmatmul.mubr.bf16.gmra.mrb[0].mxu0 %v268
        %v361 = vpop.f32.mrb[0].mxu0
        %v362 = vadd.f32 0.0, %v361
        %v363 = vpop.f32.mrb[0].mxu0
        %v364 = vpop.f32.mrb[0].mxu0
        %v365 = vpop.f32.mrb[0].mxu0
        %366 = vdwg.mxu0
        %v367 = vpack.c.b16 %v249, %v249
        %v386 = vunpack.c.l.b16 %v210
        %v387 = vunpack.c.l.b16 %v211
        %v388 = vunpack.c.l.b16 %v212
        %v389 = vunpack.c.l.b16 %v213
        %v390 = vunpack.c.l.b16 %v214
        %v391 = vunpack.c.l.b16 %v215
        %v392 = vunpack.c.l.b16 %v216
        %v393 = vunpack.c.l.b16 %v217
        %v394 = vunpack.c.l.b16 %v218
        %v395 = vunpack.c.l.b16 %v219
        %v396 = vunpack.c.l.b16 %v220
        %v397 = vunpack.c.l.b16 %v221
        %v398 = vunpack.c.l.b16 %v222
        %v399 = vunpack.c.l.b16 %v223
        %v400 = vunpack.c.l.b16 %v224
        %v401 = vunpack.c.l.b16 %v225
        %v402 = vpack.c.b16 %v387, %v386
        %v403 = vpack.c.b16 %v389, %v388
        %v404 = vpack.c.b16 %v391, %v390
        %v405 = vpack.c.b16 %v393, %v392
        %v406 = vpack.c.b16 %v395, %v394
        %v407 = vpack.c.b16 %v397, %v396
        %v408 = vpack.c.b16 %v399, %v398
        %v409 = vpack.c.b16 %v401, %v400
        %418 = vmatprep.subr.bf16.mxu0 0
        %419 = vmatpush1.bf16.msra.mxu0 %v402
        %420 = vmatprep.subr.bf16.mxu0 0
        %421 = vmatpush1.bf16.msra.mxu0 %v403
        %422 = vmatprep.subr.bf16.mxu0 0
        %423 = vmatpush1.bf16.msra.mxu0 %v404
        %424 = vmatprep.subr.bf16.mxu0 0
        %425 = vmatpush1.bf16.msra.mxu0 %v405
        %426 = vmatprep.subr.bf16.mxu0 0
        %427 = vmatpush1.bf16.msra.mxu0 %v406
        %428 = vmatprep.subr.bf16.mxu0 0
        %429 = vmatpush1.bf16.msra.mxu0 %v407
        %430 = vmatprep.subr.bf16.mxu0 0
        %431 = vmatpush1.bf16.msra.mxu0 %v408
        %432 = vmatprep.subr.bf16.mxu0 0
        %433 = vmatpush1.bf16.msra.mxu0 %v409
        %434 = vmatprep.subr.bf16.mxu0 0
        %435 = vmatpush1.bf16.msra.mxu0 0
        %436 = vmatprep.subr.bf16.mxu0 0
        %437 = vmatpush1.bf16.msra.mxu0 0
        %438 = vmatprep.subr.bf16.mxu0 0
        %439 = vmatpush1.bf16.msra.mxu0 0
        %440 = vmatprep.subr.bf16.mxu0 0
        %441 = vmatpush1.bf16.msra.mxu0 0
        %442 = vmatprep.subr.bf16.mxu0 0
        %443 = vmatpush1.bf16.msra.mxu0 0
        %444 = vmatprep.subr.bf16.mxu0 0
        %445 = vmatpush1.bf16.msra.mxu0 0
        %446 = vmatprep.subr.bf16.mxu0 0
        %447 = vmatpush1.bf16.msra.mxu0 0
        %448 = vmatprep.subr.bf16.mxu0 0
        %449 = vmatpush1.bf16.msra.mxu0 0
        %450 = vmatprep.mubr.bf16.mxu0 0
        %451 = vmatmul.mubr.bf16.gmra.mrb[0].mxu0 %v251
        %v452 = vpop.f32.mrb[0].mxu0
        %v453 = vadd.f32 %v354, %v452
        %v454 = vpop.f32.mrb[0].mxu0
        %v455 = vpop.f32.mrb[0].mxu0
        %v456 = vadd.f32 %v357, %v455
        %v457 = vpop.f32.mrb[0].mxu0
        %458 = vmatprep.mubr.bf16.mxu0 0
        %459 = vmatmul.mubr.bf16.gmra.mrb[0].mxu0 %v367
        %v460 = vpop.f32.mrb[0].mxu0
        %v461 = vadd.f32 %v362, %v460
        %v462 = vpop.f32.mrb[0].mxu0
        %v463 = vpop.f32.mrb[0].mxu0
        %v464 = vpop.f32.mrb[0].mxu0
        %465 = vdwg.mxu0
        %s466 = scalar_lea.vmem %s1, 128
        %v467 = vld [vmem:[%s466] sm:$0xf]
        %v468 = vld [vmem:[%s466 + $0x4] sm:$0xf]
        %v469 = vld [vmem:[%s466 + $0x8] sm:$0xf]
        %v470 = vld [vmem:[%s466 + $0xc] sm:$0xf]
        %v471 = vld [vmem:[%s466 + $0x10] sm:$0xf]
        %v472 = vld [vmem:[%s466 + $0x14] sm:$0xf]
        %v473 = vld [vmem:[%s466 + $0x18] sm:$0xf]
        %v474 = vld [vmem:[%s466 + $0x1c] sm:$0xf]
        %v475 = vld [vmem:[%s466 + $0x20] sm:$0xf]
        %v476 = vld [vmem:[%s466 + $0x24] sm:$0xf]
        %v477 = vld [vmem:[%s466 + $0x28] sm:$0xf]
        %v478 = vld [vmem:[%s466 + $0x2c] sm:$0xf]
        %v479 = vld [vmem:[%s466 + $0x30] sm:$0xf]
        %v480 = vld [vmem:[%s466 + $0x34] sm:$0xf]
        %v481 = vld [vmem:[%s466 + $0x38] sm:$0xf]
        %v482 = vld [vmem:[%s466 + $0x3c] sm:$0xf]
        %vm483 = vcmask 1046528
        %v484 = vrot.slane %v251, 1
        %v485 = vrot.slane %v252, 1
        %v486 = vsel %vm483, %v484, %v485
        %v505 = vunpack.c.l.b16 %v467
        %v506 = vunpack.c.l.b16 %v468
        %v507 = vunpack.c.l.b16 %v469
        %v508 = vunpack.c.l.b16 %v470
        %v509 = vunpack.c.l.b16 %v471
        %v510 = vunpack.c.l.b16 %v472
        %v511 = vunpack.c.l.b16 %v473
        %v512 = vunpack.c.l.b16 %v474
        %v513 = vunpack.c.l.b16 %v475
        %v514 = vunpack.c.l.b16 %v476
        %v515 = vunpack.c.l.b16 %v477
        %v516 = vunpack.c.l.b16 %v478
        %v517 = vunpack.c.l.b16 %v479
        %v518 = vunpack.c.l.b16 %v480
        %v519 = vunpack.c.l.b16 %v481
        %v520 = vunpack.c.l.b16 %v482
        %v521 = vpack.c.b16 %v506, %v505
        %v522 = vpack.c.b16 %v508, %v507
        %v523 = vpack.c.b16 %v510, %v509
        %v524 = vpack.c.b16 %v512, %v511
        %v525 = vpack.c.b16 %v514, %v513
        %v526 = vpack.c.b16 %v516, %v515
        %v527 = vpack.c.b16 %v518, %v517
        %v528 = vpack.c.b16 %v520, %v519
        %537 = vmatprep.subr.bf16.mxu0 0
        %538 = vmatpush1.bf16.msra.mxu0 %v521
        %539 = vmatprep.subr.bf16.mxu0 0
        %540 = vmatpush1.bf16.msra.mxu0 %v522
        %541 = vmatprep.subr.bf16.mxu0 0
        %542 = vmatpush1.bf16.msra.mxu0 %v523
        %543 = vmatprep.subr.bf16.mxu0 0
        %544 = vmatpush1.bf16.msra.mxu0 %v524
        %545 = vmatprep.subr.bf16.mxu0 0
        %546 = vmatpush1.bf16.msra.mxu0 %v525
        %547 = vmatprep.subr.bf16.mxu0 0
        %548 = vmatpush1.bf16.msra.mxu0 %v526
        %549 = vmatprep.subr.bf16.mxu0 0
        %550 = vmatpush1.bf16.msra.mxu0 %v527
        %551 = vmatprep.subr.bf16.mxu0 0
        %552 = vmatpush1.bf16.msra.mxu0 %v528
        %553 = vmatprep.subr.bf16.mxu0 0
        %554 = vmatpush1.bf16.msra.mxu0 0
        %555 = vmatprep.subr.bf16.mxu0 0
        %556 = vmatpush1.bf16.msra.mxu0 0
        %557 = vmatprep.subr.bf16.mxu0 0
        %558 = vmatpush1.bf16.msra.mxu0 0
        %559 = vmatprep.subr.bf16.mxu0 0
        %560 = vmatpush1.bf16.msra.mxu0 0
        %561 = vmatprep.subr.bf16.mxu0 0
        %562 = vmatpush1.bf16.msra.mxu0 0
        %563 = vmatprep.subr.bf16.mxu0 0
        %564 = vmatpush1.bf16.msra.mxu0 0
        %565 = vmatprep.subr.bf16.mxu0 0
        %566 = vmatpush1.bf16.msra.mxu0 0
        %567 = vmatprep.subr.bf16.mxu0 0
        %568 = vmatpush1.bf16.msra.mxu0 0
        %569 = vmatprep.mubr.bf16.mxu0 0
        %570 = vmatmul.mubr.bf16.gmra.mrb[0].mxu0 %v486
        %v571 = vpop.f32.mrb[0].mxu0
        %v572 = vadd.f32 0.0, %v571
        %v573 = vpop.f32.mrb[0].mxu0
        %v574 = vpop.f32.mrb[0].mxu0
        %v575 = vadd.f32 0.0, %v574
        %v576 = vpop.f32.mrb[0].mxu0
        %577 = vmatprep.mubr.bf16.mxu0 0
        %578 = vmatmul.mubr.bf16.gmra.mrb[0].mxu0 %v485
        %v579 = vpop.f32.mrb[0].mxu0
        %v580 = vadd.f32 0.0, %v579
        %v581 = vpop.f32.mrb[0].mxu0
        %v582 = vpop.f32.mrb[0].mxu0
        %v583 = vpop.f32.mrb[0].mxu0
        %584 = vdwg.mxu0
        %v585 = vadd.f32 %v453, %v572
        %v586 = vadd.f32 %v456, %v575
        %v587 = vadd.f32 %v461, %v580
        %s588 = sadd.s32 %s202, 1
        %s589 = smul.u32 %s588, 4
        %s590 = smul.addr %s589, 4
        %s591 = scalar_lea.vmem %s165, %s590
        %v592 = vld [vmem:[%s591] sm:$0xf]
        %v593 = vld [vmem:[%s591 + $0x4] sm:$0xf]
        %v594 = vld [vmem:[%s591 + $0x8] sm:$0xf]
        %v595 = vld [vmem:[%s591 + $0xc] sm:$0x1]
        %s596 = scalar_lea.vmem %s1, 192
        %v597 = vld [vmem:[%s596] sm:$0xf]
        %v598 = vld [vmem:[%s596 + $0x4] sm:$0xf]
        %v599 = vld [vmem:[%s596 + $0x8] sm:$0xf]
        %v600 = vld [vmem:[%s596 + $0xc] sm:$0xf]
        %v601 = vld [vmem:[%s596 + $0x10] sm:$0xf]
        %v602 = vld [vmem:[%s596 + $0x14] sm:$0xf]
        %v603 = vld [vmem:[%s596 + $0x18] sm:$0xf]
        %v604 = vld [vmem:[%s596 + $0x1c] sm:$0xf]
        %v605 = vld [vmem:[%s596 + $0x20] sm:$0xf]
        %v606 = vld [vmem:[%s596 + $0x24] sm:$0xf]
        %v607 = vld [vmem:[%s596 + $0x28] sm:$0xf]
        %v608 = vld [vmem:[%s596 + $0x2c] sm:$0xf]
        %v609 = vld [vmem:[%s596 + $0x30] sm:$0xf]
        %v610 = vld [vmem:[%s596 + $0x34] sm:$0xf]
        %v611 = vld [vmem:[%s596 + $0x38] sm:$0xf]
        %v612 = vld [vmem:[%s596 + $0x3c] sm:$0xf]
        %v616 = vunpack.c.l.b16 %v592
        %v617 = vunpack.c.l.b16 %v593
        %v618 = vunpack.c.l.b16 %v594
        %v619 = vpack.c.b16 %v617, %v616
        %v620 = vpack.c.b16 %v618, %v618
        %v639 = vunpack.c.l.b16 %v597
        %v640 = vunpack.c.l.b16 %v598
        %v641 = vunpack.c.l.b16 %v599
        %v642 = vunpack.c.l.b16 %v600
        %v643 = vunpack.c.l.b16 %v601
        %v644 = vunpack.c.l.b16 %v602
        %v645 = vunpack.c.l.b16 %v603
        %v646 = vunpack.c.l.b16 %v604
        %v647 = vunpack.c.l.b16 %v605
        %v648 = vunpack.c.l.b16 %v606
        %v649 = vunpack.c.l.b16 %v607
        %v650 = vunpack.c.l.b16 %v608
        %v651 = vunpack.c.l.b16 %v609
        %v652 = vunpack.c.l.b16 %v610
        %v653 = vunpack.c.l.b16 %v611
        %v654 = vunpack.c.l.b16 %v612
        %v655 = vpack.c.b16 %v640, %v639
        %v656 = vpack.c.b16 %v642, %v641
        %v657 = vpack.c.b16 %v644, %v643
        %v658 = vpack.c.b16 %v646, %v645
        %v659 = vpack.c.b16 %v648, %v647
        %v660 = vpack.c.b16 %v650, %v649
        %v661 = vpack.c.b16 %v652, %v651
        %v662 = vpack.c.b16 %v654, %v653
        %671 = vmatprep.subr.bf16.mxu0 0
        %672 = vmatpush1.bf16.msra.mxu0 %v655
        %673 = vmatprep.subr.bf16.mxu0 0
        %674 = vmatpush1.bf16.msra.mxu0 %v656
        %675 = vmatprep.subr.bf16.mxu0 0
        %676 = vmatpush1.bf16.msra.mxu0 %v657
        %677 = vmatprep.subr.bf16.mxu0 0
        %678 = vmatpush1.bf16.msra.mxu0 %v658
        %679 = vmatprep.subr.bf16.mxu0 0
        %680 = vmatpush1.bf16.msra.mxu0 %v659
        %681 = vmatprep.subr.bf16.mxu0 0
        %682 = vmatpush1.bf16.msra.mxu0 %v660
        %683 = vmatprep.subr.bf16.mxu0 0
        %684 = vmatpush1.bf16.msra.mxu0 %v661
        %685 = vmatprep.subr.bf16.mxu0 0
        %686 = vmatpush1.bf16.msra.mxu0 %v662
        %687 = vmatprep.subr.bf16.mxu0 0
        %688 = vmatpush1.bf16.msra.mxu0 0
        %689 = vmatprep.subr.bf16.mxu0 0
        %690 = vmatpush1.bf16.msra.mxu0 0
        %691 = vmatprep.subr.bf16.mxu0 0
        %692 = vmatpush1.bf16.msra.mxu0 0
        %693 = vmatprep.subr.bf16.mxu0 0
        %694 = vmatpush1.bf16.msra.mxu0 0
        %695 = vmatprep.subr.bf16.mxu0 0
        %696 = vmatpush1.bf16.msra.mxu0 0
        %697 = vmatprep.subr.bf16.mxu0 0
        %698 = vmatpush1.bf16.msra.mxu0 0
        %699 = vmatprep.subr.bf16.mxu0 0
        %700 = vmatpush1.bf16.msra.mxu0 0
        %701 = vmatprep.subr.bf16.mxu0 0
        %702 = vmatpush1.bf16.msra.mxu0 0
        %703 = vmatprep.mubr.bf16.mxu0 0
        %704 = vmatmul.mubr.bf16.gmra.mrb[0].mxu0 %v619
        %v705 = vpop.f32.mrb[0].mxu0
        %v706 = vadd.f32 0.0, %v705
        %v707 = vpop.f32.mrb[0].mxu0
        %v708 = vpop.f32.mrb[0].mxu0
        %v709 = vadd.f32 0.0, %v708
        %v710 = vpop.f32.mrb[0].mxu0
        %711 = vmatprep.mubr.bf16.mxu0 0
        %712 = vmatmul.mubr.bf16.gmra.mrb[0].mxu0 %v620
        %v713 = vpop.f32.mrb[0].mxu0
        %v714 = vadd.f32 0.0, %v713
        %v715 = vpop.f32.mrb[0].mxu0
        %v716 = vpop.f32.mrb[0].mxu0
        %v717 = vpop.f32.mrb[0].mxu0
        %718 = vdwg.mxu0
        %v719 = vadd.f32 %v585, %v706
        %v720 = vadd.f32 %v586, %v709
        %v721 = vadd.f32 %v587, %v714
        %s722 = scalar_lea.vmem %s1, 256
        %v723 = vld [vmem:[%s722] sm:$0xf]
        %v724 = vld [vmem:[%s722 + $0x4] sm:$0xf]
        %v725 = vld [vmem:[%s722 + $0x8] sm:$0xf]
        %v726 = vld [vmem:[%s722 + $0xc] sm:$0xf]
        %v727 = vld [vmem:[%s722 + $0x10] sm:$0xf]
        %v728 = vld [vmem:[%s722 + $0x14] sm:$0xf]
        %v729 = vld [vmem:[%s722 + $0x18] sm:$0xf]
        %v730 = vld [vmem:[%s722 + $0x1c] sm:$0xf]
        %v731 = vld [vmem:[%s722 + $0x20] sm:$0xf]
        %v732 = vld [vmem:[%s722 + $0x24] sm:$0xf]
        %v733 = vld [vmem:[%s722 + $0x28] sm:$0xf]
        %v734 = vld [vmem:[%s722 + $0x2c] sm:$0xf]
        %v735 = vld [vmem:[%s722 + $0x30] sm:$0xf]
        %v736 = vld [vmem:[%s722 + $0x34] sm:$0xf]
        %v737 = vld [vmem:[%s722 + $0x38] sm:$0xf]
        %v738 = vld [vmem:[%s722 + $0x3c] sm:$0xf]
        %v740 = vunpack.c.l.b16 %v595
        %v741 = vpack.c.b16 %v740, %v618
        %v743 = vshrl.u32 %v619, 16
        %v745 = vshll.u32 %v619, 16
        %v747 = vrot.slane %v745, 1
        %v748 = vor.u32 %v743, %v747
        %v750 = vshll.u32 %v741, 16
        %v752 = vrot.slane %v750, 1
        %v753 = vsel %vm253, %v748, %v752
        %v754 = vshrl.u32 %v741, 16
        %v756 = vor.u32 %v754, %v752
        %v775 = vunpack.c.l.b16 %v723
        %v776 = vunpack.c.l.b16 %v724
        %v777 = vunpack.c.l.b16 %v725
        %v778 = vunpack.c.l.b16 %v726
        %v779 = vunpack.c.l.b16 %v727
        %v780 = vunpack.c.l.b16 %v728
        %v781 = vunpack.c.l.b16 %v729
        %v782 = vunpack.c.l.b16 %v730
        %v783 = vunpack.c.l.b16 %v731
        %v784 = vunpack.c.l.b16 %v732
        %v785 = vunpack.c.l.b16 %v733
        %v786 = vunpack.c.l.b16 %v734
        %v787 = vunpack.c.l.b16 %v735
        %v788 = vunpack.c.l.b16 %v736
        %v789 = vunpack.c.l.b16 %v737
        %v790 = vunpack.c.l.b16 %v738
        %v791 = vpack.c.b16 %v776, %v775
        %v792 = vpack.c.b16 %v778, %v777
        %v793 = vpack.c.b16 %v780, %v779
        %v794 = vpack.c.b16 %v782, %v781
        %v795 = vpack.c.b16 %v784, %v783
        %v796 = vpack.c.b16 %v786, %v785
        %v797 = vpack.c.b16 %v788, %v787
        %v798 = vpack.c.b16 %v790, %v789
        %807 = vmatprep.subr.bf16.mxu0 0
        %808 = vmatpush1.bf16.msra.mxu0 %v791
        %809 = vmatprep.subr.bf16.mxu0 0
        %810 = vmatpush1.bf16.msra.mxu0 %v792
        %811 = vmatprep.subr.bf16.mxu0 0
        %812 = vmatpush1.bf16.msra.mxu0 %v793
        %813 = vmatprep.subr.bf16.mxu0 0
        %814 = vmatpush1.bf16.msra.mxu0 %v794
        %815 = vmatprep.subr.bf16.mxu0 0
        %816 = vmatpush1.bf16.msra.mxu0 %v795
        %817 = vmatprep.subr.bf16.mxu0 0
        %818 = vmatpush1.bf16.msra.mxu0 %v796
        %819 = vmatprep.subr.bf16.mxu0 0
        %820 = vmatpush1.bf16.msra.mxu0 %v797
        %821 = vmatprep.subr.bf16.mxu0 0
        %822 = vmatpush1.bf16.msra.mxu0 %v798
        %823 = vmatprep.subr.bf16.mxu0 0
        %824 = vmatpush1.bf16.msra.mxu0 0
        %825 = vmatprep.subr.bf16.mxu0 0
        %826 = vmatpush1.bf16.msra.mxu0 0
        %827 = vmatprep.subr.bf16.mxu0 0
        %828 = vmatpush1.bf16.msra.mxu0 0
        %829 = vmatprep.subr.bf16.mxu0 0
        %830 = vmatpush1.bf16.msra.mxu0 0
        %831 = vmatprep.subr.bf16.mxu0 0
        %832 = vmatpush1.bf16.msra.mxu0 0
        %833 = vmatprep.subr.bf16.mxu0 0
        %834 = vmatpush1.bf16.msra.mxu0 0
        %835 = vmatprep.subr.bf16.mxu0 0
        %836 = vmatpush1.bf16.msra.mxu0 0
        %837 = vmatprep.subr.bf16.mxu0 0
        %838 = vmatpush1.bf16.msra.mxu0 0
        %839 = vmatprep.mubr.bf16.mxu0 0
        %840 = vmatmul.mubr.bf16.gmra.mrb[0].mxu0 %v753
        %v841 = vpop.f32.mrb[0].mxu0
        %v842 = vadd.f32 0.0, %v841
        %v843 = vpop.f32.mrb[0].mxu0
        %v844 = vpop.f32.mrb[0].mxu0
        %v845 = vadd.f32 0.0, %v844
        %v846 = vpop.f32.mrb[0].mxu0
        %847 = vmatprep.mubr.bf16.mxu0 0
        %848 = vmatmul.mubr.bf16.gmra.mrb[0].mxu0 %v756
        %v849 = vpop.f32.mrb[0].mxu0
        %v850 = vadd.f32 0.0, %v849
        %v851 = vpop.f32.mrb[0].mxu0
        %v852 = vpop.f32.mrb[0].mxu0
        %v853 = vpop.f32.mrb[0].mxu0
        %854 = vdwg.mxu0
        %v855 = vadd.f32 %v719, %v842
        %v856 = vadd.f32 %v720, %v845
        %v857 = vadd.f32 %v721, %v850
        %s858 = scalar_lea.vmem %s1, 320
        %v859 = vld [vmem:[%s858] sm:$0xf]
        %v860 = vld [vmem:[%s858 + $0x4] sm:$0xf]
        %v861 = vld [vmem:[%s858 + $0x8] sm:$0xf]
        %v862 = vld [vmem:[%s858 + $0xc] sm:$0xf]
        %v863 = vld [vmem:[%s858 + $0x10] sm:$0xf]
        %v864 = vld [vmem:[%s858 + $0x14] sm:$0xf]
        %v865 = vld [vmem:[%s858 + $0x18] sm:$0xf]
        %v866 = vld [vmem:[%s858 + $0x1c] sm:$0xf]
        %v867 = vld [vmem:[%s858 + $0x20] sm:$0xf]
        %v868 = vld [vmem:[%s858 + $0x24] sm:$0xf]
        %v869 = vld [vmem:[%s858 + $0x28] sm:$0xf]
        %v870 = vld [vmem:[%s858 + $0x2c] sm:$0xf]
        %v871 = vld [vmem:[%s858 + $0x30] sm:$0xf]
        %v872 = vld [vmem:[%s858 + $0x34] sm:$0xf]
        %v873 = vld [vmem:[%s858 + $0x38] sm:$0xf]
        %v874 = vld [vmem:[%s858 + $0x3c] sm:$0xf]
        %v875 = vrot.slane %v619, 1
        %v876 = vrot.slane %v741, 1
        %v877 = vsel %vm483, %v875, %v876
        %v896 = vunpack.c.l.b16 %v859
        %v897 = vunpack.c.l.b16 %v860
        %v898 = vunpack.c.l.b16 %v861
        %v899 = vunpack.c.l.b16 %v862
        %v900 = vunpack.c.l.b16 %v863
        %v901 = vunpack.c.l.b16 %v864
        %v902 = vunpack.c.l.b16 %v865
        %v903 = vunpack.c.l.b16 %v866
        %v904 = vunpack.c.l.b16 %v867
        %v905 = vunpack.c.l.b16 %v868
        %v906 = vunpack.c.l.b16 %v869
        %v907 = vunpack.c.l.b16 %v870
        %v908 = vunpack.c.l.b16 %v871
        %v909 = vunpack.c.l.b16 %v872
        %v910 = vunpack.c.l.b16 %v873
        %v911 = vunpack.c.l.b16 %v874
        %v912 = vpack.c.b16 %v897, %v896
        %v913 = vpack.c.b16 %v899, %v898
        %v914 = vpack.c.b16 %v901, %v900
        %v915 = vpack.c.b16 %v903, %v902
        %v916 = vpack.c.b16 %v905, %v904
        %v917 = vpack.c.b16 %v907, %v906
        %v918 = vpack.c.b16 %v909, %v908
        %v919 = vpack.c.b16 %v911, %v910
        %928 = vmatprep.subr.bf16.mxu0 0
        %929 = vmatpush1.bf16.msra.mxu0 %v912
        %930 = vmatprep.subr.bf16.mxu0 0
        %931 = vmatpush1.bf16.msra.mxu0 %v913
        %932 = vmatprep.subr.bf16.mxu0 0
        %933 = vmatpush1.bf16.msra.mxu0 %v914
        %934 = vmatprep.subr.bf16.mxu0 0
        %935 = vmatpush1.bf16.msra.mxu0 %v915
        %936 = vmatprep.subr.bf16.mxu0 0
        %937 = vmatpush1.bf16.msra.mxu0 %v916
        %938 = vmatprep.subr.bf16.mxu0 0
        %939 = vmatpush1.bf16.msra.mxu0 %v917
        %940 = vmatprep.subr.bf16.mxu0 0
        %941 = vmatpush1.bf16.msra.mxu0 %v918
        %942 = vmatprep.subr.bf16.mxu0 0
        %943 = vmatpush1.bf16.msra.mxu0 %v919
        %944 = vmatprep.subr.bf16.mxu0 0
        %945 = vmatpush1.bf16.msra.mxu0 0
        %946 = vmatprep.subr.bf16.mxu0 0
        %947 = vmatpush1.bf16.msra.mxu0 0
        %948 = vmatprep.subr.bf16.mxu0 0
        %949 = vmatpush1.bf16.msra.mxu0 0
        %950 = vmatprep.subr.bf16.mxu0 0
        %951 = vmatpush1.bf16.msra.mxu0 0
        %952 = vmatprep.subr.bf16.mxu0 0
        %953 = vmatpush1.bf16.msra.mxu0 0
        %954 = vmatprep.subr.bf16.mxu0 0
        %955 = vmatpush1.bf16.msra.mxu0 0
        %956 = vmatprep.subr.bf16.mxu0 0
        %957 = vmatpush1.bf16.msra.mxu0 0
        %958 = vmatprep.subr.bf16.mxu0 0
        %959 = vmatpush1.bf16.msra.mxu0 0
        %960 = vmatprep.mubr.bf16.mxu0 0
        %961 = vmatmul.mubr.bf16.gmra.mrb[0].mxu0 %v877
        %v962 = vpop.f32.mrb[0].mxu0
        %v963 = vadd.f32 0.0, %v962
        %v964 = vpop.f32.mrb[0].mxu0
        %v965 = vpop.f32.mrb[0].mxu0
        %v966 = vadd.f32 0.0, %v965
        %v967 = vpop.f32.mrb[0].mxu0
        %968 = vmatprep.mubr.bf16.mxu0 0
        %969 = vmatmul.mubr.bf16.gmra.mrb[0].mxu0 %v876
        %v970 = vpop.f32.mrb[0].mxu0
        %v971 = vadd.f32 0.0, %v970
        %v972 = vpop.f32.mrb[0].mxu0
        %v973 = vpop.f32.mrb[0].mxu0
        %v974 = vpop.f32.mrb[0].mxu0
        %975 = vdwg.mxu0
        %v976 = vadd.f32 %v855, %v963
        %v977 = vadd.f32 %v856, %v966
        %v978 = vadd.f32 %v857, %v971
        %s979 = sadd.s32 %s202, 2
        %s980 = smul.u32 %s979, 4
        %s981 = smul.addr %s980, 4
        %s982 = scalar_lea.vmem %s165, %s981
        %v983 = vld [vmem:[%s982] sm:$0xf]
        %v984 = vld [vmem:[%s982 + $0x4] sm:$0xf]
        %v985 = vld [vmem:[%s982 + $0x8] sm:$0xf]
        %v986 = vld [vmem:[%s982 + $0xc] sm:$0x1]
        %s987 = scalar_lea.vmem %s1, 384
        %v988 = vld [vmem:[%s987] sm:$0xf]
        %v989 = vld [vmem:[%s987 + $0x4] sm:$0xf]
        %v990 = vld [vmem:[%s987 + $0x8] sm:$0xf]
        %v991 = vld [vmem:[%s987 + $0xc] sm:$0xf]
        %v992 = vld [vmem:[%s987 + $0x10] sm:$0xf]
        %v993 = vld [vmem:[%s987 + $0x14] sm:$0xf]
        %v994 = vld [vmem:[%s987 + $0x18] sm:$0xf]
        %v995 = vld [vmem:[%s987 + $0x1c] sm:$0xf]
        %v996 = vld [vmem:[%s987 + $0x20] sm:$0xf]
        %v997 = vld [vmem:[%s987 + $0x24] sm:$0xf]
        %v998 = vld [vmem:[%s987 + $0x28] sm:$0xf]
        %v999 = vld [vmem:[%s987 + $0x2c] sm:$0xf]
        %v1000 = vld [vmem:[%s987 + $0x30] sm:$0xf]
        %v1001 = vld [vmem:[%s987 + $0x34] sm:$0xf]
        %v1002 = vld [vmem:[%s987 + $0x38] sm:$0xf]
        %v1003 = vld [vmem:[%s987 + $0x3c] sm:$0xf]
        %v1007 = vunpack.c.l.b16 %v983
        %v1008 = vunpack.c.l.b16 %v984
        %v1009 = vunpack.c.l.b16 %v985
        %v1010 = vpack.c.b16 %v1008, %v1007
        %v1011 = vpack.c.b16 %v1009, %v1009
        %v1030 = vunpack.c.l.b16 %v988
        %v1031 = vunpack.c.l.b16 %v989
        %v1032 = vunpack.c.l.b16 %v990
        %v1033 = vunpack.c.l.b16 %v991
        %v1034 = vunpack.c.l.b16 %v992
        %v1035 = vunpack.c.l.b16 %v993
        %v1036 = vunpack.c.l.b16 %v994
        %v1037 = vunpack.c.l.b16 %v995
        %v1038 = vunpack.c.l.b16 %v996
        %v1039 = vunpack.c.l.b16 %v997
        %v1040 = vunpack.c.l.b16 %v998
        %v1041 = vunpack.c.l.b16 %v999
        %v1042 = vunpack.c.l.b16 %v1000
        %v1043 = vunpack.c.l.b16 %v1001
        %v1044 = vunpack.c.l.b16 %v1002
        %v1045 = vunpack.c.l.b16 %v1003
        %v1046 = vpack.c.b16 %v1031, %v1030
        %v1047 = vpack.c.b16 %v1033, %v1032
        %v1048 = vpack.c.b16 %v1035, %v1034
        %v1049 = vpack.c.b16 %v1037, %v1036
        %v1050 = vpack.c.b16 %v1039, %v1038
        %v1051 = vpack.c.b16 %v1041, %v1040
        %v1052 = vpack.c.b16 %v1043, %v1042
        %v1053 = vpack.c.b16 %v1045, %v1044
        %1062 = vmatprep.subr.bf16.mxu0 0
        %1063 = vmatpush1.bf16.msra.mxu0 %v1046
        %1064 = vmatprep.subr.bf16.mxu0 0
        %1065 = vmatpush1.bf16.msra.mxu0 %v1047
        %1066 = vmatprep.subr.bf16.mxu0 0
        %1067 = vmatpush1.bf16.msra.mxu0 %v1048
        %1068 = vmatprep.subr.bf16.mxu0 0
        %1069 = vmatpush1.bf16.msra.mxu0 %v1049
        %1070 = vmatprep.subr.bf16.mxu0 0
        %1071 = vmatpush1.bf16.msra.mxu0 %v1050
        %1072 = vmatprep.subr.bf16.mxu0 0
        %1073 = vmatpush1.bf16.msra.mxu0 %v1051
        %1074 = vmatprep.subr.bf16.mxu0 0
        %1075 = vmatpush1.bf16.msra.mxu0 %v1052
        %1076 = vmatprep.subr.bf16.mxu0 0
        %1077 = vmatpush1.bf16.msra.mxu0 %v1053
        %1078 = vmatprep.subr.bf16.mxu0 0
        %1079 = vmatpush1.bf16.msra.mxu0 0
        %1080 = vmatprep.subr.bf16.mxu0 0
        %1081 = vmatpush1.bf16.msra.mxu0 0
        %1082 = vmatprep.subr.bf16.mxu0 0
        %1083 = vmatpush1.bf16.msra.mxu0 0
        %1084 = vmatprep.subr.bf16.mxu0 0
        %1085 = vmatpush1.bf16.msra.mxu0 0
        %1086 = vmatprep.subr.bf16.mxu0 0
        %1087 = vmatpush1.bf16.msra.mxu0 0
        %1088 = vmatprep.subr.bf16.mxu0 0
        %1089 = vmatpush1.bf16.msra.mxu0 0
        %1090 = vmatprep.subr.bf16.mxu0 0
        %1091 = vmatpush1.bf16.msra.mxu0 0
        %1092 = vmatprep.subr.bf16.mxu0 0
        %1093 = vmatpush1.bf16.msra.mxu0 0
        %1094 = vmatprep.mubr.bf16.mxu0 0
        %1095 = vmatmul.mubr.bf16.gmra.mrb[0].mxu0 %v1010
        %v1096 = vpop.f32.mrb[0].mxu0
        %v1097 = vadd.f32 0.0, %v1096
        %v1098 = vpop.f32.mrb[0].mxu0
        %v1099 = vpop.f32.mrb[0].mxu0
        %v1100 = vadd.f32 0.0, %v1099
        %v1101 = vpop.f32.mrb[0].mxu0
        %1102 = vmatprep.mubr.bf16.mxu0 0
        %1103 = vmatmul.mubr.bf16.gmra.mrb[0].mxu0 %v1011
        %v1104 = vpop.f32.mrb[0].mxu0
        %v1105 = vadd.f32 0.0, %v1104
        %v1106 = vpop.f32.mrb[0].mxu0
        %v1107 = vpop.f32.mrb[0].mxu0
        %v1108 = vpop.f32.mrb[0].mxu0
        %1109 = vdwg.mxu0
        %v1110 = vadd.f32 %v976, %v1097
        %v1111 = vadd.f32 %v977, %v1100
        %v1112 = vadd.f32 %v978, %v1105
        %s1113 = scalar_lea.vmem %s1, 448
        %v1114 = vld [vmem:[%s1113] sm:$0xf]
        %v1115 = vld [vmem:[%s1113 + $0x4] sm:$0xf]
        %v1116 = vld [vmem:[%s1113 + $0x8] sm:$0xf]
        %v1117 = vld [vmem:[%s1113 + $0xc] sm:$0xf]
        %v1118 = vld [vmem:[%s1113 + $0x10] sm:$0xf]
        %v1119 = vld [vmem:[%s1113 + $0x14] sm:$0xf]
        %v1120 = vld [vmem:[%s1113 + $0x18] sm:$0xf]
        %v1121 = vld [vmem:[%s1113 + $0x1c] sm:$0xf]
        %v1122 = vld [vmem:[%s1113 + $0x20] sm:$0xf]
        %v1123 = vld [vmem:[%s1113 + $0x24] sm:$0xf]
        %v1124 = vld [vmem:[%s1113 + $0x28] sm:$0xf]
        %v1125 = vld [vmem:[%s1113 + $0x2c] sm:$0xf]
        %v1126 = vld [vmem:[%s1113 + $0x30] sm:$0xf]
        %v1127 = vld [vmem:[%s1113 + $0x34] sm:$0xf]
        %v1128 = vld [vmem:[%s1113 + $0x38] sm:$0xf]
        %v1129 = vld [vmem:[%s1113 + $0x3c] sm:$0xf]
        %v1131 = vunpack.c.l.b16 %v986
        %v1132 = vpack.c.b16 %v1131, %v1009
        %v1134 = vshrl.u32 %v1010, 16
        %v1136 = vshll.u32 %v1010, 16
        %v1138 = vrot.slane %v1136, 1
        %v1139 = vor.u32 %v1134, %v1138
        %v1141 = vshll.u32 %v1132, 16
        %v1143 = vrot.slane %v1141, 1
        %v1144 = vsel %vm253, %v1139, %v1143
        %v1145 = vshrl.u32 %v1132, 16
        %v1147 = vor.u32 %v1145, %v1143
        %v1166 = vunpack.c.l.b16 %v1114
        %v1167 = vunpack.c.l.b16 %v1115
        %v1168 = vunpack.c.l.b16 %v1116
        %v1169 = vunpack.c.l.b16 %v1117
        %v1170 = vunpack.c.l.b16 %v1118
        %v1171 = vunpack.c.l.b16 %v1119
        %v1172 = vunpack.c.l.b16 %v1120
        %v1173 = vunpack.c.l.b16 %v1121
        %v1174 = vunpack.c.l.b16 %v1122
        %v1175 = vunpack.c.l.b16 %v1123
        %v1176 = vunpack.c.l.b16 %v1124
        %v1177 = vunpack.c.l.b16 %v1125
        %v1178 = vunpack.c.l.b16 %v1126
        %v1179 = vunpack.c.l.b16 %v1127
        %v1180 = vunpack.c.l.b16 %v1128
        %v1181 = vunpack.c.l.b16 %v1129
        %v1182 = vpack.c.b16 %v1167, %v1166
        %v1183 = vpack.c.b16 %v1169, %v1168
        %v1184 = vpack.c.b16 %v1171, %v1170
        %v1185 = vpack.c.b16 %v1173, %v1172
        %v1186 = vpack.c.b16 %v1175, %v1174
        %v1187 = vpack.c.b16 %v1177, %v1176
        %v1188 = vpack.c.b16 %v1179, %v1178
        %v1189 = vpack.c.b16 %v1181, %v1180
        %1198 = vmatprep.subr.bf16.mxu0 0
        %1199 = vmatpush1.bf16.msra.mxu0 %v1182
        %1200 = vmatprep.subr.bf16.mxu0 0
        %1201 = vmatpush1.bf16.msra.mxu0 %v1183
        %1202 = vmatprep.subr.bf16.mxu0 0
        %1203 = vmatpush1.bf16.msra.mxu0 %v1184
        %1204 = vmatprep.subr.bf16.mxu0 0
        %1205 = vmatpush1.bf16.msra.mxu0 %v1185
        %1206 = vmatprep.subr.bf16.mxu0 0
        %1207 = vmatpush1.bf16.msra.mxu0 %v1186
        %1208 = vmatprep.subr.bf16.mxu0 0
        %1209 = vmatpush1.bf16.msra.mxu0 %v1187
        %1210 = vmatprep.subr.bf16.mxu0 0
        %1211 = vmatpush1.bf16.msra.mxu0 %v1188
        %1212 = vmatprep.subr.bf16.mxu0 0
        %1213 = vmatpush1.bf16.msra.mxu0 %v1189
        %1214 = vmatprep.subr.bf16.mxu0 0
        %1215 = vmatpush1.bf16.msra.mxu0 0
        %1216 = vmatprep.subr.bf16.mxu0 0
        %1217 = vmatpush1.bf16.msra.mxu0 0
        %1218 = vmatprep.subr.bf16.mxu0 0
        %1219 = vmatpush1.bf16.msra.mxu0 0
        %1220 = vmatprep.subr.bf16.mxu0 0
        %1221 = vmatpush1.bf16.msra.mxu0 0
        %1222 = vmatprep.subr.bf16.mxu0 0
        %1223 = vmatpush1.bf16.msra.mxu0 0
        %1224 = vmatprep.subr.bf16.mxu0 0
        %1225 = vmatpush1.bf16.msra.mxu0 0
        %1226 = vmatprep.subr.bf16.mxu0 0
        %1227 = vmatpush1.bf16.msra.mxu0 0
        %1228 = vmatprep.subr.bf16.mxu0 0
        %1229 = vmatpush1.bf16.msra.mxu0 0
        %1230 = vmatprep.mubr.bf16.mxu0 0
        %1231 = vmatmul.mubr.bf16.gmra.mrb[0].mxu0 %v1144
        %v1232 = vpop.f32.mrb[0].mxu0
        %v1233 = vadd.f32 0.0, %v1232
        %v1234 = vpop.f32.mrb[0].mxu0
        %v1235 = vpop.f32.mrb[0].mxu0
        %v1236 = vadd.f32 0.0, %v1235
        %v1237 = vpop.f32.mrb[0].mxu0
        %1238 = vmatprep.mubr.bf16.mxu0 0
        %1239 = vmatmul.mubr.bf16.gmra.mrb[0].mxu0 %v1147
        %v1240 = vpop.f32.mrb[0].mxu0
        %v1241 = vadd.f32 0.0, %v1240
        %v1242 = vpop.f32.mrb[0].mxu0
        %v1243 = vpop.f32.mrb[0].mxu0
        %v1244 = vpop.f32.mrb[0].mxu0
        %1245 = vdwg.mxu0
        %v1246 = vadd.f32 %v1110, %v1233
        %v1247 = vadd.f32 %v1111, %v1236
        %v1248 = vadd.f32 %v1112, %v1241
        %s1249 = scalar_lea.vmem %s1, 512
        %v1250 = vld [vmem:[%s1249] sm:$0xf]
        %v1251 = vld [vmem:[%s1249 + $0x4] sm:$0xf]
        %v1252 = vld [vmem:[%s1249 + $0x8] sm:$0xf]
        %v1253 = vld [vmem:[%s1249 + $0xc] sm:$0xf]
        %v1254 = vld [vmem:[%s1249 + $0x10] sm:$0xf]
        %v1255 = vld [vmem:[%s1249 + $0x14] sm:$0xf]
        %v1256 = vld [vmem:[%s1249 + $0x18] sm:$0xf]
        %v1257 = vld [vmem:[%s1249 + $0x1c] sm:$0xf]
        %v1258 = vld [vmem:[%s1249 + $0x20] sm:$0xf]
        %v1259 = vld [vmem:[%s1249 + $0x24] sm:$0xf]
        %v1260 = vld [vmem:[%s1249 + $0x28] sm:$0xf]
        %v1261 = vld [vmem:[%s1249 + $0x2c] sm:$0xf]
        %v1262 = vld [vmem:[%s1249 + $0x30] sm:$0xf]
        %v1263 = vld [vmem:[%s1249 + $0x34] sm:$0xf]
        %v1264 = vld [vmem:[%s1249 + $0x38] sm:$0xf]
        %v1265 = vld [vmem:[%s1249 + $0x3c] sm:$0xf]
        %v1266 = vrot.slane %v1010, 1
        %v1267 = vrot.slane %v1132, 1
        %v1268 = vsel %vm483, %v1266, %v1267
        %v1287 = vunpack.c.l.b16 %v1250
        %v1288 = vunpack.c.l.b16 %v1251
        %v1289 = vunpack.c.l.b16 %v1252
        %v1290 = vunpack.c.l.b16 %v1253
        %v1291 = vunpack.c.l.b16 %v1254
        %v1292 = vunpack.c.l.b16 %v1255
        %v1293 = vunpack.c.l.b16 %v1256
        %v1294 = vunpack.c.l.b16 %v1257
        %v1295 = vunpack.c.l.b16 %v1258
        %v1296 = vunpack.c.l.b16 %v1259
        %v1297 = vunpack.c.l.b16 %v1260
        %v1298 = vunpack.c.l.b16 %v1261
        %v1299 = vunpack.c.l.b16 %v1262
        %v1300 = vunpack.c.l.b16 %v1263
        %v1301 = vunpack.c.l.b16 %v1264
        %v1302 = vunpack.c.l.b16 %v1265
        %v1303 = vpack.c.b16 %v1288, %v1287
        %v1304 = vpack.c.b16 %v1290, %v1289
        %v1305 = vpack.c.b16 %v1292, %v1291
        %v1306 = vpack.c.b16 %v1294, %v1293
        %v1307 = vpack.c.b16 %v1296, %v1295
        %v1308 = vpack.c.b16 %v1298, %v1297
        %v1309 = vpack.c.b16 %v1300, %v1299
        %v1310 = vpack.c.b16 %v1302, %v1301
        %1319 = vmatprep.subr.bf16.mxu0 0
        %1320 = vmatpush1.bf16.msra.mxu0 %v1303
        %1321 = vmatprep.subr.bf16.mxu0 0
        %1322 = vmatpush1.bf16.msra.mxu0 %v1304
        %1323 = vmatprep.subr.bf16.mxu0 0
        %1324 = vmatpush1.bf16.msra.mxu0 %v1305
        %1325 = vmatprep.subr.bf16.mxu0 0
        %1326 = vmatpush1.bf16.msra.mxu0 %v1306
        %1327 = vmatprep.subr.bf16.mxu0 0
        %1328 = vmatpush1.bf16.msra.mxu0 %v1307
        %1329 = vmatprep.subr.bf16.mxu0 0
        %1330 = vmatpush1.bf16.msra.mxu0 %v1308
        %1331 = vmatprep.subr.bf16.mxu0 0
        %1332 = vmatpush1.bf16.msra.mxu0 %v1309
        %1333 = vmatprep.subr.bf16.mxu0 0
        %1334 = vmatpush1.bf16.msra.mxu0 %v1310
        %1335 = vmatprep.subr.bf16.mxu0 0
        %1336 = vmatpush1.bf16.msra.mxu0 0
        %1337 = vmatprep.subr.bf16.mxu0 0
        %1338 = vmatpush1.bf16.msra.mxu0 0
        %1339 = vmatprep.subr.bf16.mxu0 0
        %1340 = vmatpush1.bf16.msra.mxu0 0
        %1341 = vmatprep.subr.bf16.mxu0 0
        %1342 = vmatpush1.bf16.msra.mxu0 0
        %1343 = vmatprep.subr.bf16.mxu0 0
        %1344 = vmatpush1.bf16.msra.mxu0 0
        %1345 = vmatprep.subr.bf16.mxu0 0
        %1346 = vmatpush1.bf16.msra.mxu0 0
        %1347 = vmatprep.subr.bf16.mxu0 0
        %1348 = vmatpush1.bf16.msra.mxu0 0
        %1349 = vmatprep.subr.bf16.mxu0 0
        %1350 = vmatpush1.bf16.msra.mxu0 0
        %1351 = vmatprep.mubr.bf16.mxu0 0
        %1352 = vmatmul.mubr.bf16.gmra.mrb[0].mxu0 %v1268
        %v1353 = vpop.f32.mrb[0].mxu0
        %v1354 = vadd.f32 0.0, %v1353
        %v1355 = vpop.f32.mrb[0].mxu0
        %v1356 = vpop.f32.mrb[0].mxu0
        %v1357 = vadd.f32 0.0, %v1356
        %v1358 = vpop.f32.mrb[0].mxu0
        %1359 = vmatprep.mubr.bf16.mxu0 0
        %1360 = vmatmul.mubr.bf16.gmra.mrb[0].mxu0 %v1267
        %v1361 = vpop.f32.mrb[0].mxu0
        %v1362 = vadd.f32 0.0, %v1361
        %v1363 = vpop.f32.mrb[0].mxu0
        %v1364 = vpop.f32.mrb[0].mxu0
        %v1365 = vpop.f32.mrb[0].mxu0
        %1366 = vdwg.mxu0
        %v1367 = vadd.f32 %v1246, %v1354
        %v1368 = vadd.f32 %v1247, %v1357
        %v1369 = vadd.f32 %v1248, %v1362
        %v1370 = vlaneseq
        %v1371 = vshrl.u32 %v1370, 7
        %v1372 = vsub.s32 0, %v1371
        %v1373 = vrot.slane %v172, %v1372
        %v1374 = vadd.f32 %v1367, %v1373
        %v1375 = vadd.f32 %v1368, %v1373
        %v1376 = vadd.f32 %v1369, %v1373
        %vm1377 = vcmp.ge.f32.partialorder %v1374, 0.0
        %vm1378 = vcmp.ge.f32.partialorder %v1375, 0.0
        %vm1379 = vcmp.ge.f32.partialorder %v1376, 0.0
        %v1380 = vmul.f32 %v1374, 0.2
        %v1381 = vmul.f32 %v1375, 0.2
        %v1382 = vmul.f32 %v1376, 0.2
        %v1383 = vsel %vm1377, %v1374, %v1380
        %v1384 = vsel %vm1378, %v1375, %v1381
        %v1385 = vsel %vm1379, %v1376, %v1382
        %v1386 = vlaneseq
        %v1387 = vshrl.u32 %v1386, 7
        %v1388 = vsub.s32 0, %v1387
        %v1389 = vrot.slane %v173, %v1388
        %v1390 = vmul.f32 %v1383, %v1389
        %v1391 = vmul.f32 %v1384, %v1389
        %v1392 = vmul.f32 %v1385, %v1389
        %v1393 = vlaneseq
        %v1394 = vshrl.u32 %v1393, 7
        %v1395 = vsub.s32 0, %v1394
        %v1396 = vrot.slane %v174, %v1395
        %v1397 = vadd.f32 %v1390, %v1396
        %v1398 = vadd.f32 %v1391, %v1396
        %v1399 = vadd.f32 %v1392, %v1396
        %1400 = vmatprep.subr.bf16.mxu0 0
        %1401 = vmatpush1.bf16.msra.mxu0 %v303
        %1402 = vmatprep.subr.bf16.mxu0 0
        %1403 = vmatpush1.bf16.msra.mxu0 %v304
        %1404 = vmatprep.subr.bf16.mxu0 0
        %1405 = vmatpush1.bf16.msra.mxu0 %v305
        %1406 = vmatprep.subr.bf16.mxu0 0
        %1407 = vmatpush1.bf16.msra.mxu0 %v306
        %1408 = vmatprep.subr.bf16.mxu0 0
        %1409 = vmatpush1.bf16.msra.mxu0 %v307
        %1410 = vmatprep.subr.bf16.mxu0 0
        %1411 = vmatpush1.bf16.msra.mxu0 %v308
        %1412 = vmatprep.subr.bf16.mxu0 0
        %1413 = vmatpush1.bf16.msra.mxu0 %v309
        %1414 = vmatprep.subr.bf16.mxu0 0
        %1415 = vmatpush1.bf16.msra.mxu0 %v310
        %1416 = vmatprep.subr.bf16.mxu0 0
        %1417 = vmatpush1.bf16.msra.mxu0 0
        %1418 = vmatprep.subr.bf16.mxu0 0
        %1419 = vmatpush1.bf16.msra.mxu0 0
        %1420 = vmatprep.subr.bf16.mxu0 0
        %1421 = vmatpush1.bf16.msra.mxu0 0
        %1422 = vmatprep.subr.bf16.mxu0 0
        %1423 = vmatpush1.bf16.msra.mxu0 0
        %1424 = vmatprep.subr.bf16.mxu0 0
        %1425 = vmatpush1.bf16.msra.mxu0 0
        %1426 = vmatprep.subr.bf16.mxu0 0
        %1427 = vmatpush1.bf16.msra.mxu0 0
        %1428 = vmatprep.subr.bf16.mxu0 0
        %1429 = vmatpush1.bf16.msra.mxu0 0
        %1430 = vmatprep.subr.bf16.mxu0 0
        %1431 = vmatpush1.bf16.msra.mxu0 0
        %1432 = vmatprep.mubr.bf16.mxu0 0
        %1433 = vmatmul.mubr.bf16.gmra.mrb[0].mxu0 %v753
        %v1434 = vpop.f32.mrb[0].mxu0
        %v1435 = vadd.f32 0.0, %v1434
        %v1436 = vpop.f32.mrb[0].mxu0
        %v1437 = vpop.f32.mrb[0].mxu0
        %v1438 = vadd.f32 0.0, %v1437
        %v1439 = vpop.f32.mrb[0].mxu0
        %1440 = vmatprep.mubr.bf16.mxu0 0
        %1441 = vmatmul.mubr.bf16.gmra.mrb[0].mxu0 %v756
        %v1442 = vpop.f32.mrb[0].mxu0
        %v1443 = vadd.f32 0.0, %v1442
        %v1444 = vpop.f32.mrb[0].mxu0
        %v1445 = vpop.f32.mrb[0].mxu0
        %v1446 = vpop.f32.mrb[0].mxu0
        %1447 = vdwg.mxu0
        %1448 = vmatprep.subr.bf16.mxu0 0
        %1449 = vmatpush1.bf16.msra.mxu0 %v402
        %1450 = vmatprep.subr.bf16.mxu0 0
        %1451 = vmatpush1.bf16.msra.mxu0 %v403
        %1452 = vmatprep.subr.bf16.mxu0 0
        %1453 = vmatpush1.bf16.msra.mxu0 %v404
        %1454 = vmatprep.subr.bf16.mxu0 0
        %1455 = vmatpush1.bf16.msra.mxu0 %v405
        %1456 = vmatprep.subr.bf16.mxu0 0
        %1457 = vmatpush1.bf16.msra.mxu0 %v406
        %1458 = vmatprep.subr.bf16.mxu0 0
        %1459 = vmatpush1.bf16.msra.mxu0 %v407
        %1460 = vmatprep.subr.bf16.mxu0 0
        %1461 = vmatpush1.bf16.msra.mxu0 %v408
        %1462 = vmatprep.subr.bf16.mxu0 0
        %1463 = vmatpush1.bf16.msra.mxu0 %v409
        %1464 = vmatprep.subr.bf16.mxu0 0
        %1465 = vmatpush1.bf16.msra.mxu0 0
        %1466 = vmatprep.subr.bf16.mxu0 0
        %1467 = vmatpush1.bf16.msra.mxu0 0
        %1468 = vmatprep.subr.bf16.mxu0 0
        %1469 = vmatpush1.bf16.msra.mxu0 0
        %1470 = vmatprep.subr.bf16.mxu0 0
        %1471 = vmatpush1.bf16.msra.mxu0 0
        %1472 = vmatprep.subr.bf16.mxu0 0
        %1473 = vmatpush1.bf16.msra.mxu0 0
        %1474 = vmatprep.subr.bf16.mxu0 0
        %1475 = vmatpush1.bf16.msra.mxu0 0
        %1476 = vmatprep.subr.bf16.mxu0 0
        %1477 = vmatpush1.bf16.msra.mxu0 0
        %1478 = vmatprep.subr.bf16.mxu0 0
        %1479 = vmatpush1.bf16.msra.mxu0 0
        %1480 = vmatprep.mubr.bf16.mxu0 0
        %1481 = vmatmul.mubr.bf16.gmra.mrb[0].mxu0 %v619
        %v1482 = vpop.f32.mrb[0].mxu0
        %v1483 = vadd.f32 %v1435, %v1482
        %v1484 = vpop.f32.mrb[0].mxu0
        %v1485 = vpop.f32.mrb[0].mxu0
        %v1486 = vadd.f32 %v1438, %v1485
        %v1487 = vpop.f32.mrb[0].mxu0
        %1488 = vmatprep.mubr.bf16.mxu0 0
        %1489 = vmatmul.mubr.bf16.gmra.mrb[0].mxu0 %v620
        %v1490 = vpop.f32.mrb[0].mxu0
        %v1491 = vadd.f32 %v1443, %v1490
        %v1492 = vpop.f32.mrb[0].mxu0
        %v1493 = vpop.f32.mrb[0].mxu0
        %v1494 = vpop.f32.mrb[0].mxu0
        %1495 = vdwg.mxu0
        %1496 = vmatprep.subr.bf16.mxu0 0
        %1497 = vmatpush1.bf16.msra.mxu0 %v521
        %1498 = vmatprep.subr.bf16.mxu0 0
        %1499 = vmatpush1.bf16.msra.mxu0 %v522
        %1500 = vmatprep.subr.bf16.mxu0 0
        %1501 = vmatpush1.bf16.msra.mxu0 %v523
        %1502 = vmatprep.subr.bf16.mxu0 0
        %1503 = vmatpush1.bf16.msra.mxu0 %v524
        %1504 = vmatprep.subr.bf16.mxu0 0
        %1505 = vmatpush1.bf16.msra.mxu0 %v525
        %1506 = vmatprep.subr.bf16.mxu0 0
        %1507 = vmatpush1.bf16.msra.mxu0 %v526
        %1508 = vmatprep.subr.bf16.mxu0 0
        %1509 = vmatpush1.bf16.msra.mxu0 %v527
        %1510 = vmatprep.subr.bf16.mxu0 0
        %1511 = vmatpush1.bf16.msra.mxu0 %v528
        %1512 = vmatprep.subr.bf16.mxu0 0
        %1513 = vmatpush1.bf16.msra.mxu0 0
        %1514 = vmatprep.subr.bf16.mxu0 0
        %1515 = vmatpush1.bf16.msra.mxu0 0
        %1516 = vmatprep.subr.bf16.mxu0 0
        %1517 = vmatpush1.bf16.msra.mxu0 0
        %1518 = vmatprep.subr.bf16.mxu0 0
        %1519 = vmatpush1.bf16.msra.mxu0 0
        %1520 = vmatprep.subr.bf16.mxu0 0
        %1521 = vmatpush1.bf16.msra.mxu0 0
        %1522 = vmatprep.subr.bf16.mxu0 0
        %1523 = vmatpush1.bf16.msra.mxu0 0
        %1524 = vmatprep.subr.bf16.mxu0 0
        %1525 = vmatpush1.bf16.msra.mxu0 0
        %1526 = vmatprep.subr.bf16.mxu0 0
        %1527 = vmatpush1.bf16.msra.mxu0 0
        %1528 = vmatprep.mubr.bf16.mxu0 0
        %1529 = vmatmul.mubr.bf16.gmra.mrb[0].mxu0 %v877
        %v1530 = vpop.f32.mrb[0].mxu0
        %v1531 = vadd.f32 0.0, %v1530
        %v1532 = vpop.f32.mrb[0].mxu0
        %v1533 = vpop.f32.mrb[0].mxu0
        %v1534 = vadd.f32 0.0, %v1533
        %v1535 = vpop.f32.mrb[0].mxu0
        %1536 = vmatprep.mubr.bf16.mxu0 0
        %1537 = vmatmul.mubr.bf16.gmra.mrb[0].mxu0 %v876
        %v1538 = vpop.f32.mrb[0].mxu0
        %v1539 = vadd.f32 0.0, %v1538
        %v1540 = vpop.f32.mrb[0].mxu0
        %v1541 = vpop.f32.mrb[0].mxu0
        %v1542 = vpop.f32.mrb[0].mxu0
        %1543 = vdwg.mxu0
        %v1544 = vadd.f32 %v1483, %v1531
        %v1545 = vadd.f32 %v1486, %v1534
        %v1546 = vadd.f32 %v1491, %v1539
        %1547 = vmatprep.subr.bf16.mxu0 0
        %1548 = vmatpush1.bf16.msra.mxu0 %v655
        %1549 = vmatprep.subr.bf16.mxu0 0
        %1550 = vmatpush1.bf16.msra.mxu0 %v656
        %1551 = vmatprep.subr.bf16.mxu0 0
        %1552 = vmatpush1.bf16.msra.mxu0 %v657
        %1553 = vmatprep.subr.bf16.mxu0 0
        %1554 = vmatpush1.bf16.msra.mxu0 %v658
        %1555 = vmatprep.subr.bf16.mxu0 0
        %1556 = vmatpush1.bf16.msra.mxu0 %v659
        %1557 = vmatprep.subr.bf16.mxu0 0
        %1558 = vmatpush1.bf16.msra.mxu0 %v660
        %1559 = vmatprep.subr.bf16.mxu0 0
        %1560 = vmatpush1.bf16.msra.mxu0 %v661
        %1561 = vmatprep.subr.bf16.mxu0 0
        %1562 = vmatpush1.bf16.msra.mxu0 %v662
        %1563 = vmatprep.subr.bf16.mxu0 0
        %1564 = vmatpush1.bf16.msra.mxu0 0
        %1565 = vmatprep.subr.bf16.mxu0 0
        %1566 = vmatpush1.bf16.msra.mxu0 0
        %1567 = vmatprep.subr.bf16.mxu0 0
        %1568 = vmatpush1.bf16.msra.mxu0 0
        %1569 = vmatprep.subr.bf16.mxu0 0
        %1570 = vmatpush1.bf16.msra.mxu0 0
        %1571 = vmatprep.subr.bf16.mxu0 0
        %1572 = vmatpush1.bf16.msra.mxu0 0
        %1573 = vmatprep.subr.bf16.mxu0 0
        %1574 = vmatpush1.bf16.msra.mxu0 0
        %1575 = vmatprep.subr.bf16.mxu0 0
        %1576 = vmatpush1.bf16.msra.mxu0 0
        %1577 = vmatprep.subr.bf16.mxu0 0
        %1578 = vmatpush1.bf16.msra.mxu0 0
        %1579 = vmatprep.mubr.bf16.mxu0 0
        %1580 = vmatmul.mubr.bf16.gmra.mrb[0].mxu0 %v1010
        %v1581 = vpop.f32.mrb[0].mxu0
        %v1582 = vadd.f32 0.0, %v1581
        %v1583 = vpop.f32.mrb[0].mxu0
        %v1584 = vpop.f32.mrb[0].mxu0
        %v1585 = vadd.f32 0.0, %v1584
        %v1586 = vpop.f32.mrb[0].mxu0
        %1587 = vmatprep.mubr.bf16.mxu0 0
        %1588 = vmatmul.mubr.bf16.gmra.mrb[0].mxu0 %v1011
        %v1589 = vpop.f32.mrb[0].mxu0
        %v1590 = vadd.f32 0.0, %v1589
        %v1591 = vpop.f32.mrb[0].mxu0
        %v1592 = vpop.f32.mrb[0].mxu0
        %v1593 = vpop.f32.mrb[0].mxu0
        %1594 = vdwg.mxu0
        %v1595 = vadd.f32 %v1544, %v1582
        %v1596 = vadd.f32 %v1545, %v1585
        %v1597 = vadd.f32 %v1546, %v1590
        %1598 = vmatprep.subr.bf16.mxu0 0
        %1599 = vmatpush1.bf16.msra.mxu0 %v791
        %1600 = vmatprep.subr.bf16.mxu0 0
        %1601 = vmatpush1.bf16.msra.mxu0 %v792
        %1602 = vmatprep.subr.bf16.mxu0 0
        %1603 = vmatpush1.bf16.msra.mxu0 %v793
        %1604 = vmatprep.subr.bf16.mxu0 0
        %1605 = vmatpush1.bf16.msra.mxu0 %v794
        %1606 = vmatprep.subr.bf16.mxu0 0
        %1607 = vmatpush1.bf16.msra.mxu0 %v795
        %1608 = vmatprep.subr.bf16.mxu0 0
        %1609 = vmatpush1.bf16.msra.mxu0 %v796
        %1610 = vmatprep.subr.bf16.mxu0 0
        %1611 = vmatpush1.bf16.msra.mxu0 %v797
        %1612 = vmatprep.subr.bf16.mxu0 0
        %1613 = vmatpush1.bf16.msra.mxu0 %v798
        %1614 = vmatprep.subr.bf16.mxu0 0
        %1615 = vmatpush1.bf16.msra.mxu0 0
        %1616 = vmatprep.subr.bf16.mxu0 0
        %1617 = vmatpush1.bf16.msra.mxu0 0
        %1618 = vmatprep.subr.bf16.mxu0 0
        %1619 = vmatpush1.bf16.msra.mxu0 0
        %1620 = vmatprep.subr.bf16.mxu0 0
        %1621 = vmatpush1.bf16.msra.mxu0 0
        %1622 = vmatprep.subr.bf16.mxu0 0
        %1623 = vmatpush1.bf16.msra.mxu0 0
        %1624 = vmatprep.subr.bf16.mxu0 0
        %1625 = vmatpush1.bf16.msra.mxu0 0
        %1626 = vmatprep.subr.bf16.mxu0 0
        %1627 = vmatpush1.bf16.msra.mxu0 0
        %1628 = vmatprep.subr.bf16.mxu0 0
        %1629 = vmatpush1.bf16.msra.mxu0 0
        %1630 = vmatprep.mubr.bf16.mxu0 0
        %1631 = vmatmul.mubr.bf16.gmra.mrb[0].mxu0 %v1144
        %v1632 = vpop.f32.mrb[0].mxu0
        %v1633 = vadd.f32 0.0, %v1632
        %v1634 = vpop.f32.mrb[0].mxu0
        %v1635 = vpop.f32.mrb[0].mxu0
        %v1636 = vadd.f32 0.0, %v1635
        %v1637 = vpop.f32.mrb[0].mxu0
        %1638 = vmatprep.mubr.bf16.mxu0 0
        %1639 = vmatmul.mubr.bf16.gmra.mrb[0].mxu0 %v1147
        %v1640 = vpop.f32.mrb[0].mxu0
        %v1641 = vadd.f32 0.0, %v1640
        %v1642 = vpop.f32.mrb[0].mxu0
        %v1643 = vpop.f32.mrb[0].mxu0
        %v1644 = vpop.f32.mrb[0].mxu0
        %1645 = vdwg.mxu0
        %v1646 = vadd.f32 %v1595, %v1633
        %v1647 = vadd.f32 %v1596, %v1636
        %v1648 = vadd.f32 %v1597, %v1641
        %1649 = vmatprep.subr.bf16.mxu0 0
        %1650 = vmatpush1.bf16.msra.mxu0 %v912
        %1651 = vmatprep.subr.bf16.mxu0 0
        %1652 = vmatpush1.bf16.msra.mxu0 %v913
        %1653 = vmatprep.subr.bf16.mxu0 0
        %1654 = vmatpush1.bf16.msra.mxu0 %v914
        %1655 = vmatprep.subr.bf16.mxu0 0
        %1656 = vmatpush1.bf16.msra.mxu0 %v915
        %1657 = vmatprep.subr.bf16.mxu0 0
        %1658 = vmatpush1.bf16.msra.mxu0 %v916
        %1659 = vmatprep.subr.bf16.mxu0 0
        %1660 = vmatpush1.bf16.msra.mxu0 %v917
        %1661 = vmatprep.subr.bf16.mxu0 0
        %1662 = vmatpush1.bf16.msra.mxu0 %v918
        %1663 = vmatprep.subr.bf16.mxu0 0
        %1664 = vmatpush1.bf16.msra.mxu0 %v919
        %1665 = vmatprep.subr.bf16.mxu0 0
        %1666 = vmatpush1.bf16.msra.mxu0 0
        %1667 = vmatprep.subr.bf16.mxu0 0
        %1668 = vmatpush1.bf16.msra.mxu0 0
        %1669 = vmatprep.subr.bf16.mxu0 0
        %1670 = vmatpush1.bf16.msra.mxu0 0
        %1671 = vmatprep.subr.bf16.mxu0 0
        %1672 = vmatpush1.bf16.msra.mxu0 0
        %1673 = vmatprep.subr.bf16.mxu0 0
        %1674 = vmatpush1.bf16.msra.mxu0 0
        %1675 = vmatprep.subr.bf16.mxu0 0
        %1676 = vmatpush1.bf16.msra.mxu0 0
        %1677 = vmatprep.subr.bf16.mxu0 0
        %1678 = vmatpush1.bf16.msra.mxu0 0
        %1679 = vmatprep.subr.bf16.mxu0 0
        %1680 = vmatpush1.bf16.msra.mxu0 0
        %1681 = vmatprep.mubr.bf16.mxu0 0
        %1682 = vmatmul.mubr.bf16.gmra.mrb[0].mxu0 %v1268
        %v1683 = vpop.f32.mrb[0].mxu0
        %v1684 = vadd.f32 0.0, %v1683
        %v1685 = vpop.f32.mrb[0].mxu0
        %v1686 = vpop.f32.mrb[0].mxu0
        %v1687 = vadd.f32 0.0, %v1686
        %v1688 = vpop.f32.mrb[0].mxu0
        %1689 = vmatprep.mubr.bf16.mxu0 0
        %1690 = vmatmul.mubr.bf16.gmra.mrb[0].mxu0 %v1267
        %v1691 = vpop.f32.mrb[0].mxu0
        %v1692 = vadd.f32 0.0, %v1691
        %v1693 = vpop.f32.mrb[0].mxu0
        %v1694 = vpop.f32.mrb[0].mxu0
        %v1695 = vpop.f32.mrb[0].mxu0
        %1696 = vdwg.mxu0
        %v1697 = vadd.f32 %v1646, %v1684
        %v1698 = vadd.f32 %v1647, %v1687
        %v1699 = vadd.f32 %v1648, %v1692
        %s1700 = sadd.s32 %s202, 3
        %s1701 = smul.u32 %s1700, 4
        %s1702 = smul.addr %s1701, 4
        %s1703 = scalar_lea.vmem %s165, %s1702
        %v1704 = vld [vmem:[%s1703] sm:$0xf]
        %v1705 = vld [vmem:[%s1703 + $0x4] sm:$0xf]
        %v1706 = vld [vmem:[%s1703 + $0x8] sm:$0xf]
        %v1707 = vld [vmem:[%s1703 + $0xc] sm:$0x1]
        %v1711 = vunpack.c.l.b16 %v1704
        %v1712 = vunpack.c.l.b16 %v1705
        %v1713 = vunpack.c.l.b16 %v1706
        %v1714 = vpack.c.b16 %v1712, %v1711
        %v1715 = vpack.c.b16 %v1713, %v1713
        %1718 = vmatprep.subr.bf16.mxu0 0
        %1719 = vmatpush1.bf16.msra.mxu0 %v1046
        %1720 = vmatprep.subr.bf16.mxu0 0
        %1721 = vmatpush1.bf16.msra.mxu0 %v1047
        %1722 = vmatprep.subr.bf16.mxu0 0
        %1723 = vmatpush1.bf16.msra.mxu0 %v1048
        %1724 = vmatprep.subr.bf16.mxu0 0
        %1725 = vmatpush1.bf16.msra.mxu0 %v1049
        %1726 = vmatprep.subr.bf16.mxu0 0
        %1727 = vmatpush1.bf16.msra.mxu0 %v1050
        %1728 = vmatprep.subr.bf16.mxu0 0
        %1729 = vmatpush1.bf16.msra.mxu0 %v1051
        %1730 = vmatprep.subr.bf16.mxu0 0
        %1731 = vmatpush1.bf16.msra.mxu0 %v1052
        %1732 = vmatprep.subr.bf16.mxu0 0
        %1733 = vmatpush1.bf16.msra.mxu0 %v1053
        %1734 = vmatprep.subr.bf16.mxu0 0
        %1735 = vmatpush1.bf16.msra.mxu0 0
        %1736 = vmatprep.subr.bf16.mxu0 0
        %1737 = vmatpush1.bf16.msra.mxu0 0
        %1738 = vmatprep.subr.bf16.mxu0 0
        %1739 = vmatpush1.bf16.msra.mxu0 0
        %1740 = vmatprep.subr.bf16.mxu0 0
        %1741 = vmatpush1.bf16.msra.mxu0 0
        %1742 = vmatprep.subr.bf16.mxu0 0
        %1743 = vmatpush1.bf16.msra.mxu0 0
        %1744 = vmatprep.subr.bf16.mxu0 0
        %1745 = vmatpush1.bf16.msra.mxu0 0
        %1746 = vmatprep.subr.bf16.mxu0 0
        %1747 = vmatpush1.bf16.msra.mxu0 0
        %1748 = vmatprep.subr.bf16.mxu0 0
        %1749 = vmatpush1.bf16.msra.mxu0 0
        %1750 = vmatprep.mubr.bf16.mxu0 0
        %1751 = vmatmul.mubr.bf16.gmra.mrb[0].mxu0 %v1714
        %v1752 = vpop.f32.mrb[0].mxu0
        %v1753 = vadd.f32 0.0, %v1752
        %v1754 = vpop.f32.mrb[0].mxu0
        %v1755 = vpop.f32.mrb[0].mxu0
        %v1756 = vadd.f32 0.0, %v1755
        %v1757 = vpop.f32.mrb[0].mxu0
        %1758 = vmatprep.mubr.bf16.mxu0 0
        %1759 = vmatmul.mubr.bf16.gmra.mrb[0].mxu0 %v1715
        %v1760 = vpop.f32.mrb[0].mxu0
        %v1761 = vadd.f32 0.0, %v1760
        %v1762 = vpop.f32.mrb[0].mxu0
        %v1763 = vpop.f32.mrb[0].mxu0
        %v1764 = vpop.f32.mrb[0].mxu0
        %1765 = vdwg.mxu0
        %v1766 = vadd.f32 %v1697, %v1753
        %v1767 = vadd.f32 %v1698, %v1756
        %v1768 = vadd.f32 %v1699, %v1761
        %v1770 = vunpack.c.l.b16 %v1707
        %v1771 = vpack.c.b16 %v1770, %v1713
        %v1773 = vshrl.u32 %v1714, 16
        %v1775 = vshll.u32 %v1714, 16
        %v1777 = vrot.slane %v1775, 1
        %v1778 = vor.u32 %v1773, %v1777
        %v1780 = vshll.u32 %v1771, 16
        %v1782 = vrot.slane %v1780, 1
        %v1783 = vsel %vm253, %v1778, %v1782
        %v1784 = vshrl.u32 %v1771, 16
        %v1786 = vor.u32 %v1784, %v1782
        %1789 = vmatprep.subr.bf16.mxu0 0
        %1790 = vmatpush1.bf16.msra.mxu0 %v1182
        %1791 = vmatprep.subr.bf16.mxu0 0
        %1792 = vmatpush1.bf16.msra.mxu0 %v1183
        %1793 = vmatprep.subr.bf16.mxu0 0
        %1794 = vmatpush1.bf16.msra.mxu0 %v1184
        %1795 = vmatprep.subr.bf16.mxu0 0
        %1796 = vmatpush1.bf16.msra.mxu0 %v1185
        %1797 = vmatprep.subr.bf16.mxu0 0
        %1798 = vmatpush1.bf16.msra.mxu0 %v1186
        %1799 = vmatprep.subr.bf16.mxu0 0
        %1800 = vmatpush1.bf16.msra.mxu0 %v1187
        %1801 = vmatprep.subr.bf16.mxu0 0
        %1802 = vmatpush1.bf16.msra.mxu0 %v1188
        %1803 = vmatprep.subr.bf16.mxu0 0
        %1804 = vmatpush1.bf16.msra.mxu0 %v1189
        %1805 = vmatprep.subr.bf16.mxu0 0
        %1806 = vmatpush1.bf16.msra.mxu0 0
        %1807 = vmatprep.subr.bf16.mxu0 0
        %1808 = vmatpush1.bf16.msra.mxu0 0
        %1809 = vmatprep.subr.bf16.mxu0 0
        %1810 = vmatpush1.bf16.msra.mxu0 0
        %1811 = vmatprep.subr.bf16.mxu0 0
        %1812 = vmatpush1.bf16.msra.mxu0 0
        %1813 = vmatprep.subr.bf16.mxu0 0
        %1814 = vmatpush1.bf16.msra.mxu0 0
        %1815 = vmatprep.subr.bf16.mxu0 0
        %1816 = vmatpush1.bf16.msra.mxu0 0
        %1817 = vmatprep.subr.bf16.mxu0 0
        %1818 = vmatpush1.bf16.msra.mxu0 0
        %1819 = vmatprep.subr.bf16.mxu0 0
        %1820 = vmatpush1.bf16.msra.mxu0 0
        %1821 = vmatprep.mubr.bf16.mxu0 0
        %1822 = vmatmul.mubr.bf16.gmra.mrb[0].mxu0 %v1783
        %v1823 = vpop.f32.mrb[0].mxu0
        %v1824 = vadd.f32 0.0, %v1823
        %v1825 = vpop.f32.mrb[0].mxu0
        %v1826 = vpop.f32.mrb[0].mxu0
        %v1827 = vadd.f32 0.0, %v1826
        %v1828 = vpop.f32.mrb[0].mxu0
        %1829 = vmatprep.mubr.bf16.mxu0 0
        %1830 = vmatmul.mubr.bf16.gmra.mrb[0].mxu0 %v1786
        %v1831 = vpop.f32.mrb[0].mxu0
        %v1832 = vadd.f32 0.0, %v1831
        %v1833 = vpop.f32.mrb[0].mxu0
        %v1834 = vpop.f32.mrb[0].mxu0
        %v1835 = vpop.f32.mrb[0].mxu0
        %1836 = vdwg.mxu0
        %v1837 = vadd.f32 %v1766, %v1824
        %v1838 = vadd.f32 %v1767, %v1827
        %v1839 = vadd.f32 %v1768, %v1832
        %v1840 = vrot.slane %v1714, 1
        %v1841 = vrot.slane %v1771, 1
        %v1842 = vsel %vm483, %v1840, %v1841
        %1845 = vmatprep.subr.bf16.mxu0 0
        %1846 = vmatpush1.bf16.msra.mxu0 %v1303
        %1847 = vmatprep.subr.bf16.mxu0 0
        %1848 = vmatpush1.bf16.msra.mxu0 %v1304
        %1849 = vmatprep.subr.bf16.mxu0 0
        %1850 = vmatpush1.bf16.msra.mxu0 %v1305
        %1851 = vmatprep.subr.bf16.mxu0 0
        %1852 = vmatpush1.bf16.msra.mxu0 %v1306
        %1853 = vmatprep.subr.bf16.mxu0 0
        %1854 = vmatpush1.bf16.msra.mxu0 %v1307
        %1855 = vmatprep.subr.bf16.mxu0 0
        %1856 = vmatpush1.bf16.msra.mxu0 %v1308
        %1857 = vmatprep.subr.bf16.mxu0 0
        %1858 = vmatpush1.bf16.msra.mxu0 %v1309
        %1859 = vmatprep.subr.bf16.mxu0 0
        %1860 = vmatpush1.bf16.msra.mxu0 %v1310
        %1861 = vmatprep.subr.bf16.mxu0 0
        %1862 = vmatpush1.bf16.msra.mxu0 0
        %1863 = vmatprep.subr.bf16.mxu0 0
        %1864 = vmatpush1.bf16.msra.mxu0 0
        %1865 = vmatprep.subr.bf16.mxu0 0
        %1866 = vmatpush1.bf16.msra.mxu0 0
        %1867 = vmatprep.subr.bf16.mxu0 0
        %1868 = vmatpush1.bf16.msra.mxu0 0
        %1869 = vmatprep.subr.bf16.mxu0 0
        %1870 = vmatpush1.bf16.msra.mxu0 0
        %1871 = vmatprep.subr.bf16.mxu0 0
        %1872 = vmatpush1.bf16.msra.mxu0 0
        %1873 = vmatprep.subr.bf16.mxu0 0
        %1874 = vmatpush1.bf16.msra.mxu0 0
        %1875 = vmatprep.subr.bf16.mxu0 0
        %1876 = vmatpush1.bf16.msra.mxu0 0
        %1877 = vmatprep.mubr.bf16.mxu0 0
        %1878 = vmatmul.mubr.bf16.gmra.mrb[0].mxu0 %v1842
        %v1879 = vpop.f32.mrb[0].mxu0
        %v1880 = vadd.f32 0.0, %v1879
        %v1881 = vpop.f32.mrb[0].mxu0
        %v1882 = vpop.f32.mrb[0].mxu0
        %v1883 = vadd.f32 0.0, %v1882
        %v1884 = vpop.f32.mrb[0].mxu0
        %1885 = vmatprep.mubr.bf16.mxu0 0
        %1886 = vmatmul.mubr.bf16.gmra.mrb[0].mxu0 %v1841
        %v1887 = vpop.f32.mrb[0].mxu0
        %v1888 = vadd.f32 0.0, %v1887
        %v1889 = vpop.f32.mrb[0].mxu0
        %v1890 = vpop.f32.mrb[0].mxu0
        %v1891 = vpop.f32.mrb[0].mxu0
        %1892 = vdwg.mxu0
        %v1893 = vadd.f32 %v1837, %v1880
        %v1894 = vadd.f32 %v1838, %v1883
        %v1895 = vadd.f32 %v1839, %v1888
        %v1896 = vadd.f32 %v1893, %v1373
        %v1897 = vadd.f32 %v1894, %v1373
        %v1898 = vadd.f32 %v1895, %v1373
        %vm1899 = vcmp.ge.f32.partialorder %v1896, 0.0
        %vm1900 = vcmp.ge.f32.partialorder %v1897, 0.0
        %vm1901 = vcmp.ge.f32.partialorder %v1898, 0.0
        %v1902 = vmul.f32 %v1896, 0.2
        %v1903 = vmul.f32 %v1897, 0.2
        %v1904 = vmul.f32 %v1898, 0.2
        %v1905 = vsel %vm1899, %v1896, %v1902
        %v1906 = vsel %vm1900, %v1897, %v1903
        %v1907 = vsel %vm1901, %v1898, %v1904
        %v1908 = vmul.f32 %v1905, %v1389
        %v1909 = vmul.f32 %v1906, %v1389
        %v1910 = vmul.f32 %v1907, %v1389
        %v1911 = vadd.f32 %v1908, %v1396
        %v1912 = vadd.f32 %v1909, %v1396
        %v1913 = vadd.f32 %v1910, %v1396
        %v1914 = vmax.f32 %v1397, %v1911
        %v1915 = vmax.f32 %v1398, %v1912
        %v1916 = vmax.f32 %v1399, %v1913
        %vm1917 = vcmask 195584
        %v1919 = vsel %vm1917, %v186, 0
        %v1922 = vsel %vm1917, %v187, 0
        %1924 = vmatprep.subr.mxu0 0.0
        %1925 = vmatpush1.msra.mxu0 %v1914
        %1926 = vmatprep.subr.mxu0 0.0
        %1927 = vmatpush1.msra.mxu0 %v1915
        %1928 = vmatprep.subr.mxu0 0.0
        %1929 = vmatpush1.msra.mxu0 %v1916
        %1930 = vmatprep.subr.mxu0 0.0
        %1931 = vmatpush1.msra.mxu0 0.0
        %1932 = vmatprep.subr.mxu0 0.0
        %1933 = vmatpush1.msra.mxu0 0.0
        %1934 = vmatprep.subr.mxu0 0.0
        %1935 = vmatpush1.msra.mxu0 0.0
        %1936 = vmatprep.subr.mxu0 0.0
        %1937 = vmatpush1.msra.mxu0 0.0
        %1938 = vmatprep.subr.mxu0 0.0
        %1939 = vmatpush1.msra.mxu0 0.0
        %1940 = vmatprep.subr.mxu0 0.0
        %1941 = vmatpush1.msra.mxu0 0.0
        %1942 = vmatprep.subr.mxu0 0.0
        %1943 = vmatpush1.msra.mxu0 0.0
        %1944 = vmatprep.subr.mxu0 0.0
        %1945 = vmatpush1.msra.mxu0 0.0
        %1946 = vmatprep.subr.mxu0 0.0
        %1947 = vmatpush1.msra.mxu0 0.0
        %1948 = vmatprep.subr.mxu0 0.0
        %1949 = vmatpush1.msra.mxu0 0.0
        %1950 = vmatprep.subr.mxu0 0.0
        %1951 = vmatpush1.msra.mxu0 0.0
        %1952 = vmatprep.subr.mxu0 0.0
        %1953 = vmatpush1.msra.mxu0 0.0
        %1954 = vmatprep.subr.mxu0 0.0
        %1955 = vmatpush1.msra.mxu0 0.0
        %1956 = vmatprep.subr.mxu0 0.0
        %1957 = vmatpush1.msra.mxu0 0.0
        %1958 = vmatprep.subr.mxu0 0.0
        %1959 = vmatpush1.msra.mxu0 0.0
        %1960 = vmatprep.subr.mxu0 0.0
        %1961 = vmatpush1.msra.mxu0 0.0
        %1962 = vmatprep.subr.mxu0 0.0
        %1963 = vmatpush1.msra.mxu0 0.0
        %1964 = vmatprep.subr.mxu0 0.0
        %1965 = vmatpush1.msra.mxu0 0.0
        %1966 = vmatprep.subr.mxu0 0.0
        %1967 = vmatpush1.msra.mxu0 0.0
        %1968 = vmatprep.subr.mxu0 0.0
        %1969 = vmatpush1.msra.mxu0 0.0
        %1970 = vmatprep.subr.mxu0 0.0
        %1971 = vmatpush1.msra.mxu0 0.0
        %1972 = vmatprep.subr.mxu0 0.0
        %1973 = vmatpush1.msra.mxu0 0.0
        %1974 = vmatprep.subr.mxu0 0.0
        %1975 = vmatpush1.msra.mxu0 0.0
        %1976 = vmatprep.subr.mxu0 0.0
        %1977 = vmatpush1.msra.mxu0 0.0
        %1978 = vmatprep.subr.mxu0 0.0
        %1979 = vmatpush1.msra.mxu0 0.0
        %1980 = vmatprep.subr.mxu0 0.0
        %1981 = vmatpush1.msra.mxu0 0.0
        %1982 = vmatprep.subr.mxu0 0.0
        %1983 = vmatpush1.msra.mxu0 0.0
        %1984 = vmatprep.subr.mxu0 0.0
        %1985 = vmatpush1.msra.mxu0 0.0
        %1986 = vmatprep.subr.mxu0 0.0
        %1987 = vmatpush1.msra.mxu0 0.0
        %1988 = vmatprep.mubr.f32.mxu0 0.0
        %1989 = vmatmul.mubr.f32.gmra.mrb[0].mxu0 %v1919
        %v1990 = vpop.f32.mrb[0].mxu0
        %v1991 = vadd.f32 0.0, %v1990
        %v1992 = vpop.f32.mrb[0].mxu0
        %1993 = vmatprep.mubr.f32.mxu0 0.0
        %1994 = vmatmul.mubr.f32.gmra.mrb[0].mxu0 %v1922
        %v1995 = vpop.f32.mrb[0].mxu0
        %v1996 = vadd.f32 0.0, %v1995
        %v1997 = vpop.f32.mrb[0].mxu0
        %1998 = vdwg.mxu0
        %v2000 = vsel %vm1917, %v194, 0
        %v2003 = vsel %vm1917, %v195, 0
        %2005 = vmatprep.subr.mxu0 0.0
        %2006 = vmatpush1.msra.mxu0 %v1914
        %2007 = vmatprep.subr.mxu0 0.0
        %2008 = vmatpush1.msra.mxu0 %v1915
        %2009 = vmatprep.subr.mxu0 0.0
        %2010 = vmatpush1.msra.mxu0 %v1916
        %2011 = vmatprep.subr.mxu0 0.0
        %2012 = vmatpush1.msra.mxu0 0.0
        %2013 = vmatprep.subr.mxu0 0.0
        %2014 = vmatpush1.msra.mxu0 0.0
        %2015 = vmatprep.subr.mxu0 0.0
        %2016 = vmatpush1.msra.mxu0 0.0
        %2017 = vmatprep.subr.mxu0 0.0
        %2018 = vmatpush1.msra.mxu0 0.0
        %2019 = vmatprep.subr.mxu0 0.0
        %2020 = vmatpush1.msra.mxu0 0.0
        %2021 = vmatprep.subr.mxu0 0.0
        %2022 = vmatpush1.msra.mxu0 0.0
        %2023 = vmatprep.subr.mxu0 0.0
        %2024 = vmatpush1.msra.mxu0 0.0
        %2025 = vmatprep.subr.mxu0 0.0
        %2026 = vmatpush1.msra.mxu0 0.0
        %2027 = vmatprep.subr.mxu0 0.0
        %2028 = vmatpush1.msra.mxu0 0.0
        %2029 = vmatprep.subr.mxu0 0.0
        %2030 = vmatpush1.msra.mxu0 0.0
        %2031 = vmatprep.subr.mxu0 0.0
        %2032 = vmatpush1.msra.mxu0 0.0
        %2033 = vmatprep.subr.mxu0 0.0
        %2034 = vmatpush1.msra.mxu0 0.0
        %2035 = vmatprep.subr.mxu0 0.0
        %2036 = vmatpush1.msra.mxu0 0.0
        %2037 = vmatprep.subr.mxu0 0.0
        %2038 = vmatpush1.msra.mxu0 0.0
        %2039 = vmatprep.subr.mxu0 0.0
        %2040 = vmatpush1.msra.mxu0 0.0
        %2041 = vmatprep.subr.mxu0 0.0
        %2042 = vmatpush1.msra.mxu0 0.0
        %2043 = vmatprep.subr.mxu0 0.0
        %2044 = vmatpush1.msra.mxu0 0.0
        %2045 = vmatprep.subr.mxu0 0.0
        %2046 = vmatpush1.msra.mxu0 0.0
        %2047 = vmatprep.subr.mxu0 0.0
        %2048 = vmatpush1.msra.mxu0 0.0
        %2049 = vmatprep.subr.mxu0 0.0
        %2050 = vmatpush1.msra.mxu0 0.0
        %2051 = vmatprep.subr.mxu0 0.0
        %2052 = vmatpush1.msra.mxu0 0.0
        %2053 = vmatprep.subr.mxu0 0.0
        %2054 = vmatpush1.msra.mxu0 0.0
        %2055 = vmatprep.subr.mxu0 0.0
        %2056 = vmatpush1.msra.mxu0 0.0
        %2057 = vmatprep.subr.mxu0 0.0
        %2058 = vmatpush1.msra.mxu0 0.0
        %2059 = vmatprep.subr.mxu0 0.0
        %2060 = vmatpush1.msra.mxu0 0.0
        %2061 = vmatprep.subr.mxu0 0.0
        %2062 = vmatpush1.msra.mxu0 0.0
        %2063 = vmatprep.subr.mxu0 0.0
        %2064 = vmatpush1.msra.mxu0 0.0
        %2065 = vmatprep.subr.mxu0 0.0
        %2066 = vmatpush1.msra.mxu0 0.0
        %2067 = vmatprep.subr.mxu0 0.0
        %2068 = vmatpush1.msra.mxu0 0.0
        %2069 = vmatprep.mubr.f32.mxu0 0.0
        %2070 = vmatmul.mubr.f32.gmra.mrb[0].mxu0 %v2000
        %v2071 = vpop.f32.mrb[0].mxu0
        %v2072 = vadd.f32 0.0, %v2071
        %v2073 = vpop.f32.mrb[0].mxu0
        %2074 = vmatprep.mubr.f32.mxu0 0.0
        %2075 = vmatmul.mubr.f32.gmra.mrb[0].mxu0 %v2003
        %v2076 = vpop.f32.mrb[0].mxu0
        %v2077 = vadd.f32 0.0, %v2076
        %v2078 = vpop.f32.mrb[0].mxu0
        %2079 = vdwg.mxu0
        %v2080 = vmax.f32 %v1991, %v2072
        %v2081 = vmax.f32 %v1996, %v2077
        %v2082 = vpack.c.bf16 %v2081, %v2080
        %v2084 = vunpack.c.l.b16 %v2082
        %v2085 = vunpack.c.h.b16 %v2082
        %v2086 = vpack.c.b16 %v2084, %v2084
        %v2087 = vpack.c.b16 %v2085, %v2085
        %s2090 = smul.addr %s202, 4
        %s2091 = scalar_lea.vmem %s170, %s2090
        %2092 = vst [vmem:[%s2091] sm:$0xf] %v2086
        %2093 = vst [vmem:[%s2091 + $0x4] sm:$0x3] %v2087
      $region37: #{cnn_forward.6} parent=31 // loop_footer
        %s201 = sadd.s32 1, %s197
      $region38: #{cnn_forward.6} parent=31 // loop_footer_branch
        %196 = sbr.rel target = $region34
      $region39: #{cnn_forward.6} parent=31 // loop_exit
        _
      %p2094 = scmp.lt.s32.totalorder %s14, 1
      %s2095 = scalar_select %p2094, %s14, 1
      %s2096 = smul.addr %s2095, 24
      %s2097 = smul.addr %s2096, 4
      %s2098 = scalar_lea.vmem %s3, %s2097
      // Predicated region
      $region40: #{cnn_forward.6} parent=31 // pred_check
        %p2099 = pneg %p100
      $region41: #{cnn_forward.6} parent=31 // pred_check_branch
        %2101 = sbr.rel (%p2099) target = $region43
      $region42: #{cnn_forward.6} parent=31 // pred_region
        _
      $region43: #{cnn_forward.6} parent=31 // pred_fallthru
        _
    $region32: #{cnn_forward.6} parent=5 // pred_fallthru
      _
    %p2102 = scmp.le.s32.totalorder 2, %s9
    // Predicated region
    $region44: #{cnn_forward.6} parent=5 // pred_check
      %p2103 = pneg %p2102
    $region45: #{cnn_forward.6} parent=5 // pred_check_branch
      %2105 = sbr.rel (%p2103) target = $region47
    $region46: #{cnn_forward.6} parent=5 // pred_region
      %s2106 = ssub.s32 %s9, 2
      // Predicated region
      $region48: #{cnn_forward.6} parent=46 // pred_check
        %p2107 = pneg %p106
      $region49: #{cnn_forward.6} parent=46 // pred_check_branch
        %2109 = sbr.rel (%p2107) target = $region51
      $region50: #{cnn_forward.6} parent=46 // pred_region
        %p2110 = scmp.lt.s32.totalorder %s15, 1
        %s2111 = scalar_select %p2110, %s15, 1
        %s2112 = smul.addr %s2111, 24
        %s2113 = smul.addr %s2112, 4
        %s2114 = scalar_lea.vmem %s3, %s2113
      $region51: #{cnn_forward.6} parent=46 // pred_fallthru
        _
    $region47: #{cnn_forward.6} parent=5 // pred_fallthru
      _
  $region6: #{cnn_forward.6} parent=0 // loop_footer
    %s13 = sadd.s32 1, %s9
  $region7: #{cnn_forward.6} parent=0 // loop_footer_branch
    %8 = sbr.rel target = $region3
  $region8: #{cnn_forward.6} parent=0 // loop_exit
    _

// kernel: cnn_forward.7
$region0: #{cnn_forward.7}
  #allocation0 [shape = 'u32[]', space=smem, size = 0x4, offset = 0x4, fixed_abs, tag = 'smem constant byte address 0x4 - core index']
  #allocation1 [shape = 'u32[144,128]{1,0:T(1,128)}', space=vmem, size = 0x12000, scoped, tag = 'internal scratch']
  %s0 = inlined_call_operand.vmem [shape: bf16[2,14,14,128], index: 0, kind: input, shape index: {}]
  %s1 = inlined_call_operand.vmem [shape: bf16[9,128,128], index: 1, kind: input, shape index: {}]
  %s2 = inlined_call_operand.vmem [shape: f32[3,128], index: 2, kind: input, shape index: {}]
  %s3 = inlined_call_operand.vmem [shape: bf16[2,6,6,128], index: 3, kind: output, shape index: {}]
  %s4 = sld [smem:[#allocation0]]
  $region52: #{cnn_forward.7} parent=0
    _
  %s6 = ssub.s32 1, %s4
  %s7 = scalar_select 0, %s6, %s4
  loop: start=0, step=1, limit=4
  $region2: #{cnn_forward.7} parent=0 // loop_pre_header
    _
  $region3: #{cnn_forward.7} parent=0 // loop_header
    %s9 = sphi 0, %s13
    %p10 = scmp.ge.s32.totalorder %s9, 4
    %s19 = sphi 0, %s21
    %s22 = sphi 0, %s19
    %s23 = sphi 0, %s22
    %s39 = sphi 0, %s23
    %s43 = sphi 0, %s43
    %s45 = sphi 0, %s43
    %s46 = sphi 0, %s45
    %s60 = sphi 0, %s46
    %s64 = sphi 0, %s64
    %s66 = sphi 0, %s64
    %s67 = sphi 0, %s66
    %s81 = sphi 0, %s67
    %s87 = sphi 0, %s89
    %s90 = sphi 0, %s87
    %s91 = sphi 0, %s90
    %s107 = sphi 0, %s91
  $region4: #{cnn_forward.7} parent=0 // loop_header_branch
    %12 = sbr.rel (%p10) target = $region8
  $region5: #{cnn_forward.7} parent=0 // loop_body
    %s14 = ssub.s32 %s9, 1
    %s15 = ssub.s32 %s9, 2
    %s16 = sadd.s32 %s9, 1
    %s17 = ssub.s32 %s9, %s16
    %p18 = scmp.eq.s32.totalorder %s17, 0
    %s20 = sadd.s32 %s19, 1
    %s21 = scalar_select %p18, %s19, %s20
    %p24 = pneg %p18
    %p25 = scmp.eq.s32.totalorder %s9, 1
    %p26 = por %p24, %p25
    %p27 = scmp.ne.s32.totalorder %s19, %s22
    %p28 = scmp.eq.s32.totalorder %s9, 0
    %p29 = por %p27, %p28
    %p30 = scmp.ne.s32.totalorder %s19, %s22
    %p31 = scmp.eq.s32.totalorder %s14, 1
    %p32 = por %p30, %p31
    %p33 = scmp.ne.s32.totalorder %s22, %s23
    %p34 = scmp.eq.s32.totalorder %s14, 0
    %p35 = por %p33, %p34
    %p36 = scmp.ne.s32.totalorder %s22, %s23
    %p37 = scmp.eq.s32.totalorder %s15, 1
    %p38 = por %p36, %p37
    %p40 = scmp.ne.s32.totalorder %s23, %s39
    %p41 = scmp.eq.s32.totalorder %s15, 0
    %p42 = por %p40, %p41
    %s44 = sadd.s32 %s43, 1
    %p47 = scmp.eq.s32.totalorder %s9, 1
    %p48 = scmp.ne.s32.totalorder %s43, %s45
    %p49 = scmp.eq.s32.totalorder %s9, 0
    %p50 = por %p48, %p49
    %p51 = scmp.ne.s32.totalorder %s43, %s45
    %p52 = scmp.eq.s32.totalorder %s14, 1
    %p53 = por %p51, %p52
    %p54 = scmp.ne.s32.totalorder %s45, %s46
    %p55 = scmp.eq.s32.totalorder %s14, 0
    %p56 = por %p54, %p55
    %p57 = scmp.ne.s32.totalorder %s45, %s46
    %p58 = scmp.eq.s32.totalorder %s15, 1
    %p59 = por %p57, %p58
    %p61 = scmp.ne.s32.totalorder %s46, %s60
    %p62 = scmp.eq.s32.totalorder %s15, 0
    %p63 = por %p61, %p62
    %s65 = sadd.s32 %s64, 1
    %p68 = scmp.eq.s32.totalorder %s9, 1
    %p69 = scmp.ne.s32.totalorder %s64, %s66
    %p70 = scmp.eq.s32.totalorder %s9, 0
    %p71 = por %p69, %p70
    %p72 = scmp.ne.s32.totalorder %s64, %s66
    %p73 = scmp.eq.s32.totalorder %s14, 1
    %p74 = por %p72, %p73
    %p75 = scmp.ne.s32.totalorder %s66, %s67
    %p76 = scmp.eq.s32.totalorder %s14, 0
    %p77 = por %p75, %p76
    %p78 = scmp.ne.s32.totalorder %s66, %s67
    %p79 = scmp.eq.s32.totalorder %s15, 1
    %p80 = por %p78, %p79
    %p82 = scmp.ne.s32.totalorder %s67, %s81
    %p83 = scmp.eq.s32.totalorder %s15, 0
    %p84 = por %p82, %p83
    %s85 = ssub.s32 %s9, %s16
    %p86 = scmp.eq.s32.totalorder %s85, 0
    %s88 = sadd.s32 %s87, 1
    %s89 = scalar_select %p86, %s87, %s88
    %p92 = pneg %p86
    %p93 = scmp.eq.s32.totalorder %s9, 1
    %p94 = por %p92, %p93
    %p95 = scmp.ne.s32.totalorder %s87, %s90
    %p96 = scmp.eq.s32.totalorder %s9, 0
    %p97 = por %p95, %p96
    %p98 = scmp.ne.s32.totalorder %s87, %s90
    %p99 = scmp.eq.s32.totalorder %s14, 1
    %p100 = por %p98, %p99
    %p101 = scmp.ne.s32.totalorder %s90, %s91
    %p102 = scmp.eq.s32.totalorder %s14, 0
    %p103 = por %p101, %p102
    %p104 = scmp.ne.s32.totalorder %s90, %s91
    %p105 = scmp.eq.s32.totalorder %s15, 1
    %p106 = por %p104, %p105
    %p108 = scmp.ne.s32.totalorder %s91, %s107
    %p109 = scmp.eq.s32.totalorder %s15, 0
    %p110 = por %p108, %p109
    %p111 = scmp.le.s32.totalorder 1, %s9
    %p112 = scmp.lt.s32.totalorder %s9, 3
    %p113 = pnand %p111, %p112
    %p114 = pneg %p113
    // Predicated region
    $region9: #{cnn_forward.7} parent=5 // pred_check
      _
    $region10: #{cnn_forward.7} parent=5 // pred_check_branch
      %116 = sbr.rel (%p113) target = $region12
    $region11: #{cnn_forward.7} parent=5 // pred_region
      %s117 = ssub.s32 %s9, 1
      // Predicated region
      $region13: #{cnn_forward.7} parent=11 // pred_check
        %p118 = pneg %p56
      $region14: #{cnn_forward.7} parent=11 // pred_check_branch
        %120 = sbr.rel (%p118) target = $region16
      $region15: #{cnn_forward.7} parent=11 // pred_region
        _
      $region16: #{cnn_forward.7} parent=11 // pred_fallthru
        _
      // Predicated region
      $region17: #{cnn_forward.7} parent=11 // pred_check
        %p121 = pneg %p77
      $region18: #{cnn_forward.7} parent=11 // pred_check_branch
        %123 = sbr.rel (%p121) target = $region20
      $region19: #{cnn_forward.7} parent=11 // pred_region
        _
      $region20: #{cnn_forward.7} parent=11 // pred_fallthru
        _
    $region12: #{cnn_forward.7} parent=5 // pred_fallthru
      _
    %p124 = scmp.lt.s32.totalorder %s9, 2
    // Predicated region
    $region21: #{cnn_forward.7} parent=5 // pred_check
      %p125 = pneg %p124
    $region22: #{cnn_forward.7} parent=5 // pred_check_branch
      %127 = sbr.rel (%p125) target = $region24
    $region23: #{cnn_forward.7} parent=5 // pred_region
      // Predicated region
      $region25: #{cnn_forward.7} parent=23 // pred_check
        %p128 = pneg %p29
      $region26: #{cnn_forward.7} parent=23 // pred_check_branch
        %130 = sbr.rel (%p128) target = $region28
      $region27: #{cnn_forward.7} parent=23 // pred_region
        %p131 = scmp.lt.s32.totalorder %s9, 1
        %s132 = scalar_select %p131, %s9, 1
        %s133 = smul.addr %s132, 28
        %s134 = smul.addr %s133, 4
        %s135 = scalar_lea.vmem %s0, %s134
      $region28: #{cnn_forward.7} parent=23 // pred_fallthru
        _
    $region24: #{cnn_forward.7} parent=5 // pred_fallthru
      _
    %p136 = scmp.le.s32.totalorder 1, %s9
    %p137 = scmp.lt.s32.totalorder %s9, 3
    %p138 = pnand %p136, %p137
    %p139 = pneg %p138
    // Predicated region
    $region29: #{cnn_forward.7} parent=5 // pred_check
      _
    $region30: #{cnn_forward.7} parent=5 // pred_check_branch
      %141 = sbr.rel (%p138) target = $region32
    $region31: #{cnn_forward.7} parent=5 // pred_region
      %s142 = ssub.s32 %s9, 1
      %p143 = scmp.lt.s32.totalorder %s14, 1
      %s144 = scalar_select %p143, %s14, 1
      %s145 = smul.addr %s144, 28
      %s146 = smul.addr %s145, 4
      %s147 = scalar_lea.vmem %s0, %s146
      %p148 = pneg %p35
      %p149 = pneg %p32
      %p150 = pneg %p56
      %p151 = pneg %p53
      %p152 = pneg %p77
      %p153 = pneg %p74
      %p154 = pneg %p103
      %p155 = pneg %p100
      %p156 = scmp.lt.s32.totalorder %s14, 1
      %s157 = scalar_select %p156, %s14, 1
      %s158 = smul.addr %s157, 6
      %s159 = smul.addr %s158, 4
      %s160 = scalar_lea.vmem %s3, %s159
      %p161 = scmp.lt.s32.totalorder %s14, 1
      %s162 = scalar_select %p161, %s14, 1
      %s163 = smul.addr %s162, 28
      %s164 = smul.addr %s163, 4
      %s165 = scalar_lea.vmem %s0, %s164
      %p166 = scmp.lt.s32.totalorder %s14, 1
      %s167 = scalar_select %p166, %s14, 1
      %s168 = smul.addr %s167, 6
      %s169 = smul.addr %s168, 4
      %s170 = scalar_lea.vmem %s3, %s169
      %v172 = vld [vmem:[%s2] sm:$0x1]
      %v173 = vld [vmem:[%s2 + $0x1] sm:$0x1]
      %v174 = vld [vmem:[%s2 + $0x2] sm:$0x1]
      %v175 = vlaneseq
      %v176 = vshrl.u32 %v175, 7
      %v177 = vlaneseq
      %v178 = vand.u32 %v177, 127
      %v179 = vmul.u32 %v176, 2
      %vm180 = vcmp.eq.s32.totalorder %v178, %v179
      %v181 = vsel %vm180, 1, 0
      %v182 = vcvt.s32.f32 %v181
      %v183 = vadd.s32 %v179, 1
      %vm184 = vcmp.eq.s32.totalorder %v178, %v183
      %v185 = vsel %vm184, 1, 0
      %v186 = vcvt.s32.f32 %v185
      loop: start=0, step=1, limit=6
      $region33: #{cnn_forward.7} parent=31 // loop_pre_header
        _
      $region34: #{cnn_forward.7} parent=31 // loop_header
        %s188 = sphi 0, %s192
        %p189 = scmp.ge.s32.totalorder %s188, 6
      $region35: #{cnn_forward.7} parent=31 // loop_header_branch
        %191 = sbr.rel (%p189) target = $region39
      $region36: #{cnn_forward.7} parent=31 // loop_body
        %s193 = smul.u32 %s188, 2
        %s194 = smul.u32 %s193, 2
        %s195 = smul.addr %s194, 4
        %s196 = scalar_lea.vmem %s165, %s195
        %v197 = vld [vmem:[%s196] sm:$0xf]
        %v198 = vld [vmem:[%s196 + $0x4] sm:$0x7]
        %v199 = vld [vmem:[%s1] sm:$0xf]
        %v200 = vld [vmem:[%s1 + $0x4] sm:$0xf]
        %v201 = vld [vmem:[%s1 + $0x8] sm:$0xf]
        %v202 = vld [vmem:[%s1 + $0xc] sm:$0xf]
        %v203 = vld [vmem:[%s1 + $0x10] sm:$0xf]
        %v204 = vld [vmem:[%s1 + $0x14] sm:$0xf]
        %v205 = vld [vmem:[%s1 + $0x18] sm:$0xf]
        %v206 = vld [vmem:[%s1 + $0x1c] sm:$0xf]
        %v207 = vld [vmem:[%s1 + $0x20] sm:$0xf]
        %v208 = vld [vmem:[%s1 + $0x24] sm:$0xf]
        %v209 = vld [vmem:[%s1 + $0x28] sm:$0xf]
        %v210 = vld [vmem:[%s1 + $0x2c] sm:$0xf]
        %v211 = vld [vmem:[%s1 + $0x30] sm:$0xf]
        %v212 = vld [vmem:[%s1 + $0x34] sm:$0xf]
        %v213 = vld [vmem:[%s1 + $0x38] sm:$0xf]
        %v214 = vld [vmem:[%s1 + $0x3c] sm:$0xf]
        %s215 = scalar_lea.vmem %s1, 64
        %v216 = vld [vmem:[%s215] sm:$0xf]
        %v217 = vld [vmem:[%s215 + $0x4] sm:$0xf]
        %v218 = vld [vmem:[%s215 + $0x8] sm:$0xf]
        %v219 = vld [vmem:[%s215 + $0xc] sm:$0xf]
        %v220 = vld [vmem:[%s215 + $0x10] sm:$0xf]
        %v221 = vld [vmem:[%s215 + $0x14] sm:$0xf]
        %v222 = vld [vmem:[%s215 + $0x18] sm:$0xf]
        %v223 = vld [vmem:[%s215 + $0x1c] sm:$0xf]
        %v224 = vld [vmem:[%s215 + $0x20] sm:$0xf]
        %v225 = vld [vmem:[%s215 + $0x24] sm:$0xf]
        %v226 = vld [vmem:[%s215 + $0x28] sm:$0xf]
        %v227 = vld [vmem:[%s215 + $0x2c] sm:$0xf]
        %v228 = vld [vmem:[%s215 + $0x30] sm:$0xf]
        %v229 = vld [vmem:[%s215 + $0x34] sm:$0xf]
        %v230 = vld [vmem:[%s215 + $0x38] sm:$0xf]
        %v231 = vld [vmem:[%s215 + $0x3c] sm:$0xf]
        %v234 = vunpack.c.l.b16 %v197
        %v235 = vunpack.c.l.b16 %v198
        %v236 = vpack.c.b16 %v235, %v234
        %v238 = vshrl.u32 %v236, 16
        %v240 = vshll.u32 %v236, 16
        %v242 = vrot.slane %v240, 1
        %v243 = vor.u32 %v238, %v242
        %v261 = vunpack.c.l.b16 %v216
        %v262 = vunpack.c.l.b16 %v217
        %v263 = vunpack.c.l.b16 %v218
        %v264 = vunpack.c.l.b16 %v219
        %v265 = vunpack.c.l.b16 %v220
        %v266 = vunpack.c.l.b16 %v221
        %v267 = vunpack.c.l.b16 %v222
        %v268 = vunpack.c.l.b16 %v223
        %v269 = vunpack.c.l.b16 %v224
        %v270 = vunpack.c.l.b16 %v225
        %v271 = vunpack.c.l.b16 %v226
        %v272 = vunpack.c.l.b16 %v227
        %v273 = vunpack.c.l.b16 %v228
        %v274 = vunpack.c.l.b16 %v229
        %v275 = vunpack.c.l.b16 %v230
        %v276 = vunpack.c.l.b16 %v231
        %v277 = vpack.c.b16 %v262, %v261
        %v278 = vpack.c.b16 %v264, %v263
        %v279 = vpack.c.b16 %v266, %v265
        %v280 = vpack.c.b16 %v268, %v267
        %v281 = vpack.c.b16 %v270, %v269
        %v282 = vpack.c.b16 %v272, %v271
        %v283 = vpack.c.b16 %v274, %v273
        %v284 = vpack.c.b16 %v276, %v275
        %293 = vmatprep.subr.bf16.mxu0 0
        %294 = vmatpush1.bf16.msra.mxu0 %v277
        %295 = vmatprep.subr.bf16.mxu0 0
        %296 = vmatpush1.bf16.msra.mxu0 %v278
        %297 = vmatprep.subr.bf16.mxu0 0
        %298 = vmatpush1.bf16.msra.mxu0 %v279
        %299 = vmatprep.subr.bf16.mxu0 0
        %300 = vmatpush1.bf16.msra.mxu0 %v280
        %301 = vmatprep.subr.bf16.mxu0 0
        %302 = vmatpush1.bf16.msra.mxu0 %v281
        %303 = vmatprep.subr.bf16.mxu0 0
        %304 = vmatpush1.bf16.msra.mxu0 %v282
        %305 = vmatprep.subr.bf16.mxu0 0
        %306 = vmatpush1.bf16.msra.mxu0 %v283
        %307 = vmatprep.subr.bf16.mxu0 0
        %308 = vmatpush1.bf16.msra.mxu0 %v284
        %309 = vmatprep.subr.bf16.mxu0 0
        %310 = vmatpush1.bf16.msra.mxu0 0
        %311 = vmatprep.subr.bf16.mxu0 0
        %312 = vmatpush1.bf16.msra.mxu0 0
        %313 = vmatprep.subr.bf16.mxu0 0
        %314 = vmatpush1.bf16.msra.mxu0 0
        %315 = vmatprep.subr.bf16.mxu0 0
        %316 = vmatpush1.bf16.msra.mxu0 0
        %317 = vmatprep.subr.bf16.mxu0 0
        %318 = vmatpush1.bf16.msra.mxu0 0
        %319 = vmatprep.subr.bf16.mxu0 0
        %320 = vmatpush1.bf16.msra.mxu0 0
        %321 = vmatprep.subr.bf16.mxu0 0
        %322 = vmatpush1.bf16.msra.mxu0 0
        %323 = vmatprep.subr.bf16.mxu0 0
        %324 = vmatpush1.bf16.msra.mxu0 0
        %325 = vmatprep.mubr.bf16.mxu0 0
        %326 = vmatmul.mubr.bf16.gmra.mrb[0].mxu0 %v243
        %v327 = vpop.f32.mrb[0].mxu0
        %v328 = vadd.f32 0.0, %v327
        %v329 = vpop.f32.mrb[0].mxu0
        %v330 = vpop.f32.mrb[0].mxu0
        %v331 = vadd.f32 0.0, %v330
        %v332 = vpop.f32.mrb[0].mxu0
        %333 = vdwg.mxu0
        %v351 = vunpack.c.l.b16 %v199
        %v352 = vunpack.c.l.b16 %v200
        %v353 = vunpack.c.l.b16 %v201
        %v354 = vunpack.c.l.b16 %v202
        %v355 = vunpack.c.l.b16 %v203
        %v356 = vunpack.c.l.b16 %v204
        %v357 = vunpack.c.l.b16 %v205
        %v358 = vunpack.c.l.b16 %v206
        %v359 = vunpack.c.l.b16 %v207
        %v360 = vunpack.c.l.b16 %v208
        %v361 = vunpack.c.l.b16 %v209
        %v362 = vunpack.c.l.b16 %v210
        %v363 = vunpack.c.l.b16 %v211
        %v364 = vunpack.c.l.b16 %v212
        %v365 = vunpack.c.l.b16 %v213
        %v366 = vunpack.c.l.b16 %v214
        %v367 = vpack.c.b16 %v352, %v351
        %v368 = vpack.c.b16 %v354, %v353
        %v369 = vpack.c.b16 %v356, %v355
        %v370 = vpack.c.b16 %v358, %v357
        %v371 = vpack.c.b16 %v360, %v359
        %v372 = vpack.c.b16 %v362, %v361
        %v373 = vpack.c.b16 %v364, %v363
        %v374 = vpack.c.b16 %v366, %v365
        %383 = vmatprep.subr.bf16.mxu0 0
        %384 = vmatpush1.bf16.msra.mxu0 %v367
        %385 = vmatprep.subr.bf16.mxu0 0
        %386 = vmatpush1.bf16.msra.mxu0 %v368
        %387 = vmatprep.subr.bf16.mxu0 0
        %388 = vmatpush1.bf16.msra.mxu0 %v369
        %389 = vmatprep.subr.bf16.mxu0 0
        %390 = vmatpush1.bf16.msra.mxu0 %v370
        %391 = vmatprep.subr.bf16.mxu0 0
        %392 = vmatpush1.bf16.msra.mxu0 %v371
        %393 = vmatprep.subr.bf16.mxu0 0
        %394 = vmatpush1.bf16.msra.mxu0 %v372
        %395 = vmatprep.subr.bf16.mxu0 0
        %396 = vmatpush1.bf16.msra.mxu0 %v373
        %397 = vmatprep.subr.bf16.mxu0 0
        %398 = vmatpush1.bf16.msra.mxu0 %v374
        %399 = vmatprep.subr.bf16.mxu0 0
        %400 = vmatpush1.bf16.msra.mxu0 0
        %401 = vmatprep.subr.bf16.mxu0 0
        %402 = vmatpush1.bf16.msra.mxu0 0
        %403 = vmatprep.subr.bf16.mxu0 0
        %404 = vmatpush1.bf16.msra.mxu0 0
        %405 = vmatprep.subr.bf16.mxu0 0
        %406 = vmatpush1.bf16.msra.mxu0 0
        %407 = vmatprep.subr.bf16.mxu0 0
        %408 = vmatpush1.bf16.msra.mxu0 0
        %409 = vmatprep.subr.bf16.mxu0 0
        %410 = vmatpush1.bf16.msra.mxu0 0
        %411 = vmatprep.subr.bf16.mxu0 0
        %412 = vmatpush1.bf16.msra.mxu0 0
        %413 = vmatprep.subr.bf16.mxu0 0
        %414 = vmatpush1.bf16.msra.mxu0 0
        %415 = vmatprep.mubr.bf16.mxu0 0
        %416 = vmatmul.mubr.bf16.gmra.mrb[0].mxu0 %v236
        %v417 = vpop.f32.mrb[0].mxu0
        %v418 = vadd.f32 %v328, %v417
        %v419 = vpop.f32.mrb[0].mxu0
        %v420 = vpop.f32.mrb[0].mxu0
        %v421 = vadd.f32 %v331, %v420
        %v422 = vpop.f32.mrb[0].mxu0
        %423 = vdwg.mxu0
        %s424 = scalar_lea.vmem %s1, 128
        %v425 = vld [vmem:[%s424] sm:$0xf]
        %v426 = vld [vmem:[%s424 + $0x4] sm:$0xf]
        %v427 = vld [vmem:[%s424 + $0x8] sm:$0xf]
        %v428 = vld [vmem:[%s424 + $0xc] sm:$0xf]
        %v429 = vld [vmem:[%s424 + $0x10] sm:$0xf]
        %v430 = vld [vmem:[%s424 + $0x14] sm:$0xf]
        %v431 = vld [vmem:[%s424 + $0x18] sm:$0xf]
        %v432 = vld [vmem:[%s424 + $0x1c] sm:$0xf]
        %v433 = vld [vmem:[%s424 + $0x20] sm:$0xf]
        %v434 = vld [vmem:[%s424 + $0x24] sm:$0xf]
        %v435 = vld [vmem:[%s424 + $0x28] sm:$0xf]
        %v436 = vld [vmem:[%s424 + $0x2c] sm:$0xf]
        %v437 = vld [vmem:[%s424 + $0x30] sm:$0xf]
        %v438 = vld [vmem:[%s424 + $0x34] sm:$0xf]
        %v439 = vld [vmem:[%s424 + $0x38] sm:$0xf]
        %v440 = vld [vmem:[%s424 + $0x3c] sm:$0xf]
        %v441 = vrot.slane %v236, 1
        %v459 = vunpack.c.l.b16 %v425
        %v460 = vunpack.c.l.b16 %v426
        %v461 = vunpack.c.l.b16 %v427
        %v462 = vunpack.c.l.b16 %v428
        %v463 = vunpack.c.l.b16 %v429
        %v464 = vunpack.c.l.b16 %v430
        %v465 = vunpack.c.l.b16 %v431
        %v466 = vunpack.c.l.b16 %v432
        %v467 = vunpack.c.l.b16 %v433
        %v468 = vunpack.c.l.b16 %v434
        %v469 = vunpack.c.l.b16 %v435
        %v470 = vunpack.c.l.b16 %v436
        %v471 = vunpack.c.l.b16 %v437
        %v472 = vunpack.c.l.b16 %v438
        %v473 = vunpack.c.l.b16 %v439
        %v474 = vunpack.c.l.b16 %v440
        %v475 = vpack.c.b16 %v460, %v459
        %v476 = vpack.c.b16 %v462, %v461
        %v477 = vpack.c.b16 %v464, %v463
        %v478 = vpack.c.b16 %v466, %v465
        %v479 = vpack.c.b16 %v468, %v467
        %v480 = vpack.c.b16 %v470, %v469
        %v481 = vpack.c.b16 %v472, %v471
        %v482 = vpack.c.b16 %v474, %v473
        %491 = vmatprep.subr.bf16.mxu0 0
        %492 = vmatpush1.bf16.msra.mxu0 %v475
        %493 = vmatprep.subr.bf16.mxu0 0
        %494 = vmatpush1.bf16.msra.mxu0 %v476
        %495 = vmatprep.subr.bf16.mxu0 0
        %496 = vmatpush1.bf16.msra.mxu0 %v477
        %497 = vmatprep.subr.bf16.mxu0 0
        %498 = vmatpush1.bf16.msra.mxu0 %v478
        %499 = vmatprep.subr.bf16.mxu0 0
        %500 = vmatpush1.bf16.msra.mxu0 %v479
        %501 = vmatprep.subr.bf16.mxu0 0
        %502 = vmatpush1.bf16.msra.mxu0 %v480
        %503 = vmatprep.subr.bf16.mxu0 0
        %504 = vmatpush1.bf16.msra.mxu0 %v481
        %505 = vmatprep.subr.bf16.mxu0 0
        %506 = vmatpush1.bf16.msra.mxu0 %v482
        %507 = vmatprep.subr.bf16.mxu0 0
        %508 = vmatpush1.bf16.msra.mxu0 0
        %509 = vmatprep.subr.bf16.mxu0 0
        %510 = vmatpush1.bf16.msra.mxu0 0
        %511 = vmatprep.subr.bf16.mxu0 0
        %512 = vmatpush1.bf16.msra.mxu0 0
        %513 = vmatprep.subr.bf16.mxu0 0
        %514 = vmatpush1.bf16.msra.mxu0 0
        %515 = vmatprep.subr.bf16.mxu0 0
        %516 = vmatpush1.bf16.msra.mxu0 0
        %517 = vmatprep.subr.bf16.mxu0 0
        %518 = vmatpush1.bf16.msra.mxu0 0
        %519 = vmatprep.subr.bf16.mxu0 0
        %520 = vmatpush1.bf16.msra.mxu0 0
        %521 = vmatprep.subr.bf16.mxu0 0
        %522 = vmatpush1.bf16.msra.mxu0 0
        %523 = vmatprep.mubr.bf16.mxu0 0
        %524 = vmatmul.mubr.bf16.gmra.mrb[0].mxu0 %v441
        %v525 = vpop.f32.mrb[0].mxu0
        %v526 = vadd.f32 0.0, %v525
        %v527 = vpop.f32.mrb[0].mxu0
        %v528 = vpop.f32.mrb[0].mxu0
        %v529 = vadd.f32 0.0, %v528
        %v530 = vpop.f32.mrb[0].mxu0
        %531 = vdwg.mxu0
        %v532 = vadd.f32 %v418, %v526
        %v533 = vadd.f32 %v421, %v529
        %s534 = sadd.s32 %s193, 1
        %s535 = smul.u32 %s534, 2
        %s536 = smul.addr %s535, 4
        %s537 = scalar_lea.vmem %s165, %s536
        %v538 = vld [vmem:[%s537] sm:$0xf]
        %v539 = vld [vmem:[%s537 + $0x4] sm:$0x7]
        %s540 = scalar_lea.vmem %s1, 192
        %v541 = vld [vmem:[%s540] sm:$0xf]
        %v542 = vld [vmem:[%s540 + $0x4] sm:$0xf]
        %v543 = vld [vmem:[%s540 + $0x8] sm:$0xf]
        %v544 = vld [vmem:[%s540 + $0xc] sm:$0xf]
        %v545 = vld [vmem:[%s540 + $0x10] sm:$0xf]
        %v546 = vld [vmem:[%s540 + $0x14] sm:$0xf]
        %v547 = vld [vmem:[%s540 + $0x18] sm:$0xf]
        %v548 = vld [vmem:[%s540 + $0x1c] sm:$0xf]
        %v549 = vld [vmem:[%s540 + $0x20] sm:$0xf]
        %v550 = vld [vmem:[%s540 + $0x24] sm:$0xf]
        %v551 = vld [vmem:[%s540 + $0x28] sm:$0xf]
        %v552 = vld [vmem:[%s540 + $0x2c] sm:$0xf]
        %v553 = vld [vmem:[%s540 + $0x30] sm:$0xf]
        %v554 = vld [vmem:[%s540 + $0x34] sm:$0xf]
        %v555 = vld [vmem:[%s540 + $0x38] sm:$0xf]
        %v556 = vld [vmem:[%s540 + $0x3c] sm:$0xf]
        %v559 = vunpack.c.l.b16 %v538
        %v560 = vunpack.c.l.b16 %v539
        %v561 = vpack.c.b16 %v560, %v559
        %v579 = vunpack.c.l.b16 %v541
        %v580 = vunpack.c.l.b16 %v542
        %v581 = vunpack.c.l.b16 %v543
        %v582 = vunpack.c.l.b16 %v544
        %v583 = vunpack.c.l.b16 %v545
        %v584 = vunpack.c.l.b16 %v546
        %v585 = vunpack.c.l.b16 %v547
        %v586 = vunpack.c.l.b16 %v548
        %v587 = vunpack.c.l.b16 %v549
        %v588 = vunpack.c.l.b16 %v550
        %v589 = vunpack.c.l.b16 %v551
        %v590 = vunpack.c.l.b16 %v552
        %v591 = vunpack.c.l.b16 %v553
        %v592 = vunpack.c.l.b16 %v554
        %v593 = vunpack.c.l.b16 %v555
        %v594 = vunpack.c.l.b16 %v556
        %v595 = vpack.c.b16 %v580, %v579
        %v596 = vpack.c.b16 %v582, %v581
        %v597 = vpack.c.b16 %v584, %v583
        %v598 = vpack.c.b16 %v586, %v585
        %v599 = vpack.c.b16 %v588, %v587
        %v600 = vpack.c.b16 %v590, %v589
        %v601 = vpack.c.b16 %v592, %v591
        %v602 = vpack.c.b16 %v594, %v593
        %611 = vmatprep.subr.bf16.mxu0 0
        %612 = vmatpush1.bf16.msra.mxu0 %v595
        %613 = vmatprep.subr.bf16.mxu0 0
        %614 = vmatpush1.bf16.msra.mxu0 %v596
        %615 = vmatprep.subr.bf16.mxu0 0
        %616 = vmatpush1.bf16.msra.mxu0 %v597
        %617 = vmatprep.subr.bf16.mxu0 0
        %618 = vmatpush1.bf16.msra.mxu0 %v598
        %619 = vmatprep.subr.bf16.mxu0 0
        %620 = vmatpush1.bf16.msra.mxu0 %v599
        %621 = vmatprep.subr.bf16.mxu0 0
        %622 = vmatpush1.bf16.msra.mxu0 %v600
        %623 = vmatprep.subr.bf16.mxu0 0
        %624 = vmatpush1.bf16.msra.mxu0 %v601
        %625 = vmatprep.subr.bf16.mxu0 0
        %626 = vmatpush1.bf16.msra.mxu0 %v602
        %627 = vmatprep.subr.bf16.mxu0 0
        %628 = vmatpush1.bf16.msra.mxu0 0
        %629 = vmatprep.subr.bf16.mxu0 0
        %630 = vmatpush1.bf16.msra.mxu0 0
        %631 = vmatprep.subr.bf16.mxu0 0
        %632 = vmatpush1.bf16.msra.mxu0 0
        %633 = vmatprep.subr.bf16.mxu0 0
        %634 = vmatpush1.bf16.msra.mxu0 0
        %635 = vmatprep.subr.bf16.mxu0 0
        %636 = vmatpush1.bf16.msra.mxu0 0
        %637 = vmatprep.subr.bf16.mxu0 0
        %638 = vmatpush1.bf16.msra.mxu0 0
        %639 = vmatprep.subr.bf16.mxu0 0
        %640 = vmatpush1.bf16.msra.mxu0 0
        %641 = vmatprep.subr.bf16.mxu0 0
        %642 = vmatpush1.bf16.msra.mxu0 0
        %643 = vmatprep.mubr.bf16.mxu0 0
        %644 = vmatmul.mubr.bf16.gmra.mrb[0].mxu0 %v561
        %v645 = vpop.f32.mrb[0].mxu0
        %v646 = vadd.f32 0.0, %v645
        %v647 = vpop.f32.mrb[0].mxu0
        %v648 = vpop.f32.mrb[0].mxu0
        %v649 = vadd.f32 0.0, %v648
        %v650 = vpop.f32.mrb[0].mxu0
        %651 = vdwg.mxu0
        %v652 = vadd.f32 %v532, %v646
        %v653 = vadd.f32 %v533, %v649
        %s654 = scalar_lea.vmem %s1, 256
        %v655 = vld [vmem:[%s654] sm:$0xf]
        %v656 = vld [vmem:[%s654 + $0x4] sm:$0xf]
        %v657 = vld [vmem:[%s654 + $0x8] sm:$0xf]
        %v658 = vld [vmem:[%s654 + $0xc] sm:$0xf]
        %v659 = vld [vmem:[%s654 + $0x10] sm:$0xf]
        %v660 = vld [vmem:[%s654 + $0x14] sm:$0xf]
        %v661 = vld [vmem:[%s654 + $0x18] sm:$0xf]
        %v662 = vld [vmem:[%s654 + $0x1c] sm:$0xf]
        %v663 = vld [vmem:[%s654 + $0x20] sm:$0xf]
        %v664 = vld [vmem:[%s654 + $0x24] sm:$0xf]
        %v665 = vld [vmem:[%s654 + $0x28] sm:$0xf]
        %v666 = vld [vmem:[%s654 + $0x2c] sm:$0xf]
        %v667 = vld [vmem:[%s654 + $0x30] sm:$0xf]
        %v668 = vld [vmem:[%s654 + $0x34] sm:$0xf]
        %v669 = vld [vmem:[%s654 + $0x38] sm:$0xf]
        %v670 = vld [vmem:[%s654 + $0x3c] sm:$0xf]
        %v672 = vshrl.u32 %v561, 16
        %v674 = vshll.u32 %v561, 16
        %v676 = vrot.slane %v674, 1
        %v677 = vor.u32 %v672, %v676
        %v695 = vunpack.c.l.b16 %v655
        %v696 = vunpack.c.l.b16 %v656
        %v697 = vunpack.c.l.b16 %v657
        %v698 = vunpack.c.l.b16 %v658
        %v699 = vunpack.c.l.b16 %v659
        %v700 = vunpack.c.l.b16 %v660
        %v701 = vunpack.c.l.b16 %v661
        %v702 = vunpack.c.l.b16 %v662
        %v703 = vunpack.c.l.b16 %v663
        %v704 = vunpack.c.l.b16 %v664
        %v705 = vunpack.c.l.b16 %v665
        %v706 = vunpack.c.l.b16 %v666
        %v707 = vunpack.c.l.b16 %v667
        %v708 = vunpack.c.l.b16 %v668
        %v709 = vunpack.c.l.b16 %v669
        %v710 = vunpack.c.l.b16 %v670
        %v711 = vpack.c.b16 %v696, %v695
        %v712 = vpack.c.b16 %v698, %v697
        %v713 = vpack.c.b16 %v700, %v699
        %v714 = vpack.c.b16 %v702, %v701
        %v715 = vpack.c.b16 %v704, %v703
        %v716 = vpack.c.b16 %v706, %v705
        %v717 = vpack.c.b16 %v708, %v707
        %v718 = vpack.c.b16 %v710, %v709
        %727 = vmatprep.subr.bf16.mxu0 0
        %728 = vmatpush1.bf16.msra.mxu0 %v711
        %729 = vmatprep.subr.bf16.mxu0 0
        %730 = vmatpush1.bf16.msra.mxu0 %v712
        %731 = vmatprep.subr.bf16.mxu0 0
        %732 = vmatpush1.bf16.msra.mxu0 %v713
        %733 = vmatprep.subr.bf16.mxu0 0
        %734 = vmatpush1.bf16.msra.mxu0 %v714
        %735 = vmatprep.subr.bf16.mxu0 0
        %736 = vmatpush1.bf16.msra.mxu0 %v715
        %737 = vmatprep.subr.bf16.mxu0 0
        %738 = vmatpush1.bf16.msra.mxu0 %v716
        %739 = vmatprep.subr.bf16.mxu0 0
        %740 = vmatpush1.bf16.msra.mxu0 %v717
        %741 = vmatprep.subr.bf16.mxu0 0
        %742 = vmatpush1.bf16.msra.mxu0 %v718
        %743 = vmatprep.subr.bf16.mxu0 0
        %744 = vmatpush1.bf16.msra.mxu0 0
        %745 = vmatprep.subr.bf16.mxu0 0
        %746 = vmatpush1.bf16.msra.mxu0 0
        %747 = vmatprep.subr.bf16.mxu0 0
        %748 = vmatpush1.bf16.msra.mxu0 0
        %749 = vmatprep.subr.bf16.mxu0 0
        %750 = vmatpush1.bf16.msra.mxu0 0
        %751 = vmatprep.subr.bf16.mxu0 0
        %752 = vmatpush1.bf16.msra.mxu0 0
        %753 = vmatprep.subr.bf16.mxu0 0
        %754 = vmatpush1.bf16.msra.mxu0 0
        %755 = vmatprep.subr.bf16.mxu0 0
        %756 = vmatpush1.bf16.msra.mxu0 0
        %757 = vmatprep.subr.bf16.mxu0 0
        %758 = vmatpush1.bf16.msra.mxu0 0
        %759 = vmatprep.mubr.bf16.mxu0 0
        %760 = vmatmul.mubr.bf16.gmra.mrb[0].mxu0 %v677
        %v761 = vpop.f32.mrb[0].mxu0
        %v762 = vadd.f32 0.0, %v761
        %v763 = vpop.f32.mrb[0].mxu0
        %v764 = vpop.f32.mrb[0].mxu0
        %v765 = vadd.f32 0.0, %v764
        %v766 = vpop.f32.mrb[0].mxu0
        %767 = vdwg.mxu0
        %v768 = vadd.f32 %v652, %v762
        %v769 = vadd.f32 %v653, %v765
        %s770 = scalar_lea.vmem %s1, 320
        %v771 = vld [vmem:[%s770] sm:$0xf]
        %v772 = vld [vmem:[%s770 + $0x4] sm:$0xf]
        %v773 = vld [vmem:[%s770 + $0x8] sm:$0xf]
        %v774 = vld [vmem:[%s770 + $0xc] sm:$0xf]
        %v775 = vld [vmem:[%s770 + $0x10] sm:$0xf]
        %v776 = vld [vmem:[%s770 + $0x14] sm:$0xf]
        %v777 = vld [vmem:[%s770 + $0x18] sm:$0xf]
        %v778 = vld [vmem:[%s770 + $0x1c] sm:$0xf]
        %v779 = vld [vmem:[%s770 + $0x20] sm:$0xf]
        %v780 = vld [vmem:[%s770 + $0x24] sm:$0xf]
        %v781 = vld [vmem:[%s770 + $0x28] sm:$0xf]
        %v782 = vld [vmem:[%s770 + $0x2c] sm:$0xf]
        %v783 = vld [vmem:[%s770 + $0x30] sm:$0xf]
        %v784 = vld [vmem:[%s770 + $0x34] sm:$0xf]
        %v785 = vld [vmem:[%s770 + $0x38] sm:$0xf]
        %v786 = vld [vmem:[%s770 + $0x3c] sm:$0xf]
        %v787 = vrot.slane %v561, 1
        %v805 = vunpack.c.l.b16 %v771
        %v806 = vunpack.c.l.b16 %v772
        %v807 = vunpack.c.l.b16 %v773
        %v808 = vunpack.c.l.b16 %v774
        %v809 = vunpack.c.l.b16 %v775
        %v810 = vunpack.c.l.b16 %v776
        %v811 = vunpack.c.l.b16 %v777
        %v812 = vunpack.c.l.b16 %v778
        %v813 = vunpack.c.l.b16 %v779
        %v814 = vunpack.c.l.b16 %v780
        %v815 = vunpack.c.l.b16 %v781
        %v816 = vunpack.c.l.b16 %v782
        %v817 = vunpack.c.l.b16 %v783
        %v818 = vunpack.c.l.b16 %v784
        %v819 = vunpack.c.l.b16 %v785
        %v820 = vunpack.c.l.b16 %v786
        %v821 = vpack.c.b16 %v806, %v805
        %v822 = vpack.c.b16 %v808, %v807
        %v823 = vpack.c.b16 %v810, %v809
        %v824 = vpack.c.b16 %v812, %v811
        %v825 = vpack.c.b16 %v814, %v813
        %v826 = vpack.c.b16 %v816, %v815
        %v827 = vpack.c.b16 %v818, %v817
        %v828 = vpack.c.b16 %v820, %v819
        %837 = vmatprep.subr.bf16.mxu0 0
        %838 = vmatpush1.bf16.msra.mxu0 %v821
        %839 = vmatprep.subr.bf16.mxu0 0
        %840 = vmatpush1.bf16.msra.mxu0 %v822
        %841 = vmatprep.subr.bf16.mxu0 0
        %842 = vmatpush1.bf16.msra.mxu0 %v823
        %843 = vmatprep.subr.bf16.mxu0 0
        %844 = vmatpush1.bf16.msra.mxu0 %v824
        %845 = vmatprep.subr.bf16.mxu0 0
        %846 = vmatpush1.bf16.msra.mxu0 %v825
        %847 = vmatprep.subr.bf16.mxu0 0
        %848 = vmatpush1.bf16.msra.mxu0 %v826
        %849 = vmatprep.subr.bf16.mxu0 0
        %850 = vmatpush1.bf16.msra.mxu0 %v827
        %851 = vmatprep.subr.bf16.mxu0 0
        %852 = vmatpush1.bf16.msra.mxu0 %v828
        %853 = vmatprep.subr.bf16.mxu0 0
        %854 = vmatpush1.bf16.msra.mxu0 0
        %855 = vmatprep.subr.bf16.mxu0 0
        %856 = vmatpush1.bf16.msra.mxu0 0
        %857 = vmatprep.subr.bf16.mxu0 0
        %858 = vmatpush1.bf16.msra.mxu0 0
        %859 = vmatprep.subr.bf16.mxu0 0
        %860 = vmatpush1.bf16.msra.mxu0 0
        %861 = vmatprep.subr.bf16.mxu0 0
        %862 = vmatpush1.bf16.msra.mxu0 0
        %863 = vmatprep.subr.bf16.mxu0 0
        %864 = vmatpush1.bf16.msra.mxu0 0
        %865 = vmatprep.subr.bf16.mxu0 0
        %866 = vmatpush1.bf16.msra.mxu0 0
        %867 = vmatprep.subr.bf16.mxu0 0
        %868 = vmatpush1.bf16.msra.mxu0 0
        %869 = vmatprep.mubr.bf16.mxu0 0
        %870 = vmatmul.mubr.bf16.gmra.mrb[0].mxu0 %v787
        %v871 = vpop.f32.mrb[0].mxu0
        %v872 = vadd.f32 0.0, %v871
        %v873 = vpop.f32.mrb[0].mxu0
        %v874 = vpop.f32.mrb[0].mxu0
        %v875 = vadd.f32 0.0, %v874
        %v876 = vpop.f32.mrb[0].mxu0
        %877 = vdwg.mxu0
        %v878 = vadd.f32 %v768, %v872
        %v879 = vadd.f32 %v769, %v875
        %s880 = sadd.s32 %s193, 2
        %s881 = smul.u32 %s880, 2
        %s882 = smul.addr %s881, 4
        %s883 = scalar_lea.vmem %s165, %s882
        %v884 = vld [vmem:[%s883] sm:$0xf]
        %v885 = vld [vmem:[%s883 + $0x4] sm:$0x7]
        %s886 = scalar_lea.vmem %s1, 384
        %v887 = vld [vmem:[%s886] sm:$0xf]
        %v888 = vld [vmem:[%s886 + $0x4] sm:$0xf]
        %v889 = vld [vmem:[%s886 + $0x8] sm:$0xf]
        %v890 = vld [vmem:[%s886 + $0xc] sm:$0xf]
        %v891 = vld [vmem:[%s886 + $0x10] sm:$0xf]
        %v892 = vld [vmem:[%s886 + $0x14] sm:$0xf]
        %v893 = vld [vmem:[%s886 + $0x18] sm:$0xf]
        %v894 = vld [vmem:[%s886 + $0x1c] sm:$0xf]
        %v895 = vld [vmem:[%s886 + $0x20] sm:$0xf]
        %v896 = vld [vmem:[%s886 + $0x24] sm:$0xf]
        %v897 = vld [vmem:[%s886 + $0x28] sm:$0xf]
        %v898 = vld [vmem:[%s886 + $0x2c] sm:$0xf]
        %v899 = vld [vmem:[%s886 + $0x30] sm:$0xf]
        %v900 = vld [vmem:[%s886 + $0x34] sm:$0xf]
        %v901 = vld [vmem:[%s886 + $0x38] sm:$0xf]
        %v902 = vld [vmem:[%s886 + $0x3c] sm:$0xf]
        %v905 = vunpack.c.l.b16 %v884
        %v906 = vunpack.c.l.b16 %v885
        %v907 = vpack.c.b16 %v906, %v905
        %v925 = vunpack.c.l.b16 %v887
        %v926 = vunpack.c.l.b16 %v888
        %v927 = vunpack.c.l.b16 %v889
        %v928 = vunpack.c.l.b16 %v890
        %v929 = vunpack.c.l.b16 %v891
        %v930 = vunpack.c.l.b16 %v892
        %v931 = vunpack.c.l.b16 %v893
        %v932 = vunpack.c.l.b16 %v894
        %v933 = vunpack.c.l.b16 %v895
        %v934 = vunpack.c.l.b16 %v896
        %v935 = vunpack.c.l.b16 %v897
        %v936 = vunpack.c.l.b16 %v898
        %v937 = vunpack.c.l.b16 %v899
        %v938 = vunpack.c.l.b16 %v900
        %v939 = vunpack.c.l.b16 %v901
        %v940 = vunpack.c.l.b16 %v902
        %v941 = vpack.c.b16 %v926, %v925
        %v942 = vpack.c.b16 %v928, %v927
        %v943 = vpack.c.b16 %v930, %v929
        %v944 = vpack.c.b16 %v932, %v931
        %v945 = vpack.c.b16 %v934, %v933
        %v946 = vpack.c.b16 %v936, %v935
        %v947 = vpack.c.b16 %v938, %v937
        %v948 = vpack.c.b16 %v940, %v939
        %957 = vmatprep.subr.bf16.mxu0 0
        %958 = vmatpush1.bf16.msra.mxu0 %v941
        %959 = vmatprep.subr.bf16.mxu0 0
        %960 = vmatpush1.bf16.msra.mxu0 %v942
        %961 = vmatprep.subr.bf16.mxu0 0
        %962 = vmatpush1.bf16.msra.mxu0 %v943
        %963 = vmatprep.subr.bf16.mxu0 0
        %964 = vmatpush1.bf16.msra.mxu0 %v944
        %965 = vmatprep.subr.bf16.mxu0 0
        %966 = vmatpush1.bf16.msra.mxu0 %v945
        %967 = vmatprep.subr.bf16.mxu0 0
        %968 = vmatpush1.bf16.msra.mxu0 %v946
        %969 = vmatprep.subr.bf16.mxu0 0
        %970 = vmatpush1.bf16.msra.mxu0 %v947
        %971 = vmatprep.subr.bf16.mxu0 0
        %972 = vmatpush1.bf16.msra.mxu0 %v948
        %973 = vmatprep.subr.bf16.mxu0 0
        %974 = vmatpush1.bf16.msra.mxu0 0
        %975 = vmatprep.subr.bf16.mxu0 0
        %976 = vmatpush1.bf16.msra.mxu0 0
        %977 = vmatprep.subr.bf16.mxu0 0
        %978 = vmatpush1.bf16.msra.mxu0 0
        %979 = vmatprep.subr.bf16.mxu0 0
        %980 = vmatpush1.bf16.msra.mxu0 0
        %981 = vmatprep.subr.bf16.mxu0 0
        %982 = vmatpush1.bf16.msra.mxu0 0
        %983 = vmatprep.subr.bf16.mxu0 0
        %984 = vmatpush1.bf16.msra.mxu0 0
        %985 = vmatprep.subr.bf16.mxu0 0
        %986 = vmatpush1.bf16.msra.mxu0 0
        %987 = vmatprep.subr.bf16.mxu0 0
        %988 = vmatpush1.bf16.msra.mxu0 0
        %989 = vmatprep.mubr.bf16.mxu0 0
        %990 = vmatmul.mubr.bf16.gmra.mrb[0].mxu0 %v907
        %v991 = vpop.f32.mrb[0].mxu0
        %v992 = vadd.f32 0.0, %v991
        %v993 = vpop.f32.mrb[0].mxu0
        %v994 = vpop.f32.mrb[0].mxu0
        %v995 = vadd.f32 0.0, %v994
        %v996 = vpop.f32.mrb[0].mxu0
        %997 = vdwg.mxu0
        %v998 = vadd.f32 %v878, %v992
        %v999 = vadd.f32 %v879, %v995
        %s1000 = scalar_lea.vmem %s1, 448
        %v1001 = vld [vmem:[%s1000] sm:$0xf]
        %v1002 = vld [vmem:[%s1000 + $0x4] sm:$0xf]
        %v1003 = vld [vmem:[%s1000 + $0x8] sm:$0xf]
        %v1004 = vld [vmem:[%s1000 + $0xc] sm:$0xf]
        %v1005 = vld [vmem:[%s1000 + $0x10] sm:$0xf]
        %v1006 = vld [vmem:[%s1000 + $0x14] sm:$0xf]
        %v1007 = vld [vmem:[%s1000 + $0x18] sm:$0xf]
        %v1008 = vld [vmem:[%s1000 + $0x1c] sm:$0xf]
        %v1009 = vld [vmem:[%s1000 + $0x20] sm:$0xf]
        %v1010 = vld [vmem:[%s1000 + $0x24] sm:$0xf]
        %v1011 = vld [vmem:[%s1000 + $0x28] sm:$0xf]
        %v1012 = vld [vmem:[%s1000 + $0x2c] sm:$0xf]
        %v1013 = vld [vmem:[%s1000 + $0x30] sm:$0xf]
        %v1014 = vld [vmem:[%s1000 + $0x34] sm:$0xf]
        %v1015 = vld [vmem:[%s1000 + $0x38] sm:$0xf]
        %v1016 = vld [vmem:[%s1000 + $0x3c] sm:$0xf]
        %v1018 = vshrl.u32 %v907, 16
        %v1020 = vshll.u32 %v907, 16
        %v1022 = vrot.slane %v1020, 1
        %v1023 = vor.u32 %v1018, %v1022
        %v1041 = vunpack.c.l.b16 %v1001
        %v1042 = vunpack.c.l.b16 %v1002
        %v1043 = vunpack.c.l.b16 %v1003
        %v1044 = vunpack.c.l.b16 %v1004
        %v1045 = vunpack.c.l.b16 %v1005
        %v1046 = vunpack.c.l.b16 %v1006
        %v1047 = vunpack.c.l.b16 %v1007
        %v1048 = vunpack.c.l.b16 %v1008
        %v1049 = vunpack.c.l.b16 %v1009
        %v1050 = vunpack.c.l.b16 %v1010
        %v1051 = vunpack.c.l.b16 %v1011
        %v1052 = vunpack.c.l.b16 %v1012
        %v1053 = vunpack.c.l.b16 %v1013
        %v1054 = vunpack.c.l.b16 %v1014
        %v1055 = vunpack.c.l.b16 %v1015
        %v1056 = vunpack.c.l.b16 %v1016
        %v1057 = vpack.c.b16 %v1042, %v1041
        %v1058 = vpack.c.b16 %v1044, %v1043
        %v1059 = vpack.c.b16 %v1046, %v1045
        %v1060 = vpack.c.b16 %v1048, %v1047
        %v1061 = vpack.c.b16 %v1050, %v1049
        %v1062 = vpack.c.b16 %v1052, %v1051
        %v1063 = vpack.c.b16 %v1054, %v1053
        %v1064 = vpack.c.b16 %v1056, %v1055
        %1073 = vmatprep.subr.bf16.mxu0 0
        %1074 = vmatpush1.bf16.msra.mxu0 %v1057
        %1075 = vmatprep.subr.bf16.mxu0 0
        %1076 = vmatpush1.bf16.msra.mxu0 %v1058
        %1077 = vmatprep.subr.bf16.mxu0 0
        %1078 = vmatpush1.bf16.msra.mxu0 %v1059
        %1079 = vmatprep.subr.bf16.mxu0 0
        %1080 = vmatpush1.bf16.msra.mxu0 %v1060
        %1081 = vmatprep.subr.bf16.mxu0 0
        %1082 = vmatpush1.bf16.msra.mxu0 %v1061
        %1083 = vmatprep.subr.bf16.mxu0 0
        %1084 = vmatpush1.bf16.msra.mxu0 %v1062
        %1085 = vmatprep.subr.bf16.mxu0 0
        %1086 = vmatpush1.bf16.msra.mxu0 %v1063
        %1087 = vmatprep.subr.bf16.mxu0 0
        %1088 = vmatpush1.bf16.msra.mxu0 %v1064
        %1089 = vmatprep.subr.bf16.mxu0 0
        %1090 = vmatpush1.bf16.msra.mxu0 0
        %1091 = vmatprep.subr.bf16.mxu0 0
        %1092 = vmatpush1.bf16.msra.mxu0 0
        %1093 = vmatprep.subr.bf16.mxu0 0
        %1094 = vmatpush1.bf16.msra.mxu0 0
        %1095 = vmatprep.subr.bf16.mxu0 0
        %1096 = vmatpush1.bf16.msra.mxu0 0
        %1097 = vmatprep.subr.bf16.mxu0 0
        %1098 = vmatpush1.bf16.msra.mxu0 0
        %1099 = vmatprep.subr.bf16.mxu0 0
        %1100 = vmatpush1.bf16.msra.mxu0 0
        %1101 = vmatprep.subr.bf16.mxu0 0
        %1102 = vmatpush1.bf16.msra.mxu0 0
        %1103 = vmatprep.subr.bf16.mxu0 0
        %1104 = vmatpush1.bf16.msra.mxu0 0
        %1105 = vmatprep.mubr.bf16.mxu0 0
        %1106 = vmatmul.mubr.bf16.gmra.mrb[0].mxu0 %v1023
        %v1107 = vpop.f32.mrb[0].mxu0
        %v1108 = vadd.f32 0.0, %v1107
        %v1109 = vpop.f32.mrb[0].mxu0
        %v1110 = vpop.f32.mrb[0].mxu0
        %v1111 = vadd.f32 0.0, %v1110
        %v1112 = vpop.f32.mrb[0].mxu0
        %1113 = vdwg.mxu0
        %v1114 = vadd.f32 %v998, %v1108
        %v1115 = vadd.f32 %v999, %v1111
        %s1116 = scalar_lea.vmem %s1, 512
        %v1117 = vld [vmem:[%s1116] sm:$0xf]
        %v1118 = vld [vmem:[%s1116 + $0x4] sm:$0xf]
        %v1119 = vld [vmem:[%s1116 + $0x8] sm:$0xf]
        %v1120 = vld [vmem:[%s1116 + $0xc] sm:$0xf]
        %v1121 = vld [vmem:[%s1116 + $0x10] sm:$0xf]
        %v1122 = vld [vmem:[%s1116 + $0x14] sm:$0xf]
        %v1123 = vld [vmem:[%s1116 + $0x18] sm:$0xf]
        %v1124 = vld [vmem:[%s1116 + $0x1c] sm:$0xf]
        %v1125 = vld [vmem:[%s1116 + $0x20] sm:$0xf]
        %v1126 = vld [vmem:[%s1116 + $0x24] sm:$0xf]
        %v1127 = vld [vmem:[%s1116 + $0x28] sm:$0xf]
        %v1128 = vld [vmem:[%s1116 + $0x2c] sm:$0xf]
        %v1129 = vld [vmem:[%s1116 + $0x30] sm:$0xf]
        %v1130 = vld [vmem:[%s1116 + $0x34] sm:$0xf]
        %v1131 = vld [vmem:[%s1116 + $0x38] sm:$0xf]
        %v1132 = vld [vmem:[%s1116 + $0x3c] sm:$0xf]
        %v1133 = vrot.slane %v907, 1
        %v1151 = vunpack.c.l.b16 %v1117
        %v1152 = vunpack.c.l.b16 %v1118
        %v1153 = vunpack.c.l.b16 %v1119
        %v1154 = vunpack.c.l.b16 %v1120
        %v1155 = vunpack.c.l.b16 %v1121
        %v1156 = vunpack.c.l.b16 %v1122
        %v1157 = vunpack.c.l.b16 %v1123
        %v1158 = vunpack.c.l.b16 %v1124
        %v1159 = vunpack.c.l.b16 %v1125
        %v1160 = vunpack.c.l.b16 %v1126
        %v1161 = vunpack.c.l.b16 %v1127
        %v1162 = vunpack.c.l.b16 %v1128
        %v1163 = vunpack.c.l.b16 %v1129
        %v1164 = vunpack.c.l.b16 %v1130
        %v1165 = vunpack.c.l.b16 %v1131
        %v1166 = vunpack.c.l.b16 %v1132
        %v1167 = vpack.c.b16 %v1152, %v1151
        %v1168 = vpack.c.b16 %v1154, %v1153
        %v1169 = vpack.c.b16 %v1156, %v1155
        %v1170 = vpack.c.b16 %v1158, %v1157
        %v1171 = vpack.c.b16 %v1160, %v1159
        %v1172 = vpack.c.b16 %v1162, %v1161
        %v1173 = vpack.c.b16 %v1164, %v1163
        %v1174 = vpack.c.b16 %v1166, %v1165
        %1183 = vmatprep.subr.bf16.mxu0 0
        %1184 = vmatpush1.bf16.msra.mxu0 %v1167
        %1185 = vmatprep.subr.bf16.mxu0 0
        %1186 = vmatpush1.bf16.msra.mxu0 %v1168
        %1187 = vmatprep.subr.bf16.mxu0 0
        %1188 = vmatpush1.bf16.msra.mxu0 %v1169
        %1189 = vmatprep.subr.bf16.mxu0 0
        %1190 = vmatpush1.bf16.msra.mxu0 %v1170
        %1191 = vmatprep.subr.bf16.mxu0 0
        %1192 = vmatpush1.bf16.msra.mxu0 %v1171
        %1193 = vmatprep.subr.bf16.mxu0 0
        %1194 = vmatpush1.bf16.msra.mxu0 %v1172
        %1195 = vmatprep.subr.bf16.mxu0 0
        %1196 = vmatpush1.bf16.msra.mxu0 %v1173
        %1197 = vmatprep.subr.bf16.mxu0 0
        %1198 = vmatpush1.bf16.msra.mxu0 %v1174
        %1199 = vmatprep.subr.bf16.mxu0 0
        %1200 = vmatpush1.bf16.msra.mxu0 0
        %1201 = vmatprep.subr.bf16.mxu0 0
        %1202 = vmatpush1.bf16.msra.mxu0 0
        %1203 = vmatprep.subr.bf16.mxu0 0
        %1204 = vmatpush1.bf16.msra.mxu0 0
        %1205 = vmatprep.subr.bf16.mxu0 0
        %1206 = vmatpush1.bf16.msra.mxu0 0
        %1207 = vmatprep.subr.bf16.mxu0 0
        %1208 = vmatpush1.bf16.msra.mxu0 0
        %1209 = vmatprep.subr.bf16.mxu0 0
        %1210 = vmatpush1.bf16.msra.mxu0 0
        %1211 = vmatprep.subr.bf16.mxu0 0
        %1212 = vmatpush1.bf16.msra.mxu0 0
        %1213 = vmatprep.subr.bf16.mxu0 0
        %1214 = vmatpush1.bf16.msra.mxu0 0
        %1215 = vmatprep.mubr.bf16.mxu0 0
        %1216 = vmatmul.mubr.bf16.gmra.mrb[0].mxu0 %v1133
        %v1217 = vpop.f32.mrb[0].mxu0
        %v1218 = vadd.f32 0.0, %v1217
        %v1219 = vpop.f32.mrb[0].mxu0
        %v1220 = vpop.f32.mrb[0].mxu0
        %v1221 = vadd.f32 0.0, %v1220
        %v1222 = vpop.f32.mrb[0].mxu0
        %1223 = vdwg.mxu0
        %v1224 = vadd.f32 %v1114, %v1218
        %v1225 = vadd.f32 %v1115, %v1221
        %v1226 = vlaneseq
        %v1227 = vshrl.u32 %v1226, 7
        %v1228 = vsub.s32 0, %v1227
        %v1229 = vrot.slane %v172, %v1228
        %v1230 = vadd.f32 %v1224, %v1229
        %v1231 = vadd.f32 %v1225, %v1229
        %vm1232 = vcmp.ge.f32.partialorder %v1230, 0.0
        %vm1233 = vcmp.ge.f32.partialorder %v1231, 0.0
        %v1234 = vmul.f32 %v1230, 0.2
        %v1235 = vmul.f32 %v1231, 0.2
        %v1236 = vsel %vm1232, %v1230, %v1234
        %v1237 = vsel %vm1233, %v1231, %v1235
        %v1238 = vlaneseq
        %v1239 = vshrl.u32 %v1238, 7
        %v1240 = vsub.s32 0, %v1239
        %v1241 = vrot.slane %v173, %v1240
        %v1242 = vmul.f32 %v1236, %v1241
        %v1243 = vmul.f32 %v1237, %v1241
        %v1244 = vlaneseq
        %v1245 = vshrl.u32 %v1244, 7
        %v1246 = vsub.s32 0, %v1245
        %v1247 = vrot.slane %v174, %v1246
        %v1248 = vadd.f32 %v1242, %v1247
        %v1249 = vadd.f32 %v1243, %v1247
        %1250 = vmatprep.subr.bf16.mxu0 0
        %1251 = vmatpush1.bf16.msra.mxu0 %v277
        %1252 = vmatprep.subr.bf16.mxu0 0
        %1253 = vmatpush1.bf16.msra.mxu0 %v278
        %1254 = vmatprep.subr.bf16.mxu0 0
        %1255 = vmatpush1.bf16.msra.mxu0 %v279
        %1256 = vmatprep.subr.bf16.mxu0 0
        %1257 = vmatpush1.bf16.msra.mxu0 %v280
        %1258 = vmatprep.subr.bf16.mxu0 0
        %1259 = vmatpush1.bf16.msra.mxu0 %v281
        %1260 = vmatprep.subr.bf16.mxu0 0
        %1261 = vmatpush1.bf16.msra.mxu0 %v282
        %1262 = vmatprep.subr.bf16.mxu0 0
        %1263 = vmatpush1.bf16.msra.mxu0 %v283
        %1264 = vmatprep.subr.bf16.mxu0 0
        %1265 = vmatpush1.bf16.msra.mxu0 %v284
        %1266 = vmatprep.subr.bf16.mxu0 0
        %1267 = vmatpush1.bf16.msra.mxu0 0
        %1268 = vmatprep.subr.bf16.mxu0 0
        %1269 = vmatpush1.bf16.msra.mxu0 0
        %1270 = vmatprep.subr.bf16.mxu0 0
        %1271 = vmatpush1.bf16.msra.mxu0 0
        %1272 = vmatprep.subr.bf16.mxu0 0
        %1273 = vmatpush1.bf16.msra.mxu0 0
        %1274 = vmatprep.subr.bf16.mxu0 0
        %1275 = vmatpush1.bf16.msra.mxu0 0
        %1276 = vmatprep.subr.bf16.mxu0 0
        %1277 = vmatpush1.bf16.msra.mxu0 0
        %1278 = vmatprep.subr.bf16.mxu0 0
        %1279 = vmatpush1.bf16.msra.mxu0 0
        %1280 = vmatprep.subr.bf16.mxu0 0
        %1281 = vmatpush1.bf16.msra.mxu0 0
        %1282 = vmatprep.mubr.bf16.mxu0 0
        %1283 = vmatmul.mubr.bf16.gmra.mrb[0].mxu0 %v677
        %v1284 = vpop.f32.mrb[0].mxu0
        %v1285 = vadd.f32 0.0, %v1284
        %v1286 = vpop.f32.mrb[0].mxu0
        %v1287 = vpop.f32.mrb[0].mxu0
        %v1288 = vadd.f32 0.0, %v1287
        %v1289 = vpop.f32.mrb[0].mxu0
        %1290 = vdwg.mxu0
        %1291 = vmatprep.subr.bf16.mxu0 0
        %1292 = vmatpush1.bf16.msra.mxu0 %v367
        %1293 = vmatprep.subr.bf16.mxu0 0
        %1294 = vmatpush1.bf16.msra.mxu0 %v368
        %1295 = vmatprep.subr.bf16.mxu0 0
        %1296 = vmatpush1.bf16.msra.mxu0 %v369
        %1297 = vmatprep.subr.bf16.mxu0 0
        %1298 = vmatpush1.bf16.msra.mxu0 %v370
        %1299 = vmatprep.subr.bf16.mxu0 0
        %1300 = vmatpush1.bf16.msra.mxu0 %v371
        %1301 = vmatprep.subr.bf16.mxu0 0
        %1302 = vmatpush1.bf16.msra.mxu0 %v372
        %1303 = vmatprep.subr.bf16.mxu0 0
        %1304 = vmatpush1.bf16.msra.mxu0 %v373
        %1305 = vmatprep.subr.bf16.mxu0 0
        %1306 = vmatpush1.bf16.msra.mxu0 %v374
        %1307 = vmatprep.subr.bf16.mxu0 0
        %1308 = vmatpush1.bf16.msra.mxu0 0
        %1309 = vmatprep.subr.bf16.mxu0 0
        %1310 = vmatpush1.bf16.msra.mxu0 0
        %1311 = vmatprep.subr.bf16.mxu0 0
        %1312 = vmatpush1.bf16.msra.mxu0 0
        %1313 = vmatprep.subr.bf16.mxu0 0
        %1314 = vmatpush1.bf16.msra.mxu0 0
        %1315 = vmatprep.subr.bf16.mxu0 0
        %1316 = vmatpush1.bf16.msra.mxu0 0
        %1317 = vmatprep.subr.bf16.mxu0 0
        %1318 = vmatpush1.bf16.msra.mxu0 0
        %1319 = vmatprep.subr.bf16.mxu0 0
        %1320 = vmatpush1.bf16.msra.mxu0 0
        %1321 = vmatprep.subr.bf16.mxu0 0
        %1322 = vmatpush1.bf16.msra.mxu0 0
        %1323 = vmatprep.mubr.bf16.mxu0 0
        %1324 = vmatmul.mubr.bf16.gmra.mrb[0].mxu0 %v561
        %v1325 = vpop.f32.mrb[0].mxu0
        %v1326 = vadd.f32 %v1285, %v1325
        %v1327 = vpop.f32.mrb[0].mxu0
        %v1328 = vpop.f32.mrb[0].mxu0
        %v1329 = vadd.f32 %v1288, %v1328
        %v1330 = vpop.f32.mrb[0].mxu0
        %1331 = vdwg.mxu0
        %1332 = vmatprep.subr.bf16.mxu0 0
        %1333 = vmatpush1.bf16.msra.mxu0 %v475
        %1334 = vmatprep.subr.bf16.mxu0 0
        %1335 = vmatpush1.bf16.msra.mxu0 %v476
        %1336 = vmatprep.subr.bf16.mxu0 0
        %1337 = vmatpush1.bf16.msra.mxu0 %v477
        %1338 = vmatprep.subr.bf16.mxu0 0
        %1339 = vmatpush1.bf16.msra.mxu0 %v478
        %1340 = vmatprep.subr.bf16.mxu0 0
        %1341 = vmatpush1.bf16.msra.mxu0 %v479
        %1342 = vmatprep.subr.bf16.mxu0 0
        %1343 = vmatpush1.bf16.msra.mxu0 %v480
        %1344 = vmatprep.subr.bf16.mxu0 0
        %1345 = vmatpush1.bf16.msra.mxu0 %v481
        %1346 = vmatprep.subr.bf16.mxu0 0
        %1347 = vmatpush1.bf16.msra.mxu0 %v482
        %1348 = vmatprep.subr.bf16.mxu0 0
        %1349 = vmatpush1.bf16.msra.mxu0 0
        %1350 = vmatprep.subr.bf16.mxu0 0
        %1351 = vmatpush1.bf16.msra.mxu0 0
        %1352 = vmatprep.subr.bf16.mxu0 0
        %1353 = vmatpush1.bf16.msra.mxu0 0
        %1354 = vmatprep.subr.bf16.mxu0 0
        %1355 = vmatpush1.bf16.msra.mxu0 0
        %1356 = vmatprep.subr.bf16.mxu0 0
        %1357 = vmatpush1.bf16.msra.mxu0 0
        %1358 = vmatprep.subr.bf16.mxu0 0
        %1359 = vmatpush1.bf16.msra.mxu0 0
        %1360 = vmatprep.subr.bf16.mxu0 0
        %1361 = vmatpush1.bf16.msra.mxu0 0
        %1362 = vmatprep.subr.bf16.mxu0 0
        %1363 = vmatpush1.bf16.msra.mxu0 0
        %1364 = vmatprep.mubr.bf16.mxu0 0
        %1365 = vmatmul.mubr.bf16.gmra.mrb[0].mxu0 %v787
        %v1366 = vpop.f32.mrb[0].mxu0
        %v1367 = vadd.f32 0.0, %v1366
        %v1368 = vpop.f32.mrb[0].mxu0
        %v1369 = vpop.f32.mrb[0].mxu0
        %v1370 = vadd.f32 0.0, %v1369
        %v1371 = vpop.f32.mrb[0].mxu0
        %1372 = vdwg.mxu0
        %v1373 = vadd.f32 %v1326, %v1367
        %v1374 = vadd.f32 %v1329, %v1370
        %1375 = vmatprep.subr.bf16.mxu0 0
        %1376 = vmatpush1.bf16.msra.mxu0 %v595
        %1377 = vmatprep.subr.bf16.mxu0 0
        %1378 = vmatpush1.bf16.msra.mxu0 %v596
        %1379 = vmatprep.subr.bf16.mxu0 0
        %1380 = vmatpush1.bf16.msra.mxu0 %v597
        %1381 = vmatprep.subr.bf16.mxu0 0
        %1382 = vmatpush1.bf16.msra.mxu0 %v598
        %1383 = vmatprep.subr.bf16.mxu0 0
        %1384 = vmatpush1.bf16.msra.mxu0 %v599
        %1385 = vmatprep.subr.bf16.mxu0 0
        %1386 = vmatpush1.bf16.msra.mxu0 %v600
        %1387 = vmatprep.subr.bf16.mxu0 0
        %1388 = vmatpush1.bf16.msra.mxu0 %v601
        %1389 = vmatprep.subr.bf16.mxu0 0
        %1390 = vmatpush1.bf16.msra.mxu0 %v602
        %1391 = vmatprep.subr.bf16.mxu0 0
        %1392 = vmatpush1.bf16.msra.mxu0 0
        %1393 = vmatprep.subr.bf16.mxu0 0
        %1394 = vmatpush1.bf16.msra.mxu0 0
        %1395 = vmatprep.subr.bf16.mxu0 0
        %1396 = vmatpush1.bf16.msra.mxu0 0
        %1397 = vmatprep.subr.bf16.mxu0 0
        %1398 = vmatpush1.bf16.msra.mxu0 0
        %1399 = vmatprep.subr.bf16.mxu0 0
        %1400 = vmatpush1.bf16.msra.mxu0 0
        %1401 = vmatprep.subr.bf16.mxu0 0
        %1402 = vmatpush1.bf16.msra.mxu0 0
        %1403 = vmatprep.subr.bf16.mxu0 0
        %1404 = vmatpush1.bf16.msra.mxu0 0
        %1405 = vmatprep.subr.bf16.mxu0 0
        %1406 = vmatpush1.bf16.msra.mxu0 0
        %1407 = vmatprep.mubr.bf16.mxu0 0
        %1408 = vmatmul.mubr.bf16.gmra.mrb[0].mxu0 %v907
        %v1409 = vpop.f32.mrb[0].mxu0
        %v1410 = vadd.f32 0.0, %v1409
        %v1411 = vpop.f32.mrb[0].mxu0
        %v1412 = vpop.f32.mrb[0].mxu0
        %v1413 = vadd.f32 0.0, %v1412
        %v1414 = vpop.f32.mrb[0].mxu0
        %1415 = vdwg.mxu0
        %v1416 = vadd.f32 %v1373, %v1410
        %v1417 = vadd.f32 %v1374, %v1413
        %1418 = vmatprep.subr.bf16.mxu0 0
        %1419 = vmatpush1.bf16.msra.mxu0 %v711
        %1420 = vmatprep.subr.bf16.mxu0 0
        %1421 = vmatpush1.bf16.msra.mxu0 %v712
        %1422 = vmatprep.subr.bf16.mxu0 0
        %1423 = vmatpush1.bf16.msra.mxu0 %v713
        %1424 = vmatprep.subr.bf16.mxu0 0
        %1425 = vmatpush1.bf16.msra.mxu0 %v714
        %1426 = vmatprep.subr.bf16.mxu0 0
        %1427 = vmatpush1.bf16.msra.mxu0 %v715
        %1428 = vmatprep.subr.bf16.mxu0 0
        %1429 = vmatpush1.bf16.msra.mxu0 %v716
        %1430 = vmatprep.subr.bf16.mxu0 0
        %1431 = vmatpush1.bf16.msra.mxu0 %v717
        %1432 = vmatprep.subr.bf16.mxu0 0
        %1433 = vmatpush1.bf16.msra.mxu0 %v718
        %1434 = vmatprep.subr.bf16.mxu0 0
        %1435 = vmatpush1.bf16.msra.mxu0 0
        %1436 = vmatprep.subr.bf16.mxu0 0
        %1437 = vmatpush1.bf16.msra.mxu0 0
        %1438 = vmatprep.subr.bf16.mxu0 0
        %1439 = vmatpush1.bf16.msra.mxu0 0
        %1440 = vmatprep.subr.bf16.mxu0 0
        %1441 = vmatpush1.bf16.msra.mxu0 0
        %1442 = vmatprep.subr.bf16.mxu0 0
        %1443 = vmatpush1.bf16.msra.mxu0 0
        %1444 = vmatprep.subr.bf16.mxu0 0
        %1445 = vmatpush1.bf16.msra.mxu0 0
        %1446 = vmatprep.subr.bf16.mxu0 0
        %1447 = vmatpush1.bf16.msra.mxu0 0
        %1448 = vmatprep.subr.bf16.mxu0 0
        %1449 = vmatpush1.bf16.msra.mxu0 0
        %1450 = vmatprep.mubr.bf16.mxu0 0
        %1451 = vmatmul.mubr.bf16.gmra.mrb[0].mxu0 %v1023
        %v1452 = vpop.f32.mrb[0].mxu0
        %v1453 = vadd.f32 0.0, %v1452
        %v1454 = vpop.f32.mrb[0].mxu0
        %v1455 = vpop.f32.mrb[0].mxu0
        %v1456 = vadd.f32 0.0, %v1455
        %v1457 = vpop.f32.mrb[0].mxu0
        %1458 = vdwg.mxu0
        %v1459 = vadd.f32 %v1416, %v1453
        %v1460 = vadd.f32 %v1417, %v1456
        %1461 = vmatprep.subr.bf16.mxu0 0
        %1462 = vmatpush1.bf16.msra.mxu0 %v821
        %1463 = vmatprep.subr.bf16.mxu0 0
        %1464 = vmatpush1.bf16.msra.mxu0 %v822
        %1465 = vmatprep.subr.bf16.mxu0 0
        %1466 = vmatpush1.bf16.msra.mxu0 %v823
        %1467 = vmatprep.subr.bf16.mxu0 0
        %1468 = vmatpush1.bf16.msra.mxu0 %v824
        %1469 = vmatprep.subr.bf16.mxu0 0
        %1470 = vmatpush1.bf16.msra.mxu0 %v825
        %1471 = vmatprep.subr.bf16.mxu0 0
        %1472 = vmatpush1.bf16.msra.mxu0 %v826
        %1473 = vmatprep.subr.bf16.mxu0 0
        %1474 = vmatpush1.bf16.msra.mxu0 %v827
        %1475 = vmatprep.subr.bf16.mxu0 0
        %1476 = vmatpush1.bf16.msra.mxu0 %v828
        %1477 = vmatprep.subr.bf16.mxu0 0
        %1478 = vmatpush1.bf16.msra.mxu0 0
        %1479 = vmatprep.subr.bf16.mxu0 0
        %1480 = vmatpush1.bf16.msra.mxu0 0
        %1481 = vmatprep.subr.bf16.mxu0 0
        %1482 = vmatpush1.bf16.msra.mxu0 0
        %1483 = vmatprep.subr.bf16.mxu0 0
        %1484 = vmatpush1.bf16.msra.mxu0 0
        %1485 = vmatprep.subr.bf16.mxu0 0
        %1486 = vmatpush1.bf16.msra.mxu0 0
        %1487 = vmatprep.subr.bf16.mxu0 0
        %1488 = vmatpush1.bf16.msra.mxu0 0
        %1489 = vmatprep.subr.bf16.mxu0 0
        %1490 = vmatpush1.bf16.msra.mxu0 0
        %1491 = vmatprep.subr.bf16.mxu0 0
        %1492 = vmatpush1.bf16.msra.mxu0 0
        %1493 = vmatprep.mubr.bf16.mxu0 0
        %1494 = vmatmul.mubr.bf16.gmra.mrb[0].mxu0 %v1133
        %v1495 = vpop.f32.mrb[0].mxu0
        %v1496 = vadd.f32 0.0, %v1495
        %v1497 = vpop.f32.mrb[0].mxu0
        %v1498 = vpop.f32.mrb[0].mxu0
        %v1499 = vadd.f32 0.0, %v1498
        %v1500 = vpop.f32.mrb[0].mxu0
        %1501 = vdwg.mxu0
        %v1502 = vadd.f32 %v1459, %v1496
        %v1503 = vadd.f32 %v1460, %v1499
        %s1504 = sadd.s32 %s193, 3
        %s1505 = smul.u32 %s1504, 2
        %s1506 = smul.addr %s1505, 4
        %s1507 = scalar_lea.vmem %s165, %s1506
        %v1508 = vld [vmem:[%s1507] sm:$0xf]
        %v1509 = vld [vmem:[%s1507 + $0x4] sm:$0x7]
        %v1512 = vunpack.c.l.b16 %v1508
        %v1513 = vunpack.c.l.b16 %v1509
        %v1514 = vpack.c.b16 %v1513, %v1512
        %1516 = vmatprep.subr.bf16.mxu0 0
        %1517 = vmatpush1.bf16.msra.mxu0 %v941
        %1518 = vmatprep.subr.bf16.mxu0 0
        %1519 = vmatpush1.bf16.msra.mxu0 %v942
        %1520 = vmatprep.subr.bf16.mxu0 0
        %1521 = vmatpush1.bf16.msra.mxu0 %v943
        %1522 = vmatprep.subr.bf16.mxu0 0
        %1523 = vmatpush1.bf16.msra.mxu0 %v944
        %1524 = vmatprep.subr.bf16.mxu0 0
        %1525 = vmatpush1.bf16.msra.mxu0 %v945
        %1526 = vmatprep.subr.bf16.mxu0 0
        %1527 = vmatpush1.bf16.msra.mxu0 %v946
        %1528 = vmatprep.subr.bf16.mxu0 0
        %1529 = vmatpush1.bf16.msra.mxu0 %v947
        %1530 = vmatprep.subr.bf16.mxu0 0
        %1531 = vmatpush1.bf16.msra.mxu0 %v948
        %1532 = vmatprep.subr.bf16.mxu0 0
        %1533 = vmatpush1.bf16.msra.mxu0 0
        %1534 = vmatprep.subr.bf16.mxu0 0
        %1535 = vmatpush1.bf16.msra.mxu0 0
        %1536 = vmatprep.subr.bf16.mxu0 0
        %1537 = vmatpush1.bf16.msra.mxu0 0
        %1538 = vmatprep.subr.bf16.mxu0 0
        %1539 = vmatpush1.bf16.msra.mxu0 0
        %1540 = vmatprep.subr.bf16.mxu0 0
        %1541 = vmatpush1.bf16.msra.mxu0 0
        %1542 = vmatprep.subr.bf16.mxu0 0
        %1543 = vmatpush1.bf16.msra.mxu0 0
        %1544 = vmatprep.subr.bf16.mxu0 0
        %1545 = vmatpush1.bf16.msra.mxu0 0
        %1546 = vmatprep.subr.bf16.mxu0 0
        %1547 = vmatpush1.bf16.msra.mxu0 0
        %1548 = vmatprep.mubr.bf16.mxu0 0
        %1549 = vmatmul.mubr.bf16.gmra.mrb[0].mxu0 %v1514
        %v1550 = vpop.f32.mrb[0].mxu0
        %v1551 = vadd.f32 0.0, %v1550
        %v1552 = vpop.f32.mrb[0].mxu0
        %v1553 = vpop.f32.mrb[0].mxu0
        %v1554 = vadd.f32 0.0, %v1553
        %v1555 = vpop.f32.mrb[0].mxu0
        %1556 = vdwg.mxu0
        %v1557 = vadd.f32 %v1502, %v1551
        %v1558 = vadd.f32 %v1503, %v1554
        %v1560 = vshrl.u32 %v1514, 16
        %v1562 = vshll.u32 %v1514, 16
        %v1564 = vrot.slane %v1562, 1
        %v1565 = vor.u32 %v1560, %v1564
        %1567 = vmatprep.subr.bf16.mxu0 0
        %1568 = vmatpush1.bf16.msra.mxu0 %v1057
        %1569 = vmatprep.subr.bf16.mxu0 0
        %1570 = vmatpush1.bf16.msra.mxu0 %v1058
        %1571 = vmatprep.subr.bf16.mxu0 0
        %1572 = vmatpush1.bf16.msra.mxu0 %v1059
        %1573 = vmatprep.subr.bf16.mxu0 0
        %1574 = vmatpush1.bf16.msra.mxu0 %v1060
        %1575 = vmatprep.subr.bf16.mxu0 0
        %1576 = vmatpush1.bf16.msra.mxu0 %v1061
        %1577 = vmatprep.subr.bf16.mxu0 0
        %1578 = vmatpush1.bf16.msra.mxu0 %v1062
        %1579 = vmatprep.subr.bf16.mxu0 0
        %1580 = vmatpush1.bf16.msra.mxu0 %v1063
        %1581 = vmatprep.subr.bf16.mxu0 0
        %1582 = vmatpush1.bf16.msra.mxu0 %v1064
        %1583 = vmatprep.subr.bf16.mxu0 0
        %1584 = vmatpush1.bf16.msra.mxu0 0
        %1585 = vmatprep.subr.bf16.mxu0 0
        %1586 = vmatpush1.bf16.msra.mxu0 0
        %1587 = vmatprep.subr.bf16.mxu0 0
        %1588 = vmatpush1.bf16.msra.mxu0 0
        %1589 = vmatprep.subr.bf16.mxu0 0
        %1590 = vmatpush1.bf16.msra.mxu0 0
        %1591 = vmatprep.subr.bf16.mxu0 0
        %1592 = vmatpush1.bf16.msra.mxu0 0
        %1593 = vmatprep.subr.bf16.mxu0 0
        %1594 = vmatpush1.bf16.msra.mxu0 0
        %1595 = vmatprep.subr.bf16.mxu0 0
        %1596 = vmatpush1.bf16.msra.mxu0 0
        %1597 = vmatprep.subr.bf16.mxu0 0
        %1598 = vmatpush1.bf16.msra.mxu0 0
        %1599 = vmatprep.mubr.bf16.mxu0 0
        %1600 = vmatmul.mubr.bf16.gmra.mrb[0].mxu0 %v1565
        %v1601 = vpop.f32.mrb[0].mxu0
        %v1602 = vadd.f32 0.0, %v1601
        %v1603 = vpop.f32.mrb[0].mxu0
        %v1604 = vpop.f32.mrb[0].mxu0
        %v1605 = vadd.f32 0.0, %v1604
        %v1606 = vpop.f32.mrb[0].mxu0
        %1607 = vdwg.mxu0
        %v1608 = vadd.f32 %v1557, %v1602
        %v1609 = vadd.f32 %v1558, %v1605
        %v1610 = vrot.slane %v1514, 1
        %1612 = vmatprep.subr.bf16.mxu0 0
        %1613 = vmatpush1.bf16.msra.mxu0 %v1167
        %1614 = vmatprep.subr.bf16.mxu0 0
        %1615 = vmatpush1.bf16.msra.mxu0 %v1168
        %1616 = vmatprep.subr.bf16.mxu0 0
        %1617 = vmatpush1.bf16.msra.mxu0 %v1169
        %1618 = vmatprep.subr.bf16.mxu0 0
        %1619 = vmatpush1.bf16.msra.mxu0 %v1170
        %1620 = vmatprep.subr.bf16.mxu0 0
        %1621 = vmatpush1.bf16.msra.mxu0 %v1171
        %1622 = vmatprep.subr.bf16.mxu0 0
        %1623 = vmatpush1.bf16.msra.mxu0 %v1172
        %1624 = vmatprep.subr.bf16.mxu0 0
        %1625 = vmatpush1.bf16.msra.mxu0 %v1173
        %1626 = vmatprep.subr.bf16.mxu0 0
        %1627 = vmatpush1.bf16.msra.mxu0 %v1174
        %1628 = vmatprep.subr.bf16.mxu0 0
        %1629 = vmatpush1.bf16.msra.mxu0 0
        %1630 = vmatprep.subr.bf16.mxu0 0
        %1631 = vmatpush1.bf16.msra.mxu0 0
        %1632 = vmatprep.subr.bf16.mxu0 0
        %1633 = vmatpush1.bf16.msra.mxu0 0
        %1634 = vmatprep.subr.bf16.mxu0 0
        %1635 = vmatpush1.bf16.msra.mxu0 0
        %1636 = vmatprep.subr.bf16.mxu0 0
        %1637 = vmatpush1.bf16.msra.mxu0 0
        %1638 = vmatprep.subr.bf16.mxu0 0
        %1639 = vmatpush1.bf16.msra.mxu0 0
        %1640 = vmatprep.subr.bf16.mxu0 0
        %1641 = vmatpush1.bf16.msra.mxu0 0
        %1642 = vmatprep.subr.bf16.mxu0 0
        %1643 = vmatpush1.bf16.msra.mxu0 0
        %1644 = vmatprep.mubr.bf16.mxu0 0
        %1645 = vmatmul.mubr.bf16.gmra.mrb[0].mxu0 %v1610
        %v1646 = vpop.f32.mrb[0].mxu0
        %v1647 = vadd.f32 0.0, %v1646
        %v1648 = vpop.f32.mrb[0].mxu0
        %v1649 = vpop.f32.mrb[0].mxu0
        %v1650 = vadd.f32 0.0, %v1649
        %v1651 = vpop.f32.mrb[0].mxu0
        %1652 = vdwg.mxu0
        %v1653 = vadd.f32 %v1608, %v1647
        %v1654 = vadd.f32 %v1609, %v1650
        %v1655 = vadd.f32 %v1653, %v1229
        %v1656 = vadd.f32 %v1654, %v1229
        %vm1657 = vcmp.ge.f32.partialorder %v1655, 0.0
        %vm1658 = vcmp.ge.f32.partialorder %v1656, 0.0
        %v1659 = vmul.f32 %v1655, 0.2
        %v1660 = vmul.f32 %v1656, 0.2
        %v1661 = vsel %vm1657, %v1655, %v1659
        %v1662 = vsel %vm1658, %v1656, %v1660
        %v1663 = vmul.f32 %v1661, %v1241
        %v1664 = vmul.f32 %v1662, %v1241
        %v1665 = vadd.f32 %v1663, %v1247
        %v1666 = vadd.f32 %v1664, %v1247
        %v1667 = vmax.f32 %v1248, %v1665
        %v1668 = vmax.f32 %v1249, %v1666
        %vm1669 = vcmask 97280
        %v1671 = vsel %vm1669, %v182, 0
        %vm1673 = vcmask 1043456
        %v1675 = vsel %vm1673, %v1668, 0
        %1677 = vmatprep.subr.mxu0 0.0
        %1678 = vmatpush1.msra.mxu0 %v1667
        %1679 = vmatprep.subr.mxu0 0.0
        %1680 = vmatpush1.msra.mxu0 %v1675
        %1681 = vmatprep.subr.mxu0 0.0
        %1682 = vmatpush1.msra.mxu0 0.0
        %1683 = vmatprep.subr.mxu0 0.0
        %1684 = vmatpush1.msra.mxu0 0.0
        %1685 = vmatprep.subr.mxu0 0.0
        %1686 = vmatpush1.msra.mxu0 0.0
        %1687 = vmatprep.subr.mxu0 0.0
        %1688 = vmatpush1.msra.mxu0 0.0
        %1689 = vmatprep.subr.mxu0 0.0
        %1690 = vmatpush1.msra.mxu0 0.0
        %1691 = vmatprep.subr.mxu0 0.0
        %1692 = vmatpush1.msra.mxu0 0.0
        %1693 = vmatprep.subr.mxu0 0.0
        %1694 = vmatpush1.msra.mxu0 0.0
        %1695 = vmatprep.subr.mxu0 0.0
        %1696 = vmatpush1.msra.mxu0 0.0
        %1697 = vmatprep.subr.mxu0 0.0
        %1698 = vmatpush1.msra.mxu0 0.0
        %1699 = vmatprep.subr.mxu0 0.0
        %1700 = vmatpush1.msra.mxu0 0.0
        %1701 = vmatprep.subr.mxu0 0.0
        %1702 = vmatpush1.msra.mxu0 0.0
        %1703 = vmatprep.subr.mxu0 0.0
        %1704 = vmatpush1.msra.mxu0 0.0
        %1705 = vmatprep.subr.mxu0 0.0
        %1706 = vmatpush1.msra.mxu0 0.0
        %1707 = vmatprep.subr.mxu0 0.0
        %1708 = vmatpush1.msra.mxu0 0.0
        %1709 = vmatprep.subr.mxu0 0.0
        %1710 = vmatpush1.msra.mxu0 0.0
        %1711 = vmatprep.subr.mxu0 0.0
        %1712 = vmatpush1.msra.mxu0 0.0
        %1713 = vmatprep.subr.mxu0 0.0
        %1714 = vmatpush1.msra.mxu0 0.0
        %1715 = vmatprep.subr.mxu0 0.0
        %1716 = vmatpush1.msra.mxu0 0.0
        %1717 = vmatprep.subr.mxu0 0.0
        %1718 = vmatpush1.msra.mxu0 0.0
        %1719 = vmatprep.subr.mxu0 0.0
        %1720 = vmatpush1.msra.mxu0 0.0
        %1721 = vmatprep.subr.mxu0 0.0
        %1722 = vmatpush1.msra.mxu0 0.0
        %1723 = vmatprep.subr.mxu0 0.0
        %1724 = vmatpush1.msra.mxu0 0.0
        %1725 = vmatprep.subr.mxu0 0.0
        %1726 = vmatpush1.msra.mxu0 0.0
        %1727 = vmatprep.subr.mxu0 0.0
        %1728 = vmatpush1.msra.mxu0 0.0
        %1729 = vmatprep.subr.mxu0 0.0
        %1730 = vmatpush1.msra.mxu0 0.0
        %1731 = vmatprep.subr.mxu0 0.0
        %1732 = vmatpush1.msra.mxu0 0.0
        %1733 = vmatprep.subr.mxu0 0.0
        %1734 = vmatpush1.msra.mxu0 0.0
        %1735 = vmatprep.subr.mxu0 0.0
        %1736 = vmatpush1.msra.mxu0 0.0
        %1737 = vmatprep.subr.mxu0 0.0
        %1738 = vmatpush1.msra.mxu0 0.0
        %1739 = vmatprep.subr.mxu0 0.0
        %1740 = vmatpush1.msra.mxu0 0.0
        %1741 = vmatprep.mubr.f32.mxu0 0.0
        %1742 = vmatmul.mubr.f32.gmra.mrb[0].mxu0 %v1671
        %v1743 = vpop.f32.mrb[0].mxu0
        %v1744 = vadd.f32 0.0, %v1743
        %v1745 = vpop.f32.mrb[0].mxu0
        %1746 = vdwg.mxu0
        %v1748 = vsel %vm1669, %v186, 0
        %1750 = vmatprep.subr.mxu0 0.0
        %1751 = vmatpush1.msra.mxu0 %v1667
        %1752 = vmatprep.subr.mxu0 0.0
        %1753 = vmatpush1.msra.mxu0 %v1675
        %1754 = vmatprep.subr.mxu0 0.0
        %1755 = vmatpush1.msra.mxu0 0.0
        %1756 = vmatprep.subr.mxu0 0.0
        %1757 = vmatpush1.msra.mxu0 0.0
        %1758 = vmatprep.subr.mxu0 0.0
        %1759 = vmatpush1.msra.mxu0 0.0
        %1760 = vmatprep.subr.mxu0 0.0
        %1761 = vmatpush1.msra.mxu0 0.0
        %1762 = vmatprep.subr.mxu0 0.0
        %1763 = vmatpush1.msra.mxu0 0.0
        %1764 = vmatprep.subr.mxu0 0.0
        %1765 = vmatpush1.msra.mxu0 0.0
        %1766 = vmatprep.subr.mxu0 0.0
        %1767 = vmatpush1.msra.mxu0 0.0
        %1768 = vmatprep.subr.mxu0 0.0
        %1769 = vmatpush1.msra.mxu0 0.0
        %1770 = vmatprep.subr.mxu0 0.0
        %1771 = vmatpush1.msra.mxu0 0.0
        %1772 = vmatprep.subr.mxu0 0.0
        %1773 = vmatpush1.msra.mxu0 0.0
        %1774 = vmatprep.subr.mxu0 0.0
        %1775 = vmatpush1.msra.mxu0 0.0
        %1776 = vmatprep.subr.mxu0 0.0
        %1777 = vmatpush1.msra.mxu0 0.0
        %1778 = vmatprep.subr.mxu0 0.0
        %1779 = vmatpush1.msra.mxu0 0.0
        %1780 = vmatprep.subr.mxu0 0.0
        %1781 = vmatpush1.msra.mxu0 0.0
        %1782 = vmatprep.subr.mxu0 0.0
        %1783 = vmatpush1.msra.mxu0 0.0
        %1784 = vmatprep.subr.mxu0 0.0
        %1785 = vmatpush1.msra.mxu0 0.0
        %1786 = vmatprep.subr.mxu0 0.0
        %1787 = vmatpush1.msra.mxu0 0.0
        %1788 = vmatprep.subr.mxu0 0.0
        %1789 = vmatpush1.msra.mxu0 0.0
        %1790 = vmatprep.subr.mxu0 0.0
        %1791 = vmatpush1.msra.mxu0 0.0
        %1792 = vmatprep.subr.mxu0 0.0
        %1793 = vmatpush1.msra.mxu0 0.0
        %1794 = vmatprep.subr.mxu0 0.0
        %1795 = vmatpush1.msra.mxu0 0.0
        %1796 = vmatprep.subr.mxu0 0.0
        %1797 = vmatpush1.msra.mxu0 0.0
        %1798 = vmatprep.subr.mxu0 0.0
        %1799 = vmatpush1.msra.mxu0 0.0
        %1800 = vmatprep.subr.mxu0 0.0
        %1801 = vmatpush1.msra.mxu0 0.0
        %1802 = vmatprep.subr.mxu0 0.0
        %1803 = vmatpush1.msra.mxu0 0.0
        %1804 = vmatprep.subr.mxu0 0.0
        %1805 = vmatpush1.msra.mxu0 0.0
        %1806 = vmatprep.subr.mxu0 0.0
        %1807 = vmatpush1.msra.mxu0 0.0
        %1808 = vmatprep.subr.mxu0 0.0
        %1809 = vmatpush1.msra.mxu0 0.0
        %1810 = vmatprep.subr.mxu0 0.0
        %1811 = vmatpush1.msra.mxu0 0.0
        %1812 = vmatprep.subr.mxu0 0.0
        %1813 = vmatpush1.msra.mxu0 0.0
        %1814 = vmatprep.mubr.f32.mxu0 0.0
        %1815 = vmatmul.mubr.f32.gmra.mrb[0].mxu0 %v1748
        %v1816 = vpop.f32.mrb[0].mxu0
        %v1817 = vadd.f32 0.0, %v1816
        %v1818 = vpop.f32.mrb[0].mxu0
        %1819 = vdwg.mxu0
        %v1820 = vmax.f32 %v1744, %v1817
        %v1821 = vpack.c.bf16 %v1820, %v1820
        %s1822 = smul.addr %s188, 4
        %s1823 = scalar_lea.vmem %s170, %s1822
        %1824 = vst [vmem:[%s1823] sm:$0x7] %v1821
      $region37: #{cnn_forward.7} parent=31 // loop_footer
        %s192 = sadd.s32 1, %s188
      $region38: #{cnn_forward.7} parent=31 // loop_footer_branch
        %187 = sbr.rel target = $region34
      $region39: #{cnn_forward.7} parent=31 // loop_exit
        _
      %p1825 = scmp.lt.s32.totalorder %s14, 1
      %s1826 = scalar_select %p1825, %s14, 1
      %s1827 = smul.addr %s1826, 6
      %s1828 = smul.addr %s1827, 4
      %s1829 = scalar_lea.vmem %s3, %s1828
      // Predicated region
      $region40: #{cnn_forward.7} parent=31 // pred_check
        %p1830 = pneg %p100
      $region41: #{cnn_forward.7} parent=31 // pred_check_branch
        %1832 = sbr.rel (%p1830) target = $region43
      $region42: #{cnn_forward.7} parent=31 // pred_region
        _
      $region43: #{cnn_forward.7} parent=31 // pred_fallthru
        _
    $region32: #{cnn_forward.7} parent=5 // pred_fallthru
      _
    %p1833 = scmp.le.s32.totalorder 2, %s9
    // Predicated region
    $region44: #{cnn_forward.7} parent=5 // pred_check
      %p1834 = pneg %p1833
    $region45: #{cnn_forward.7} parent=5 // pred_check_branch
      %1836 = sbr.rel (%p1834) target = $region47
    $region46: #{cnn_forward.7} parent=5 // pred_region
      %s1837 = ssub.s32 %s9, 2
      // Predicated region
      $region48: #{cnn_forward.7} parent=46 // pred_check
        %p1838 = pneg %p106
      $region49: #{cnn_forward.7} parent=46 // pred_check_branch
        %1840 = sbr.rel (%p1838) target = $region51
      $region50: #{cnn_forward.7} parent=46 // pred_region
        %p1841 = scmp.lt.s32.totalorder %s15, 1
        %s1842 = scalar_select %p1841, %s15, 1
        %s1843 = smul.addr %s1842, 6
        %s1844 = smul.addr %s1843, 4
        %s1845 = scalar_lea.vmem %s3, %s1844
      $region51: #{cnn_forward.7} parent=46 // pred_fallthru
        _
    $region47: #{cnn_forward.7} parent=5 // pred_fallthru
      _
  $region6: #{cnn_forward.7} parent=0 // loop_footer
    %s13 = sadd.s32 1, %s9
  $region7: #{cnn_forward.7} parent=0 // loop_footer_branch
    %8 = sbr.rel target = $region3
  $region8: #{cnn_forward.7} parent=0 // loop_exit
    _

// kernel: cnn_forward.8
$region0: #{cnn_forward.8}
  #allocation0 [shape = 'u32[]', space=smem, size = 0x4, offset = 0x4, fixed_abs, tag = 'smem constant byte address 0x4 - core index']
  #allocation1 [shape = 'u32[144,128]{1,0:T(1,128)}', space=vmem, size = 0x12000, scoped, tag = 'internal scratch']
  %s0 = inlined_call_operand.vmem [shape: bf16[2,8,8,128], index: 0, kind: input, shape index: {}]
  %s1 = inlined_call_operand.vmem [shape: bf16[9,128,128], index: 1, kind: input, shape index: {}]
  %s2 = inlined_call_operand.vmem [shape: f32[3,128], index: 2, kind: input, shape index: {}]
  %s3 = inlined_call_operand.vmem [shape: bf16[2,3,3,128], index: 3, kind: output, shape index: {}]
  %s4 = sld [smem:[#allocation0]]
  $region52: #{cnn_forward.8} parent=0
    _
  %s6 = ssub.s32 1, %s4
  %s7 = scalar_select 0, %s6, %s4
  loop: start=0, step=1, limit=4
  $region2: #{cnn_forward.8} parent=0 // loop_pre_header
    _
  $region3: #{cnn_forward.8} parent=0 // loop_header
    %s9 = sphi 0, %s13
    %p10 = scmp.ge.s32.totalorder %s9, 4
    %s19 = sphi 0, %s21
    %s22 = sphi 0, %s19
    %s23 = sphi 0, %s22
    %s39 = sphi 0, %s23
    %s43 = sphi 0, %s43
    %s45 = sphi 0, %s43
    %s46 = sphi 0, %s45
    %s60 = sphi 0, %s46
    %s64 = sphi 0, %s64
    %s66 = sphi 0, %s64
    %s67 = sphi 0, %s66
    %s81 = sphi 0, %s67
    %s87 = sphi 0, %s89
    %s90 = sphi 0, %s87
    %s91 = sphi 0, %s90
    %s107 = sphi 0, %s91
  $region4: #{cnn_forward.8} parent=0 // loop_header_branch
    %12 = sbr.rel (%p10) target = $region8
  $region5: #{cnn_forward.8} parent=0 // loop_body
    %s14 = ssub.s32 %s9, 1
    %s15 = ssub.s32 %s9, 2
    %s16 = sadd.s32 %s9, 1
    %s17 = ssub.s32 %s9, %s16
    %p18 = scmp.eq.s32.totalorder %s17, 0
    %s20 = sadd.s32 %s19, 1
    %s21 = scalar_select %p18, %s19, %s20
    %p24 = pneg %p18
    %p25 = scmp.eq.s32.totalorder %s9, 1
    %p26 = por %p24, %p25
    %p27 = scmp.ne.s32.totalorder %s19, %s22
    %p28 = scmp.eq.s32.totalorder %s9, 0
    %p29 = por %p27, %p28
    %p30 = scmp.ne.s32.totalorder %s19, %s22
    %p31 = scmp.eq.s32.totalorder %s14, 1
    %p32 = por %p30, %p31
    %p33 = scmp.ne.s32.totalorder %s22, %s23
    %p34 = scmp.eq.s32.totalorder %s14, 0
    %p35 = por %p33, %p34
    %p36 = scmp.ne.s32.totalorder %s22, %s23
    %p37 = scmp.eq.s32.totalorder %s15, 1
    %p38 = por %p36, %p37
    %p40 = scmp.ne.s32.totalorder %s23, %s39
    %p41 = scmp.eq.s32.totalorder %s15, 0
    %p42 = por %p40, %p41
    %s44 = sadd.s32 %s43, 1
    %p47 = scmp.eq.s32.totalorder %s9, 1
    %p48 = scmp.ne.s32.totalorder %s43, %s45
    %p49 = scmp.eq.s32.totalorder %s9, 0
    %p50 = por %p48, %p49
    %p51 = scmp.ne.s32.totalorder %s43, %s45
    %p52 = scmp.eq.s32.totalorder %s14, 1
    %p53 = por %p51, %p52
    %p54 = scmp.ne.s32.totalorder %s45, %s46
    %p55 = scmp.eq.s32.totalorder %s14, 0
    %p56 = por %p54, %p55
    %p57 = scmp.ne.s32.totalorder %s45, %s46
    %p58 = scmp.eq.s32.totalorder %s15, 1
    %p59 = por %p57, %p58
    %p61 = scmp.ne.s32.totalorder %s46, %s60
    %p62 = scmp.eq.s32.totalorder %s15, 0
    %p63 = por %p61, %p62
    %s65 = sadd.s32 %s64, 1
    %p68 = scmp.eq.s32.totalorder %s9, 1
    %p69 = scmp.ne.s32.totalorder %s64, %s66
    %p70 = scmp.eq.s32.totalorder %s9, 0
    %p71 = por %p69, %p70
    %p72 = scmp.ne.s32.totalorder %s64, %s66
    %p73 = scmp.eq.s32.totalorder %s14, 1
    %p74 = por %p72, %p73
    %p75 = scmp.ne.s32.totalorder %s66, %s67
    %p76 = scmp.eq.s32.totalorder %s14, 0
    %p77 = por %p75, %p76
    %p78 = scmp.ne.s32.totalorder %s66, %s67
    %p79 = scmp.eq.s32.totalorder %s15, 1
    %p80 = por %p78, %p79
    %p82 = scmp.ne.s32.totalorder %s67, %s81
    %p83 = scmp.eq.s32.totalorder %s15, 0
    %p84 = por %p82, %p83
    %s85 = ssub.s32 %s9, %s16
    %p86 = scmp.eq.s32.totalorder %s85, 0
    %s88 = sadd.s32 %s87, 1
    %s89 = scalar_select %p86, %s87, %s88
    %p92 = pneg %p86
    %p93 = scmp.eq.s32.totalorder %s9, 1
    %p94 = por %p92, %p93
    %p95 = scmp.ne.s32.totalorder %s87, %s90
    %p96 = scmp.eq.s32.totalorder %s9, 0
    %p97 = por %p95, %p96
    %p98 = scmp.ne.s32.totalorder %s87, %s90
    %p99 = scmp.eq.s32.totalorder %s14, 1
    %p100 = por %p98, %p99
    %p101 = scmp.ne.s32.totalorder %s90, %s91
    %p102 = scmp.eq.s32.totalorder %s14, 0
    %p103 = por %p101, %p102
    %p104 = scmp.ne.s32.totalorder %s90, %s91
    %p105 = scmp.eq.s32.totalorder %s15, 1
    %p106 = por %p104, %p105
    %p108 = scmp.ne.s32.totalorder %s91, %s107
    %p109 = scmp.eq.s32.totalorder %s15, 0
    %p110 = por %p108, %p109
    %p111 = scmp.le.s32.totalorder 1, %s9
    %p112 = scmp.lt.s32.totalorder %s9, 3
    %p113 = pnand %p111, %p112
    %p114 = pneg %p113
    // Predicated region
    $region9: #{cnn_forward.8} parent=5 // pred_check
      _
    $region10: #{cnn_forward.8} parent=5 // pred_check_branch
      %116 = sbr.rel (%p113) target = $region12
    $region11: #{cnn_forward.8} parent=5 // pred_region
      %s117 = ssub.s32 %s9, 1
      // Predicated region
      $region13: #{cnn_forward.8} parent=11 // pred_check
        %p118 = pneg %p56
      $region14: #{cnn_forward.8} parent=11 // pred_check_branch
        %120 = sbr.rel (%p118) target = $region16
      $region15: #{cnn_forward.8} parent=11 // pred_region
        _
      $region16: #{cnn_forward.8} parent=11 // pred_fallthru
        _
      // Predicated region
      $region17: #{cnn_forward.8} parent=11 // pred_check
        %p121 = pneg %p77
      $region18: #{cnn_forward.8} parent=11 // pred_check_branch
        %123 = sbr.rel (%p121) target = $region20
      $region19: #{cnn_forward.8} parent=11 // pred_region
        _
      $region20: #{cnn_forward.8} parent=11 // pred_fallthru
        _
    $region12: #{cnn_forward.8} parent=5 // pred_fallthru
      _
    %p124 = scmp.lt.s32.totalorder %s9, 2
    // Predicated region
    $region21: #{cnn_forward.8} parent=5 // pred_check
      %p125 = pneg %p124
    $region22: #{cnn_forward.8} parent=5 // pred_check_branch
      %127 = sbr.rel (%p125) target = $region24
    $region23: #{cnn_forward.8} parent=5 // pred_region
      // Predicated region
      $region25: #{cnn_forward.8} parent=23 // pred_check
        %p128 = pneg %p29
      $region26: #{cnn_forward.8} parent=23 // pred_check_branch
        %130 = sbr.rel (%p128) target = $region28
      $region27: #{cnn_forward.8} parent=23 // pred_region
        %p131 = scmp.lt.s32.totalorder %s9, 1
        %s132 = scalar_select %p131, %s9, 1
        %s133 = smul.addr %s132, 8
        %s134 = smul.addr %s133, 4
        %s135 = scalar_lea.vmem %s0, %s134
      $region28: #{cnn_forward.8} parent=23 // pred_fallthru
        _
    $region24: #{cnn_forward.8} parent=5 // pred_fallthru
      _
    %p136 = scmp.le.s32.totalorder 1, %s9
    %p137 = scmp.lt.s32.totalorder %s9, 3
    %p138 = pnand %p136, %p137
    %p139 = pneg %p138
    // Predicated region
    $region29: #{cnn_forward.8} parent=5 // pred_check
      _
    $region30: #{cnn_forward.8} parent=5 // pred_check_branch
      %141 = sbr.rel (%p138) target = $region32
    $region31: #{cnn_forward.8} parent=5 // pred_region
      %s142 = ssub.s32 %s9, 1
      %p143 = scmp.lt.s32.totalorder %s14, 1
      %s144 = scalar_select %p143, %s14, 1
      %s145 = smul.addr %s144, 8
      %s146 = smul.addr %s145, 4
      %s147 = scalar_lea.vmem %s0, %s146
      %p148 = pneg %p35
      %p149 = pneg %p32
      %p150 = pneg %p56
      %p151 = pneg %p53
      %p152 = pneg %p77
      %p153 = pneg %p74
      %p154 = pneg %p103
      %p155 = pneg %p100
      %p156 = scmp.lt.s32.totalorder %s14, 1
      %s157 = scalar_select %p156, %s14, 1
      %s158 = smul.addr %s157, 3
      %s159 = smul.addr %s158, 2
      %s160 = scalar_lea.vmem %s3, %s159
      %p161 = scmp.lt.s32.totalorder %s14, 1
      %s162 = scalar_select %p161, %s14, 1
      %s163 = smul.addr %s162, 8
      %s164 = smul.addr %s163, 4
      %s165 = scalar_lea.vmem %s0, %s164
      %p166 = scmp.lt.s32.totalorder %s14, 1
      %s167 = scalar_select %p166, %s14, 1
      %s168 = smul.addr %s167, 3
      %s169 = smul.addr %s168, 2
      %s170 = scalar_lea.vmem %s3, %s169
      %v172 = vld [vmem:[%s2] sm:$0x1]
      %v173 = vld [vmem:[%s2 + $0x1] sm:$0x1]
      %v174 = vld [vmem:[%s2 + $0x2] sm:$0x1]
      %v175 = vlaneseq
      %v176 = vshrl.u32 %v175, 7
      %v177 = vlaneseq
      %v178 = vand.u32 %v177, 127
      %v179 = vmul.u32 %v176, 2
      %vm180 = vcmp.eq.s32.totalorder %v178, %v179
      %v181 = vsel %vm180, 1, 0
      %v182 = vcvt.s32.f32 %v181
      %v183 = vadd.s32 %v179, 1
      %vm184 = vcmp.eq.s32.totalorder %v178, %v183
      %v185 = vsel %vm184, 1, 0
      %v186 = vcvt.s32.f32 %v185
      loop: start=0, step=1, limit=3
      $region33: #{cnn_forward.8} parent=31 // loop_pre_header
        _
      $region34: #{cnn_forward.8} parent=31 // loop_header
        %s188 = sphi 0, %s192
        %p189 = scmp.ge.s32.totalorder %s188, 3
      $region35: #{cnn_forward.8} parent=31 // loop_header_branch
        %191 = sbr.rel (%p189) target = $region39
      $region36: #{cnn_forward.8} parent=31 // loop_body
        %s193 = smul.u32 %s188, 2
        %s194 = smul.addr %s193, 4
        %s195 = scalar_lea.vmem %s165, %s194
        %v196 = vld [vmem:[%s195] sm:$0xf]
        %v197 = vld [vmem:[%s1] sm:$0xf]
        %v198 = vld [vmem:[%s1 + $0x4] sm:$0xf]
        %v199 = vld [vmem:[%s1 + $0x8] sm:$0xf]
        %v200 = vld [vmem:[%s1 + $0xc] sm:$0xf]
        %v201 = vld [vmem:[%s1 + $0x10] sm:$0xf]
        %v202 = vld [vmem:[%s1 + $0x14] sm:$0xf]
        %v203 = vld [vmem:[%s1 + $0x18] sm:$0xf]
        %v204 = vld [vmem:[%s1 + $0x1c] sm:$0xf]
        %v205 = vld [vmem:[%s1 + $0x20] sm:$0xf]
        %v206 = vld [vmem:[%s1 + $0x24] sm:$0xf]
        %v207 = vld [vmem:[%s1 + $0x28] sm:$0xf]
        %v208 = vld [vmem:[%s1 + $0x2c] sm:$0xf]
        %v209 = vld [vmem:[%s1 + $0x30] sm:$0xf]
        %v210 = vld [vmem:[%s1 + $0x34] sm:$0xf]
        %v211 = vld [vmem:[%s1 + $0x38] sm:$0xf]
        %v212 = vld [vmem:[%s1 + $0x3c] sm:$0xf]
        %s213 = scalar_lea.vmem %s1, 64
        %v214 = vld [vmem:[%s213] sm:$0xf]
        %v215 = vld [vmem:[%s213 + $0x4] sm:$0xf]
        %v216 = vld [vmem:[%s213 + $0x8] sm:$0xf]
        %v217 = vld [vmem:[%s213 + $0xc] sm:$0xf]
        %v218 = vld [vmem:[%s213 + $0x10] sm:$0xf]
        %v219 = vld [vmem:[%s213 + $0x14] sm:$0xf]
        %v220 = vld [vmem:[%s213 + $0x18] sm:$0xf]
        %v221 = vld [vmem:[%s213 + $0x1c] sm:$0xf]
        %v222 = vld [vmem:[%s213 + $0x20] sm:$0xf]
        %v223 = vld [vmem:[%s213 + $0x24] sm:$0xf]
        %v224 = vld [vmem:[%s213 + $0x28] sm:$0xf]
        %v225 = vld [vmem:[%s213 + $0x2c] sm:$0xf]
        %v226 = vld [vmem:[%s213 + $0x30] sm:$0xf]
        %v227 = vld [vmem:[%s213 + $0x34] sm:$0xf]
        %v228 = vld [vmem:[%s213 + $0x38] sm:$0xf]
        %v229 = vld [vmem:[%s213 + $0x3c] sm:$0xf]
        %v231 = vunpack.c.l.b16 %v196
        %v232 = vpack.c.b16 %v231, %v231
        %v234 = vshrl.u32 %v232, 16
        %v236 = vshll.u32 %v232, 16
        %v238 = vrot.slane %v236, 1
        %v239 = vor.u32 %v234, %v238
        %v257 = vunpack.c.l.b16 %v214
        %v258 = vunpack.c.l.b16 %v215
        %v259 = vunpack.c.l.b16 %v216
        %v260 = vunpack.c.l.b16 %v217
        %v261 = vunpack.c.l.b16 %v218
        %v262 = vunpack.c.l.b16 %v219
        %v263 = vunpack.c.l.b16 %v220
        %v264 = vunpack.c.l.b16 %v221
        %v265 = vunpack.c.l.b16 %v222
        %v266 = vunpack.c.l.b16 %v223
        %v267 = vunpack.c.l.b16 %v224
        %v268 = vunpack.c.l.b16 %v225
        %v269 = vunpack.c.l.b16 %v226
        %v270 = vunpack.c.l.b16 %v227
        %v271 = vunpack.c.l.b16 %v228
        %v272 = vunpack.c.l.b16 %v229
        %v273 = vpack.c.b16 %v258, %v257
        %v274 = vpack.c.b16 %v260, %v259
        %v275 = vpack.c.b16 %v262, %v261
        %v276 = vpack.c.b16 %v264, %v263
        %v277 = vpack.c.b16 %v266, %v265
        %v278 = vpack.c.b16 %v268, %v267
        %v279 = vpack.c.b16 %v270, %v269
        %v280 = vpack.c.b16 %v272, %v271
        %289 = vmatprep.subr.bf16.mxu0 0
        %290 = vmatpush1.bf16.msra.mxu0 %v273
        %291 = vmatprep.subr.bf16.mxu0 0
        %292 = vmatpush1.bf16.msra.mxu0 %v274
        %293 = vmatprep.subr.bf16.mxu0 0
        %294 = vmatpush1.bf16.msra.mxu0 %v275
        %295 = vmatprep.subr.bf16.mxu0 0
        %296 = vmatpush1.bf16.msra.mxu0 %v276
        %297 = vmatprep.subr.bf16.mxu0 0
        %298 = vmatpush1.bf16.msra.mxu0 %v277
        %299 = vmatprep.subr.bf16.mxu0 0
        %300 = vmatpush1.bf16.msra.mxu0 %v278
        %301 = vmatprep.subr.bf16.mxu0 0
        %302 = vmatpush1.bf16.msra.mxu0 %v279
        %303 = vmatprep.subr.bf16.mxu0 0
        %304 = vmatpush1.bf16.msra.mxu0 %v280
        %305 = vmatprep.subr.bf16.mxu0 0
        %306 = vmatpush1.bf16.msra.mxu0 0
        %307 = vmatprep.subr.bf16.mxu0 0
        %308 = vmatpush1.bf16.msra.mxu0 0
        %309 = vmatprep.subr.bf16.mxu0 0
        %310 = vmatpush1.bf16.msra.mxu0 0
        %311 = vmatprep.subr.bf16.mxu0 0
        %312 = vmatpush1.bf16.msra.mxu0 0
        %313 = vmatprep.subr.bf16.mxu0 0
        %314 = vmatpush1.bf16.msra.mxu0 0
        %315 = vmatprep.subr.bf16.mxu0 0
        %316 = vmatpush1.bf16.msra.mxu0 0
        %317 = vmatprep.subr.bf16.mxu0 0
        %318 = vmatpush1.bf16.msra.mxu0 0
        %319 = vmatprep.subr.bf16.mxu0 0
        %320 = vmatpush1.bf16.msra.mxu0 0
        %321 = vmatprep.mubr.bf16.mxu0 0
        %322 = vmatmul.mubr.bf16.gmra.mrb[0].mxu0 %v239
        %v323 = vpop.f32.mrb[0].mxu0
        %v324 = vadd.f32 0.0, %v323
        %v325 = vpop.f32.mrb[0].mxu0
        %v326 = vpop.f32.mrb[0].mxu0
        %v327 = vpop.f32.mrb[0].mxu0
        %328 = vdwg.mxu0
        %v345 = vunpack.c.l.b16 %v197
        %v346 = vunpack.c.l.b16 %v198
        %v347 = vunpack.c.l.b16 %v199
        %v348 = vunpack.c.l.b16 %v200
        %v349 = vunpack.c.l.b16 %v201
        %v350 = vunpack.c.l.b16 %v202
        %v351 = vunpack.c.l.b16 %v203
        %v352 = vunpack.c.l.b16 %v204
        %v353 = vunpack.c.l.b16 %v205
        %v354 = vunpack.c.l.b16 %v206
        %v355 = vunpack.c.l.b16 %v207
        %v356 = vunpack.c.l.b16 %v208
        %v357 = vunpack.c.l.b16 %v209
        %v358 = vunpack.c.l.b16 %v210
        %v359 = vunpack.c.l.b16 %v211
        %v360 = vunpack.c.l.b16 %v212
        %v361 = vpack.c.b16 %v346, %v345
        %v362 = vpack.c.b16 %v348, %v347
        %v363 = vpack.c.b16 %v350, %v349
        %v364 = vpack.c.b16 %v352, %v351
        %v365 = vpack.c.b16 %v354, %v353
        %v366 = vpack.c.b16 %v356, %v355
        %v367 = vpack.c.b16 %v358, %v357
        %v368 = vpack.c.b16 %v360, %v359
        %377 = vmatprep.subr.bf16.mxu0 0
        %378 = vmatpush1.bf16.msra.mxu0 %v361
        %379 = vmatprep.subr.bf16.mxu0 0
        %380 = vmatpush1.bf16.msra.mxu0 %v362
        %381 = vmatprep.subr.bf16.mxu0 0
        %382 = vmatpush1.bf16.msra.mxu0 %v363
        %383 = vmatprep.subr.bf16.mxu0 0
        %384 = vmatpush1.bf16.msra.mxu0 %v364
        %385 = vmatprep.subr.bf16.mxu0 0
        %386 = vmatpush1.bf16.msra.mxu0 %v365
        %387 = vmatprep.subr.bf16.mxu0 0
        %388 = vmatpush1.bf16.msra.mxu0 %v366
        %389 = vmatprep.subr.bf16.mxu0 0
        %390 = vmatpush1.bf16.msra.mxu0 %v367
        %391 = vmatprep.subr.bf16.mxu0 0
        %392 = vmatpush1.bf16.msra.mxu0 %v368
        %393 = vmatprep.subr.bf16.mxu0 0
        %394 = vmatpush1.bf16.msra.mxu0 0
        %395 = vmatprep.subr.bf16.mxu0 0
        %396 = vmatpush1.bf16.msra.mxu0 0
        %397 = vmatprep.subr.bf16.mxu0 0
        %398 = vmatpush1.bf16.msra.mxu0 0
        %399 = vmatprep.subr.bf16.mxu0 0
        %400 = vmatpush1.bf16.msra.mxu0 0
        %401 = vmatprep.subr.bf16.mxu0 0
        %402 = vmatpush1.bf16.msra.mxu0 0
        %403 = vmatprep.subr.bf16.mxu0 0
        %404 = vmatpush1.bf16.msra.mxu0 0
        %405 = vmatprep.subr.bf16.mxu0 0
        %406 = vmatpush1.bf16.msra.mxu0 0
        %407 = vmatprep.subr.bf16.mxu0 0
        %408 = vmatpush1.bf16.msra.mxu0 0
        %409 = vmatprep.mubr.bf16.mxu0 0
        %410 = vmatmul.mubr.bf16.gmra.mrb[0].mxu0 %v196
        %v411 = vpop.f32.mrb[0].mxu0
        %v412 = vadd.f32 %v324, %v411
        %v413 = vpop.f32.mrb[0].mxu0
        %v414 = vpop.f32.mrb[0].mxu0
        %v415 = vpop.f32.mrb[0].mxu0
        %416 = vdwg.mxu0
        %s417 = scalar_lea.vmem %s1, 128
        %v418 = vld [vmem:[%s417] sm:$0xf]
        %v419 = vld [vmem:[%s417 + $0x4] sm:$0xf]
        %v420 = vld [vmem:[%s417 + $0x8] sm:$0xf]
        %v421 = vld [vmem:[%s417 + $0xc] sm:$0xf]
        %v422 = vld [vmem:[%s417 + $0x10] sm:$0xf]
        %v423 = vld [vmem:[%s417 + $0x14] sm:$0xf]
        %v424 = vld [vmem:[%s417 + $0x18] sm:$0xf]
        %v425 = vld [vmem:[%s417 + $0x1c] sm:$0xf]
        %v426 = vld [vmem:[%s417 + $0x20] sm:$0xf]
        %v427 = vld [vmem:[%s417 + $0x24] sm:$0xf]
        %v428 = vld [vmem:[%s417 + $0x28] sm:$0xf]
        %v429 = vld [vmem:[%s417 + $0x2c] sm:$0xf]
        %v430 = vld [vmem:[%s417 + $0x30] sm:$0xf]
        %v431 = vld [vmem:[%s417 + $0x34] sm:$0xf]
        %v432 = vld [vmem:[%s417 + $0x38] sm:$0xf]
        %v433 = vld [vmem:[%s417 + $0x3c] sm:$0xf]
        %v434 = vrot.slane %v232, 1
        %v452 = vunpack.c.l.b16 %v418
        %v453 = vunpack.c.l.b16 %v419
        %v454 = vunpack.c.l.b16 %v420
        %v455 = vunpack.c.l.b16 %v421
        %v456 = vunpack.c.l.b16 %v422
        %v457 = vunpack.c.l.b16 %v423
        %v458 = vunpack.c.l.b16 %v424
        %v459 = vunpack.c.l.b16 %v425
        %v460 = vunpack.c.l.b16 %v426
        %v461 = vunpack.c.l.b16 %v427
        %v462 = vunpack.c.l.b16 %v428
        %v463 = vunpack.c.l.b16 %v429
        %v464 = vunpack.c.l.b16 %v430
        %v465 = vunpack.c.l.b16 %v431
        %v466 = vunpack.c.l.b16 %v432
        %v467 = vunpack.c.l.b16 %v433
        %v468 = vpack.c.b16 %v453, %v452
        %v469 = vpack.c.b16 %v455, %v454
        %v470 = vpack.c.b16 %v457, %v456
        %v471 = vpack.c.b16 %v459, %v458
        %v472 = vpack.c.b16 %v461, %v460
        %v473 = vpack.c.b16 %v463, %v462
        %v474 = vpack.c.b16 %v465, %v464
        %v475 = vpack.c.b16 %v467, %v466
        %484 = vmatprep.subr.bf16.mxu0 0
        %485 = vmatpush1.bf16.msra.mxu0 %v468
        %486 = vmatprep.subr.bf16.mxu0 0
        %487 = vmatpush1.bf16.msra.mxu0 %v469
        %488 = vmatprep.subr.bf16.mxu0 0
        %489 = vmatpush1.bf16.msra.mxu0 %v470
        %490 = vmatprep.subr.bf16.mxu0 0
        %491 = vmatpush1.bf16.msra.mxu0 %v471
        %492 = vmatprep.subr.bf16.mxu0 0
        %493 = vmatpush1.bf16.msra.mxu0 %v472
        %494 = vmatprep.subr.bf16.mxu0 0
        %495 = vmatpush1.bf16.msra.mxu0 %v473
        %496 = vmatprep.subr.bf16.mxu0 0
        %497 = vmatpush1.bf16.msra.mxu0 %v474
        %498 = vmatprep.subr.bf16.mxu0 0
        %499 = vmatpush1.bf16.msra.mxu0 %v475
        %500 = vmatprep.subr.bf16.mxu0 0
        %501 = vmatpush1.bf16.msra.mxu0 0
        %502 = vmatprep.subr.bf16.mxu0 0
        %503 = vmatpush1.bf16.msra.mxu0 0
        %504 = vmatprep.subr.bf16.mxu0 0
        %505 = vmatpush1.bf16.msra.mxu0 0
        %506 = vmatprep.subr.bf16.mxu0 0
        %507 = vmatpush1.bf16.msra.mxu0 0
        %508 = vmatprep.subr.bf16.mxu0 0
        %509 = vmatpush1.bf16.msra.mxu0 0
        %510 = vmatprep.subr.bf16.mxu0 0
        %511 = vmatpush1.bf16.msra.mxu0 0
        %512 = vmatprep.subr.bf16.mxu0 0
        %513 = vmatpush1.bf16.msra.mxu0 0
        %514 = vmatprep.subr.bf16.mxu0 0
        %515 = vmatpush1.bf16.msra.mxu0 0
        %516 = vmatprep.mubr.bf16.mxu0 0
        %517 = vmatmul.mubr.bf16.gmra.mrb[0].mxu0 %v434
        %v518 = vpop.f32.mrb[0].mxu0
        %v519 = vadd.f32 0.0, %v518
        %v520 = vpop.f32.mrb[0].mxu0
        %v521 = vpop.f32.mrb[0].mxu0
        %v522 = vpop.f32.mrb[0].mxu0
        %523 = vdwg.mxu0
        %v524 = vadd.f32 %v412, %v519
        %s525 = sadd.s32 %s193, 1
        %s526 = smul.addr %s525, 4
        %s527 = scalar_lea.vmem %s165, %s526
        %v528 = vld [vmem:[%s527] sm:$0xf]
        %s529 = scalar_lea.vmem %s1, 192
        %v530 = vld [vmem:[%s529] sm:$0xf]
        %v531 = vld [vmem:[%s529 + $0x4] sm:$0xf]
        %v532 = vld [vmem:[%s529 + $0x8] sm:$0xf]
        %v533 = vld [vmem:[%s529 + $0xc] sm:$0xf]
        %v534 = vld [vmem:[%s529 + $0x10] sm:$0xf]
        %v535 = vld [vmem:[%s529 + $0x14] sm:$0xf]
        %v536 = vld [vmem:[%s529 + $0x18] sm:$0xf]
        %v537 = vld [vmem:[%s529 + $0x1c] sm:$0xf]
        %v538 = vld [vmem:[%s529 + $0x20] sm:$0xf]
        %v539 = vld [vmem:[%s529 + $0x24] sm:$0xf]
        %v540 = vld [vmem:[%s529 + $0x28] sm:$0xf]
        %v541 = vld [vmem:[%s529 + $0x2c] sm:$0xf]
        %v542 = vld [vmem:[%s529 + $0x30] sm:$0xf]
        %v543 = vld [vmem:[%s529 + $0x34] sm:$0xf]
        %v544 = vld [vmem:[%s529 + $0x38] sm:$0xf]
        %v545 = vld [vmem:[%s529 + $0x3c] sm:$0xf]
        %v562 = vunpack.c.l.b16 %v530
        %v563 = vunpack.c.l.b16 %v531
        %v564 = vunpack.c.l.b16 %v532
        %v565 = vunpack.c.l.b16 %v533
        %v566 = vunpack.c.l.b16 %v534
        %v567 = vunpack.c.l.b16 %v535
        %v568 = vunpack.c.l.b16 %v536
        %v569 = vunpack.c.l.b16 %v537
        %v570 = vunpack.c.l.b16 %v538
        %v571 = vunpack.c.l.b16 %v539
        %v572 = vunpack.c.l.b16 %v540
        %v573 = vunpack.c.l.b16 %v541
        %v574 = vunpack.c.l.b16 %v542
        %v575 = vunpack.c.l.b16 %v543
        %v576 = vunpack.c.l.b16 %v544
        %v577 = vunpack.c.l.b16 %v545
        %v578 = vpack.c.b16 %v563, %v562
        %v579 = vpack.c.b16 %v565, %v564
        %v580 = vpack.c.b16 %v567, %v566
        %v581 = vpack.c.b16 %v569, %v568
        %v582 = vpack.c.b16 %v571, %v570
        %v583 = vpack.c.b16 %v573, %v572
        %v584 = vpack.c.b16 %v575, %v574
        %v585 = vpack.c.b16 %v577, %v576
        %594 = vmatprep.subr.bf16.mxu0 0
        %595 = vmatpush1.bf16.msra.mxu0 %v578
        %596 = vmatprep.subr.bf16.mxu0 0
        %597 = vmatpush1.bf16.msra.mxu0 %v579
        %598 = vmatprep.subr.bf16.mxu0 0
        %599 = vmatpush1.bf16.msra.mxu0 %v580
        %600 = vmatprep.subr.bf16.mxu0 0
        %601 = vmatpush1.bf16.msra.mxu0 %v581
        %602 = vmatprep.subr.bf16.mxu0 0
        %603 = vmatpush1.bf16.msra.mxu0 %v582
        %604 = vmatprep.subr.bf16.mxu0 0
        %605 = vmatpush1.bf16.msra.mxu0 %v583
        %606 = vmatprep.subr.bf16.mxu0 0
        %607 = vmatpush1.bf16.msra.mxu0 %v584
        %608 = vmatprep.subr.bf16.mxu0 0
        %609 = vmatpush1.bf16.msra.mxu0 %v585
        %610 = vmatprep.subr.bf16.mxu0 0
        %611 = vmatpush1.bf16.msra.mxu0 0
        %612 = vmatprep.subr.bf16.mxu0 0
        %613 = vmatpush1.bf16.msra.mxu0 0
        %614 = vmatprep.subr.bf16.mxu0 0
        %615 = vmatpush1.bf16.msra.mxu0 0
        %616 = vmatprep.subr.bf16.mxu0 0
        %617 = vmatpush1.bf16.msra.mxu0 0
        %618 = vmatprep.subr.bf16.mxu0 0
        %619 = vmatpush1.bf16.msra.mxu0 0
        %620 = vmatprep.subr.bf16.mxu0 0
        %621 = vmatpush1.bf16.msra.mxu0 0
        %622 = vmatprep.subr.bf16.mxu0 0
        %623 = vmatpush1.bf16.msra.mxu0 0
        %624 = vmatprep.subr.bf16.mxu0 0
        %625 = vmatpush1.bf16.msra.mxu0 0
        %626 = vmatprep.mubr.bf16.mxu0 0
        %627 = vmatmul.mubr.bf16.gmra.mrb[0].mxu0 %v528
        %v628 = vpop.f32.mrb[0].mxu0
        %v629 = vadd.f32 0.0, %v628
        %v630 = vpop.f32.mrb[0].mxu0
        %v631 = vpop.f32.mrb[0].mxu0
        %v632 = vpop.f32.mrb[0].mxu0
        %633 = vdwg.mxu0
        %v634 = vadd.f32 %v524, %v629
        %s635 = scalar_lea.vmem %s1, 256
        %v636 = vld [vmem:[%s635] sm:$0xf]
        %v637 = vld [vmem:[%s635 + $0x4] sm:$0xf]
        %v638 = vld [vmem:[%s635 + $0x8] sm:$0xf]
        %v639 = vld [vmem:[%s635 + $0xc] sm:$0xf]
        %v640 = vld [vmem:[%s635 + $0x10] sm:$0xf]
        %v641 = vld [vmem:[%s635 + $0x14] sm:$0xf]
        %v642 = vld [vmem:[%s635 + $0x18] sm:$0xf]
        %v643 = vld [vmem:[%s635 + $0x1c] sm:$0xf]
        %v644 = vld [vmem:[%s635 + $0x20] sm:$0xf]
        %v645 = vld [vmem:[%s635 + $0x24] sm:$0xf]
        %v646 = vld [vmem:[%s635 + $0x28] sm:$0xf]
        %v647 = vld [vmem:[%s635 + $0x2c] sm:$0xf]
        %v648 = vld [vmem:[%s635 + $0x30] sm:$0xf]
        %v649 = vld [vmem:[%s635 + $0x34] sm:$0xf]
        %v650 = vld [vmem:[%s635 + $0x38] sm:$0xf]
        %v651 = vld [vmem:[%s635 + $0x3c] sm:$0xf]
        %v653 = vunpack.c.l.b16 %v528
        %v654 = vpack.c.b16 %v653, %v653
        %v656 = vshrl.u32 %v654, 16
        %v658 = vshll.u32 %v654, 16
        %v660 = vrot.slane %v658, 1
        %v661 = vor.u32 %v656, %v660
        %v679 = vunpack.c.l.b16 %v636
        %v680 = vunpack.c.l.b16 %v637
        %v681 = vunpack.c.l.b16 %v638
        %v682 = vunpack.c.l.b16 %v639
        %v683 = vunpack.c.l.b16 %v640
        %v684 = vunpack.c.l.b16 %v641
        %v685 = vunpack.c.l.b16 %v642
        %v686 = vunpack.c.l.b16 %v643
        %v687 = vunpack.c.l.b16 %v644
        %v688 = vunpack.c.l.b16 %v645
        %v689 = vunpack.c.l.b16 %v646
        %v690 = vunpack.c.l.b16 %v647
        %v691 = vunpack.c.l.b16 %v648
        %v692 = vunpack.c.l.b16 %v649
        %v693 = vunpack.c.l.b16 %v650
        %v694 = vunpack.c.l.b16 %v651
        %v695 = vpack.c.b16 %v680, %v679
        %v696 = vpack.c.b16 %v682, %v681
        %v697 = vpack.c.b16 %v684, %v683
        %v698 = vpack.c.b16 %v686, %v685
        %v699 = vpack.c.b16 %v688, %v687
        %v700 = vpack.c.b16 %v690, %v689
        %v701 = vpack.c.b16 %v692, %v691
        %v702 = vpack.c.b16 %v694, %v693
        %711 = vmatprep.subr.bf16.mxu0 0
        %712 = vmatpush1.bf16.msra.mxu0 %v695
        %713 = vmatprep.subr.bf16.mxu0 0
        %714 = vmatpush1.bf16.msra.mxu0 %v696
        %715 = vmatprep.subr.bf16.mxu0 0
        %716 = vmatpush1.bf16.msra.mxu0 %v697
        %717 = vmatprep.subr.bf16.mxu0 0
        %718 = vmatpush1.bf16.msra.mxu0 %v698
        %719 = vmatprep.subr.bf16.mxu0 0
        %720 = vmatpush1.bf16.msra.mxu0 %v699
        %721 = vmatprep.subr.bf16.mxu0 0
        %722 = vmatpush1.bf16.msra.mxu0 %v700
        %723 = vmatprep.subr.bf16.mxu0 0
        %724 = vmatpush1.bf16.msra.mxu0 %v701
        %725 = vmatprep.subr.bf16.mxu0 0
        %726 = vmatpush1.bf16.msra.mxu0 %v702
        %727 = vmatprep.subr.bf16.mxu0 0
        %728 = vmatpush1.bf16.msra.mxu0 0
        %729 = vmatprep.subr.bf16.mxu0 0
        %730 = vmatpush1.bf16.msra.mxu0 0
        %731 = vmatprep.subr.bf16.mxu0 0
        %732 = vmatpush1.bf16.msra.mxu0 0
        %733 = vmatprep.subr.bf16.mxu0 0
        %734 = vmatpush1.bf16.msra.mxu0 0
        %735 = vmatprep.subr.bf16.mxu0 0
        %736 = vmatpush1.bf16.msra.mxu0 0
        %737 = vmatprep.subr.bf16.mxu0 0
        %738 = vmatpush1.bf16.msra.mxu0 0
        %739 = vmatprep.subr.bf16.mxu0 0
        %740 = vmatpush1.bf16.msra.mxu0 0
        %741 = vmatprep.subr.bf16.mxu0 0
        %742 = vmatpush1.bf16.msra.mxu0 0
        %743 = vmatprep.mubr.bf16.mxu0 0
        %744 = vmatmul.mubr.bf16.gmra.mrb[0].mxu0 %v661
        %v745 = vpop.f32.mrb[0].mxu0
        %v746 = vadd.f32 0.0, %v745
        %v747 = vpop.f32.mrb[0].mxu0
        %v748 = vpop.f32.mrb[0].mxu0
        %v749 = vpop.f32.mrb[0].mxu0
        %750 = vdwg.mxu0
        %v751 = vadd.f32 %v634, %v746
        %s752 = scalar_lea.vmem %s1, 320
        %v753 = vld [vmem:[%s752] sm:$0xf]
        %v754 = vld [vmem:[%s752 + $0x4] sm:$0xf]
        %v755 = vld [vmem:[%s752 + $0x8] sm:$0xf]
        %v756 = vld [vmem:[%s752 + $0xc] sm:$0xf]
        %v757 = vld [vmem:[%s752 + $0x10] sm:$0xf]
        %v758 = vld [vmem:[%s752 + $0x14] sm:$0xf]
        %v759 = vld [vmem:[%s752 + $0x18] sm:$0xf]
        %v760 = vld [vmem:[%s752 + $0x1c] sm:$0xf]
        %v761 = vld [vmem:[%s752 + $0x20] sm:$0xf]
        %v762 = vld [vmem:[%s752 + $0x24] sm:$0xf]
        %v763 = vld [vmem:[%s752 + $0x28] sm:$0xf]
        %v764 = vld [vmem:[%s752 + $0x2c] sm:$0xf]
        %v765 = vld [vmem:[%s752 + $0x30] sm:$0xf]
        %v766 = vld [vmem:[%s752 + $0x34] sm:$0xf]
        %v767 = vld [vmem:[%s752 + $0x38] sm:$0xf]
        %v768 = vld [vmem:[%s752 + $0x3c] sm:$0xf]
        %v769 = vrot.slane %v654, 1
        %v787 = vunpack.c.l.b16 %v753
        %v788 = vunpack.c.l.b16 %v754
        %v789 = vunpack.c.l.b16 %v755
        %v790 = vunpack.c.l.b16 %v756
        %v791 = vunpack.c.l.b16 %v757
        %v792 = vunpack.c.l.b16 %v758
        %v793 = vunpack.c.l.b16 %v759
        %v794 = vunpack.c.l.b16 %v760
        %v795 = vunpack.c.l.b16 %v761
        %v796 = vunpack.c.l.b16 %v762
        %v797 = vunpack.c.l.b16 %v763
        %v798 = vunpack.c.l.b16 %v764
        %v799 = vunpack.c.l.b16 %v765
        %v800 = vunpack.c.l.b16 %v766
        %v801 = vunpack.c.l.b16 %v767
        %v802 = vunpack.c.l.b16 %v768
        %v803 = vpack.c.b16 %v788, %v787
        %v804 = vpack.c.b16 %v790, %v789
        %v805 = vpack.c.b16 %v792, %v791
        %v806 = vpack.c.b16 %v794, %v793
        %v807 = vpack.c.b16 %v796, %v795
        %v808 = vpack.c.b16 %v798, %v797
        %v809 = vpack.c.b16 %v800, %v799
        %v810 = vpack.c.b16 %v802, %v801
        %819 = vmatprep.subr.bf16.mxu0 0
        %820 = vmatpush1.bf16.msra.mxu0 %v803
        %821 = vmatprep.subr.bf16.mxu0 0
        %822 = vmatpush1.bf16.msra.mxu0 %v804
        %823 = vmatprep.subr.bf16.mxu0 0
        %824 = vmatpush1.bf16.msra.mxu0 %v805
        %825 = vmatprep.subr.bf16.mxu0 0
        %826 = vmatpush1.bf16.msra.mxu0 %v806
        %827 = vmatprep.subr.bf16.mxu0 0
        %828 = vmatpush1.bf16.msra.mxu0 %v807
        %829 = vmatprep.subr.bf16.mxu0 0
        %830 = vmatpush1.bf16.msra.mxu0 %v808
        %831 = vmatprep.subr.bf16.mxu0 0
        %832 = vmatpush1.bf16.msra.mxu0 %v809
        %833 = vmatprep.subr.bf16.mxu0 0
        %834 = vmatpush1.bf16.msra.mxu0 %v810
        %835 = vmatprep.subr.bf16.mxu0 0
        %836 = vmatpush1.bf16.msra.mxu0 0
        %837 = vmatprep.subr.bf16.mxu0 0
        %838 = vmatpush1.bf16.msra.mxu0 0
        %839 = vmatprep.subr.bf16.mxu0 0
        %840 = vmatpush1.bf16.msra.mxu0 0
        %841 = vmatprep.subr.bf16.mxu0 0
        %842 = vmatpush1.bf16.msra.mxu0 0
        %843 = vmatprep.subr.bf16.mxu0 0
        %844 = vmatpush1.bf16.msra.mxu0 0
        %845 = vmatprep.subr.bf16.mxu0 0
        %846 = vmatpush1.bf16.msra.mxu0 0
        %847 = vmatprep.subr.bf16.mxu0 0
        %848 = vmatpush1.bf16.msra.mxu0 0
        %849 = vmatprep.subr.bf16.mxu0 0
        %850 = vmatpush1.bf16.msra.mxu0 0
        %851 = vmatprep.mubr.bf16.mxu0 0
        %852 = vmatmul.mubr.bf16.gmra.mrb[0].mxu0 %v769
        %v853 = vpop.f32.mrb[0].mxu0
        %v854 = vadd.f32 0.0, %v853
        %v855 = vpop.f32.mrb[0].mxu0
        %v856 = vpop.f32.mrb[0].mxu0
        %v857 = vpop.f32.mrb[0].mxu0
        %858 = vdwg.mxu0
        %v859 = vadd.f32 %v751, %v854
        %s860 = sadd.s32 %s193, 2
        %s861 = smul.addr %s860, 4
        %s862 = scalar_lea.vmem %s165, %s861
        %v863 = vld [vmem:[%s862] sm:$0xf]
        %s864 = scalar_lea.vmem %s1, 384
        %v865 = vld [vmem:[%s864] sm:$0xf]
        %v866 = vld [vmem:[%s864 + $0x4] sm:$0xf]
        %v867 = vld [vmem:[%s864 + $0x8] sm:$0xf]
        %v868 = vld [vmem:[%s864 + $0xc] sm:$0xf]
        %v869 = vld [vmem:[%s864 + $0x10] sm:$0xf]
        %v870 = vld [vmem:[%s864 + $0x14] sm:$0xf]
        %v871 = vld [vmem:[%s864 + $0x18] sm:$0xf]
        %v872 = vld [vmem:[%s864 + $0x1c] sm:$0xf]
        %v873 = vld [vmem:[%s864 + $0x20] sm:$0xf]
        %v874 = vld [vmem:[%s864 + $0x24] sm:$0xf]
        %v875 = vld [vmem:[%s864 + $0x28] sm:$0xf]
        %v876 = vld [vmem:[%s864 + $0x2c] sm:$0xf]
        %v877 = vld [vmem:[%s864 + $0x30] sm:$0xf]
        %v878 = vld [vmem:[%s864 + $0x34] sm:$0xf]
        %v879 = vld [vmem:[%s864 + $0x38] sm:$0xf]
        %v880 = vld [vmem:[%s864 + $0x3c] sm:$0xf]
        %v897 = vunpack.c.l.b16 %v865
        %v898 = vunpack.c.l.b16 %v866
        %v899 = vunpack.c.l.b16 %v867
        %v900 = vunpack.c.l.b16 %v868
        %v901 = vunpack.c.l.b16 %v869
        %v902 = vunpack.c.l.b16 %v870
        %v903 = vunpack.c.l.b16 %v871
        %v904 = vunpack.c.l.b16 %v872
        %v905 = vunpack.c.l.b16 %v873
        %v906 = vunpack.c.l.b16 %v874
        %v907 = vunpack.c.l.b16 %v875
        %v908 = vunpack.c.l.b16 %v876
        %v909 = vunpack.c.l.b16 %v877
        %v910 = vunpack.c.l.b16 %v878
        %v911 = vunpack.c.l.b16 %v879
        %v912 = vunpack.c.l.b16 %v880
        %v913 = vpack.c.b16 %v898, %v897
        %v914 = vpack.c.b16 %v900, %v899
        %v915 = vpack.c.b16 %v902, %v901
        %v916 = vpack.c.b16 %v904, %v903
        %v917 = vpack.c.b16 %v906, %v905
        %v918 = vpack.c.b16 %v908, %v907
        %v919 = vpack.c.b16 %v910, %v909
        %v920 = vpack.c.b16 %v912, %v911
        %929 = vmatprep.subr.bf16.mxu0 0
        %930 = vmatpush1.bf16.msra.mxu0 %v913
        %931 = vmatprep.subr.bf16.mxu0 0
        %932 = vmatpush1.bf16.msra.mxu0 %v914
        %933 = vmatprep.subr.bf16.mxu0 0
        %934 = vmatpush1.bf16.msra.mxu0 %v915
        %935 = vmatprep.subr.bf16.mxu0 0
        %936 = vmatpush1.bf16.msra.mxu0 %v916
        %937 = vmatprep.subr.bf16.mxu0 0
        %938 = vmatpush1.bf16.msra.mxu0 %v917
        %939 = vmatprep.subr.bf16.mxu0 0
        %940 = vmatpush1.bf16.msra.mxu0 %v918
        %941 = vmatprep.subr.bf16.mxu0 0
        %942 = vmatpush1.bf16.msra.mxu0 %v919
        %943 = vmatprep.subr.bf16.mxu0 0
        %944 = vmatpush1.bf16.msra.mxu0 %v920
        %945 = vmatprep.subr.bf16.mxu0 0
        %946 = vmatpush1.bf16.msra.mxu0 0
        %947 = vmatprep.subr.bf16.mxu0 0
        %948 = vmatpush1.bf16.msra.mxu0 0
        %949 = vmatprep.subr.bf16.mxu0 0
        %950 = vmatpush1.bf16.msra.mxu0 0
        %951 = vmatprep.subr.bf16.mxu0 0
        %952 = vmatpush1.bf16.msra.mxu0 0
        %953 = vmatprep.subr.bf16.mxu0 0
        %954 = vmatpush1.bf16.msra.mxu0 0
        %955 = vmatprep.subr.bf16.mxu0 0
        %956 = vmatpush1.bf16.msra.mxu0 0
        %957 = vmatprep.subr.bf16.mxu0 0
        %958 = vmatpush1.bf16.msra.mxu0 0
        %959 = vmatprep.subr.bf16.mxu0 0
        %960 = vmatpush1.bf16.msra.mxu0 0
        %961 = vmatprep.mubr.bf16.mxu0 0
        %962 = vmatmul.mubr.bf16.gmra.mrb[0].mxu0 %v863
        %v963 = vpop.f32.mrb[0].mxu0
        %v964 = vadd.f32 0.0, %v963
        %v965 = vpop.f32.mrb[0].mxu0
        %v966 = vpop.f32.mrb[0].mxu0
        %v967 = vpop.f32.mrb[0].mxu0
        %968 = vdwg.mxu0
        %v969 = vadd.f32 %v859, %v964
        %s970 = scalar_lea.vmem %s1, 448
        %v971 = vld [vmem:[%s970] sm:$0xf]
        %v972 = vld [vmem:[%s970 + $0x4] sm:$0xf]
        %v973 = vld [vmem:[%s970 + $0x8] sm:$0xf]
        %v974 = vld [vmem:[%s970 + $0xc] sm:$0xf]
        %v975 = vld [vmem:[%s970 + $0x10] sm:$0xf]
        %v976 = vld [vmem:[%s970 + $0x14] sm:$0xf]
        %v977 = vld [vmem:[%s970 + $0x18] sm:$0xf]
        %v978 = vld [vmem:[%s970 + $0x1c] sm:$0xf]
        %v979 = vld [vmem:[%s970 + $0x20] sm:$0xf]
        %v980 = vld [vmem:[%s970 + $0x24] sm:$0xf]
        %v981 = vld [vmem:[%s970 + $0x28] sm:$0xf]
        %v982 = vld [vmem:[%s970 + $0x2c] sm:$0xf]
        %v983 = vld [vmem:[%s970 + $0x30] sm:$0xf]
        %v984 = vld [vmem:[%s970 + $0x34] sm:$0xf]
        %v985 = vld [vmem:[%s970 + $0x38] sm:$0xf]
        %v986 = vld [vmem:[%s970 + $0x3c] sm:$0xf]
        %v988 = vunpack.c.l.b16 %v863
        %v989 = vpack.c.b16 %v988, %v988
        %v991 = vshrl.u32 %v989, 16
        %v993 = vshll.u32 %v989, 16
        %v995 = vrot.slane %v993, 1
        %v996 = vor.u32 %v991, %v995
        %v1014 = vunpack.c.l.b16 %v971
        %v1015 = vunpack.c.l.b16 %v972
        %v1016 = vunpack.c.l.b16 %v973
        %v1017 = vunpack.c.l.b16 %v974
        %v1018 = vunpack.c.l.b16 %v975
        %v1019 = vunpack.c.l.b16 %v976
        %v1020 = vunpack.c.l.b16 %v977
        %v1021 = vunpack.c.l.b16 %v978
        %v1022 = vunpack.c.l.b16 %v979
        %v1023 = vunpack.c.l.b16 %v980
        %v1024 = vunpack.c.l.b16 %v981
        %v1025 = vunpack.c.l.b16 %v982
        %v1026 = vunpack.c.l.b16 %v983
        %v1027 = vunpack.c.l.b16 %v984
        %v1028 = vunpack.c.l.b16 %v985
        %v1029 = vunpack.c.l.b16 %v986
        %v1030 = vpack.c.b16 %v1015, %v1014
        %v1031 = vpack.c.b16 %v1017, %v1016
        %v1032 = vpack.c.b16 %v1019, %v1018
        %v1033 = vpack.c.b16 %v1021, %v1020
        %v1034 = vpack.c.b16 %v1023, %v1022
        %v1035 = vpack.c.b16 %v1025, %v1024
        %v1036 = vpack.c.b16 %v1027, %v1026
        %v1037 = vpack.c.b16 %v1029, %v1028
        %1046 = vmatprep.subr.bf16.mxu0 0
        %1047 = vmatpush1.bf16.msra.mxu0 %v1030
        %1048 = vmatprep.subr.bf16.mxu0 0
        %1049 = vmatpush1.bf16.msra.mxu0 %v1031
        %1050 = vmatprep.subr.bf16.mxu0 0
        %1051 = vmatpush1.bf16.msra.mxu0 %v1032
        %1052 = vmatprep.subr.bf16.mxu0 0
        %1053 = vmatpush1.bf16.msra.mxu0 %v1033
        %1054 = vmatprep.subr.bf16.mxu0 0
        %1055 = vmatpush1.bf16.msra.mxu0 %v1034
        %1056 = vmatprep.subr.bf16.mxu0 0
        %1057 = vmatpush1.bf16.msra.mxu0 %v1035
        %1058 = vmatprep.subr.bf16.mxu0 0
        %1059 = vmatpush1.bf16.msra.mxu0 %v1036
        %1060 = vmatprep.subr.bf16.mxu0 0
        %1061 = vmatpush1.bf16.msra.mxu0 %v1037
        %1062 = vmatprep.subr.bf16.mxu0 0
        %1063 = vmatpush1.bf16.msra.mxu0 0
        %1064 = vmatprep.subr.bf16.mxu0 0
        %1065 = vmatpush1.bf16.msra.mxu0 0
        %1066 = vmatprep.subr.bf16.mxu0 0
        %1067 = vmatpush1.bf16.msra.mxu0 0
        %1068 = vmatprep.subr.bf16.mxu0 0
        %1069 = vmatpush1.bf16.msra.mxu0 0
        %1070 = vmatprep.subr.bf16.mxu0 0
        %1071 = vmatpush1.bf16.msra.mxu0 0
        %1072 = vmatprep.subr.bf16.mxu0 0
        %1073 = vmatpush1.bf16.msra.mxu0 0
        %1074 = vmatprep.subr.bf16.mxu0 0
        %1075 = vmatpush1.bf16.msra.mxu0 0
        %1076 = vmatprep.subr.bf16.mxu0 0
        %1077 = vmatpush1.bf16.msra.mxu0 0
        %1078 = vmatprep.mubr.bf16.mxu0 0
        %1079 = vmatmul.mubr.bf16.gmra.mrb[0].mxu0 %v996
        %v1080 = vpop.f32.mrb[0].mxu0
        %v1081 = vadd.f32 0.0, %v1080
        %v1082 = vpop.f32.mrb[0].mxu0
        %v1083 = vpop.f32.mrb[0].mxu0
        %v1084 = vpop.f32.mrb[0].mxu0
        %1085 = vdwg.mxu0
        %v1086 = vadd.f32 %v969, %v1081
        %s1087 = scalar_lea.vmem %s1, 512
        %v1088 = vld [vmem:[%s1087] sm:$0xf]
        %v1089 = vld [vmem:[%s1087 + $0x4] sm:$0xf]
        %v1090 = vld [vmem:[%s1087 + $0x8] sm:$0xf]
        %v1091 = vld [vmem:[%s1087 + $0xc] sm:$0xf]
        %v1092 = vld [vmem:[%s1087 + $0x10] sm:$0xf]
        %v1093 = vld [vmem:[%s1087 + $0x14] sm:$0xf]
        %v1094 = vld [vmem:[%s1087 + $0x18] sm:$0xf]
        %v1095 = vld [vmem:[%s1087 + $0x1c] sm:$0xf]
        %v1096 = vld [vmem:[%s1087 + $0x20] sm:$0xf]
        %v1097 = vld [vmem:[%s1087 + $0x24] sm:$0xf]
        %v1098 = vld [vmem:[%s1087 + $0x28] sm:$0xf]
        %v1099 = vld [vmem:[%s1087 + $0x2c] sm:$0xf]
        %v1100 = vld [vmem:[%s1087 + $0x30] sm:$0xf]
        %v1101 = vld [vmem:[%s1087 + $0x34] sm:$0xf]
        %v1102 = vld [vmem:[%s1087 + $0x38] sm:$0xf]
        %v1103 = vld [vmem:[%s1087 + $0x3c] sm:$0xf]
        %v1104 = vrot.slane %v989, 1
        %v1122 = vunpack.c.l.b16 %v1088
        %v1123 = vunpack.c.l.b16 %v1089
        %v1124 = vunpack.c.l.b16 %v1090
        %v1125 = vunpack.c.l.b16 %v1091
        %v1126 = vunpack.c.l.b16 %v1092
        %v1127 = vunpack.c.l.b16 %v1093
        %v1128 = vunpack.c.l.b16 %v1094
        %v1129 = vunpack.c.l.b16 %v1095
        %v1130 = vunpack.c.l.b16 %v1096
        %v1131 = vunpack.c.l.b16 %v1097
        %v1132 = vunpack.c.l.b16 %v1098
        %v1133 = vunpack.c.l.b16 %v1099
        %v1134 = vunpack.c.l.b16 %v1100
        %v1135 = vunpack.c.l.b16 %v1101
        %v1136 = vunpack.c.l.b16 %v1102
        %v1137 = vunpack.c.l.b16 %v1103
        %v1138 = vpack.c.b16 %v1123, %v1122
        %v1139 = vpack.c.b16 %v1125, %v1124
        %v1140 = vpack.c.b16 %v1127, %v1126
        %v1141 = vpack.c.b16 %v1129, %v1128
        %v1142 = vpack.c.b16 %v1131, %v1130
        %v1143 = vpack.c.b16 %v1133, %v1132
        %v1144 = vpack.c.b16 %v1135, %v1134
        %v1145 = vpack.c.b16 %v1137, %v1136
        %1154 = vmatprep.subr.bf16.mxu0 0
        %1155 = vmatpush1.bf16.msra.mxu0 %v1138
        %1156 = vmatprep.subr.bf16.mxu0 0
        %1157 = vmatpush1.bf16.msra.mxu0 %v1139
        %1158 = vmatprep.subr.bf16.mxu0 0
        %1159 = vmatpush1.bf16.msra.mxu0 %v1140
        %1160 = vmatprep.subr.bf16.mxu0 0
        %1161 = vmatpush1.bf16.msra.mxu0 %v1141
        %1162 = vmatprep.subr.bf16.mxu0 0
        %1163 = vmatpush1.bf16.msra.mxu0 %v1142
        %1164 = vmatprep.subr.bf16.mxu0 0
        %1165 = vmatpush1.bf16.msra.mxu0 %v1143
        %1166 = vmatprep.subr.bf16.mxu0 0
        %1167 = vmatpush1.bf16.msra.mxu0 %v1144
        %1168 = vmatprep.subr.bf16.mxu0 0
        %1169 = vmatpush1.bf16.msra.mxu0 %v1145
        %1170 = vmatprep.subr.bf16.mxu0 0
        %1171 = vmatpush1.bf16.msra.mxu0 0
        %1172 = vmatprep.subr.bf16.mxu0 0
        %1173 = vmatpush1.bf16.msra.mxu0 0
        %1174 = vmatprep.subr.bf16.mxu0 0
        %1175 = vmatpush1.bf16.msra.mxu0 0
        %1176 = vmatprep.subr.bf16.mxu0 0
        %1177 = vmatpush1.bf16.msra.mxu0 0
        %1178 = vmatprep.subr.bf16.mxu0 0
        %1179 = vmatpush1.bf16.msra.mxu0 0
        %1180 = vmatprep.subr.bf16.mxu0 0
        %1181 = vmatpush1.bf16.msra.mxu0 0
        %1182 = vmatprep.subr.bf16.mxu0 0
        %1183 = vmatpush1.bf16.msra.mxu0 0
        %1184 = vmatprep.subr.bf16.mxu0 0
        %1185 = vmatpush1.bf16.msra.mxu0 0
        %1186 = vmatprep.mubr.bf16.mxu0 0
        %1187 = vmatmul.mubr.bf16.gmra.mrb[0].mxu0 %v1104
        %v1188 = vpop.f32.mrb[0].mxu0
        %v1189 = vadd.f32 0.0, %v1188
        %v1190 = vpop.f32.mrb[0].mxu0
        %v1191 = vpop.f32.mrb[0].mxu0
        %v1192 = vpop.f32.mrb[0].mxu0
        %1193 = vdwg.mxu0
        %v1194 = vadd.f32 %v1086, %v1189
        %v1195 = vlaneseq
        %v1196 = vshrl.u32 %v1195, 7
        %v1197 = vsub.s32 0, %v1196
        %v1198 = vrot.slane %v172, %v1197
        %v1199 = vadd.f32 %v1194, %v1198
        %vm1200 = vcmp.ge.f32.partialorder %v1199, 0.0
        %v1201 = vmul.f32 %v1199, 0.2
        %v1202 = vsel %vm1200, %v1199, %v1201
        %v1203 = vlaneseq
        %v1204 = vshrl.u32 %v1203, 7
        %v1205 = vsub.s32 0, %v1204
        %v1206 = vrot.slane %v173, %v1205
        %v1207 = vmul.f32 %v1202, %v1206
        %v1208 = vlaneseq
        %v1209 = vshrl.u32 %v1208, 7
        %v1210 = vsub.s32 0, %v1209
        %v1211 = vrot.slane %v174, %v1210
        %v1212 = vadd.f32 %v1207, %v1211
        %1213 = vmatprep.subr.bf16.mxu0 0
        %1214 = vmatpush1.bf16.msra.mxu0 %v273
        %1215 = vmatprep.subr.bf16.mxu0 0
        %1216 = vmatpush1.bf16.msra.mxu0 %v274
        %1217 = vmatprep.subr.bf16.mxu0 0
        %1218 = vmatpush1.bf16.msra.mxu0 %v275
        %1219 = vmatprep.subr.bf16.mxu0 0
        %1220 = vmatpush1.bf16.msra.mxu0 %v276
        %1221 = vmatprep.subr.bf16.mxu0 0
        %1222 = vmatpush1.bf16.msra.mxu0 %v277
        %1223 = vmatprep.subr.bf16.mxu0 0
        %1224 = vmatpush1.bf16.msra.mxu0 %v278
        %1225 = vmatprep.subr.bf16.mxu0 0
        %1226 = vmatpush1.bf16.msra.mxu0 %v279
        %1227 = vmatprep.subr.bf16.mxu0 0
        %1228 = vmatpush1.bf16.msra.mxu0 %v280
        %1229 = vmatprep.subr.bf16.mxu0 0
        %1230 = vmatpush1.bf16.msra.mxu0 0
        %1231 = vmatprep.subr.bf16.mxu0 0
        %1232 = vmatpush1.bf16.msra.mxu0 0
        %1233 = vmatprep.subr.bf16.mxu0 0
        %1234 = vmatpush1.bf16.msra.mxu0 0
        %1235 = vmatprep.subr.bf16.mxu0 0
        %1236 = vmatpush1.bf16.msra.mxu0 0
        %1237 = vmatprep.subr.bf16.mxu0 0
        %1238 = vmatpush1.bf16.msra.mxu0 0
        %1239 = vmatprep.subr.bf16.mxu0 0
        %1240 = vmatpush1.bf16.msra.mxu0 0
        %1241 = vmatprep.subr.bf16.mxu0 0
        %1242 = vmatpush1.bf16.msra.mxu0 0
        %1243 = vmatprep.subr.bf16.mxu0 0
        %1244 = vmatpush1.bf16.msra.mxu0 0
        %1245 = vmatprep.mubr.bf16.mxu0 0
        %1246 = vmatmul.mubr.bf16.gmra.mrb[0].mxu0 %v661
        %v1247 = vpop.f32.mrb[0].mxu0
        %v1248 = vadd.f32 0.0, %v1247
        %v1249 = vpop.f32.mrb[0].mxu0
        %v1250 = vpop.f32.mrb[0].mxu0
        %v1251 = vpop.f32.mrb[0].mxu0
        %1252 = vdwg.mxu0
        %1253 = vmatprep.subr.bf16.mxu0 0
        %1254 = vmatpush1.bf16.msra.mxu0 %v361
        %1255 = vmatprep.subr.bf16.mxu0 0
        %1256 = vmatpush1.bf16.msra.mxu0 %v362
        %1257 = vmatprep.subr.bf16.mxu0 0
        %1258 = vmatpush1.bf16.msra.mxu0 %v363
        %1259 = vmatprep.subr.bf16.mxu0 0
        %1260 = vmatpush1.bf16.msra.mxu0 %v364
        %1261 = vmatprep.subr.bf16.mxu0 0
        %1262 = vmatpush1.bf16.msra.mxu0 %v365
        %1263 = vmatprep.subr.bf16.mxu0 0
        %1264 = vmatpush1.bf16.msra.mxu0 %v366
        %1265 = vmatprep.subr.bf16.mxu0 0
        %1266 = vmatpush1.bf16.msra.mxu0 %v367
        %1267 = vmatprep.subr.bf16.mxu0 0
        %1268 = vmatpush1.bf16.msra.mxu0 %v368
        %1269 = vmatprep.subr.bf16.mxu0 0
        %1270 = vmatpush1.bf16.msra.mxu0 0
        %1271 = vmatprep.subr.bf16.mxu0 0
        %1272 = vmatpush1.bf16.msra.mxu0 0
        %1273 = vmatprep.subr.bf16.mxu0 0
        %1274 = vmatpush1.bf16.msra.mxu0 0
        %1275 = vmatprep.subr.bf16.mxu0 0
        %1276 = vmatpush1.bf16.msra.mxu0 0
        %1277 = vmatprep.subr.bf16.mxu0 0
        %1278 = vmatpush1.bf16.msra.mxu0 0
        %1279 = vmatprep.subr.bf16.mxu0 0
        %1280 = vmatpush1.bf16.msra.mxu0 0
        %1281 = vmatprep.subr.bf16.mxu0 0
        %1282 = vmatpush1.bf16.msra.mxu0 0
        %1283 = vmatprep.subr.bf16.mxu0 0
        %1284 = vmatpush1.bf16.msra.mxu0 0
        %1285 = vmatprep.mubr.bf16.mxu0 0
        %1286 = vmatmul.mubr.bf16.gmra.mrb[0].mxu0 %v528
        %v1287 = vpop.f32.mrb[0].mxu0
        %v1288 = vadd.f32 %v1248, %v1287
        %v1289 = vpop.f32.mrb[0].mxu0
        %v1290 = vpop.f32.mrb[0].mxu0
        %v1291 = vpop.f32.mrb[0].mxu0
        %1292 = vdwg.mxu0
        %1293 = vmatprep.subr.bf16.mxu0 0
        %1294 = vmatpush1.bf16.msra.mxu0 %v468
        %1295 = vmatprep.subr.bf16.mxu0 0
        %1296 = vmatpush1.bf16.msra.mxu0 %v469
        %1297 = vmatprep.subr.bf16.mxu0 0
        %1298 = vmatpush1.bf16.msra.mxu0 %v470
        %1299 = vmatprep.subr.bf16.mxu0 0
        %1300 = vmatpush1.bf16.msra.mxu0 %v471
        %1301 = vmatprep.subr.bf16.mxu0 0
        %1302 = vmatpush1.bf16.msra.mxu0 %v472
        %1303 = vmatprep.subr.bf16.mxu0 0
        %1304 = vmatpush1.bf16.msra.mxu0 %v473
        %1305 = vmatprep.subr.bf16.mxu0 0
        %1306 = vmatpush1.bf16.msra.mxu0 %v474
        %1307 = vmatprep.subr.bf16.mxu0 0
        %1308 = vmatpush1.bf16.msra.mxu0 %v475
        %1309 = vmatprep.subr.bf16.mxu0 0
        %1310 = vmatpush1.bf16.msra.mxu0 0
        %1311 = vmatprep.subr.bf16.mxu0 0
        %1312 = vmatpush1.bf16.msra.mxu0 0
        %1313 = vmatprep.subr.bf16.mxu0 0
        %1314 = vmatpush1.bf16.msra.mxu0 0
        %1315 = vmatprep.subr.bf16.mxu0 0
        %1316 = vmatpush1.bf16.msra.mxu0 0
        %1317 = vmatprep.subr.bf16.mxu0 0
        %1318 = vmatpush1.bf16.msra.mxu0 0
        %1319 = vmatprep.subr.bf16.mxu0 0
        %1320 = vmatpush1.bf16.msra.mxu0 0
        %1321 = vmatprep.subr.bf16.mxu0 0
        %1322 = vmatpush1.bf16.msra.mxu0 0
        %1323 = vmatprep.subr.bf16.mxu0 0
        %1324 = vmatpush1.bf16.msra.mxu0 0
        %1325 = vmatprep.mubr.bf16.mxu0 0
        %1326 = vmatmul.mubr.bf16.gmra.mrb[0].mxu0 %v769
        %v1327 = vpop.f32.mrb[0].mxu0
        %v1328 = vadd.f32 0.0, %v1327
        %v1329 = vpop.f32.mrb[0].mxu0
        %v1330 = vpop.f32.mrb[0].mxu0
        %v1331 = vpop.f32.mrb[0].mxu0
        %1332 = vdwg.mxu0
        %v1333 = vadd.f32 %v1288, %v1328
        %1334 = vmatprep.subr.bf16.mxu0 0
        %1335 = vmatpush1.bf16.msra.mxu0 %v578
        %1336 = vmatprep.subr.bf16.mxu0 0
        %1337 = vmatpush1.bf16.msra.mxu0 %v579
        %1338 = vmatprep.subr.bf16.mxu0 0
        %1339 = vmatpush1.bf16.msra.mxu0 %v580
        %1340 = vmatprep.subr.bf16.mxu0 0
        %1341 = vmatpush1.bf16.msra.mxu0 %v581
        %1342 = vmatprep.subr.bf16.mxu0 0
        %1343 = vmatpush1.bf16.msra.mxu0 %v582
        %1344 = vmatprep.subr.bf16.mxu0 0
        %1345 = vmatpush1.bf16.msra.mxu0 %v583
        %1346 = vmatprep.subr.bf16.mxu0 0
        %1347 = vmatpush1.bf16.msra.mxu0 %v584
        %1348 = vmatprep.subr.bf16.mxu0 0
        %1349 = vmatpush1.bf16.msra.mxu0 %v585
        %1350 = vmatprep.subr.bf16.mxu0 0
        %1351 = vmatpush1.bf16.msra.mxu0 0
        %1352 = vmatprep.subr.bf16.mxu0 0
        %1353 = vmatpush1.bf16.msra.mxu0 0
        %1354 = vmatprep.subr.bf16.mxu0 0
        %1355 = vmatpush1.bf16.msra.mxu0 0
        %1356 = vmatprep.subr.bf16.mxu0 0
        %1357 = vmatpush1.bf16.msra.mxu0 0
        %1358 = vmatprep.subr.bf16.mxu0 0
        %1359 = vmatpush1.bf16.msra.mxu0 0
        %1360 = vmatprep.subr.bf16.mxu0 0
        %1361 = vmatpush1.bf16.msra.mxu0 0
        %1362 = vmatprep.subr.bf16.mxu0 0
        %1363 = vmatpush1.bf16.msra.mxu0 0
        %1364 = vmatprep.subr.bf16.mxu0 0
        %1365 = vmatpush1.bf16.msra.mxu0 0
        %1366 = vmatprep.mubr.bf16.mxu0 0
        %1367 = vmatmul.mubr.bf16.gmra.mrb[0].mxu0 %v863
        %v1368 = vpop.f32.mrb[0].mxu0
        %v1369 = vadd.f32 0.0, %v1368
        %v1370 = vpop.f32.mrb[0].mxu0
        %v1371 = vpop.f32.mrb[0].mxu0
        %v1372 = vpop.f32.mrb[0].mxu0
        %1373 = vdwg.mxu0
        %v1374 = vadd.f32 %v1333, %v1369
        %1375 = vmatprep.subr.bf16.mxu0 0
        %1376 = vmatpush1.bf16.msra.mxu0 %v695
        %1377 = vmatprep.subr.bf16.mxu0 0
        %1378 = vmatpush1.bf16.msra.mxu0 %v696
        %1379 = vmatprep.subr.bf16.mxu0 0
        %1380 = vmatpush1.bf16.msra.mxu0 %v697
        %1381 = vmatprep.subr.bf16.mxu0 0
        %1382 = vmatpush1.bf16.msra.mxu0 %v698
        %1383 = vmatprep.subr.bf16.mxu0 0
        %1384 = vmatpush1.bf16.msra.mxu0 %v699
        %1385 = vmatprep.subr.bf16.mxu0 0
        %1386 = vmatpush1.bf16.msra.mxu0 %v700
        %1387 = vmatprep.subr.bf16.mxu0 0
        %1388 = vmatpush1.bf16.msra.mxu0 %v701
        %1389 = vmatprep.subr.bf16.mxu0 0
        %1390 = vmatpush1.bf16.msra.mxu0 %v702
        %1391 = vmatprep.subr.bf16.mxu0 0
        %1392 = vmatpush1.bf16.msra.mxu0 0
        %1393 = vmatprep.subr.bf16.mxu0 0
        %1394 = vmatpush1.bf16.msra.mxu0 0
        %1395 = vmatprep.subr.bf16.mxu0 0
        %1396 = vmatpush1.bf16.msra.mxu0 0
        %1397 = vmatprep.subr.bf16.mxu0 0
        %1398 = vmatpush1.bf16.msra.mxu0 0
        %1399 = vmatprep.subr.bf16.mxu0 0
        %1400 = vmatpush1.bf16.msra.mxu0 0
        %1401 = vmatprep.subr.bf16.mxu0 0
        %1402 = vmatpush1.bf16.msra.mxu0 0
        %1403 = vmatprep.subr.bf16.mxu0 0
        %1404 = vmatpush1.bf16.msra.mxu0 0
        %1405 = vmatprep.subr.bf16.mxu0 0
        %1406 = vmatpush1.bf16.msra.mxu0 0
        %1407 = vmatprep.mubr.bf16.mxu0 0
        %1408 = vmatmul.mubr.bf16.gmra.mrb[0].mxu0 %v996
        %v1409 = vpop.f32.mrb[0].mxu0
        %v1410 = vadd.f32 0.0, %v1409
        %v1411 = vpop.f32.mrb[0].mxu0
        %v1412 = vpop.f32.mrb[0].mxu0
        %v1413 = vpop.f32.mrb[0].mxu0
        %1414 = vdwg.mxu0
        %v1415 = vadd.f32 %v1374, %v1410
        %1416 = vmatprep.subr.bf16.mxu0 0
        %1417 = vmatpush1.bf16.msra.mxu0 %v803
        %1418 = vmatprep.subr.bf16.mxu0 0
        %1419 = vmatpush1.bf16.msra.mxu0 %v804
        %1420 = vmatprep.subr.bf16.mxu0 0
        %1421 = vmatpush1.bf16.msra.mxu0 %v805
        %1422 = vmatprep.subr.bf16.mxu0 0
        %1423 = vmatpush1.bf16.msra.mxu0 %v806
        %1424 = vmatprep.subr.bf16.mxu0 0
        %1425 = vmatpush1.bf16.msra.mxu0 %v807
        %1426 = vmatprep.subr.bf16.mxu0 0
        %1427 = vmatpush1.bf16.msra.mxu0 %v808
        %1428 = vmatprep.subr.bf16.mxu0 0
        %1429 = vmatpush1.bf16.msra.mxu0 %v809
        %1430 = vmatprep.subr.bf16.mxu0 0
        %1431 = vmatpush1.bf16.msra.mxu0 %v810
        %1432 = vmatprep.subr.bf16.mxu0 0
        %1433 = vmatpush1.bf16.msra.mxu0 0
        %1434 = vmatprep.subr.bf16.mxu0 0
        %1435 = vmatpush1.bf16.msra.mxu0 0
        %1436 = vmatprep.subr.bf16.mxu0 0
        %1437 = vmatpush1.bf16.msra.mxu0 0
        %1438 = vmatprep.subr.bf16.mxu0 0
        %1439 = vmatpush1.bf16.msra.mxu0 0
        %1440 = vmatprep.subr.bf16.mxu0 0
        %1441 = vmatpush1.bf16.msra.mxu0 0
        %1442 = vmatprep.subr.bf16.mxu0 0
        %1443 = vmatpush1.bf16.msra.mxu0 0
        %1444 = vmatprep.subr.bf16.mxu0 0
        %1445 = vmatpush1.bf16.msra.mxu0 0
        %1446 = vmatprep.subr.bf16.mxu0 0
        %1447 = vmatpush1.bf16.msra.mxu0 0
        %1448 = vmatprep.mubr.bf16.mxu0 0
        %1449 = vmatmul.mubr.bf16.gmra.mrb[0].mxu0 %v1104
        %v1450 = vpop.f32.mrb[0].mxu0
        %v1451 = vadd.f32 0.0, %v1450
        %v1452 = vpop.f32.mrb[0].mxu0
        %v1453 = vpop.f32.mrb[0].mxu0
        %v1454 = vpop.f32.mrb[0].mxu0
        %1455 = vdwg.mxu0
        %v1456 = vadd.f32 %v1415, %v1451
        %s1457 = sadd.s32 %s193, 3
        %s1458 = smul.addr %s1457, 4
        %s1459 = scalar_lea.vmem %s165, %s1458
        %v1460 = vld [vmem:[%s1459] sm:$0xf]
        %1461 = vmatprep.subr.bf16.mxu0 0
        %1462 = vmatpush1.bf16.msra.mxu0 %v913
        %1463 = vmatprep.subr.bf16.mxu0 0
        %1464 = vmatpush1.bf16.msra.mxu0 %v914
        %1465 = vmatprep.subr.bf16.mxu0 0
        %1466 = vmatpush1.bf16.msra.mxu0 %v915
        %1467 = vmatprep.subr.bf16.mxu0 0
        %1468 = vmatpush1.bf16.msra.mxu0 %v916
        %1469 = vmatprep.subr.bf16.mxu0 0
        %1470 = vmatpush1.bf16.msra.mxu0 %v917
        %1471 = vmatprep.subr.bf16.mxu0 0
        %1472 = vmatpush1.bf16.msra.mxu0 %v918
        %1473 = vmatprep.subr.bf16.mxu0 0
        %1474 = vmatpush1.bf16.msra.mxu0 %v919
        %1475 = vmatprep.subr.bf16.mxu0 0
        %1476 = vmatpush1.bf16.msra.mxu0 %v920
        %1477 = vmatprep.subr.bf16.mxu0 0
        %1478 = vmatpush1.bf16.msra.mxu0 0
        %1479 = vmatprep.subr.bf16.mxu0 0
        %1480 = vmatpush1.bf16.msra.mxu0 0
        %1481 = vmatprep.subr.bf16.mxu0 0
        %1482 = vmatpush1.bf16.msra.mxu0 0
        %1483 = vmatprep.subr.bf16.mxu0 0
        %1484 = vmatpush1.bf16.msra.mxu0 0
        %1485 = vmatprep.subr.bf16.mxu0 0
        %1486 = vmatpush1.bf16.msra.mxu0 0
        %1487 = vmatprep.subr.bf16.mxu0 0
        %1488 = vmatpush1.bf16.msra.mxu0 0
        %1489 = vmatprep.subr.bf16.mxu0 0
        %1490 = vmatpush1.bf16.msra.mxu0 0
        %1491 = vmatprep.subr.bf16.mxu0 0
        %1492 = vmatpush1.bf16.msra.mxu0 0
        %1493 = vmatprep.mubr.bf16.mxu0 0
        %1494 = vmatmul.mubr.bf16.gmra.mrb[0].mxu0 %v1460
        %v1495 = vpop.f32.mrb[0].mxu0
        %v1496 = vadd.f32 0.0, %v1495
        %v1497 = vpop.f32.mrb[0].mxu0
        %v1498 = vpop.f32.mrb[0].mxu0
        %v1499 = vpop.f32.mrb[0].mxu0
        %1500 = vdwg.mxu0
        %v1501 = vadd.f32 %v1456, %v1496
        %v1503 = vunpack.c.l.b16 %v1460
        %v1504 = vpack.c.b16 %v1503, %v1503
        %v1506 = vshrl.u32 %v1504, 16
        %v1508 = vshll.u32 %v1504, 16
        %v1510 = vrot.slane %v1508, 1
        %v1511 = vor.u32 %v1506, %v1510
        %1513 = vmatprep.subr.bf16.mxu0 0
        %1514 = vmatpush1.bf16.msra.mxu0 %v1030
        %1515 = vmatprep.subr.bf16.mxu0 0
        %1516 = vmatpush1.bf16.msra.mxu0 %v1031
        %1517 = vmatprep.subr.bf16.mxu0 0
        %1518 = vmatpush1.bf16.msra.mxu0 %v1032
        %1519 = vmatprep.subr.bf16.mxu0 0
        %1520 = vmatpush1.bf16.msra.mxu0 %v1033
        %1521 = vmatprep.subr.bf16.mxu0 0
        %1522 = vmatpush1.bf16.msra.mxu0 %v1034
        %1523 = vmatprep.subr.bf16.mxu0 0
        %1524 = vmatpush1.bf16.msra.mxu0 %v1035
        %1525 = vmatprep.subr.bf16.mxu0 0
        %1526 = vmatpush1.bf16.msra.mxu0 %v1036
        %1527 = vmatprep.subr.bf16.mxu0 0
        %1528 = vmatpush1.bf16.msra.mxu0 %v1037
        %1529 = vmatprep.subr.bf16.mxu0 0
        %1530 = vmatpush1.bf16.msra.mxu0 0
        %1531 = vmatprep.subr.bf16.mxu0 0
        %1532 = vmatpush1.bf16.msra.mxu0 0
        %1533 = vmatprep.subr.bf16.mxu0 0
        %1534 = vmatpush1.bf16.msra.mxu0 0
        %1535 = vmatprep.subr.bf16.mxu0 0
        %1536 = vmatpush1.bf16.msra.mxu0 0
        %1537 = vmatprep.subr.bf16.mxu0 0
        %1538 = vmatpush1.bf16.msra.mxu0 0
        %1539 = vmatprep.subr.bf16.mxu0 0
        %1540 = vmatpush1.bf16.msra.mxu0 0
        %1541 = vmatprep.subr.bf16.mxu0 0
        %1542 = vmatpush1.bf16.msra.mxu0 0
        %1543 = vmatprep.subr.bf16.mxu0 0
        %1544 = vmatpush1.bf16.msra.mxu0 0
        %1545 = vmatprep.mubr.bf16.mxu0 0
        %1546 = vmatmul.mubr.bf16.gmra.mrb[0].mxu0 %v1511
        %v1547 = vpop.f32.mrb[0].mxu0
        %v1548 = vadd.f32 0.0, %v1547
        %v1549 = vpop.f32.mrb[0].mxu0
        %v1550 = vpop.f32.mrb[0].mxu0
        %v1551 = vpop.f32.mrb[0].mxu0
        %1552 = vdwg.mxu0
        %v1553 = vadd.f32 %v1501, %v1548
        %v1554 = vrot.slane %v1504, 1
        %1556 = vmatprep.subr.bf16.mxu0 0
        %1557 = vmatpush1.bf16.msra.mxu0 %v1138
        %1558 = vmatprep.subr.bf16.mxu0 0
        %1559 = vmatpush1.bf16.msra.mxu0 %v1139
        %1560 = vmatprep.subr.bf16.mxu0 0
        %1561 = vmatpush1.bf16.msra.mxu0 %v1140
        %1562 = vmatprep.subr.bf16.mxu0 0
        %1563 = vmatpush1.bf16.msra.mxu0 %v1141
        %1564 = vmatprep.subr.bf16.mxu0 0
        %1565 = vmatpush1.bf16.msra.mxu0 %v1142
        %1566 = vmatprep.subr.bf16.mxu0 0
        %1567 = vmatpush1.bf16.msra.mxu0 %v1143
        %1568 = vmatprep.subr.bf16.mxu0 0
        %1569 = vmatpush1.bf16.msra.mxu0 %v1144
        %1570 = vmatprep.subr.bf16.mxu0 0
        %1571 = vmatpush1.bf16.msra.mxu0 %v1145
        %1572 = vmatprep.subr.bf16.mxu0 0
        %1573 = vmatpush1.bf16.msra.mxu0 0
        %1574 = vmatprep.subr.bf16.mxu0 0
        %1575 = vmatpush1.bf16.msra.mxu0 0
        %1576 = vmatprep.subr.bf16.mxu0 0
        %1577 = vmatpush1.bf16.msra.mxu0 0
        %1578 = vmatprep.subr.bf16.mxu0 0
        %1579 = vmatpush1.bf16.msra.mxu0 0
        %1580 = vmatprep.subr.bf16.mxu0 0
        %1581 = vmatpush1.bf16.msra.mxu0 0
        %1582 = vmatprep.subr.bf16.mxu0 0
        %1583 = vmatpush1.bf16.msra.mxu0 0
        %1584 = vmatprep.subr.bf16.mxu0 0
        %1585 = vmatpush1.bf16.msra.mxu0 0
        %1586 = vmatprep.subr.bf16.mxu0 0
        %1587 = vmatpush1.bf16.msra.mxu0 0
        %1588 = vmatprep.mubr.bf16.mxu0 0
        %1589 = vmatmul.mubr.bf16.gmra.mrb[0].mxu0 %v1554
        %v1590 = vpop.f32.mrb[0].mxu0
        %v1591 = vadd.f32 0.0, %v1590
        %v1592 = vpop.f32.mrb[0].mxu0
        %v1593 = vpop.f32.mrb[0].mxu0
        %v1594 = vpop.f32.mrb[0].mxu0
        %1595 = vdwg.mxu0
        %v1596 = vadd.f32 %v1553, %v1591
        %v1597 = vadd.f32 %v1596, %v1198
        %vm1598 = vcmp.ge.f32.partialorder %v1597, 0.0
        %v1599 = vmul.f32 %v1597, 0.2
        %v1600 = vsel %vm1598, %v1597, %v1599
        %v1601 = vmul.f32 %v1600, %v1206
        %v1602 = vadd.f32 %v1601, %v1211
        %v1603 = vmax.f32 %v1212, %v1602
        %vm1604 = vcmask 48128
        %v1606 = vsel %vm1604, %v182, 0
        %vm1608 = vcmask 1045504
        %v1610 = vsel %vm1608, %v1603, 0
        %1612 = vmatprep.subr.mxu0 0.0
        %1613 = vmatpush1.msra.mxu0 %v1610
        %1614 = vmatprep.subr.mxu0 0.0
        %1615 = vmatpush1.msra.mxu0 0.0
        %1616 = vmatprep.subr.mxu0 0.0
        %1617 = vmatpush1.msra.mxu0 0.0
        %1618 = vmatprep.subr.mxu0 0.0
        %1619 = vmatpush1.msra.mxu0 0.0
        %1620 = vmatprep.subr.mxu0 0.0
        %1621 = vmatpush1.msra.mxu0 0.0
        %1622 = vmatprep.subr.mxu0 0.0
        %1623 = vmatpush1.msra.mxu0 0.0
        %1624 = vmatprep.subr.mxu0 0.0
        %1625 = vmatpush1.msra.mxu0 0.0
        %1626 = vmatprep.subr.mxu0 0.0
        %1627 = vmatpush1.msra.mxu0 0.0
        %1628 = vmatprep.subr.mxu0 0.0
        %1629 = vmatpush1.msra.mxu0 0.0
        %1630 = vmatprep.subr.mxu0 0.0
        %1631 = vmatpush1.msra.mxu0 0.0
        %1632 = vmatprep.subr.mxu0 0.0
        %1633 = vmatpush1.msra.mxu0 0.0
        %1634 = vmatprep.subr.mxu0 0.0
        %1635 = vmatpush1.msra.mxu0 0.0
        %1636 = vmatprep.subr.mxu0 0.0
        %1637 = vmatpush1.msra.mxu0 0.0
        %1638 = vmatprep.subr.mxu0 0.0
        %1639 = vmatpush1.msra.mxu0 0.0
        %1640 = vmatprep.subr.mxu0 0.0
        %1641 = vmatpush1.msra.mxu0 0.0
        %1642 = vmatprep.subr.mxu0 0.0
        %1643 = vmatpush1.msra.mxu0 0.0
        %1644 = vmatprep.subr.mxu0 0.0
        %1645 = vmatpush1.msra.mxu0 0.0
        %1646 = vmatprep.subr.mxu0 0.0
        %1647 = vmatpush1.msra.mxu0 0.0
        %1648 = vmatprep.subr.mxu0 0.0
        %1649 = vmatpush1.msra.mxu0 0.0
        %1650 = vmatprep.subr.mxu0 0.0
        %1651 = vmatpush1.msra.mxu0 0.0
        %1652 = vmatprep.subr.mxu0 0.0
        %1653 = vmatpush1.msra.mxu0 0.0
        %1654 = vmatprep.subr.mxu0 0.0
        %1655 = vmatpush1.msra.mxu0 0.0
        %1656 = vmatprep.subr.mxu0 0.0
        %1657 = vmatpush1.msra.mxu0 0.0
        %1658 = vmatprep.subr.mxu0 0.0
        %1659 = vmatpush1.msra.mxu0 0.0
        %1660 = vmatprep.subr.mxu0 0.0
        %1661 = vmatpush1.msra.mxu0 0.0
        %1662 = vmatprep.subr.mxu0 0.0
        %1663 = vmatpush1.msra.mxu0 0.0
        %1664 = vmatprep.subr.mxu0 0.0
        %1665 = vmatpush1.msra.mxu0 0.0
        %1666 = vmatprep.subr.mxu0 0.0
        %1667 = vmatpush1.msra.mxu0 0.0
        %1668 = vmatprep.subr.mxu0 0.0
        %1669 = vmatpush1.msra.mxu0 0.0
        %1670 = vmatprep.subr.mxu0 0.0
        %1671 = vmatpush1.msra.mxu0 0.0
        %1672 = vmatprep.subr.mxu0 0.0
        %1673 = vmatpush1.msra.mxu0 0.0
        %1674 = vmatprep.subr.mxu0 0.0
        %1675 = vmatpush1.msra.mxu0 0.0
        %1676 = vmatprep.mubr.f32.mxu0 0.0
        %1677 = vmatmul.mubr.f32.gmra.mrb[0].mxu0 %v1606
        %v1678 = vpop.f32.mrb[0].mxu0
        %v1679 = vadd.f32 0.0, %v1678
        %v1680 = vpop.f32.mrb[0].mxu0
        %1681 = vdwg.mxu0
        %v1683 = vsel %vm1604, %v186, 0
        %1685 = vmatprep.subr.mxu0 0.0
        %1686 = vmatpush1.msra.mxu0 %v1610
        %1687 = vmatprep.subr.mxu0 0.0
        %1688 = vmatpush1.msra.mxu0 0.0
        %1689 = vmatprep.subr.mxu0 0.0
        %1690 = vmatpush1.msra.mxu0 0.0
        %1691 = vmatprep.subr.mxu0 0.0
        %1692 = vmatpush1.msra.mxu0 0.0
        %1693 = vmatprep.subr.mxu0 0.0
        %1694 = vmatpush1.msra.mxu0 0.0
        %1695 = vmatprep.subr.mxu0 0.0
        %1696 = vmatpush1.msra.mxu0 0.0
        %1697 = vmatprep.subr.mxu0 0.0
        %1698 = vmatpush1.msra.mxu0 0.0
        %1699 = vmatprep.subr.mxu0 0.0
        %1700 = vmatpush1.msra.mxu0 0.0
        %1701 = vmatprep.subr.mxu0 0.0
        %1702 = vmatpush1.msra.mxu0 0.0
        %1703 = vmatprep.subr.mxu0 0.0
        %1704 = vmatpush1.msra.mxu0 0.0
        %1705 = vmatprep.subr.mxu0 0.0
        %1706 = vmatpush1.msra.mxu0 0.0
        %1707 = vmatprep.subr.mxu0 0.0
        %1708 = vmatpush1.msra.mxu0 0.0
        %1709 = vmatprep.subr.mxu0 0.0
        %1710 = vmatpush1.msra.mxu0 0.0
        %1711 = vmatprep.subr.mxu0 0.0
        %1712 = vmatpush1.msra.mxu0 0.0
        %1713 = vmatprep.subr.mxu0 0.0
        %1714 = vmatpush1.msra.mxu0 0.0
        %1715 = vmatprep.subr.mxu0 0.0
        %1716 = vmatpush1.msra.mxu0 0.0
        %1717 = vmatprep.subr.mxu0 0.0
        %1718 = vmatpush1.msra.mxu0 0.0
        %1719 = vmatprep.subr.mxu0 0.0
        %1720 = vmatpush1.msra.mxu0 0.0
        %1721 = vmatprep.subr.mxu0 0.0
        %1722 = vmatpush1.msra.mxu0 0.0
        %1723 = vmatprep.subr.mxu0 0.0
        %1724 = vmatpush1.msra.mxu0 0.0
        %1725 = vmatprep.subr.mxu0 0.0
        %1726 = vmatpush1.msra.mxu0 0.0
        %1727 = vmatprep.subr.mxu0 0.0
        %1728 = vmatpush1.msra.mxu0 0.0
        %1729 = vmatprep.subr.mxu0 0.0
        %1730 = vmatpush1.msra.mxu0 0.0
        %1731 = vmatprep.subr.mxu0 0.0
        %1732 = vmatpush1.msra.mxu0 0.0
        %1733 = vmatprep.subr.mxu0 0.0
        %1734 = vmatpush1.msra.mxu0 0.0
        %1735 = vmatprep.subr.mxu0 0.0
        %1736 = vmatpush1.msra.mxu0 0.0
        %1737 = vmatprep.subr.mxu0 0.0
        %1738 = vmatpush1.msra.mxu0 0.0
        %1739 = vmatprep.subr.mxu0 0.0
        %1740 = vmatpush1.msra.mxu0 0.0
        %1741 = vmatprep.subr.mxu0 0.0
        %1742 = vmatpush1.msra.mxu0 0.0
        %1743 = vmatprep.subr.mxu0 0.0
        %1744 = vmatpush1.msra.mxu0 0.0
        %1745 = vmatprep.subr.mxu0 0.0
        %1746 = vmatpush1.msra.mxu0 0.0
        %1747 = vmatprep.subr.mxu0 0.0
        %1748 = vmatpush1.msra.mxu0 0.0
        %1749 = vmatprep.mubr.f32.mxu0 0.0
        %1750 = vmatmul.mubr.f32.gmra.mrb[0].mxu0 %v1683
        %v1751 = vpop.f32.mrb[0].mxu0
        %v1752 = vadd.f32 0.0, %v1751
        %v1753 = vpop.f32.mrb[0].mxu0
        %1754 = vdwg.mxu0
        %v1755 = vmax.f32 %v1679, %v1752
        %v1756 = vpack.c.bf16 %v1755, %v1755
        %s1757 = smul.addr %s188, 2
        %s1758 = scalar_lea.vmem %s170, %s1757
        %vm1759 = vcmask 1041408
        %vm1760 = vsmask.f32 1280
        %vm1761 = vmand %vm1759, %vm1760
        %v1762 = vld [vmem:[%s1758] sm:$0x3]
        %v1763 = vsel %vm1761, %v1756, %v1762
        %1764 = vst [vmem:[%s1758] sm:$0x3] %v1763
      $region37: #{cnn_forward.8} parent=31 // loop_footer
        %s192 = sadd.s32 1, %s188
      $region38: #{cnn_forward.8} parent=31 // loop_footer_branch
        %187 = sbr.rel target = $region34
      $region39: #{cnn_forward.8} parent=31 // loop_exit
        _
      %p1765 = scmp.lt.s32.totalorder %s14, 1
      %s1766 = scalar_select %p1765, %s14, 1
      %s1767 = smul.addr %s1766, 3
      %s1768 = smul.addr %s1767, 2
      %s1769 = scalar_lea.vmem %s3, %s1768
      // Predicated region
      $region40: #{cnn_forward.8} parent=31 // pred_check
        %p1770 = pneg %p100
      $region41: #{cnn_forward.8} parent=31 // pred_check_branch
        %1772 = sbr.rel (%p1770) target = $region43
      $region42: #{cnn_forward.8} parent=31 // pred_region
        _
      $region43: #{cnn_forward.8} parent=31 // pred_fallthru
        _
    $region32: #{cnn_forward.8} parent=5 // pred_fallthru
      _
    %p1773 = scmp.le.s32.totalorder 2, %s9
    // Predicated region
    $region44: #{cnn_forward.8} parent=5 // pred_check
      %p1774 = pneg %p1773
    $region45: #{cnn_forward.8} parent=5 // pred_check_branch
      %1776 = sbr.rel (%p1774) target = $region47
    $region46: #{cnn_forward.8} parent=5 // pred_region
      %s1777 = ssub.s32 %s9, 2
      // Predicated region
      $region48: #{cnn_forward.8} parent=46 // pred_check
        %p1778 = pneg %p106
      $region49: #{cnn_forward.8} parent=46 // pred_check_branch
        %1780 = sbr.rel (%p1778) target = $region51
      $region50: #{cnn_forward.8} parent=46 // pred_region
        %p1781 = scmp.lt.s32.totalorder %s15, 1
        %s1782 = scalar_select %p1781, %s15, 1
        %s1783 = smul.addr %s1782, 3
        %s1784 = smul.addr %s1783, 2
        %s1785 = scalar_lea.vmem %s3, %s1784
      $region51: #{cnn_forward.8} parent=46 // pred_fallthru
        _
    $region47: #{cnn_forward.8} parent=5 // pred_fallthru
      _
  $region6: #{cnn_forward.8} parent=0 // loop_footer
    %s13 = sadd.s32 1, %s9
  $region7: #{cnn_forward.8} parent=0 // loop_footer_branch
    %8 = sbr.rel target = $region3
  $region8: #{cnn_forward.8} parent=0 // loop_exit
    _

// kernel: cnn_forward.9
$region0: #{cnn_forward.9}
  #allocation0 [shape = 'u32[]', space=smem, size = 0x4, offset = 0x4, fixed_abs, tag = 'smem constant byte address 0x4 - core index']
  #allocation1 [shape = 'u32[144,128]{1,0:T(1,128)}', space=vmem, size = 0x12000, scoped, tag = 'internal scratch']
  %s0 = inlined_call_operand.vmem [shape: bf16[2,1152], index: 0, kind: input, shape index: {}]
  %s1 = inlined_call_operand.vmem [shape: bf16[1152,512], index: 1, kind: input, shape index: {}]
  %s2 = inlined_call_operand.vmem [shape: f32[1,512], index: 2, kind: input, shape index: {}]
  %s3 = inlined_call_operand.vmem [shape: bf16[512,128], index: 3, kind: input, shape index: {}]
  %s4 = inlined_call_operand.vmem [shape: f32[1,128], index: 4, kind: input, shape index: {}]
  %s5 = inlined_call_operand.hbm [shape: f32[2,128], index: 5, kind: output, shape index: {}]
  %s6 = sld [smem:[#allocation0]]
  $region30: #{cnn_forward.9} parent=0
    _
  %s8 = ssub.s32 1, %s6
  %s9 = scalar_select 0, %s8, %s6
  $region1: #{cnn_forward.9} parent=0
    #allocation2 [shape = 'u8[1024]{0}', space=vmem, size = 0x400, scoped, tag = 'output window, operand 0, single buffered']
    #allocation3 [shape = 's32[1]{0}', space=sflag, size = 0x4, scoped, tag = 'scoped memory for cnn_forward.9']
    %10 = vsyncpa [#allocation3], 0
    // Predicated region
    $region2: #{cnn_forward.9} parent=1 // pred_check
      _
    $region3: #{cnn_forward.9} parent=1 // pred_check_branch
      %12 = sbr.rel (0) target = $region5
    $region4: #{cnn_forward.9} parent=1 // pred_region
      _
    $region5: #{cnn_forward.9} parent=1 // pred_fallthru
      _
    // Predicated region
    $region6: #{cnn_forward.9} parent=1 // pred_check
      _
    $region7: #{cnn_forward.9} parent=1 // pred_check_branch
      %14 = sbr.rel (0) target = $region9
    $region8: #{cnn_forward.9} parent=1 // pred_region
      _
    $region9: #{cnn_forward.9} parent=1 // pred_fallthru
      _
    // Predicated region
    $region10: #{cnn_forward.9} parent=1 // pred_check
      _
    $region11: #{cnn_forward.9} parent=1 // pred_check_branch
      %16 = sbr.rel (0) target = $region13
    $region12: #{cnn_forward.9} parent=1 // pred_region
      _
    $region13: #{cnn_forward.9} parent=1 // pred_fallthru
      _
    // Predicated region
    $region14: #{cnn_forward.9} parent=1 // pred_check
      _
    $region15: #{cnn_forward.9} parent=1 // pred_check_branch
      %18 = sbr.rel (0) target = $region17
    $region16: #{cnn_forward.9} parent=1 // pred_region
      _
    $region17: #{cnn_forward.9} parent=1 // pred_fallthru
      _
    // Predicated region
    $region18: #{cnn_forward.9} parent=1 // pred_check
      _
    $region19: #{cnn_forward.9} parent=1 // pred_check_branch
      %20 = sbr.rel (0) target = $region21
    $region20: #{cnn_forward.9} parent=1 // pred_region
      _
    $region21: #{cnn_forward.9} parent=1 // pred_fallthru
      _
    %v22 = vld [vmem:[%s0] sm:$0xff]
    %v23 = vld [vmem:[%s0 + $0x8] sm:$0x1]
    %v24 = vld [vmem:[%s1] sm:$0xff]
    %v25 = vld [vmem:[%s1 + $0x8] sm:$0xff]
    %v26 = vld [vmem:[%s1 + $0x10] sm:$0xff]
    %v27 = vld [vmem:[%s1 + $0x18] sm:$0xff]
    %v28 = vld [vmem:[%s1 + $0x20] sm:$0xff]
    %v29 = vld [vmem:[%s1 + $0x28] sm:$0xff]
    %v30 = vld [vmem:[%s1 + $0x30] sm:$0xff]
    %v31 = vld [vmem:[%s1 + $0x38] sm:$0xff]
    %v32 = vld [vmem:[%s1 + $0x40] sm:$0xff]
    %v33 = vld [vmem:[%s1 + $0x48] sm:$0xff]
    %v34 = vld [vmem:[%s1 + $0x50] sm:$0xff]
    %v35 = vld [vmem:[%s1 + $0x58] sm:$0xff]
    %v36 = vld [vmem:[%s1 + $0x60] sm:$0xff]
    %v37 = vld [vmem:[%s1 + $0x68] sm:$0xff]
    %v38 = vld [vmem:[%s1 + $0x70] sm:$0xff]
    %v39 = vld [vmem:[%s1 + $0x78] sm:$0xff]
    %v40 = vld [vmem:[%s1 + $0x80] sm:$0xff]
    %v41 = vld [vmem:[%s1 + $0x88] sm:$0xff]
    %v42 = vld [vmem:[%s1 + $0x90] sm:$0xff]
    %v43 = vld [vmem:[%s1 + $0x98] sm:$0xff]
    %v44 = vld [vmem:[%s1 + $0xa0] sm:$0xff]
    %v45 = vld [vmem:[%s1 + $0xa8] sm:$0xff]
    %v46 = vld [vmem:[%s1 + $0xb0] sm:$0xff]
    %v47 = vld [vmem:[%s1 + $0xb8] sm:$0xff]
    %v48 = vld [vmem:[%s1 + $0xc0] sm:$0xff]
    %v49 = vld [vmem:[%s1 + $0xc8] sm:$0xff]
    %v50 = vld [vmem:[%s1 + $0xd0] sm:$0xff]
    %v51 = vld [vmem:[%s1 + $0xd8] sm:$0xff]
    %v52 = vld [vmem:[%s1 + $0xe0] sm:$0xff]
    %v53 = vld [vmem:[%s1 + $0xe8] sm:$0xff]
    %v54 = vld [vmem:[%s1 + $0xf0] sm:$0xff]
    %v55 = vld [vmem:[%s1 + $0xf8] sm:$0xff]
    %v56 = vld [vmem:[%s1 + $0x100] sm:$0xff]
    %v57 = vld [vmem:[%s1 + $0x108] sm:$0xff]
    %v58 = vld [vmem:[%s1 + $0x110] sm:$0xff]
    %v59 = vld [vmem:[%s1 + $0x118] sm:$0xff]
    %v60 = vld [vmem:[%s1 + $0x120] sm:$0xff]
    %v61 = vld [vmem:[%s1 + $0x128] sm:$0xff]
    %v62 = vld [vmem:[%s1 + $0x130] sm:$0xff]
    %v63 = vld [vmem:[%s1 + $0x138] sm:$0xff]
    %v64 = vld [vmem:[%s1 + $0x140] sm:$0xff]
    %v65 = vld [vmem:[%s1 + $0x148] sm:$0xff]
    %v66 = vld [vmem:[%s1 + $0x150] sm:$0xff]
    %v67 = vld [vmem:[%s1 + $0x158] sm:$0xff]
    %v68 = vld [vmem:[%s1 + $0x160] sm:$0xff]
    %v69 = vld [vmem:[%s1 + $0x168] sm:$0xff]
    %v70 = vld [vmem:[%s1 + $0x170] sm:$0xff]
    %v71 = vld [vmem:[%s1 + $0x178] sm:$0xff]
    %v72 = vld [vmem:[%s1 + $0x180] sm:$0xff]
    %v73 = vld [vmem:[%s1 + $0x188] sm:$0xff]
    %v74 = vld [vmem:[%s1 + $0x190] sm:$0xff]
    %v75 = vld [vmem:[%s1 + $0x198] sm:$0xff]
    %v76 = vld [vmem:[%s1 + $0x1a0] sm:$0xff]
    %v77 = vld [vmem:[%s1 + $0x1a8] sm:$0xff]
    %v78 = vld [vmem:[%s1 + $0x1b0] sm:$0xff]
    %v79 = vld [vmem:[%s1 + $0x1b8] sm:$0xff]
    %v80 = vld [vmem:[%s1 + $0x1c0] sm:$0xff]
    %v81 = vld [vmem:[%s1 + $0x1c8] sm:$0xff]
    %v82 = vld [vmem:[%s1 + $0x1d0] sm:$0xff]
    %v83 = vld [vmem:[%s1 + $0x1d8] sm:$0xff]
    %v84 = vld [vmem:[%s1 + $0x1e0] sm:$0xff]
    %v85 = vld [vmem:[%s1 + $0x1e8] sm:$0xff]
    %v86 = vld [vmem:[%s1 + $0x1f0] sm:$0xff]
    %v87 = vld [vmem:[%s1 + $0x1f8] sm:$0xff]
    %v88 = vld [vmem:[%s1 + $0x200] sm:$0xff]
    %v89 = vld [vmem:[%s1 + $0x208] sm:$0xff]
    %v90 = vld [vmem:[%s1 + $0x210] sm:$0xff]
    %v91 = vld [vmem:[%s1 + $0x218] sm:$0xff]
    %v92 = vld [vmem:[%s1 + $0x220] sm:$0xff]
    %v93 = vld [vmem:[%s1 + $0x228] sm:$0xff]
    %v94 = vld [vmem:[%s1 + $0x230] sm:$0xff]
    %v95 = vld [vmem:[%s1 + $0x238] sm:$0xff]
    %v96 = vld [vmem:[%s1 + $0x240] sm:$0xff]
    %v97 = vld [vmem:[%s1 + $0x248] sm:$0xff]
    %v98 = vld [vmem:[%s1 + $0x250] sm:$0xff]
    %v99 = vld [vmem:[%s1 + $0x258] sm:$0xff]
    %v100 = vld [vmem:[%s1 + $0x260] sm:$0xff]
    %v101 = vld [vmem:[%s1 + $0x268] sm:$0xff]
    %v102 = vld [vmem:[%s1 + $0x270] sm:$0xff]
    %v103 = vld [vmem:[%s1 + $0x278] sm:$0xff]
    %v104 = vld [vmem:[%s1 + $0x280] sm:$0xff]
    %v105 = vld [vmem:[%s1 + $0x288] sm:$0xff]
    %v106 = vld [vmem:[%s1 + $0x290] sm:$0xff]
    %v107 = vld [vmem:[%s1 + $0x298] sm:$0xff]
    %v108 = vld [vmem:[%s1 + $0x2a0] sm:$0xff]
    %v109 = vld [vmem:[%s1 + $0x2a8] sm:$0xff]
    %v110 = vld [vmem:[%s1 + $0x2b0] sm:$0xff]
    %v111 = vld [vmem:[%s1 + $0x2b8] sm:$0xff]
    %v112 = vld [vmem:[%s1 + $0x2c0] sm:$0xff]
    %v113 = vld [vmem:[%s1 + $0x2c8] sm:$0xff]
    %v114 = vld [vmem:[%s1 + $0x2d0] sm:$0xff]
    %v115 = vld [vmem:[%s1 + $0x2d8] sm:$0xff]
    %v116 = vld [vmem:[%s1 + $0x2e0] sm:$0xff]
    %v117 = vld [vmem:[%s1 + $0x2e8] sm:$0xff]
    %v118 = vld [vmem:[%s1 + $0x2f0] sm:$0xff]
    %v119 = vld [vmem:[%s1 + $0x2f8] sm:$0xff]
    %v120 = vld [vmem:[%s1 + $0x300] sm:$0xff]
    %v121 = vld [vmem:[%s1 + $0x308] sm:$0xff]
    %v122 = vld [vmem:[%s1 + $0x310] sm:$0xff]
    %v123 = vld [vmem:[%s1 + $0x318] sm:$0xff]
    %v124 = vld [vmem:[%s1 + $0x320] sm:$0xff]
    %v125 = vld [vmem:[%s1 + $0x328] sm:$0xff]
    %v126 = vld [vmem:[%s1 + $0x330] sm:$0xff]
    %v127 = vld [vmem:[%s1 + $0x338] sm:$0xff]
    %v128 = vld [vmem:[%s1 + $0x340] sm:$0xff]
    %v129 = vld [vmem:[%s1 + $0x348] sm:$0xff]
    %v130 = vld [vmem:[%s1 + $0x350] sm:$0xff]
    %v131 = vld [vmem:[%s1 + $0x358] sm:$0xff]
    %v132 = vld [vmem:[%s1 + $0x360] sm:$0xff]
    %v133 = vld [vmem:[%s1 + $0x368] sm:$0xff]
    %v134 = vld [vmem:[%s1 + $0x370] sm:$0xff]
    %v135 = vld [vmem:[%s1 + $0x378] sm:$0xff]
    %v136 = vld [vmem:[%s1 + $0x380] sm:$0xff]
    %v137 = vld [vmem:[%s1 + $0x388] sm:$0xff]
    %v138 = vld [vmem:[%s1 + $0x390] sm:$0xff]
    %v139 = vld [vmem:[%s1 + $0x398] sm:$0xff]
    %v140 = vld [vmem:[%s1 + $0x3a0] sm:$0xff]
    %v141 = vld [vmem:[%s1 + $0x3a8] sm:$0xff]
    %v142 = vld [vmem:[%s1 + $0x3b0] sm:$0xff]
    %v143 = vld [vmem:[%s1 + $0x3b8] sm:$0xff]
    %v144 = vld [vmem:[%s1 + $0x3c0] sm:$0xff]
    %v145 = vld [vmem:[%s1 + $0x3c8] sm:$0xff]
    %v146 = vld [vmem:[%s1 + $0x3d0] sm:$0xff]
    %v147 = vld [vmem:[%s1 + $0x3d8] sm:$0xff]
    %v148 = vld [vmem:[%s1 + $0x3e0] sm:$0xff]
    %v149 = vld [vmem:[%s1 + $0x3e8] sm:$0xff]
    %v150 = vld [vmem:[%s1 + $0x3f0] sm:$0xff]
    %v151 = vld [vmem:[%s1 + $0x3f8] sm:$0xff]
    %v152 = vld [vmem:[%s1 + $0x400] sm:$0xff]
    %v153 = vld [vmem:[%s1 + $0x408] sm:$0xff]
    %v154 = vld [vmem:[%s1 + $0x410] sm:$0xff]
    %v155 = vld [vmem:[%s1 + $0x418] sm:$0xff]
    %v156 = vld [vmem:[%s1 + $0x420] sm:$0xff]
    %v157 = vld [vmem:[%s1 + $0x428] sm:$0xff]
    %v158 = vld [vmem:[%s1 + $0x430] sm:$0xff]
    %v159 = vld [vmem:[%s1 + $0x438] sm:$0xff]
    %v160 = vld [vmem:[%s1 + $0x440] sm:$0xff]
    %v161 = vld [vmem:[%s1 + $0x448] sm:$0xff]
    %v162 = vld [vmem:[%s1 + $0x450] sm:$0xff]
    %v163 = vld [vmem:[%s1 + $0x458] sm:$0xff]
    %v164 = vld [vmem:[%s1 + $0x460] sm:$0xff]
    %v165 = vld [vmem:[%s1 + $0x468] sm:$0xff]
    %v166 = vld [vmem:[%s1 + $0x470] sm:$0xff]
    %v167 = vld [vmem:[%s1 + $0x478] sm:$0xff]
    %v168 = vld [vmem:[%s1 + $0x480] sm:$0xff]
    %v169 = vld [vmem:[%s1 + $0x488] sm:$0xff]
    %v170 = vld [vmem:[%s1 + $0x490] sm:$0xff]
    %v171 = vld [vmem:[%s1 + $0x498] sm:$0xff]
    %v172 = vld [vmem:[%s1 + $0x4a0] sm:$0xff]
    %v173 = vld [vmem:[%s1 + $0x4a8] sm:$0xff]
    %v174 = vld [vmem:[%s1 + $0x4b0] sm:$0xff]
    %v175 = vld [vmem:[%s1 + $0x4b8] sm:$0xff]
    %v176 = vld [vmem:[%s1 + $0x4c0] sm:$0xff]
    %v177 = vld [vmem:[%s1 + $0x4c8] sm:$0xff]
    %v178 = vld [vmem:[%s1 + $0x4d0] sm:$0xff]
    %v179 = vld [vmem:[%s1 + $0x4d8] sm:$0xff]
    %v180 = vld [vmem:[%s1 + $0x4e0] sm:$0xff]
    %v181 = vld [vmem:[%s1 + $0x4e8] sm:$0xff]
    %v182 = vld [vmem:[%s1 + $0x4f0] sm:$0xff]
    %v183 = vld [vmem:[%s1 + $0x4f8] sm:$0xff]
    %v184 = vld [vmem:[%s1 + $0x500] sm:$0xff]
    %v185 = vld [vmem:[%s1 + $0x508] sm:$0xff]
    %v186 = vld [vmem:[%s1 + $0x510] sm:$0xff]
    %v187 = vld [vmem:[%s1 + $0x518] sm:$0xff]
    %v188 = vld [vmem:[%s1 + $0x520] sm:$0xff]
    %v189 = vld [vmem:[%s1 + $0x528] sm:$0xff]
    %v190 = vld [vmem:[%s1 + $0x530] sm:$0xff]
    %v191 = vld [vmem:[%s1 + $0x538] sm:$0xff]
    %v192 = vld [vmem:[%s1 + $0x540] sm:$0xff]
    %v193 = vld [vmem:[%s1 + $0x548] sm:$0xff]
    %v194 = vld [vmem:[%s1 + $0x550] sm:$0xff]
    %v195 = vld [vmem:[%s1 + $0x558] sm:$0xff]
    %v196 = vld [vmem:[%s1 + $0x560] sm:$0xff]
    %v197 = vld [vmem:[%s1 + $0x568] sm:$0xff]
    %v198 = vld [vmem:[%s1 + $0x570] sm:$0xff]
    %v199 = vld [vmem:[%s1 + $0x578] sm:$0xff]
    %v200 = vld [vmem:[%s1 + $0x580] sm:$0xff]
    %v201 = vld [vmem:[%s1 + $0x588] sm:$0xff]
    %v202 = vld [vmem:[%s1 + $0x590] sm:$0xff]
    %v203 = vld [vmem:[%s1 + $0x598] sm:$0xff]
    %v204 = vld [vmem:[%s1 + $0x5a0] sm:$0xff]
    %v205 = vld [vmem:[%s1 + $0x5a8] sm:$0xff]
    %v206 = vld [vmem:[%s1 + $0x5b0] sm:$0xff]
    %v207 = vld [vmem:[%s1 + $0x5b8] sm:$0xff]
    %v208 = vld [vmem:[%s1 + $0x5c0] sm:$0xff]
    %v209 = vld [vmem:[%s1 + $0x5c8] sm:$0xff]
    %v210 = vld [vmem:[%s1 + $0x5d0] sm:$0xff]
    %v211 = vld [vmem:[%s1 + $0x5d8] sm:$0xff]
    %v212 = vld [vmem:[%s1 + $0x5e0] sm:$0xff]
    %v213 = vld [vmem:[%s1 + $0x5e8] sm:$0xff]
    %v214 = vld [vmem:[%s1 + $0x5f0] sm:$0xff]
    %v215 = vld [vmem:[%s1 + $0x5f8] sm:$0xff]
    %v216 = vld [vmem:[%s1 + $0x600] sm:$0xff]
    %v217 = vld [vmem:[%s1 + $0x608] sm:$0xff]
    %v218 = vld [vmem:[%s1 + $0x610] sm:$0xff]
    %v219 = vld [vmem:[%s1 + $0x618] sm:$0xff]
    %v220 = vld [vmem:[%s1 + $0x620] sm:$0xff]
    %v221 = vld [vmem:[%s1 + $0x628] sm:$0xff]
    %v222 = vld [vmem:[%s1 + $0x630] sm:$0xff]
    %v223 = vld [vmem:[%s1 + $0x638] sm:$0xff]
    %v224 = vld [vmem:[%s1 + $0x640] sm:$0xff]
    %v225 = vld [vmem:[%s1 + $0x648] sm:$0xff]
    %v226 = vld [vmem:[%s1 + $0x650] sm:$0xff]
    %v227 = vld [vmem:[%s1 + $0x658] sm:$0xff]
    %v228 = vld [vmem:[%s1 + $0x660] sm:$0xff]
    %v229 = vld [vmem:[%s1 + $0x668] sm:$0xff]
    %v230 = vld [vmem:[%s1 + $0x670] sm:$0xff]
    %v231 = vld [vmem:[%s1 + $0x678] sm:$0xff]
    %v232 = vld [vmem:[%s1 + $0x680] sm:$0xff]
    %v233 = vld [vmem:[%s1 + $0x688] sm:$0xff]
    %v234 = vld [vmem:[%s1 + $0x690] sm:$0xff]
    %v235 = vld [vmem:[%s1 + $0x698] sm:$0xff]
    %v236 = vld [vmem:[%s1 + $0x6a0] sm:$0xff]
    %v237 = vld [vmem:[%s1 + $0x6a8] sm:$0xff]
    %v238 = vld [vmem:[%s1 + $0x6b0] sm:$0xff]
    %v239 = vld [vmem:[%s1 + $0x6b8] sm:$0xff]
    %v240 = vld [vmem:[%s1 + $0x6c0] sm:$0xff]
    %v241 = vld [vmem:[%s1 + $0x6c8] sm:$0xff]
    %v242 = vld [vmem:[%s1 + $0x6d0] sm:$0xff]
    %v243 = vld [vmem:[%s1 + $0x6d8] sm:$0xff]
    %v244 = vld [vmem:[%s1 + $0x6e0] sm:$0xff]
    %v245 = vld [vmem:[%s1 + $0x6e8] sm:$0xff]
    %v246 = vld [vmem:[%s1 + $0x6f0] sm:$0xff]
    %v247 = vld [vmem:[%s1 + $0x6f8] sm:$0xff]
    %v248 = vld [vmem:[%s1 + $0x700] sm:$0xff]
    %v249 = vld [vmem:[%s1 + $0x708] sm:$0xff]
    %v250 = vld [vmem:[%s1 + $0x710] sm:$0xff]
    %v251 = vld [vmem:[%s1 + $0x718] sm:$0xff]
    %v252 = vld [vmem:[%s1 + $0x720] sm:$0xff]
    %v253 = vld [vmem:[%s1 + $0x728] sm:$0xff]
    %v254 = vld [vmem:[%s1 + $0x730] sm:$0xff]
    %v255 = vld [vmem:[%s1 + $0x738] sm:$0xff]
    %v256 = vld [vmem:[%s1 + $0x740] sm:$0xff]
    %v257 = vld [vmem:[%s1 + $0x748] sm:$0xff]
    %v258 = vld [vmem:[%s1 + $0x750] sm:$0xff]
    %v259 = vld [vmem:[%s1 + $0x758] sm:$0xff]
    %v260 = vld [vmem:[%s1 + $0x760] sm:$0xff]
    %v261 = vld [vmem:[%s1 + $0x768] sm:$0xff]
    %v262 = vld [vmem:[%s1 + $0x770] sm:$0xff]
    %v263 = vld [vmem:[%s1 + $0x778] sm:$0xff]
    %v264 = vld [vmem:[%s1 + $0x780] sm:$0xff]
    %v265 = vld [vmem:[%s1 + $0x788] sm:$0xff]
    %v266 = vld [vmem:[%s1 + $0x790] sm:$0xff]
    %v267 = vld [vmem:[%s1 + $0x798] sm:$0xff]
    %v268 = vld [vmem:[%s1 + $0x7a0] sm:$0xff]
    %v269 = vld [vmem:[%s1 + $0x7a8] sm:$0xff]
    %v270 = vld [vmem:[%s1 + $0x7b0] sm:$0xff]
    %v271 = vld [vmem:[%s1 + $0x7b8] sm:$0xff]
    %v272 = vld [vmem:[%s1 + $0x7c0] sm:$0xff]
    %v273 = vld [vmem:[%s1 + $0x7c8] sm:$0xff]
    %v274 = vld [vmem:[%s1 + $0x7d0] sm:$0xff]
    %v275 = vld [vmem:[%s1 + $0x7d8] sm:$0xff]
    %v276 = vld [vmem:[%s1 + $0x7e0] sm:$0xff]
    %v277 = vld [vmem:[%s1 + $0x7e8] sm:$0xff]
    %v278 = vld [vmem:[%s1 + $0x7f0] sm:$0xff]
    %v279 = vld [vmem:[%s1 + $0x7f8] sm:$0xff]
    %v280 = vld [vmem:[%s1 + $0x800] sm:$0xff]
    %v281 = vld [vmem:[%s1 + $0x808] sm:$0xff]
    %v282 = vld [vmem:[%s1 + $0x810] sm:$0xff]
    %v283 = vld [vmem:[%s1 + $0x818] sm:$0xff]
    %v284 = vld [vmem:[%s1 + $0x820] sm:$0xff]
    %v285 = vld [vmem:[%s1 + $0x828] sm:$0xff]
    %v286 = vld [vmem:[%s1 + $0x830] sm:$0xff]
    %v287 = vld [vmem:[%s1 + $0x838] sm:$0xff]
    %v288 = vld [vmem:[%s1 + $0x840] sm:$0xff]
    %v289 = vld [vmem:[%s1 + $0x848] sm:$0xff]
    %v290 = vld [vmem:[%s1 + $0x850] sm:$0xff]
    %v291 = vld [vmem:[%s1 + $0x858] sm:$0xff]
    %v292 = vld [vmem:[%s1 + $0x860] sm:$0xff]
    %v293 = vld [vmem:[%s1 + $0x868] sm:$0xff]
    %v294 = vld [vmem:[%s1 + $0x870] sm:$0xff]
    %v295 = vld [vmem:[%s1 + $0x878] sm:$0xff]
    %v296 = vld [vmem:[%s1 + $0x880] sm:$0xff]
    %v297 = vld [vmem:[%s1 + $0x888] sm:$0xff]
    %v298 = vld [vmem:[%s1 + $0x890] sm:$0xff]
    %v299 = vld [vmem:[%s1 + $0x898] sm:$0xff]
    %v300 = vld [vmem:[%s1 + $0x8a0] sm:$0xff]
    %v301 = vld [vmem:[%s1 + $0x8a8] sm:$0xff]
    %v302 = vld [vmem:[%s1 + $0x8b0] sm:$0xff]
    %v303 = vld [vmem:[%s1 + $0x8b8] sm:$0xff]
    %v304 = vld [vmem:[%s1 + $0x8c0] sm:$0xff]
    %v305 = vld [vmem:[%s1 + $0x8c8] sm:$0xff]
    %v306 = vld [vmem:[%s1 + $0x8d0] sm:$0xff]
    %v307 = vld [vmem:[%s1 + $0x8d8] sm:$0xff]
    %v308 = vld [vmem:[%s1 + $0x8e0] sm:$0xff]
    %v309 = vld [vmem:[%s1 + $0x8e8] sm:$0xff]
    %v310 = vld [vmem:[%s1 + $0x8f0] sm:$0xff]
    %v311 = vld [vmem:[%s1 + $0x8f8] sm:$0xff]
    %v312 = vld [vmem:[%s2] sm:$0xf]
    %v314 = vlaneseq
    %v315 = vshrl.u32 %v314, 7
    %v316 = vsub.s32 0, %v315
    %v317 = vrot.slane %v312, %v316
    %v318 = vlaneseq
    %v319 = vshrl.u32 %v318, 7
    %v320 = vsub.s32 1, %v319
    %v321 = vrot.slane %v312, %v320
    %v322 = vlaneseq
    %v323 = vshrl.u32 %v322, 7
    %v324 = vsub.s32 2, %v323
    %v325 = vrot.slane %v312, %v324
    %v326 = vlaneseq
    %v327 = vshrl.u32 %v326, 7
    %v328 = vsub.s32 3, %v327
    %v329 = vrot.slane %v312, %v328
    %v336 = vcombine.high %v22, %v22
    %v338 = vunpack.c.l.s4 1966171168
    %v339 = vunpack.c.0.s8 %v338
    %v340 = vlaneseq
    %v341 = vshrl.u32 %v340, 7
    %v342 = vsub.s32 %v339, %v341
    %v343 = vrot.slane %v22, %v342
    %v345 = vunpack.c.l.s4 1966171168
    %v346 = vunpack.c.0.s8 %v345
    %v347 = vlaneseq
    %v348 = vshrl.u32 %v347, 7
    %v349 = vsub.s32 %v346, %v348
    %v350 = vrot.slane %v336, %v349
    %v351 = vcombine.high %v343, %v343
    %v352 = vcombine.high %v350, %v350
    %v354 = vunpack.c.l.s4 1966171168
    %v355 = vunpack.c.0.s8 %v354
    %v356 = vlaneseq
    %v357 = vshrl.u32 %v356, 7
    %v358 = vsub.s32 %v355, %v357
    %v359 = vrot.slane %v343, %v358
    %v361 = vunpack.c.l.s4 1966171168
    %v362 = vunpack.c.0.s8 %v361
    %v363 = vlaneseq
    %v364 = vshrl.u32 %v363, 7
    %v365 = vsub.s32 %v362, %v364
    %v366 = vrot.slane %v350, %v365
    %v368 = vunpack.c.l.s4 1966171168
    %v369 = vunpack.c.0.s8 %v368
    %v370 = vlaneseq
    %v371 = vshrl.u32 %v370, 7
    %v372 = vsub.s32 %v369, %v371
    %v373 = vrot.slane %v351, %v372
    %v375 = vunpack.c.l.s4 1966171168
    %v376 = vunpack.c.0.s8 %v375
    %v377 = vlaneseq
    %v378 = vshrl.u32 %v377, 7
    %v379 = vsub.s32 %v376, %v378
    %v380 = vrot.slane %v352, %v379
    %v381 = vcombine.high %v359, %v359
    %v382 = vcombine.high %v366, %v366
    %v383 = vcombine.high %v373, %v373
    %v384 = vcombine.high %v380, %v380
    %v386 = vunpack.c.l.s4 1966171168
    %v387 = vunpack.c.0.s8 %v386
    %v388 = vlaneseq
    %v389 = vshrl.u32 %v388, 7
    %v390 = vsub.s32 %v387, %v389
    %v391 = vrot.slane %v23, %v390
    %v393 = vunpack.c.l.s4 1966171168
    %v394 = vunpack.c.0.s8 %v393
    %v395 = vlaneseq
    %v396 = vshrl.u32 %v395, 7
    %v397 = vsub.s32 %v394, %v396
    %v398 = vrot.slane %v391, %v397
    %v696 = vunpack.c.l.b16 %v24
    %v697 = vunpack.c.h.b16 %v24
    %v698 = vunpack.c.l.b16 %v25
    %v699 = vunpack.c.h.b16 %v25
    %v700 = vunpack.c.l.b16 %v26
    %v701 = vunpack.c.h.b16 %v26
    %v702 = vunpack.c.l.b16 %v27
    %v703 = vunpack.c.h.b16 %v27
    %v704 = vunpack.c.l.b16 %v28
    %v705 = vunpack.c.h.b16 %v28
    %v706 = vunpack.c.l.b16 %v29
    %v707 = vunpack.c.h.b16 %v29
    %v708 = vunpack.c.l.b16 %v30
    %v709 = vunpack.c.h.b16 %v30
    %v710 = vunpack.c.l.b16 %v31
    %v711 = vunpack.c.h.b16 %v31
    %v712 = vunpack.c.l.b16 %v32
    %v713 = vunpack.c.h.b16 %v32
    %v714 = vunpack.c.l.b16 %v33
    %v715 = vunpack.c.h.b16 %v33
    %v716 = vunpack.c.l.b16 %v34
    %v717 = vunpack.c.h.b16 %v34
    %v718 = vunpack.c.l.b16 %v35
    %v719 = vunpack.c.h.b16 %v35
    %v720 = vunpack.c.l.b16 %v36
    %v721 = vunpack.c.h.b16 %v36
    %v722 = vunpack.c.l.b16 %v37
    %v723 = vunpack.c.h.b16 %v37
    %v724 = vunpack.c.l.b16 %v38
    %v725 = vunpack.c.h.b16 %v38
    %v726 = vunpack.c.l.b16 %v39
    %v727 = vunpack.c.h.b16 %v39
    %v728 = vunpack.c.l.b16 %v40
    %v729 = vunpack.c.h.b16 %v40
    %v730 = vunpack.c.l.b16 %v41
    %v731 = vunpack.c.h.b16 %v41
    %v732 = vunpack.c.l.b16 %v42
    %v733 = vunpack.c.h.b16 %v42
    %v734 = vunpack.c.l.b16 %v43
    %v735 = vunpack.c.h.b16 %v43
    %v736 = vunpack.c.l.b16 %v44
    %v737 = vunpack.c.h.b16 %v44
    %v738 = vunpack.c.l.b16 %v45
    %v739 = vunpack.c.h.b16 %v45
    %v740 = vunpack.c.l.b16 %v46
    %v741 = vunpack.c.h.b16 %v46
    %v742 = vunpack.c.l.b16 %v47
    %v743 = vunpack.c.h.b16 %v47
    %v744 = vunpack.c.l.b16 %v48
    %v745 = vunpack.c.h.b16 %v48
    %v746 = vunpack.c.l.b16 %v49
    %v747 = vunpack.c.h.b16 %v49
    %v748 = vunpack.c.l.b16 %v50
    %v749 = vunpack.c.h.b16 %v50
    %v750 = vunpack.c.l.b16 %v51
    %v751 = vunpack.c.h.b16 %v51
    %v752 = vunpack.c.l.b16 %v52
    %v753 = vunpack.c.h.b16 %v52
    %v754 = vunpack.c.l.b16 %v53
    %v755 = vunpack.c.h.b16 %v53
    %v756 = vunpack.c.l.b16 %v54
    %v757 = vunpack.c.h.b16 %v54
    %v758 = vunpack.c.l.b16 %v55
    %v759 = vunpack.c.h.b16 %v55
    %v760 = vunpack.c.l.b16 %v56
    %v761 = vunpack.c.h.b16 %v56
    %v762 = vunpack.c.l.b16 %v57
    %v763 = vunpack.c.h.b16 %v57
    %v764 = vunpack.c.l.b16 %v58
    %v765 = vunpack.c.h.b16 %v58
    %v766 = vunpack.c.l.b16 %v59
    %v767 = vunpack.c.h.b16 %v59
    %v768 = vunpack.c.l.b16 %v60
    %v769 = vunpack.c.h.b16 %v60
    %v770 = vunpack.c.l.b16 %v61
    %v771 = vunpack.c.h.b16 %v61
    %v772 = vunpack.c.l.b16 %v62
    %v773 = vunpack.c.h.b16 %v62
    %v774 = vunpack.c.l.b16 %v63
    %v775 = vunpack.c.h.b16 %v63
    %v776 = vunpack.c.l.b16 %v64
    %v777 = vunpack.c.h.b16 %v64
    %v778 = vunpack.c.l.b16 %v65
    %v779 = vunpack.c.h.b16 %v65
    %v780 = vunpack.c.l.b16 %v66
    %v781 = vunpack.c.h.b16 %v66
    %v782 = vunpack.c.l.b16 %v67
    %v783 = vunpack.c.h.b16 %v67
    %v784 = vunpack.c.l.b16 %v68
    %v785 = vunpack.c.h.b16 %v68
    %v786 = vunpack.c.l.b16 %v69
    %v787 = vunpack.c.h.b16 %v69
    %v788 = vunpack.c.l.b16 %v70
    %v789 = vunpack.c.h.b16 %v70
    %v790 = vunpack.c.l.b16 %v71
    %v791 = vunpack.c.h.b16 %v71
    %v792 = vunpack.c.l.b16 %v72
    %v793 = vunpack.c.h.b16 %v72
    %v794 = vunpack.c.l.b16 %v73
    %v795 = vunpack.c.h.b16 %v73
    %v796 = vunpack.c.l.b16 %v74
    %v797 = vunpack.c.h.b16 %v74
    %v798 = vunpack.c.l.b16 %v75
    %v799 = vunpack.c.h.b16 %v75
    %v800 = vunpack.c.l.b16 %v76
    %v801 = vunpack.c.h.b16 %v76
    %v802 = vunpack.c.l.b16 %v77
    %v803 = vunpack.c.h.b16 %v77
    %v804 = vunpack.c.l.b16 %v78
    %v805 = vunpack.c.h.b16 %v78
    %v806 = vunpack.c.l.b16 %v79
    %v807 = vunpack.c.h.b16 %v79
    %v808 = vunpack.c.l.b16 %v80
    %v809 = vunpack.c.h.b16 %v80
    %v810 = vunpack.c.l.b16 %v81
    %v811 = vunpack.c.h.b16 %v81
    %v812 = vunpack.c.l.b16 %v82
    %v813 = vunpack.c.h.b16 %v82
    %v814 = vunpack.c.l.b16 %v83
    %v815 = vunpack.c.h.b16 %v83
    %v816 = vunpack.c.l.b16 %v84
    %v817 = vunpack.c.h.b16 %v84
    %v818 = vunpack.c.l.b16 %v85
    %v819 = vunpack.c.h.b16 %v85
    %v820 = vunpack.c.l.b16 %v86
    %v821 = vunpack.c.h.b16 %v86
    %v822 = vunpack.c.l.b16 %v87
    %v823 = vunpack.c.h.b16 %v87
    %v824 = vunpack.c.l.b16 %v88
    %v825 = vunpack.c.h.b16 %v88
    %v826 = vunpack.c.l.b16 %v89
    %v827 = vunpack.c.h.b16 %v89
    %v828 = vunpack.c.l.b16 %v90
    %v829 = vunpack.c.h.b16 %v90
    %v830 = vunpack.c.l.b16 %v91
    %v831 = vunpack.c.h.b16 %v91
    %v832 = vunpack.c.l.b16 %v92
    %v833 = vunpack.c.h.b16 %v92
    %v834 = vunpack.c.l.b16 %v93
    %v835 = vunpack.c.h.b16 %v93
    %v836 = vunpack.c.l.b16 %v94
    %v837 = vunpack.c.h.b16 %v94
    %v838 = vunpack.c.l.b16 %v95
    %v839 = vunpack.c.h.b16 %v95
    %v840 = vunpack.c.l.b16 %v96
    %v841 = vunpack.c.h.b16 %v96
    %v842 = vunpack.c.l.b16 %v97
    %v843 = vunpack.c.h.b16 %v97
    %v844 = vunpack.c.l.b16 %v98
    %v845 = vunpack.c.h.b16 %v98
    %v846 = vunpack.c.l.b16 %v99
    %v847 = vunpack.c.h.b16 %v99
    %v848 = vunpack.c.l.b16 %v100
    %v849 = vunpack.c.h.b16 %v100
    %v850 = vunpack.c.l.b16 %v101
    %v851 = vunpack.c.h.b16 %v101
    %v852 = vunpack.c.l.b16 %v102
    %v853 = vunpack.c.h.b16 %v102
    %v854 = vunpack.c.l.b16 %v103
    %v855 = vunpack.c.h.b16 %v103
    %v856 = vunpack.c.l.b16 %v104
    %v857 = vunpack.c.h.b16 %v104
    %v858 = vunpack.c.l.b16 %v105
    %v859 = vunpack.c.h.b16 %v105
    %v860 = vunpack.c.l.b16 %v106
    %v861 = vunpack.c.h.b16 %v106
    %v862 = vunpack.c.l.b16 %v107
    %v863 = vunpack.c.h.b16 %v107
    %v864 = vunpack.c.l.b16 %v108
    %v865 = vunpack.c.h.b16 %v108
    %v866 = vunpack.c.l.b16 %v109
    %v867 = vunpack.c.h.b16 %v109
    %v868 = vunpack.c.l.b16 %v110
    %v869 = vunpack.c.h.b16 %v110
    %v870 = vunpack.c.l.b16 %v111
    %v871 = vunpack.c.h.b16 %v111
    %v872 = vunpack.c.l.b16 %v112
    %v873 = vunpack.c.h.b16 %v112
    %v874 = vunpack.c.l.b16 %v113
    %v875 = vunpack.c.h.b16 %v113
    %v876 = vunpack.c.l.b16 %v114
    %v877 = vunpack.c.h.b16 %v114
    %v878 = vunpack.c.l.b16 %v115
    %v879 = vunpack.c.h.b16 %v115
    %v880 = vunpack.c.l.b16 %v116
    %v881 = vunpack.c.h.b16 %v116
    %v882 = vunpack.c.l.b16 %v117
    %v883 = vunpack.c.h.b16 %v117
    %v884 = vunpack.c.l.b16 %v118
    %v885 = vunpack.c.h.b16 %v118
    %v886 = vunpack.c.l.b16 %v119
    %v887 = vunpack.c.h.b16 %v119
    %v888 = vunpack.c.l.b16 %v120
    %v889 = vunpack.c.h.b16 %v120
    %v890 = vunpack.c.l.b16 %v121
    %v891 = vunpack.c.h.b16 %v121
    %v892 = vunpack.c.l.b16 %v122
    %v893 = vunpack.c.h.b16 %v122
    %v894 = vunpack.c.l.b16 %v123
    %v895 = vunpack.c.h.b16 %v123
    %v896 = vunpack.c.l.b16 %v124
    %v897 = vunpack.c.h.b16 %v124
    %v898 = vunpack.c.l.b16 %v125
    %v899 = vunpack.c.h.b16 %v125
    %v900 = vunpack.c.l.b16 %v126
    %v901 = vunpack.c.h.b16 %v126
    %v902 = vunpack.c.l.b16 %v127
    %v903 = vunpack.c.h.b16 %v127
    %v904 = vunpack.c.l.b16 %v128
    %v905 = vunpack.c.h.b16 %v128
    %v906 = vunpack.c.l.b16 %v129
    %v907 = vunpack.c.h.b16 %v129
    %v908 = vunpack.c.l.b16 %v130
    %v909 = vunpack.c.h.b16 %v130
    %v910 = vunpack.c.l.b16 %v131
    %v911 = vunpack.c.h.b16 %v131
    %v912 = vunpack.c.l.b16 %v132
    %v913 = vunpack.c.h.b16 %v132
    %v914 = vunpack.c.l.b16 %v133
    %v915 = vunpack.c.h.b16 %v133
    %v916 = vunpack.c.l.b16 %v134
    %v917 = vunpack.c.h.b16 %v134
    %v918 = vunpack.c.l.b16 %v135
    %v919 = vunpack.c.h.b16 %v135
    %v920 = vunpack.c.l.b16 %v136
    %v921 = vunpack.c.h.b16 %v136
    %v922 = vunpack.c.l.b16 %v137
    %v923 = vunpack.c.h.b16 %v137
    %v924 = vunpack.c.l.b16 %v138
    %v925 = vunpack.c.h.b16 %v138
    %v926 = vunpack.c.l.b16 %v139
    %v927 = vunpack.c.h.b16 %v139
    %v928 = vunpack.c.l.b16 %v140
    %v929 = vunpack.c.h.b16 %v140
    %v930 = vunpack.c.l.b16 %v141
    %v931 = vunpack.c.h.b16 %v141
    %v932 = vunpack.c.l.b16 %v142
    %v933 = vunpack.c.h.b16 %v142
    %v934 = vunpack.c.l.b16 %v143
    %v935 = vunpack.c.h.b16 %v143
    %v936 = vunpack.c.l.b16 %v144
    %v937 = vunpack.c.h.b16 %v144
    %v938 = vunpack.c.l.b16 %v145
    %v939 = vunpack.c.h.b16 %v145
    %v940 = vunpack.c.l.b16 %v146
    %v941 = vunpack.c.h.b16 %v146
    %v942 = vunpack.c.l.b16 %v147
    %v943 = vunpack.c.h.b16 %v147
    %v944 = vunpack.c.l.b16 %v148
    %v945 = vunpack.c.h.b16 %v148
    %v946 = vunpack.c.l.b16 %v149
    %v947 = vunpack.c.h.b16 %v149
    %v948 = vunpack.c.l.b16 %v150
    %v949 = vunpack.c.h.b16 %v150
    %v950 = vunpack.c.l.b16 %v151
    %v951 = vunpack.c.h.b16 %v151
    %v952 = vunpack.c.l.b16 %v152
    %v953 = vunpack.c.h.b16 %v152
    %v954 = vunpack.c.l.b16 %v153
    %v955 = vunpack.c.h.b16 %v153
    %v956 = vunpack.c.l.b16 %v154
    %v957 = vunpack.c.h.b16 %v154
    %v958 = vunpack.c.l.b16 %v155
    %v959 = vunpack.c.h.b16 %v155
    %v960 = vunpack.c.l.b16 %v156
    %v961 = vunpack.c.h.b16 %v156
    %v962 = vunpack.c.l.b16 %v157
    %v963 = vunpack.c.h.b16 %v157
    %v964 = vunpack.c.l.b16 %v158
    %v965 = vunpack.c.h.b16 %v158
    %v966 = vunpack.c.l.b16 %v159
    %v967 = vunpack.c.h.b16 %v159
    %v968 = vunpack.c.l.b16 %v160
    %v969 = vunpack.c.h.b16 %v160
    %v970 = vunpack.c.l.b16 %v161
    %v971 = vunpack.c.h.b16 %v161
    %v972 = vunpack.c.l.b16 %v162
    %v973 = vunpack.c.h.b16 %v162
    %v974 = vunpack.c.l.b16 %v163
    %v975 = vunpack.c.h.b16 %v163
    %v976 = vunpack.c.l.b16 %v164
    %v977 = vunpack.c.h.b16 %v164
    %v978 = vunpack.c.l.b16 %v165
    %v979 = vunpack.c.h.b16 %v165
    %v980 = vunpack.c.l.b16 %v166
    %v981 = vunpack.c.h.b16 %v166
    %v982 = vunpack.c.l.b16 %v167
    %v983 = vunpack.c.h.b16 %v167
    %v984 = vunpack.c.l.b16 %v168
    %v985 = vunpack.c.h.b16 %v168
    %v986 = vunpack.c.l.b16 %v169
    %v987 = vunpack.c.h.b16 %v169
    %v988 = vunpack.c.l.b16 %v170
    %v989 = vunpack.c.h.b16 %v170
    %v990 = vunpack.c.l.b16 %v171
    %v991 = vunpack.c.h.b16 %v171
    %v992 = vunpack.c.l.b16 %v172
    %v993 = vunpack.c.h.b16 %v172
    %v994 = vunpack.c.l.b16 %v173
    %v995 = vunpack.c.h.b16 %v173
    %v996 = vunpack.c.l.b16 %v174
    %v997 = vunpack.c.h.b16 %v174
    %v998 = vunpack.c.l.b16 %v175
    %v999 = vunpack.c.h.b16 %v175
    %v1000 = vunpack.c.l.b16 %v176
    %v1001 = vunpack.c.h.b16 %v176
    %v1002 = vunpack.c.l.b16 %v177
    %v1003 = vunpack.c.h.b16 %v177
    %v1004 = vunpack.c.l.b16 %v178
    %v1005 = vunpack.c.h.b16 %v178
    %v1006 = vunpack.c.l.b16 %v179
    %v1007 = vunpack.c.h.b16 %v179
    %v1008 = vunpack.c.l.b16 %v180
    %v1009 = vunpack.c.h.b16 %v180
    %v1010 = vunpack.c.l.b16 %v181
    %v1011 = vunpack.c.h.b16 %v181
    %v1012 = vunpack.c.l.b16 %v182
    %v1013 = vunpack.c.h.b16 %v182
    %v1014 = vunpack.c.l.b16 %v183
    %v1015 = vunpack.c.h.b16 %v183
    %v1016 = vunpack.c.l.b16 %v184
    %v1017 = vunpack.c.h.b16 %v184
    %v1018 = vunpack.c.l.b16 %v185
    %v1019 = vunpack.c.h.b16 %v185
    %v1020 = vunpack.c.l.b16 %v186
    %v1021 = vunpack.c.h.b16 %v186
    %v1022 = vunpack.c.l.b16 %v187
    %v1023 = vunpack.c.h.b16 %v187
    %v1024 = vunpack.c.l.b16 %v188
    %v1025 = vunpack.c.h.b16 %v188
    %v1026 = vunpack.c.l.b16 %v189
    %v1027 = vunpack.c.h.b16 %v189
    %v1028 = vunpack.c.l.b16 %v190
    %v1029 = vunpack.c.h.b16 %v190
    %v1030 = vunpack.c.l.b16 %v191
    %v1031 = vunpack.c.h.b16 %v191
    %v1032 = vunpack.c.l.b16 %v192
    %v1033 = vunpack.c.h.b16 %v192
    %v1034 = vunpack.c.l.b16 %v193
    %v1035 = vunpack.c.h.b16 %v193
    %v1036 = vunpack.c.l.b16 %v194
    %v1037 = vunpack.c.h.b16 %v194
    %v1038 = vunpack.c.l.b16 %v195
    %v1039 = vunpack.c.h.b16 %v195
    %v1040 = vunpack.c.l.b16 %v196
    %v1041 = vunpack.c.h.b16 %v196
    %v1042 = vunpack.c.l.b16 %v197
    %v1043 = vunpack.c.h.b16 %v197
    %v1044 = vunpack.c.l.b16 %v198
    %v1045 = vunpack.c.h.b16 %v198
    %v1046 = vunpack.c.l.b16 %v199
    %v1047 = vunpack.c.h.b16 %v199
    %v1048 = vunpack.c.l.b16 %v200
    %v1049 = vunpack.c.h.b16 %v200
    %v1050 = vunpack.c.l.b16 %v201
    %v1051 = vunpack.c.h.b16 %v201
    %v1052 = vunpack.c.l.b16 %v202
    %v1053 = vunpack.c.h.b16 %v202
    %v1054 = vunpack.c.l.b16 %v203
    %v1055 = vunpack.c.h.b16 %v203
    %v1056 = vunpack.c.l.b16 %v204
    %v1057 = vunpack.c.h.b16 %v204
    %v1058 = vunpack.c.l.b16 %v205
    %v1059 = vunpack.c.h.b16 %v205
    %v1060 = vunpack.c.l.b16 %v206
    %v1061 = vunpack.c.h.b16 %v206
    %v1062 = vunpack.c.l.b16 %v207
    %v1063 = vunpack.c.h.b16 %v207
    %v1064 = vunpack.c.l.b16 %v208
    %v1065 = vunpack.c.h.b16 %v208
    %v1066 = vunpack.c.l.b16 %v209
    %v1067 = vunpack.c.h.b16 %v209
    %v1068 = vunpack.c.l.b16 %v210
    %v1069 = vunpack.c.h.b16 %v210
    %v1070 = vunpack.c.l.b16 %v211
    %v1071 = vunpack.c.h.b16 %v211
    %v1072 = vunpack.c.l.b16 %v212
    %v1073 = vunpack.c.h.b16 %v212
    %v1074 = vunpack.c.l.b16 %v213
    %v1075 = vunpack.c.h.b16 %v213
    %v1076 = vunpack.c.l.b16 %v214
    %v1077 = vunpack.c.h.b16 %v214
    %v1078 = vunpack.c.l.b16 %v215
    %v1079 = vunpack.c.h.b16 %v215
    %v1080 = vunpack.c.l.b16 %v216
    %v1081 = vunpack.c.h.b16 %v216
    %v1082 = vunpack.c.l.b16 %v217
    %v1083 = vunpack.c.h.b16 %v217
    %v1084 = vunpack.c.l.b16 %v218
    %v1085 = vunpack.c.h.b16 %v218
    %v1086 = vunpack.c.l.b16 %v219
    %v1087 = vunpack.c.h.b16 %v219
    %v1088 = vunpack.c.l.b16 %v220
    %v1089 = vunpack.c.h.b16 %v220
    %v1090 = vunpack.c.l.b16 %v221
    %v1091 = vunpack.c.h.b16 %v221
    %v1092 = vunpack.c.l.b16 %v222
    %v1093 = vunpack.c.h.b16 %v222
    %v1094 = vunpack.c.l.b16 %v223
    %v1095 = vunpack.c.h.b16 %v223
    %v1096 = vunpack.c.l.b16 %v224
    %v1097 = vunpack.c.h.b16 %v224
    %v1098 = vunpack.c.l.b16 %v225
    %v1099 = vunpack.c.h.b16 %v225
    %v1100 = vunpack.c.l.b16 %v226
    %v1101 = vunpack.c.h.b16 %v226
    %v1102 = vunpack.c.l.b16 %v227
    %v1103 = vunpack.c.h.b16 %v227
    %v1104 = vunpack.c.l.b16 %v228
    %v1105 = vunpack.c.h.b16 %v228
    %v1106 = vunpack.c.l.b16 %v229
    %v1107 = vunpack.c.h.b16 %v229
    %v1108 = vunpack.c.l.b16 %v230
    %v1109 = vunpack.c.h.b16 %v230
    %v1110 = vunpack.c.l.b16 %v231
    %v1111 = vunpack.c.h.b16 %v231
    %v1112 = vunpack.c.l.b16 %v232
    %v1113 = vunpack.c.h.b16 %v232
    %v1114 = vunpack.c.l.b16 %v233
    %v1115 = vunpack.c.h.b16 %v233
    %v1116 = vunpack.c.l.b16 %v234
    %v1117 = vunpack.c.h.b16 %v234
    %v1118 = vunpack.c.l.b16 %v235
    %v1119 = vunpack.c.h.b16 %v235
    %v1120 = vunpack.c.l.b16 %v236
    %v1121 = vunpack.c.h.b16 %v236
    %v1122 = vunpack.c.l.b16 %v237
    %v1123 = vunpack.c.h.b16 %v237
    %v1124 = vunpack.c.l.b16 %v238
    %v1125 = vunpack.c.h.b16 %v238
    %v1126 = vunpack.c.l.b16 %v239
    %v1127 = vunpack.c.h.b16 %v239
    %v1128 = vunpack.c.l.b16 %v240
    %v1129 = vunpack.c.h.b16 %v240
    %v1130 = vunpack.c.l.b16 %v241
    %v1131 = vunpack.c.h.b16 %v241
    %v1132 = vunpack.c.l.b16 %v242
    %v1133 = vunpack.c.h.b16 %v242
    %v1134 = vunpack.c.l.b16 %v243
    %v1135 = vunpack.c.h.b16 %v243
    %v1136 = vunpack.c.l.b16 %v244
    %v1137 = vunpack.c.h.b16 %v244
    %v1138 = vunpack.c.l.b16 %v245
    %v1139 = vunpack.c.h.b16 %v245
    %v1140 = vunpack.c.l.b16 %v246
    %v1141 = vunpack.c.h.b16 %v246
    %v1142 = vunpack.c.l.b16 %v247
    %v1143 = vunpack.c.h.b16 %v247
    %v1144 = vunpack.c.l.b16 %v248
    %v1145 = vunpack.c.h.b16 %v248
    %v1146 = vunpack.c.l.b16 %v249
    %v1147 = vunpack.c.h.b16 %v249
    %v1148 = vunpack.c.l.b16 %v250
    %v1149 = vunpack.c.h.b16 %v250
    %v1150 = vunpack.c.l.b16 %v251
    %v1151 = vunpack.c.h.b16 %v251
    %v1152 = vunpack.c.l.b16 %v252
    %v1153 = vunpack.c.h.b16 %v252
    %v1154 = vunpack.c.l.b16 %v253
    %v1155 = vunpack.c.h.b16 %v253
    %v1156 = vunpack.c.l.b16 %v254
    %v1157 = vunpack.c.h.b16 %v254
    %v1158 = vunpack.c.l.b16 %v255
    %v1159 = vunpack.c.h.b16 %v255
    %v1160 = vunpack.c.l.b16 %v256
    %v1161 = vunpack.c.h.b16 %v256
    %v1162 = vunpack.c.l.b16 %v257
    %v1163 = vunpack.c.h.b16 %v257
    %v1164 = vunpack.c.l.b16 %v258
    %v1165 = vunpack.c.h.b16 %v258
    %v1166 = vunpack.c.l.b16 %v259
    %v1167 = vunpack.c.h.b16 %v259
    %v1168 = vunpack.c.l.b16 %v260
    %v1169 = vunpack.c.h.b16 %v260
    %v1170 = vunpack.c.l.b16 %v261
    %v1171 = vunpack.c.h.b16 %v261
    %v1172 = vunpack.c.l.b16 %v262
    %v1173 = vunpack.c.h.b16 %v262
    %v1174 = vunpack.c.l.b16 %v263
    %v1175 = vunpack.c.h.b16 %v263
    %v1176 = vunpack.c.l.b16 %v264
    %v1177 = vunpack.c.h.b16 %v264
    %v1178 = vunpack.c.l.b16 %v265
    %v1179 = vunpack.c.h.b16 %v265
    %v1180 = vunpack.c.l.b16 %v266
    %v1181 = vunpack.c.h.b16 %v266
    %v1182 = vunpack.c.l.b16 %v267
    %v1183 = vunpack.c.h.b16 %v267
    %v1184 = vunpack.c.l.b16 %v268
    %v1185 = vunpack.c.h.b16 %v268
    %v1186 = vunpack.c.l.b16 %v269
    %v1187 = vunpack.c.h.b16 %v269
    %v1188 = vunpack.c.l.b16 %v270
    %v1189 = vunpack.c.h.b16 %v270
    %v1190 = vunpack.c.l.b16 %v271
    %v1191 = vunpack.c.h.b16 %v271
    %v1192 = vunpack.c.l.b16 %v272
    %v1193 = vunpack.c.h.b16 %v272
    %v1194 = vunpack.c.l.b16 %v273
    %v1195 = vunpack.c.h.b16 %v273
    %v1196 = vunpack.c.l.b16 %v274
    %v1197 = vunpack.c.h.b16 %v274
    %v1198 = vunpack.c.l.b16 %v275
    %v1199 = vunpack.c.h.b16 %v275
    %v1200 = vunpack.c.l.b16 %v276
    %v1201 = vunpack.c.h.b16 %v276
    %v1202 = vunpack.c.l.b16 %v277
    %v1203 = vunpack.c.h.b16 %v277
    %v1204 = vunpack.c.l.b16 %v278
    %v1205 = vunpack.c.h.b16 %v278
    %v1206 = vunpack.c.l.b16 %v279
    %v1207 = vunpack.c.h.b16 %v279
    %v1208 = vunpack.c.l.b16 %v280
    %v1209 = vunpack.c.h.b16 %v280
    %v1210 = vunpack.c.l.b16 %v281
    %v1211 = vunpack.c.h.b16 %v281
    %v1212 = vunpack.c.l.b16 %v282
    %v1213 = vunpack.c.h.b16 %v282
    %v1214 = vunpack.c.l.b16 %v283
    %v1215 = vunpack.c.h.b16 %v283
    %v1216 = vunpack.c.l.b16 %v284
    %v1217 = vunpack.c.h.b16 %v284
    %v1218 = vunpack.c.l.b16 %v285
    %v1219 = vunpack.c.h.b16 %v285
    %v1220 = vunpack.c.l.b16 %v286
    %v1221 = vunpack.c.h.b16 %v286
    %v1222 = vunpack.c.l.b16 %v287
    %v1223 = vunpack.c.h.b16 %v287
    %v1224 = vunpack.c.l.b16 %v288
    %v1225 = vunpack.c.h.b16 %v288
    %v1226 = vunpack.c.l.b16 %v289
    %v1227 = vunpack.c.h.b16 %v289
    %v1228 = vunpack.c.l.b16 %v290
    %v1229 = vunpack.c.h.b16 %v290
    %v1230 = vunpack.c.l.b16 %v291
    %v1231 = vunpack.c.h.b16 %v291
    %v1232 = vunpack.c.l.b16 %v292
    %v1233 = vunpack.c.h.b16 %v292
    %v1234 = vunpack.c.l.b16 %v293
    %v1235 = vunpack.c.h.b16 %v293
    %v1236 = vunpack.c.l.b16 %v294
    %v1237 = vunpack.c.h.b16 %v294
    %v1238 = vunpack.c.l.b16 %v295
    %v1239 = vunpack.c.h.b16 %v295
    %v1240 = vunpack.c.l.b16 %v296
    %v1241 = vunpack.c.h.b16 %v296
    %v1242 = vunpack.c.l.b16 %v297
    %v1243 = vunpack.c.h.b16 %v297
    %v1244 = vunpack.c.l.b16 %v298
    %v1245 = vunpack.c.h.b16 %v298
    %v1246 = vunpack.c.l.b16 %v299
    %v1247 = vunpack.c.h.b16 %v299
    %v1248 = vunpack.c.l.b16 %v300
    %v1249 = vunpack.c.h.b16 %v300
    %v1250 = vunpack.c.l.b16 %v301
    %v1251 = vunpack.c.h.b16 %v301
    %v1252 = vunpack.c.l.b16 %v302
    %v1253 = vunpack.c.h.b16 %v302
    %v1254 = vunpack.c.l.b16 %v303
    %v1255 = vunpack.c.h.b16 %v303
    %v1256 = vunpack.c.l.b16 %v304
    %v1257 = vunpack.c.h.b16 %v304
    %v1258 = vunpack.c.l.b16 %v305
    %v1259 = vunpack.c.h.b16 %v305
    %v1260 = vunpack.c.l.b16 %v306
    %v1261 = vunpack.c.h.b16 %v306
    %v1262 = vunpack.c.l.b16 %v307
    %v1263 = vunpack.c.h.b16 %v307
    %v1264 = vunpack.c.l.b16 %v308
    %v1265 = vunpack.c.h.b16 %v308
    %v1266 = vunpack.c.l.b16 %v309
    %v1267 = vunpack.c.h.b16 %v309
    %v1268 = vunpack.c.l.b16 %v310
    %v1269 = vunpack.c.h.b16 %v310
    %v1270 = vunpack.c.l.b16 %v311
    %v1271 = vunpack.c.h.b16 %v311
    %v1272 = vpack.c.b16 %v700, %v696
    %v1273 = vpack.c.b16 %v701, %v697
    %v1274 = vpack.c.b16 %v702, %v698
    %v1275 = vpack.c.b16 %v703, %v699
    %v1276 = vpack.c.b16 %v708, %v704
    %v1277 = vpack.c.b16 %v709, %v705
    %v1278 = vpack.c.b16 %v710, %v706
    %v1279 = vpack.c.b16 %v711, %v707
    %v1280 = vpack.c.b16 %v716, %v712
    %v1281 = vpack.c.b16 %v717, %v713
    %v1282 = vpack.c.b16 %v718, %v714
    %v1283 = vpack.c.b16 %v719, %v715
    %v1284 = vpack.c.b16 %v724, %v720
    %v1285 = vpack.c.b16 %v725, %v721
    %v1286 = vpack.c.b16 %v726, %v722
    %v1287 = vpack.c.b16 %v727, %v723
    %v1288 = vpack.c.b16 %v732, %v728
    %v1289 = vpack.c.b16 %v733, %v729
    %v1290 = vpack.c.b16 %v734, %v730
    %v1291 = vpack.c.b16 %v735, %v731
    %v1292 = vpack.c.b16 %v740, %v736
    %v1293 = vpack.c.b16 %v741, %v737
    %v1294 = vpack.c.b16 %v742, %v738
    %v1295 = vpack.c.b16 %v743, %v739
    %v1296 = vpack.c.b16 %v748, %v744
    %v1297 = vpack.c.b16 %v749, %v745
    %v1298 = vpack.c.b16 %v750, %v746
    %v1299 = vpack.c.b16 %v751, %v747
    %v1300 = vpack.c.b16 %v756, %v752
    %v1301 = vpack.c.b16 %v757, %v753
    %v1302 = vpack.c.b16 %v758, %v754
    %v1303 = vpack.c.b16 %v759, %v755
    %v1304 = vpack.c.b16 %v764, %v760
    %v1305 = vpack.c.b16 %v765, %v761
    %v1306 = vpack.c.b16 %v766, %v762
    %v1307 = vpack.c.b16 %v767, %v763
    %v1308 = vpack.c.b16 %v772, %v768
    %v1309 = vpack.c.b16 %v773, %v769
    %v1310 = vpack.c.b16 %v774, %v770
    %v1311 = vpack.c.b16 %v775, %v771
    %v1312 = vpack.c.b16 %v780, %v776
    %v1313 = vpack.c.b16 %v781, %v777
    %v1314 = vpack.c.b16 %v782, %v778
    %v1315 = vpack.c.b16 %v783, %v779
    %v1316 = vpack.c.b16 %v788, %v784
    %v1317 = vpack.c.b16 %v789, %v785
    %v1318 = vpack.c.b16 %v790, %v786
    %v1319 = vpack.c.b16 %v791, %v787
    %v1320 = vpack.c.b16 %v796, %v792
    %v1321 = vpack.c.b16 %v797, %v793
    %v1322 = vpack.c.b16 %v798, %v794
    %v1323 = vpack.c.b16 %v799, %v795
    %v1324 = vpack.c.b16 %v804, %v800
    %v1325 = vpack.c.b16 %v805, %v801
    %v1326 = vpack.c.b16 %v806, %v802
    %v1327 = vpack.c.b16 %v807, %v803
    %v1328 = vpack.c.b16 %v812, %v808
    %v1329 = vpack.c.b16 %v813, %v809
    %v1330 = vpack.c.b16 %v814, %v810
    %v1331 = vpack.c.b16 %v815, %v811
    %v1332 = vpack.c.b16 %v820, %v816
    %v1333 = vpack.c.b16 %v821, %v817
    %v1334 = vpack.c.b16 %v822, %v818
    %v1335 = vpack.c.b16 %v823, %v819
    %v1336 = vpack.c.b16 %v828, %v824
    %v1337 = vpack.c.b16 %v829, %v825
    %v1338 = vpack.c.b16 %v830, %v826
    %v1339 = vpack.c.b16 %v831, %v827
    %v1340 = vpack.c.b16 %v836, %v832
    %v1341 = vpack.c.b16 %v837, %v833
    %v1342 = vpack.c.b16 %v838, %v834
    %v1343 = vpack.c.b16 %v839, %v835
    %v1344 = vpack.c.b16 %v844, %v840
    %v1345 = vpack.c.b16 %v845, %v841
    %v1346 = vpack.c.b16 %v846, %v842
    %v1347 = vpack.c.b16 %v847, %v843
    %v1348 = vpack.c.b16 %v852, %v848
    %v1349 = vpack.c.b16 %v853, %v849
    %v1350 = vpack.c.b16 %v854, %v850
    %v1351 = vpack.c.b16 %v855, %v851
    %v1352 = vpack.c.b16 %v860, %v856
    %v1353 = vpack.c.b16 %v861, %v857
    %v1354 = vpack.c.b16 %v862, %v858
    %v1355 = vpack.c.b16 %v863, %v859
    %v1356 = vpack.c.b16 %v868, %v864
    %v1357 = vpack.c.b16 %v869, %v865
    %v1358 = vpack.c.b16 %v870, %v866
    %v1359 = vpack.c.b16 %v871, %v867
    %v1360 = vpack.c.b16 %v876, %v872
    %v1361 = vpack.c.b16 %v877, %v873
    %v1362 = vpack.c.b16 %v878, %v874
    %v1363 = vpack.c.b16 %v879, %v875
    %v1364 = vpack.c.b16 %v884, %v880
    %v1365 = vpack.c.b16 %v885, %v881
    %v1366 = vpack.c.b16 %v886, %v882
    %v1367 = vpack.c.b16 %v887, %v883
    %v1368 = vpack.c.b16 %v892, %v888
    %v1369 = vpack.c.b16 %v893, %v889
    %v1370 = vpack.c.b16 %v894, %v890
    %v1371 = vpack.c.b16 %v895, %v891
    %v1372 = vpack.c.b16 %v900, %v896
    %v1373 = vpack.c.b16 %v901, %v897
    %v1374 = vpack.c.b16 %v902, %v898
    %v1375 = vpack.c.b16 %v903, %v899
    %v1376 = vpack.c.b16 %v908, %v904
    %v1377 = vpack.c.b16 %v909, %v905
    %v1378 = vpack.c.b16 %v910, %v906
    %v1379 = vpack.c.b16 %v911, %v907
    %v1380 = vpack.c.b16 %v916, %v912
    %v1381 = vpack.c.b16 %v917, %v913
    %v1382 = vpack.c.b16 %v918, %v914
    %v1383 = vpack.c.b16 %v919, %v915
    %v1384 = vpack.c.b16 %v924, %v920
    %v1385 = vpack.c.b16 %v925, %v921
    %v1386 = vpack.c.b16 %v926, %v922
    %v1387 = vpack.c.b16 %v927, %v923
    %v1388 = vpack.c.b16 %v932, %v928
    %v1389 = vpack.c.b16 %v933, %v929
    %v1390 = vpack.c.b16 %v934, %v930
    %v1391 = vpack.c.b16 %v935, %v931
    %v1392 = vpack.c.b16 %v940, %v936
    %v1393 = vpack.c.b16 %v941, %v937
    %v1394 = vpack.c.b16 %v942, %v938
    %v1395 = vpack.c.b16 %v943, %v939
    %v1396 = vpack.c.b16 %v948, %v944
    %v1397 = vpack.c.b16 %v949, %v945
    %v1398 = vpack.c.b16 %v950, %v946
    %v1399 = vpack.c.b16 %v951, %v947
    %v1400 = vpack.c.b16 %v956, %v952
    %v1401 = vpack.c.b16 %v957, %v953
    %v1402 = vpack.c.b16 %v958, %v954
    %v1403 = vpack.c.b16 %v959, %v955
    %v1404 = vpack.c.b16 %v964, %v960
    %v1405 = vpack.c.b16 %v965, %v961
    %v1406 = vpack.c.b16 %v966, %v962
    %v1407 = vpack.c.b16 %v967, %v963
    %v1408 = vpack.c.b16 %v972, %v968
    %v1409 = vpack.c.b16 %v973, %v969
    %v1410 = vpack.c.b16 %v974, %v970
    %v1411 = vpack.c.b16 %v975, %v971
    %v1412 = vpack.c.b16 %v980, %v976
    %v1413 = vpack.c.b16 %v981, %v977
    %v1414 = vpack.c.b16 %v982, %v978
    %v1415 = vpack.c.b16 %v983, %v979
    %v1416 = vpack.c.b16 %v988, %v984
    %v1417 = vpack.c.b16 %v989, %v985
    %v1418 = vpack.c.b16 %v990, %v986
    %v1419 = vpack.c.b16 %v991, %v987
    %v1420 = vpack.c.b16 %v996, %v992
    %v1421 = vpack.c.b16 %v997, %v993
    %v1422 = vpack.c.b16 %v998, %v994
    %v1423 = vpack.c.b16 %v999, %v995
    %v1424 = vpack.c.b16 %v1004, %v1000
    %v1425 = vpack.c.b16 %v1005, %v1001
    %v1426 = vpack.c.b16 %v1006, %v1002
    %v1427 = vpack.c.b16 %v1007, %v1003
    %v1428 = vpack.c.b16 %v1012, %v1008
    %v1429 = vpack.c.b16 %v1013, %v1009
    %v1430 = vpack.c.b16 %v1014, %v1010
    %v1431 = vpack.c.b16 %v1015, %v1011
    %v1432 = vpack.c.b16 %v1020, %v1016
    %v1433 = vpack.c.b16 %v1021, %v1017
    %v1434 = vpack.c.b16 %v1022, %v1018
    %v1435 = vpack.c.b16 %v1023, %v1019
    %v1436 = vpack.c.b16 %v1028, %v1024
    %v1437 = vpack.c.b16 %v1029, %v1025
    %v1438 = vpack.c.b16 %v1030, %v1026
    %v1439 = vpack.c.b16 %v1031, %v1027
    %v1440 = vpack.c.b16 %v1036, %v1032
    %v1441 = vpack.c.b16 %v1037, %v1033
    %v1442 = vpack.c.b16 %v1038, %v1034
    %v1443 = vpack.c.b16 %v1039, %v1035
    %v1444 = vpack.c.b16 %v1044, %v1040
    %v1445 = vpack.c.b16 %v1045, %v1041
    %v1446 = vpack.c.b16 %v1046, %v1042
    %v1447 = vpack.c.b16 %v1047, %v1043
    %v1448 = vpack.c.b16 %v1052, %v1048
    %v1449 = vpack.c.b16 %v1053, %v1049
    %v1450 = vpack.c.b16 %v1054, %v1050
    %v1451 = vpack.c.b16 %v1055, %v1051
    %v1452 = vpack.c.b16 %v1060, %v1056
    %v1453 = vpack.c.b16 %v1061, %v1057
    %v1454 = vpack.c.b16 %v1062, %v1058
    %v1455 = vpack.c.b16 %v1063, %v1059
    %v1456 = vpack.c.b16 %v1068, %v1064
    %v1457 = vpack.c.b16 %v1069, %v1065
    %v1458 = vpack.c.b16 %v1070, %v1066
    %v1459 = vpack.c.b16 %v1071, %v1067
    %v1460 = vpack.c.b16 %v1076, %v1072
    %v1461 = vpack.c.b16 %v1077, %v1073
    %v1462 = vpack.c.b16 %v1078, %v1074
    %v1463 = vpack.c.b16 %v1079, %v1075
    %v1464 = vpack.c.b16 %v1084, %v1080
    %v1465 = vpack.c.b16 %v1085, %v1081
    %v1466 = vpack.c.b16 %v1086, %v1082
    %v1467 = vpack.c.b16 %v1087, %v1083
    %v1468 = vpack.c.b16 %v1092, %v1088
    %v1469 = vpack.c.b16 %v1093, %v1089
    %v1470 = vpack.c.b16 %v1094, %v1090
    %v1471 = vpack.c.b16 %v1095, %v1091
    %v1472 = vpack.c.b16 %v1100, %v1096
    %v1473 = vpack.c.b16 %v1101, %v1097
    %v1474 = vpack.c.b16 %v1102, %v1098
    %v1475 = vpack.c.b16 %v1103, %v1099
    %v1476 = vpack.c.b16 %v1108, %v1104
    %v1477 = vpack.c.b16 %v1109, %v1105
    %v1478 = vpack.c.b16 %v1110, %v1106
    %v1479 = vpack.c.b16 %v1111, %v1107
    %v1480 = vpack.c.b16 %v1116, %v1112
    %v1481 = vpack.c.b16 %v1117, %v1113
    %v1482 = vpack.c.b16 %v1118, %v1114
    %v1483 = vpack.c.b16 %v1119, %v1115
    %v1484 = vpack.c.b16 %v1124, %v1120
    %v1485 = vpack.c.b16 %v1125, %v1121
    %v1486 = vpack.c.b16 %v1126, %v1122
    %v1487 = vpack.c.b16 %v1127, %v1123
    %v1488 = vpack.c.b16 %v1132, %v1128
    %v1489 = vpack.c.b16 %v1133, %v1129
    %v1490 = vpack.c.b16 %v1134, %v1130
    %v1491 = vpack.c.b16 %v1135, %v1131
    %v1492 = vpack.c.b16 %v1140, %v1136
    %v1493 = vpack.c.b16 %v1141, %v1137
    %v1494 = vpack.c.b16 %v1142, %v1138
    %v1495 = vpack.c.b16 %v1143, %v1139
    %v1496 = vpack.c.b16 %v1148, %v1144
    %v1497 = vpack.c.b16 %v1149, %v1145
    %v1498 = vpack.c.b16 %v1150, %v1146
    %v1499 = vpack.c.b16 %v1151, %v1147
    %v1500 = vpack.c.b16 %v1156, %v1152
    %v1501 = vpack.c.b16 %v1157, %v1153
    %v1502 = vpack.c.b16 %v1158, %v1154
    %v1503 = vpack.c.b16 %v1159, %v1155
    %v1504 = vpack.c.b16 %v1164, %v1160
    %v1505 = vpack.c.b16 %v1165, %v1161
    %v1506 = vpack.c.b16 %v1166, %v1162
    %v1507 = vpack.c.b16 %v1167, %v1163
    %v1508 = vpack.c.b16 %v1172, %v1168
    %v1509 = vpack.c.b16 %v1173, %v1169
    %v1510 = vpack.c.b16 %v1174, %v1170
    %v1511 = vpack.c.b16 %v1175, %v1171
    %v1512 = vpack.c.b16 %v1180, %v1176
    %v1513 = vpack.c.b16 %v1181, %v1177
    %v1514 = vpack.c.b16 %v1182, %v1178
    %v1515 = vpack.c.b16 %v1183, %v1179
    %v1516 = vpack.c.b16 %v1188, %v1184
    %v1517 = vpack.c.b16 %v1189, %v1185
    %v1518 = vpack.c.b16 %v1190, %v1186
    %v1519 = vpack.c.b16 %v1191, %v1187
    %v1520 = vpack.c.b16 %v1196, %v1192
    %v1521 = vpack.c.b16 %v1197, %v1193
    %v1522 = vpack.c.b16 %v1198, %v1194
    %v1523 = vpack.c.b16 %v1199, %v1195
    %v1524 = vpack.c.b16 %v1204, %v1200
    %v1525 = vpack.c.b16 %v1205, %v1201
    %v1526 = vpack.c.b16 %v1206, %v1202
    %v1527 = vpack.c.b16 %v1207, %v1203
    %v1528 = vpack.c.b16 %v1212, %v1208
    %v1529 = vpack.c.b16 %v1213, %v1209
    %v1530 = vpack.c.b16 %v1214, %v1210
    %v1531 = vpack.c.b16 %v1215, %v1211
    %v1532 = vpack.c.b16 %v1220, %v1216
    %v1533 = vpack.c.b16 %v1221, %v1217
    %v1534 = vpack.c.b16 %v1222, %v1218
    %v1535 = vpack.c.b16 %v1223, %v1219
    %v1536 = vpack.c.b16 %v1228, %v1224
    %v1537 = vpack.c.b16 %v1229, %v1225
    %v1538 = vpack.c.b16 %v1230, %v1226
    %v1539 = vpack.c.b16 %v1231, %v1227
    %v1540 = vpack.c.b16 %v1236, %v1232
    %v1541 = vpack.c.b16 %v1237, %v1233
    %v1542 = vpack.c.b16 %v1238, %v1234
    %v1543 = vpack.c.b16 %v1239, %v1235
    %v1544 = vpack.c.b16 %v1244, %v1240
    %v1545 = vpack.c.b16 %v1245, %v1241
    %v1546 = vpack.c.b16 %v1246, %v1242
    %v1547 = vpack.c.b16 %v1247, %v1243
    %v1548 = vpack.c.b16 %v1252, %v1248
    %v1549 = vpack.c.b16 %v1253, %v1249
    %v1550 = vpack.c.b16 %v1254, %v1250
    %v1551 = vpack.c.b16 %v1255, %v1251
    %v1552 = vpack.c.b16 %v1260, %v1256
    %v1553 = vpack.c.b16 %v1261, %v1257
    %v1554 = vpack.c.b16 %v1262, %v1258
    %v1555 = vpack.c.b16 %v1263, %v1259
    %v1556 = vpack.c.b16 %v1268, %v1264
    %v1557 = vpack.c.b16 %v1269, %v1265
    %v1558 = vpack.c.b16 %v1270, %v1266
    %v1559 = vpack.c.b16 %v1271, %v1267
    %1848 = vmatprep.subr.bf16.mxu0 %v1273
    %1849 = vmatpush1.bf16.msra.mxu0 %v1272
    %1850 = vmatprep.subr.bf16.mxu0 %v1277
    %1851 = vmatpush1.bf16.msra.mxu0 %v1276
    %1852 = vmatprep.subr.bf16.mxu0 %v1281
    %1853 = vmatpush1.bf16.msra.mxu0 %v1280
    %1854 = vmatprep.subr.bf16.mxu0 %v1285
    %1855 = vmatpush1.bf16.msra.mxu0 %v1284
    %1856 = vmatprep.subr.bf16.mxu0 %v1289
    %1857 = vmatpush1.bf16.msra.mxu0 %v1288
    %1858 = vmatprep.subr.bf16.mxu0 %v1293
    %1859 = vmatpush1.bf16.msra.mxu0 %v1292
    %1860 = vmatprep.subr.bf16.mxu0 %v1297
    %1861 = vmatpush1.bf16.msra.mxu0 %v1296
    %1862 = vmatprep.subr.bf16.mxu0 %v1301
    %1863 = vmatpush1.bf16.msra.mxu0 %v1300
    %1864 = vmatprep.subr.bf16.mxu0 %v1305
    %1865 = vmatpush1.bf16.msra.mxu0 %v1304
    %1866 = vmatprep.subr.bf16.mxu0 %v1309
    %1867 = vmatpush1.bf16.msra.mxu0 %v1308
    %1868 = vmatprep.subr.bf16.mxu0 %v1313
    %1869 = vmatpush1.bf16.msra.mxu0 %v1312
    %1870 = vmatprep.subr.bf16.mxu0 %v1317
    %1871 = vmatpush1.bf16.msra.mxu0 %v1316
    %1872 = vmatprep.subr.bf16.mxu0 %v1321
    %1873 = vmatpush1.bf16.msra.mxu0 %v1320
    %1874 = vmatprep.subr.bf16.mxu0 %v1325
    %1875 = vmatpush1.bf16.msra.mxu0 %v1324
    %1876 = vmatprep.subr.bf16.mxu0 %v1329
    %1877 = vmatpush1.bf16.msra.mxu0 %v1328
    %1878 = vmatprep.subr.bf16.mxu0 %v1333
    %1879 = vmatpush1.bf16.msra.mxu0 %v1332
    %1880 = vmatprep.mubr.bf16.mxu0 %v373
    %1881 = vmatmul.mubr.bf16.gmra.mrb[0].mxu0 %v359
    %v1882 = vpop.f32.mrb[0].mxu0
    %v1883 = vadd.f32 %v317, %v1882
    %v1884 = vpop.f32.mrb[0].mxu0
    %v1885 = vadd.f32 %v321, %v1884
    %v1886 = vpop.f32.mrb[0].mxu0
    %v1887 = vpop.f32.mrb[0].mxu0
    %1888 = vdwg.mxu0
    %1889 = vmatprep.subr.bf16.mxu0 %v1337
    %1890 = vmatpush1.bf16.msra.mxu0 %v1336
    %1891 = vmatprep.subr.bf16.mxu0 %v1341
    %1892 = vmatpush1.bf16.msra.mxu0 %v1340
    %1893 = vmatprep.subr.bf16.mxu0 %v1345
    %1894 = vmatpush1.bf16.msra.mxu0 %v1344
    %1895 = vmatprep.subr.bf16.mxu0 %v1349
    %1896 = vmatpush1.bf16.msra.mxu0 %v1348
    %1897 = vmatprep.subr.bf16.mxu0 %v1353
    %1898 = vmatpush1.bf16.msra.mxu0 %v1352
    %1899 = vmatprep.subr.bf16.mxu0 %v1357
    %1900 = vmatpush1.bf16.msra.mxu0 %v1356
    %1901 = vmatprep.subr.bf16.mxu0 %v1361
    %1902 = vmatpush1.bf16.msra.mxu0 %v1360
    %1903 = vmatprep.subr.bf16.mxu0 %v1365
    %1904 = vmatpush1.bf16.msra.mxu0 %v1364
    %1905 = vmatprep.subr.bf16.mxu0 %v1369
    %1906 = vmatpush1.bf16.msra.mxu0 %v1368
    %1907 = vmatprep.subr.bf16.mxu0 %v1373
    %1908 = vmatpush1.bf16.msra.mxu0 %v1372
    %1909 = vmatprep.subr.bf16.mxu0 %v1377
    %1910 = vmatpush1.bf16.msra.mxu0 %v1376
    %1911 = vmatprep.subr.bf16.mxu0 %v1381
    %1912 = vmatpush1.bf16.msra.mxu0 %v1380
    %1913 = vmatprep.subr.bf16.mxu0 %v1385
    %1914 = vmatpush1.bf16.msra.mxu0 %v1384
    %1915 = vmatprep.subr.bf16.mxu0 %v1389
    %1916 = vmatpush1.bf16.msra.mxu0 %v1388
    %1917 = vmatprep.subr.bf16.mxu0 %v1393
    %1918 = vmatpush1.bf16.msra.mxu0 %v1392
    %1919 = vmatprep.subr.bf16.mxu0 %v1397
    %1920 = vmatpush1.bf16.msra.mxu0 %v1396
    %1921 = vmatprep.mubr.bf16.mxu0 %v383
    %1922 = vmatmul.mubr.bf16.gmra.mrb[0].mxu0 %v381
    %v1923 = vpop.f32.mrb[0].mxu0
    %v1924 = vadd.f32 %v1883, %v1923
    %v1925 = vpop.f32.mrb[0].mxu0
    %v1926 = vadd.f32 %v1885, %v1925
    %v1927 = vpop.f32.mrb[0].mxu0
    %v1928 = vpop.f32.mrb[0].mxu0
    %1929 = vdwg.mxu0
    %1930 = vmatprep.subr.bf16.mxu0 %v1401
    %1931 = vmatpush1.bf16.msra.mxu0 %v1400
    %1932 = vmatprep.subr.bf16.mxu0 %v1405
    %1933 = vmatpush1.bf16.msra.mxu0 %v1404
    %1934 = vmatprep.subr.bf16.mxu0 %v1409
    %1935 = vmatpush1.bf16.msra.mxu0 %v1408
    %1936 = vmatprep.subr.bf16.mxu0 %v1413
    %1937 = vmatpush1.bf16.msra.mxu0 %v1412
    %1938 = vmatprep.subr.bf16.mxu0 %v1417
    %1939 = vmatpush1.bf16.msra.mxu0 %v1416
    %1940 = vmatprep.subr.bf16.mxu0 %v1421
    %1941 = vmatpush1.bf16.msra.mxu0 %v1420
    %1942 = vmatprep.subr.bf16.mxu0 %v1425
    %1943 = vmatpush1.bf16.msra.mxu0 %v1424
    %1944 = vmatprep.subr.bf16.mxu0 %v1429
    %1945 = vmatpush1.bf16.msra.mxu0 %v1428
    %1946 = vmatprep.subr.bf16.mxu0 %v1433
    %1947 = vmatpush1.bf16.msra.mxu0 %v1432
    %1948 = vmatprep.subr.bf16.mxu0 %v1437
    %1949 = vmatpush1.bf16.msra.mxu0 %v1436
    %1950 = vmatprep.subr.bf16.mxu0 %v1441
    %1951 = vmatpush1.bf16.msra.mxu0 %v1440
    %1952 = vmatprep.subr.bf16.mxu0 %v1445
    %1953 = vmatpush1.bf16.msra.mxu0 %v1444
    %1954 = vmatprep.subr.bf16.mxu0 %v1449
    %1955 = vmatpush1.bf16.msra.mxu0 %v1448
    %1956 = vmatprep.subr.bf16.mxu0 %v1453
    %1957 = vmatpush1.bf16.msra.mxu0 %v1452
    %1958 = vmatprep.subr.bf16.mxu0 %v1457
    %1959 = vmatpush1.bf16.msra.mxu0 %v1456
    %1960 = vmatprep.subr.bf16.mxu0 %v1461
    %1961 = vmatpush1.bf16.msra.mxu0 %v1460
    %1962 = vmatprep.mubr.bf16.mxu0 %v380
    %1963 = vmatmul.mubr.bf16.gmra.mrb[0].mxu0 %v366
    %v1964 = vpop.f32.mrb[0].mxu0
    %v1965 = vadd.f32 %v1924, %v1964
    %v1966 = vpop.f32.mrb[0].mxu0
    %v1967 = vadd.f32 %v1926, %v1966
    %v1968 = vpop.f32.mrb[0].mxu0
    %v1969 = vpop.f32.mrb[0].mxu0
    %1970 = vdwg.mxu0
    %1971 = vmatprep.subr.bf16.mxu0 %v1465
    %1972 = vmatpush1.bf16.msra.mxu0 %v1464
    %1973 = vmatprep.subr.bf16.mxu0 %v1469
    %1974 = vmatpush1.bf16.msra.mxu0 %v1468
    %1975 = vmatprep.subr.bf16.mxu0 %v1473
    %1976 = vmatpush1.bf16.msra.mxu0 %v1472
    %1977 = vmatprep.subr.bf16.mxu0 %v1477
    %1978 = vmatpush1.bf16.msra.mxu0 %v1476
    %1979 = vmatprep.subr.bf16.mxu0 %v1481
    %1980 = vmatpush1.bf16.msra.mxu0 %v1480
    %1981 = vmatprep.subr.bf16.mxu0 %v1485
    %1982 = vmatpush1.bf16.msra.mxu0 %v1484
    %1983 = vmatprep.subr.bf16.mxu0 %v1489
    %1984 = vmatpush1.bf16.msra.mxu0 %v1488
    %1985 = vmatprep.subr.bf16.mxu0 %v1493
    %1986 = vmatpush1.bf16.msra.mxu0 %v1492
    %1987 = vmatprep.subr.bf16.mxu0 %v1497
    %1988 = vmatpush1.bf16.msra.mxu0 %v1496
    %1989 = vmatprep.subr.bf16.mxu0 %v1501
    %1990 = vmatpush1.bf16.msra.mxu0 %v1500
    %1991 = vmatprep.subr.bf16.mxu0 %v1505
    %1992 = vmatpush1.bf16.msra.mxu0 %v1504
    %1993 = vmatprep.subr.bf16.mxu0 %v1509
    %1994 = vmatpush1.bf16.msra.mxu0 %v1508
    %1995 = vmatprep.subr.bf16.mxu0 %v1513
    %1996 = vmatpush1.bf16.msra.mxu0 %v1512
    %1997 = vmatprep.subr.bf16.mxu0 %v1517
    %1998 = vmatpush1.bf16.msra.mxu0 %v1516
    %1999 = vmatprep.subr.bf16.mxu0 %v1521
    %2000 = vmatpush1.bf16.msra.mxu0 %v1520
    %2001 = vmatprep.subr.bf16.mxu0 %v1525
    %2002 = vmatpush1.bf16.msra.mxu0 %v1524
    %2003 = vmatprep.mubr.bf16.mxu0 %v384
    %2004 = vmatmul.mubr.bf16.gmra.mrb[0].mxu0 %v382
    %v2005 = vpop.f32.mrb[0].mxu0
    %v2006 = vadd.f32 %v1965, %v2005
    %v2007 = vpop.f32.mrb[0].mxu0
    %v2008 = vadd.f32 %v1967, %v2007
    %v2009 = vpop.f32.mrb[0].mxu0
    %v2010 = vpop.f32.mrb[0].mxu0
    %2011 = vdwg.mxu0
    %2012 = vmatprep.subr.bf16.mxu0 %v1529
    %2013 = vmatpush1.bf16.msra.mxu0 %v1528
    %2014 = vmatprep.subr.bf16.mxu0 %v1533
    %2015 = vmatpush1.bf16.msra.mxu0 %v1532
    %2016 = vmatprep.subr.bf16.mxu0 %v1537
    %2017 = vmatpush1.bf16.msra.mxu0 %v1536
    %2018 = vmatprep.subr.bf16.mxu0 %v1541
    %2019 = vmatpush1.bf16.msra.mxu0 %v1540
    %2020 = vmatprep.subr.bf16.mxu0 %v1545
    %2021 = vmatpush1.bf16.msra.mxu0 %v1544
    %2022 = vmatprep.subr.bf16.mxu0 %v1549
    %2023 = vmatpush1.bf16.msra.mxu0 %v1548
    %2024 = vmatprep.subr.bf16.mxu0 %v1553
    %2025 = vmatpush1.bf16.msra.mxu0 %v1552
    %2026 = vmatprep.subr.bf16.mxu0 %v1557
    %2027 = vmatpush1.bf16.msra.mxu0 %v1556
    %2028 = vmatprep.subr.bf16.mxu0 0
    %2029 = vmatpush1.bf16.msra.mxu0 0
    %2030 = vmatprep.subr.bf16.mxu0 0
    %2031 = vmatpush1.bf16.msra.mxu0 0
    %2032 = vmatprep.subr.bf16.mxu0 0
    %2033 = vmatpush1.bf16.msra.mxu0 0
    %2034 = vmatprep.subr.bf16.mxu0 0
    %2035 = vmatpush1.bf16.msra.mxu0 0
    %2036 = vmatprep.subr.bf16.mxu0 0
    %2037 = vmatpush1.bf16.msra.mxu0 0
    %2038 = vmatprep.subr.bf16.mxu0 0
    %2039 = vmatpush1.bf16.msra.mxu0 0
    %2040 = vmatprep.subr.bf16.mxu0 0
    %2041 = vmatpush1.bf16.msra.mxu0 0
    %2042 = vmatprep.subr.bf16.mxu0 0
    %2043 = vmatpush1.bf16.msra.mxu0 0
    %2044 = vmatprep.mubr.bf16.mxu0 0
    %2045 = vmatmul.mubr.bf16.gmra.mrb[0].mxu0 %v398
    %v2046 = vpop.f32.mrb[0].mxu0
    %v2047 = vadd.f32 %v2006, %v2046
    %v2048 = vpop.f32.mrb[0].mxu0
    %v2049 = vadd.f32 %v2008, %v2048
    %v2050 = vpop.f32.mrb[0].mxu0
    %v2051 = vpop.f32.mrb[0].mxu0
    %2052 = vdwg.mxu0
    %2053 = vmatprep.subr.bf16.mxu0 %v1275
    %2054 = vmatpush1.bf16.msra.mxu0 %v1274
    %2055 = vmatprep.subr.bf16.mxu0 %v1279
    %2056 = vmatpush1.bf16.msra.mxu0 %v1278
    %2057 = vmatprep.subr.bf16.mxu0 %v1283
    %2058 = vmatpush1.bf16.msra.mxu0 %v1282
    %2059 = vmatprep.subr.bf16.mxu0 %v1287
    %2060 = vmatpush1.bf16.msra.mxu0 %v1286
    %2061 = vmatprep.subr.bf16.mxu0 %v1291
    %2062 = vmatpush1.bf16.msra.mxu0 %v1290
    %2063 = vmatprep.subr.bf16.mxu0 %v1295
    %2064 = vmatpush1.bf16.msra.mxu0 %v1294
    %2065 = vmatprep.subr.bf16.mxu0 %v1299
    %2066 = vmatpush1.bf16.msra.mxu0 %v1298
    %2067 = vmatprep.subr.bf16.mxu0 %v1303
    %2068 = vmatpush1.bf16.msra.mxu0 %v1302
    %2069 = vmatprep.subr.bf16.mxu0 %v1307
    %2070 = vmatpush1.bf16.msra.mxu0 %v1306
    %2071 = vmatprep.subr.bf16.mxu0 %v1311
    %2072 = vmatpush1.bf16.msra.mxu0 %v1310
    %2073 = vmatprep.subr.bf16.mxu0 %v1315
    %2074 = vmatpush1.bf16.msra.mxu0 %v1314
    %2075 = vmatprep.subr.bf16.mxu0 %v1319
    %2076 = vmatpush1.bf16.msra.mxu0 %v1318
    %2077 = vmatprep.subr.bf16.mxu0 %v1323
    %2078 = vmatpush1.bf16.msra.mxu0 %v1322
    %2079 = vmatprep.subr.bf16.mxu0 %v1327
    %2080 = vmatpush1.bf16.msra.mxu0 %v1326
    %2081 = vmatprep.subr.bf16.mxu0 %v1331
    %2082 = vmatpush1.bf16.msra.mxu0 %v1330
    %2083 = vmatprep.subr.bf16.mxu0 %v1335
    %2084 = vmatpush1.bf16.msra.mxu0 %v1334
    %2085 = vmatprep.mubr.bf16.mxu0 %v373
    %2086 = vmatmul.mubr.bf16.gmra.mrb[0].mxu0 %v359
    %v2087 = vpop.f32.mrb[0].mxu0
    %v2088 = vadd.f32 %v325, %v2087
    %v2089 = vpop.f32.mrb[0].mxu0
    %v2090 = vadd.f32 %v329, %v2089
    %v2091 = vpop.f32.mrb[0].mxu0
    %v2092 = vpop.f32.mrb[0].mxu0
    %2093 = vdwg.mxu0
    %2094 = vmatprep.subr.bf16.mxu0 %v1339
    %2095 = vmatpush1.bf16.msra.mxu0 %v1338
    %2096 = vmatprep.subr.bf16.mxu0 %v1343
    %2097 = vmatpush1.bf16.msra.mxu0 %v1342
    %2098 = vmatprep.subr.bf16.mxu0 %v1347
    %2099 = vmatpush1.bf16.msra.mxu0 %v1346
    %2100 = vmatprep.subr.bf16.mxu0 %v1351
    %2101 = vmatpush1.bf16.msra.mxu0 %v1350
    %2102 = vmatprep.subr.bf16.mxu0 %v1355
    %2103 = vmatpush1.bf16.msra.mxu0 %v1354
    %2104 = vmatprep.subr.bf16.mxu0 %v1359
    %2105 = vmatpush1.bf16.msra.mxu0 %v1358
    %2106 = vmatprep.subr.bf16.mxu0 %v1363
    %2107 = vmatpush1.bf16.msra.mxu0 %v1362
    %2108 = vmatprep.subr.bf16.mxu0 %v1367
    %2109 = vmatpush1.bf16.msra.mxu0 %v1366
    %2110 = vmatprep.subr.bf16.mxu0 %v1371
    %2111 = vmatpush1.bf16.msra.mxu0 %v1370
    %2112 = vmatprep.subr.bf16.mxu0 %v1375
    %2113 = vmatpush1.bf16.msra.mxu0 %v1374
    %2114 = vmatprep.subr.bf16.mxu0 %v1379
    %2115 = vmatpush1.bf16.msra.mxu0 %v1378
    %2116 = vmatprep.subr.bf16.mxu0 %v1383
    %2117 = vmatpush1.bf16.msra.mxu0 %v1382
    %2118 = vmatprep.subr.bf16.mxu0 %v1387
    %2119 = vmatpush1.bf16.msra.mxu0 %v1386
    %2120 = vmatprep.subr.bf16.mxu0 %v1391
    %2121 = vmatpush1.bf16.msra.mxu0 %v1390
    %2122 = vmatprep.subr.bf16.mxu0 %v1395
    %2123 = vmatpush1.bf16.msra.mxu0 %v1394
    %2124 = vmatprep.subr.bf16.mxu0 %v1399
    %2125 = vmatpush1.bf16.msra.mxu0 %v1398
    %2126 = vmatprep.mubr.bf16.mxu0 %v383
    %2127 = vmatmul.mubr.bf16.gmra.mrb[0].mxu0 %v381
    %v2128 = vpop.f32.mrb[0].mxu0
    %v2129 = vadd.f32 %v2088, %v2128
    %v2130 = vpop.f32.mrb[0].mxu0
    %v2131 = vadd.f32 %v2090, %v2130
    %v2132 = vpop.f32.mrb[0].mxu0
    %v2133 = vpop.f32.mrb[0].mxu0
    %2134 = vdwg.mxu0
    %2135 = vmatprep.subr.bf16.mxu0 %v1403
    %2136 = vmatpush1.bf16.msra.mxu0 %v1402
    %2137 = vmatprep.subr.bf16.mxu0 %v1407
    %2138 = vmatpush1.bf16.msra.mxu0 %v1406
    %2139 = vmatprep.subr.bf16.mxu0 %v1411
    %2140 = vmatpush1.bf16.msra.mxu0 %v1410
    %2141 = vmatprep.subr.bf16.mxu0 %v1415
    %2142 = vmatpush1.bf16.msra.mxu0 %v1414
    %2143 = vmatprep.subr.bf16.mxu0 %v1419
    %2144 = vmatpush1.bf16.msra.mxu0 %v1418
    %2145 = vmatprep.subr.bf16.mxu0 %v1423
    %2146 = vmatpush1.bf16.msra.mxu0 %v1422
    %2147 = vmatprep.subr.bf16.mxu0 %v1427
    %2148 = vmatpush1.bf16.msra.mxu0 %v1426
    %2149 = vmatprep.subr.bf16.mxu0 %v1431
    %2150 = vmatpush1.bf16.msra.mxu0 %v1430
    %2151 = vmatprep.subr.bf16.mxu0 %v1435
    %2152 = vmatpush1.bf16.msra.mxu0 %v1434
    %2153 = vmatprep.subr.bf16.mxu0 %v1439
    %2154 = vmatpush1.bf16.msra.mxu0 %v1438
    %2155 = vmatprep.subr.bf16.mxu0 %v1443
    %2156 = vmatpush1.bf16.msra.mxu0 %v1442
    %2157 = vmatprep.subr.bf16.mxu0 %v1447
    %2158 = vmatpush1.bf16.msra.mxu0 %v1446
    %2159 = vmatprep.subr.bf16.mxu0 %v1451
    %2160 = vmatpush1.bf16.msra.mxu0 %v1450
    %2161 = vmatprep.subr.bf16.mxu0 %v1455
    %2162 = vmatpush1.bf16.msra.mxu0 %v1454
    %2163 = vmatprep.subr.bf16.mxu0 %v1459
    %2164 = vmatpush1.bf16.msra.mxu0 %v1458
    %2165 = vmatprep.subr.bf16.mxu0 %v1463
    %2166 = vmatpush1.bf16.msra.mxu0 %v1462
    %2167 = vmatprep.mubr.bf16.mxu0 %v380
    %2168 = vmatmul.mubr.bf16.gmra.mrb[0].mxu0 %v366
    %v2169 = vpop.f32.mrb[0].mxu0
    %v2170 = vadd.f32 %v2129, %v2169
    %v2171 = vpop.f32.mrb[0].mxu0
    %v2172 = vadd.f32 %v2131, %v2171
    %v2173 = vpop.f32.mrb[0].mxu0
    %v2174 = vpop.f32.mrb[0].mxu0
    %2175 = vdwg.mxu0
    %2176 = vmatprep.subr.bf16.mxu0 %v1467
    %2177 = vmatpush1.bf16.msra.mxu0 %v1466
    %2178 = vmatprep.subr.bf16.mxu0 %v1471
    %2179 = vmatpush1.bf16.msra.mxu0 %v1470
    %2180 = vmatprep.subr.bf16.mxu0 %v1475
    %2181 = vmatpush1.bf16.msra.mxu0 %v1474
    %2182 = vmatprep.subr.bf16.mxu0 %v1479
    %2183 = vmatpush1.bf16.msra.mxu0 %v1478
    %2184 = vmatprep.subr.bf16.mxu0 %v1483
    %2185 = vmatpush1.bf16.msra.mxu0 %v1482
    %2186 = vmatprep.subr.bf16.mxu0 %v1487
    %2187 = vmatpush1.bf16.msra.mxu0 %v1486
    %2188 = vmatprep.subr.bf16.mxu0 %v1491
    %2189 = vmatpush1.bf16.msra.mxu0 %v1490
    %2190 = vmatprep.subr.bf16.mxu0 %v1495
    %2191 = vmatpush1.bf16.msra.mxu0 %v1494
    %2192 = vmatprep.subr.bf16.mxu0 %v1499
    %2193 = vmatpush1.bf16.msra.mxu0 %v1498
    %2194 = vmatprep.subr.bf16.mxu0 %v1503
    %2195 = vmatpush1.bf16.msra.mxu0 %v1502
    %2196 = vmatprep.subr.bf16.mxu0 %v1507
    %2197 = vmatpush1.bf16.msra.mxu0 %v1506
    %2198 = vmatprep.subr.bf16.mxu0 %v1511
    %2199 = vmatpush1.bf16.msra.mxu0 %v1510
    %2200 = vmatprep.subr.bf16.mxu0 %v1515
    %2201 = vmatpush1.bf16.msra.mxu0 %v1514
    %2202 = vmatprep.subr.bf16.mxu0 %v1519
    %2203 = vmatpush1.bf16.msra.mxu0 %v1518
    %2204 = vmatprep.subr.bf16.mxu0 %v1523
    %2205 = vmatpush1.bf16.msra.mxu0 %v1522
    %2206 = vmatprep.subr.bf16.mxu0 %v1527
    %2207 = vmatpush1.bf16.msra.mxu0 %v1526
    %2208 = vmatprep.mubr.bf16.mxu0 %v384
    %2209 = vmatmul.mubr.bf16.gmra.mrb[0].mxu0 %v382
    %v2210 = vpop.f32.mrb[0].mxu0
    %v2211 = vadd.f32 %v2170, %v2210
    %v2212 = vpop.f32.mrb[0].mxu0
    %v2213 = vadd.f32 %v2172, %v2212
    %v2214 = vpop.f32.mrb[0].mxu0
    %v2215 = vpop.f32.mrb[0].mxu0
    %2216 = vdwg.mxu0
    %2217 = vmatprep.subr.bf16.mxu0 %v1531
    %2218 = vmatpush1.bf16.msra.mxu0 %v1530
    %2219 = vmatprep.subr.bf16.mxu0 %v1535
    %2220 = vmatpush1.bf16.msra.mxu0 %v1534
    %2221 = vmatprep.subr.bf16.mxu0 %v1539
    %2222 = vmatpush1.bf16.msra.mxu0 %v1538
    %2223 = vmatprep.subr.bf16.mxu0 %v1543
    %2224 = vmatpush1.bf16.msra.mxu0 %v1542
    %2225 = vmatprep.subr.bf16.mxu0 %v1547
    %2226 = vmatpush1.bf16.msra.mxu0 %v1546
    %2227 = vmatprep.subr.bf16.mxu0 %v1551
    %2228 = vmatpush1.bf16.msra.mxu0 %v1550
    %2229 = vmatprep.subr.bf16.mxu0 %v1555
    %2230 = vmatpush1.bf16.msra.mxu0 %v1554
    %2231 = vmatprep.subr.bf16.mxu0 %v1559
    %2232 = vmatpush1.bf16.msra.mxu0 %v1558
    %2233 = vmatprep.subr.bf16.mxu0 0
    %2234 = vmatpush1.bf16.msra.mxu0 0
    %2235 = vmatprep.subr.bf16.mxu0 0
    %2236 = vmatpush1.bf16.msra.mxu0 0
    %2237 = vmatprep.subr.bf16.mxu0 0
    %2238 = vmatpush1.bf16.msra.mxu0 0
    %2239 = vmatprep.subr.bf16.mxu0 0
    %2240 = vmatpush1.bf16.msra.mxu0 0
    %2241 = vmatprep.subr.bf16.mxu0 0
    %2242 = vmatpush1.bf16.msra.mxu0 0
    %2243 = vmatprep.subr.bf16.mxu0 0
    %2244 = vmatpush1.bf16.msra.mxu0 0
    %2245 = vmatprep.subr.bf16.mxu0 0
    %2246 = vmatpush1.bf16.msra.mxu0 0
    %2247 = vmatprep.subr.bf16.mxu0 0
    %2248 = vmatpush1.bf16.msra.mxu0 0
    %2249 = vmatprep.mubr.bf16.mxu0 0
    %2250 = vmatmul.mubr.bf16.gmra.mrb[0].mxu0 %v398
    %v2251 = vpop.f32.mrb[0].mxu0
    %v2252 = vadd.f32 %v2211, %v2251
    %v2253 = vpop.f32.mrb[0].mxu0
    %v2254 = vadd.f32 %v2213, %v2253
    %v2255 = vpop.f32.mrb[0].mxu0
    %v2256 = vpop.f32.mrb[0].mxu0
    %2257 = vdwg.mxu0
    %vm2258 = vcmp.ge.f32.partialorder %v2047, 0.0
    %vm2259 = vcmp.ge.f32.partialorder %v2049, 0.0
    %vm2260 = vcmp.ge.f32.partialorder %v2252, 0.0
    %vm2261 = vcmp.ge.f32.partialorder %v2254, 0.0
    %v2262 = vmul.f32 %v2047, 0.2
    %v2263 = vmul.f32 %v2049, 0.2
    %v2264 = vmul.f32 %v2252, 0.2
    %v2265 = vmul.f32 %v2254, 0.2
    %v2266 = vsel %vm2258, %v2047, %v2262
    %v2267 = vsel %vm2259, %v2049, %v2263
    %v2268 = vsel %vm2260, %v2252, %v2264
    %v2269 = vsel %vm2261, %v2254, %v2265
    %v2270 = vpack.c.bf16 %v2266, %v2266
    %v2271 = vpack.c.bf16 %v2267, %v2267
    %v2272 = vpack.c.bf16 %v2268, %v2268
    %v2273 = vpack.c.bf16 %v2269, %v2269
    %v2274 = vld [vmem:[%s3] sm:$0xf]
    %v2275 = vld [vmem:[%s3 + $0x4] sm:$0xf]
    %v2276 = vld [vmem:[%s3 + $0x8] sm:$0xf]
    %v2277 = vld [vmem:[%s3 + $0xc] sm:$0xf]
    %v2278 = vld [vmem:[%s3 + $0x10] sm:$0xf]
    %v2279 = vld [vmem:[%s3 + $0x14] sm:$0xf]
    %v2280 = vld [vmem:[%s3 + $0x18] sm:$0xf]
    %v2281 = vld [vmem:[%s3 + $0x1c] sm:$0xf]
    %v2282 = vld [vmem:[%s3 + $0x20] sm:$0xf]
    %v2283 = vld [vmem:[%s3 + $0x24] sm:$0xf]
    %v2284 = vld [vmem:[%s3 + $0x28] sm:$0xf]
    %v2285 = vld [vmem:[%s3 + $0x2c] sm:$0xf]
    %v2286 = vld [vmem:[%s3 + $0x30] sm:$0xf]
    %v2287 = vld [vmem:[%s3 + $0x34] sm:$0xf]
    %v2288 = vld [vmem:[%s3 + $0x38] sm:$0xf]
    %v2289 = vld [vmem:[%s3 + $0x3c] sm:$0xf]
    %v2290 = vld [vmem:[%s3 + $0x40] sm:$0xf]
    %v2291 = vld [vmem:[%s3 + $0x44] sm:$0xf]
    %v2292 = vld [vmem:[%s3 + $0x48] sm:$0xf]
    %v2293 = vld [vmem:[%s3 + $0x4c] sm:$0xf]
    %v2294 = vld [vmem:[%s3 + $0x50] sm:$0xf]
    %v2295 = vld [vmem:[%s3 + $0x54] sm:$0xf]
    %v2296 = vld [vmem:[%s3 + $0x58] sm:$0xf]
    %v2297 = vld [vmem:[%s3 + $0x5c] sm:$0xf]
    %v2298 = vld [vmem:[%s3 + $0x60] sm:$0xf]
    %v2299 = vld [vmem:[%s3 + $0x64] sm:$0xf]
    %v2300 = vld [vmem:[%s3 + $0x68] sm:$0xf]
    %v2301 = vld [vmem:[%s3 + $0x6c] sm:$0xf]
    %v2302 = vld [vmem:[%s3 + $0x70] sm:$0xf]
    %v2303 = vld [vmem:[%s3 + $0x74] sm:$0xf]
    %v2304 = vld [vmem:[%s3 + $0x78] sm:$0xf]
    %v2305 = vld [vmem:[%s3 + $0x7c] sm:$0xf]
    %v2306 = vld [vmem:[%s3 + $0x80] sm:$0xf]
    %v2307 = vld [vmem:[%s3 + $0x84] sm:$0xf]
    %v2308 = vld [vmem:[%s3 + $0x88] sm:$0xf]
    %v2309 = vld [vmem:[%s3 + $0x8c] sm:$0xf]
    %v2310 = vld [vmem:[%s3 + $0x90] sm:$0xf]
    %v2311 = vld [vmem:[%s3 + $0x94] sm:$0xf]
    %v2312 = vld [vmem:[%s3 + $0x98] sm:$0xf]
    %v2313 = vld [vmem:[%s3 + $0x9c] sm:$0xf]
    %v2314 = vld [vmem:[%s3 + $0xa0] sm:$0xf]
    %v2315 = vld [vmem:[%s3 + $0xa4] sm:$0xf]
    %v2316 = vld [vmem:[%s3 + $0xa8] sm:$0xf]
    %v2317 = vld [vmem:[%s3 + $0xac] sm:$0xf]
    %v2318 = vld [vmem:[%s3 + $0xb0] sm:$0xf]
    %v2319 = vld [vmem:[%s3 + $0xb4] sm:$0xf]
    %v2320 = vld [vmem:[%s3 + $0xb8] sm:$0xf]
    %v2321 = vld [vmem:[%s3 + $0xbc] sm:$0xf]
    %v2322 = vld [vmem:[%s3 + $0xc0] sm:$0xf]
    %v2323 = vld [vmem:[%s3 + $0xc4] sm:$0xf]
    %v2324 = vld [vmem:[%s3 + $0xc8] sm:$0xf]
    %v2325 = vld [vmem:[%s3 + $0xcc] sm:$0xf]
    %v2326 = vld [vmem:[%s3 + $0xd0] sm:$0xf]
    %v2327 = vld [vmem:[%s3 + $0xd4] sm:$0xf]
    %v2328 = vld [vmem:[%s3 + $0xd8] sm:$0xf]
    %v2329 = vld [vmem:[%s3 + $0xdc] sm:$0xf]
    %v2330 = vld [vmem:[%s3 + $0xe0] sm:$0xf]
    %v2331 = vld [vmem:[%s3 + $0xe4] sm:$0xf]
    %v2332 = vld [vmem:[%s3 + $0xe8] sm:$0xf]
    %v2333 = vld [vmem:[%s3 + $0xec] sm:$0xf]
    %v2334 = vld [vmem:[%s3 + $0xf0] sm:$0xf]
    %v2335 = vld [vmem:[%s3 + $0xf4] sm:$0xf]
    %v2336 = vld [vmem:[%s3 + $0xf8] sm:$0xf]
    %v2337 = vld [vmem:[%s3 + $0xfc] sm:$0xf]
    %v2338 = vld [vmem:[%s4] sm:$0x1]
    %v2340 = vlaneseq
    %v2341 = vshrl.u32 %v2340, 7
    %v2342 = vsub.s32 0, %v2341
    %v2343 = vrot.slane %v2338, %v2342
    %v2409 = vunpack.c.l.b16 %v2274
    %v2410 = vunpack.c.l.b16 %v2275
    %v2411 = vunpack.c.l.b16 %v2276
    %v2412 = vunpack.c.l.b16 %v2277
    %v2413 = vunpack.c.l.b16 %v2278
    %v2414 = vunpack.c.l.b16 %v2279
    %v2415 = vunpack.c.l.b16 %v2280
    %v2416 = vunpack.c.l.b16 %v2281
    %v2417 = vunpack.c.l.b16 %v2282
    %v2418 = vunpack.c.l.b16 %v2283
    %v2419 = vunpack.c.l.b16 %v2284
    %v2420 = vunpack.c.l.b16 %v2285
    %v2421 = vunpack.c.l.b16 %v2286
    %v2422 = vunpack.c.l.b16 %v2287
    %v2423 = vunpack.c.l.b16 %v2288
    %v2424 = vunpack.c.l.b16 %v2289
    %v2425 = vunpack.c.l.b16 %v2290
    %v2426 = vunpack.c.l.b16 %v2291
    %v2427 = vunpack.c.l.b16 %v2292
    %v2428 = vunpack.c.l.b16 %v2293
    %v2429 = vunpack.c.l.b16 %v2294
    %v2430 = vunpack.c.l.b16 %v2295
    %v2431 = vunpack.c.l.b16 %v2296
    %v2432 = vunpack.c.l.b16 %v2297
    %v2433 = vunpack.c.l.b16 %v2298
    %v2434 = vunpack.c.l.b16 %v2299
    %v2435 = vunpack.c.l.b16 %v2300
    %v2436 = vunpack.c.l.b16 %v2301
    %v2437 = vunpack.c.l.b16 %v2302
    %v2438 = vunpack.c.l.b16 %v2303
    %v2439 = vunpack.c.l.b16 %v2304
    %v2440 = vunpack.c.l.b16 %v2305
    %v2441 = vunpack.c.l.b16 %v2306
    %v2442 = vunpack.c.l.b16 %v2307
    %v2443 = vunpack.c.l.b16 %v2308
    %v2444 = vunpack.c.l.b16 %v2309
    %v2445 = vunpack.c.l.b16 %v2310
    %v2446 = vunpack.c.l.b16 %v2311
    %v2447 = vunpack.c.l.b16 %v2312
    %v2448 = vunpack.c.l.b16 %v2313
    %v2449 = vunpack.c.l.b16 %v2314
    %v2450 = vunpack.c.l.b16 %v2315
    %v2451 = vunpack.c.l.b16 %v2316
    %v2452 = vunpack.c.l.b16 %v2317
    %v2453 = vunpack.c.l.b16 %v2318
    %v2454 = vunpack.c.l.b16 %v2319
    %v2455 = vunpack.c.l.b16 %v2320
    %v2456 = vunpack.c.l.b16 %v2321
    %v2457 = vunpack.c.l.b16 %v2322
    %v2458 = vunpack.c.l.b16 %v2323
    %v2459 = vunpack.c.l.b16 %v2324
    %v2460 = vunpack.c.l.b16 %v2325
    %v2461 = vunpack.c.l.b16 %v2326
    %v2462 = vunpack.c.l.b16 %v2327
    %v2463 = vunpack.c.l.b16 %v2328
    %v2464 = vunpack.c.l.b16 %v2329
    %v2465 = vunpack.c.l.b16 %v2330
    %v2466 = vunpack.c.l.b16 %v2331
    %v2467 = vunpack.c.l.b16 %v2332
    %v2468 = vunpack.c.l.b16 %v2333
    %v2469 = vunpack.c.l.b16 %v2334
    %v2470 = vunpack.c.l.b16 %v2335
    %v2471 = vunpack.c.l.b16 %v2336
    %v2472 = vunpack.c.l.b16 %v2337
    %v2473 = vpack.c.b16 %v2410, %v2409
    %v2474 = vpack.c.b16 %v2412, %v2411
    %v2475 = vpack.c.b16 %v2414, %v2413
    %v2476 = vpack.c.b16 %v2416, %v2415
    %v2477 = vpack.c.b16 %v2418, %v2417
    %v2478 = vpack.c.b16 %v2420, %v2419
    %v2479 = vpack.c.b16 %v2422, %v2421
    %v2480 = vpack.c.b16 %v2424, %v2423
    %v2481 = vpack.c.b16 %v2426, %v2425
    %v2482 = vpack.c.b16 %v2428, %v2427
    %v2483 = vpack.c.b16 %v2430, %v2429
    %v2484 = vpack.c.b16 %v2432, %v2431
    %v2485 = vpack.c.b16 %v2434, %v2433
    %v2486 = vpack.c.b16 %v2436, %v2435
    %v2487 = vpack.c.b16 %v2438, %v2437
    %v2488 = vpack.c.b16 %v2440, %v2439
    %v2489 = vpack.c.b16 %v2442, %v2441
    %v2490 = vpack.c.b16 %v2444, %v2443
    %v2491 = vpack.c.b16 %v2446, %v2445
    %v2492 = vpack.c.b16 %v2448, %v2447
    %v2493 = vpack.c.b16 %v2450, %v2449
    %v2494 = vpack.c.b16 %v2452, %v2451
    %v2495 = vpack.c.b16 %v2454, %v2453
    %v2496 = vpack.c.b16 %v2456, %v2455
    %v2497 = vpack.c.b16 %v2458, %v2457
    %v2498 = vpack.c.b16 %v2460, %v2459
    %v2499 = vpack.c.b16 %v2462, %v2461
    %v2500 = vpack.c.b16 %v2464, %v2463
    %v2501 = vpack.c.b16 %v2466, %v2465
    %v2502 = vpack.c.b16 %v2468, %v2467
    %v2503 = vpack.c.b16 %v2470, %v2469
    %v2504 = vpack.c.b16 %v2472, %v2471
    %2537 = vmatprep.subr.bf16.mxu0 0
    %2538 = vmatpush1.bf16.msra.mxu0 %v2473
    %2539 = vmatprep.subr.bf16.mxu0 0
    %2540 = vmatpush1.bf16.msra.mxu0 %v2474
    %2541 = vmatprep.subr.bf16.mxu0 0
    %2542 = vmatpush1.bf16.msra.mxu0 %v2475
    %2543 = vmatprep.subr.bf16.mxu0 0
    %2544 = vmatpush1.bf16.msra.mxu0 %v2476
    %2545 = vmatprep.subr.bf16.mxu0 0
    %2546 = vmatpush1.bf16.msra.mxu0 %v2477
    %2547 = vmatprep.subr.bf16.mxu0 0
    %2548 = vmatpush1.bf16.msra.mxu0 %v2478
    %2549 = vmatprep.subr.bf16.mxu0 0
    %2550 = vmatpush1.bf16.msra.mxu0 %v2479
    %2551 = vmatprep.subr.bf16.mxu0 0
    %2552 = vmatpush1.bf16.msra.mxu0 %v2480
    %2553 = vmatprep.subr.bf16.mxu0 0
    %2554 = vmatpush1.bf16.msra.mxu0 %v2481
    %2555 = vmatprep.subr.bf16.mxu0 0
    %2556 = vmatpush1.bf16.msra.mxu0 %v2482
    %2557 = vmatprep.subr.bf16.mxu0 0
    %2558 = vmatpush1.bf16.msra.mxu0 %v2483
    %2559 = vmatprep.subr.bf16.mxu0 0
    %2560 = vmatpush1.bf16.msra.mxu0 %v2484
    %2561 = vmatprep.subr.bf16.mxu0 0
    %2562 = vmatpush1.bf16.msra.mxu0 %v2485
    %2563 = vmatprep.subr.bf16.mxu0 0
    %2564 = vmatpush1.bf16.msra.mxu0 %v2486
    %2565 = vmatprep.subr.bf16.mxu0 0
    %2566 = vmatpush1.bf16.msra.mxu0 %v2487
    %2567 = vmatprep.subr.bf16.mxu0 0
    %2568 = vmatpush1.bf16.msra.mxu0 %v2488
    %2569 = vmatprep.mubr.bf16.mxu0 %v2271
    %2570 = vmatmul.mubr.bf16.gmra.mrb[0].mxu0 %v2270
    %v2571 = vpop.f32.mrb[0].mxu0
    %v2572 = vadd.f32 %v2343, %v2571
    %v2573 = vpop.f32.mrb[0].mxu0
    %v2574 = vpop.f32.mrb[0].mxu0
    %v2575 = vpop.f32.mrb[0].mxu0
    %2576 = vdwg.mxu0
    %2577 = vmatprep.subr.bf16.mxu0 0
    %2578 = vmatpush1.bf16.msra.mxu0 %v2489
    %2579 = vmatprep.subr.bf16.mxu0 0
    %2580 = vmatpush1.bf16.msra.mxu0 %v2490
    %2581 = vmatprep.subr.bf16.mxu0 0
    %2582 = vmatpush1.bf16.msra.mxu0 %v2491
    %2583 = vmatprep.subr.bf16.mxu0 0
    %2584 = vmatpush1.bf16.msra.mxu0 %v2492
    %2585 = vmatprep.subr.bf16.mxu0 0
    %2586 = vmatpush1.bf16.msra.mxu0 %v2493
    %2587 = vmatprep.subr.bf16.mxu0 0
    %2588 = vmatpush1.bf16.msra.mxu0 %v2494
    %2589 = vmatprep.subr.bf16.mxu0 0
    %2590 = vmatpush1.bf16.msra.mxu0 %v2495
    %2591 = vmatprep.subr.bf16.mxu0 0
    %2592 = vmatpush1.bf16.msra.mxu0 %v2496
    %2593 = vmatprep.subr.bf16.mxu0 0
    %2594 = vmatpush1.bf16.msra.mxu0 %v2497
    %2595 = vmatprep.subr.bf16.mxu0 0
    %2596 = vmatpush1.bf16.msra.mxu0 %v2498
    %2597 = vmatprep.subr.bf16.mxu0 0
    %2598 = vmatpush1.bf16.msra.mxu0 %v2499
    %2599 = vmatprep.subr.bf16.mxu0 0
    %2600 = vmatpush1.bf16.msra.mxu0 %v2500
    %2601 = vmatprep.subr.bf16.mxu0 0
    %2602 = vmatpush1.bf16.msra.mxu0 %v2501
    %2603 = vmatprep.subr.bf16.mxu0 0
    %2604 = vmatpush1.bf16.msra.mxu0 %v2502
    %2605 = vmatprep.subr.bf16.mxu0 0
    %2606 = vmatpush1.bf16.msra.mxu0 %v2503
    %2607 = vmatprep.subr.bf16.mxu0 0
    %2608 = vmatpush1.bf16.msra.mxu0 %v2504
    %2609 = vmatprep.mubr.bf16.mxu0 %v2273
    %2610 = vmatmul.mubr.bf16.gmra.mrb[0].mxu0 %v2272
    %v2611 = vpop.f32.mrb[0].mxu0
    %v2612 = vadd.f32 %v2572, %v2611
    %v2613 = vpop.f32.mrb[0].mxu0
    %v2614 = vpop.f32.mrb[0].mxu0
    %v2615 = vpop.f32.mrb[0].mxu0
    %2616 = vdwg.mxu0
    %2617 = vst [vmem:[#allocation2] sm:$0x3] %v2612
    // Predicated region
    $region22: #{cnn_forward.9} parent=1 // pred_check
      _
    $region23: #{cnn_forward.9} parent=1 // pred_check_branch
      %2619 = sbr.rel (0) target = $region25
    $region24: #{cnn_forward.9} parent=1 // pred_region
      %s2621 = ssub.s32 32, 32
      %2622 = vsyncadd [#allocation3], %s2621
      %s2624 = sshll.u32 [#allocation2], 4
      %s2625 = int_to_ptr.vmem [resolvable:$true] %s2624
      %2627 = dma.vmem_to_hbm [thread:$0]  %s2625, 32, %s5, [#allocation3]
    $region25: #{cnn_forward.9} parent=1 // pred_fallthru
      _
    // Predicated region
    $region26: #{cnn_forward.9} parent=1 // pred_check
      _
    $region27: #{cnn_forward.9} parent=1 // pred_check_branch
      %2629 = sbr.rel (0) target = $region29
    $region28: #{cnn_forward.9} parent=1 // pred_region
      %2630 = dma.done [#allocation3], 32
    $region29: #{cnn_forward.9} parent=1 // pred_fallthru
      _
    %2631 = vsyncpa [#allocation3], 1

</llo_original>
